<compile_context>
chip_gen: v7x
topology: tpu7x:2x2x1
jax: 0.10.0
libtpu: 0.0.40
codegen_flags: <defaults>
</compile_context>

<pallas_src>
import functools

import jax
import jax.numpy as jnp
from jax.experimental import pallas as pl
from jax.experimental.pallas import tpu as pltpu


# ----------------------------------------------------------------------------
# Shared helper: zero only the P-wide halo of a (bn, H+2P, W+2P, C) scratch.
# ----------------------------------------------------------------------------
def _zero_halo(pad_ref, P, H, W):
    bn, Hp, Wp, C = pad_ref.shape
    pad_ref[:, 0:P, :, :] = jnp.zeros((bn, P, Wp, C), jnp.float32)
    pad_ref[:, P + H:Hp, :, :] = jnp.zeros((bn, Hp - H - P, Wp, C), jnp.float32)
    pad_ref[:, P:P + H, 0:P, :] = jnp.zeros((bn, H, P, C), jnp.float32)
    pad_ref[:, P:P + H, P + W:Wp, :] = jnp.zeros((bn, H, Wp - W - P, C),
                                                 jnp.float32)


# ----------------------------------------------------------------------------
# Kernel A: conv0/conv1/conv2 (3x3 conv + folded BN + ReLU) in one pallas_call
# ----------------------------------------------------------------------------
def fused_convs3x3_bn_relu(xs, ws, bs, *, bn=1, use_bf16=False):
    """xs[i]: (N, H_i, W_i, Cin_i) NHWC.  ws[i]: (9*Cin_i, Cout) with the BN
    scale folded in (tap-major, channel-minor rows).  bs[i]: (1, Cout).
    Returns a list of (N, H_i*W_i, Cout)."""
    n_lvls = len(xs)
    N = xs[0].shape[0]
    Cout = ws[0].shape[-1]
    shapes = tuple(x.shape[1:] for x in xs)          # (H, W, Cin) per level
    mdt = jnp.bfloat16 if use_bf16 else jnp.float32

    def kernel(*refs):
        x_refs = refs[:n_lvls]
        w_refs = refs[n_lvls:2 * n_lvls]
        b_refs = refs[2 * n_lvls:3 * n_lvls]
        o_refs = refs[3 * n_lvls:4 * n_lvls]
        pad_refs = refs[4 * n_lvls:]
        for i, (H, W, Cin) in enumerate(shapes):
            xpad = pad_refs[i]
            _zero_halo(xpad, 1, H, W)
            xpad[:, 1:1 + H, 1:1 + W, :] = x_refs[i][...].astype(jnp.float32)
            # im2col: one (bn*H*W, 9*Cin) operand -> single K=9*Cin matmul.
            taps = []
            for ky in range(3):
                for kx in range(3):
                    taps.append(
                        xpad[:, ky:ky + H, kx:kx + W, :].reshape(bn * H * W,
                                                                 Cin))
            cols = jnp.concatenate(taps, axis=-1)            # (bn*HW, 9*Cin)
            y = jnp.dot(cols.astype(mdt), w_refs[i][...].astype(mdt),
                        preferred_element_type=jnp.float32)
            y = jnp.maximum(y + b_refs[i][...], 0.0)
            o_refs[i][...] = y.reshape(bn, H * W, Cout).astype(o_refs[i].dtype)

    in_specs = (
        [pl.BlockSpec((bn,) + s, lambda n: (n, 0, 0, 0)) for s in shapes]
        + [pl.BlockSpec(w.shape, lambda n: (0, 0)) for w in ws]
        + [pl.BlockSpec(b.shape, lambda n: (0, 0)) for b in bs])
    out_specs = [pl.BlockSpec((bn, H * W, Cout), lambda n: (n, 0, 0))
                 for (H, W, _) in shapes]
    out_shape = [jax.ShapeDtypeStruct((N, H * W, Cout), xs[0].dtype)
                 for (H, W, _) in shapes]
    scratch = [pltpu.VMEM((bn, H + 2, W + 2, Cin), jnp.float32)
               for (H, W, Cin) in shapes]
    return pl.pallas_call(
        kernel,
        out_shape=out_shape,
        grid=(N // bn,),
        in_specs=in_specs,
        out_specs=out_specs,
        scratch_shapes=scratch,
        compiler_params=pltpu.CompilerParams(
            dimension_semantics=("parallel",)),
    )(*xs, *ws, *bs)


# ----------------------------------------------------------------------------
# Kernel B: SeparableConv2d branches + ChannelwiseAttention + conv3, fused
# ----------------------------------------------------------------------------
def fused_branches_attn_conv3(feat, dw_w, dw_b, pw_w, pw_b, w1, w2, w3, b3,
                              *, bn=1, use_bf16=False):
    """feat : (N, H, W, C3) with C3 = 3*width.
    dw_w : (28, C3) depthwise taps with dw-BN scale folded (row 0 = 1x1 branch;
           rows 1+9*(b-1)..+8 = 3x3 branch b with dilation b).
    dw_b : (4, C3) depthwise BN biases.
    pw_w : (4, C3, C4) block-embedded pointwise weights (pw-BN scale folded):
           branch b only writes output lanes [b*width, (b+1)*width).
    pw_b : (4, C4) block-embedded pointwise BN biases.
    w1   : (C4, C4//16), w2 : (C4//16, C4)  attention FCs (no bias).
    w3   : (C4, Cout) conv3 weight with BN scale folded ; b3 : (1, Cout).
    Returns (N, H*W, Cout)."""
    N, H, W, C3 = feat.shape
    C4 = pw_w.shape[-1]
    Cout = w3.shape[-1]
    HW = H * W
    P = 3                                           # max padding (dilation 3)
    Hp, Wp = H + 2 * P, W + 2 * P
    mdt = jnp.bfloat16 if use_bf16 else jnp.float32

    def kernel(x_ref, dww_ref, dwb_ref, pww_ref, pwb_ref,
               w1_ref, w2_ref, w3_ref, b3_ref, o_ref, xpad_ref):
        x = x_ref[...].astype(jnp.float32)          # (bn, H, W, C3)
        _zero_halo(xpad_ref, P, H, W)
        xpad_ref[:, P:P + H, P:P + W, :] = x

        def dw_tap(t):
            return dww_ref[t, :].reshape(1, 1, 1, C3)

        def dw_bias(b):
            return dwb_ref[b, :].reshape(1, 1, 1, C3)

        def pw_bias(b):
            return pwb_ref[b, :].reshape(1, C4)

        # -- branch 0: 1x1 depthwise (= per-channel scale) + pointwise ------
        d0 = jnp.maximum(x * dw_tap(0) + dw_bias(0), 0.0)
        slab = jnp.dot(d0.reshape(bn * HW, C3).astype(mdt),
                       pww_ref[0].astype(mdt),
                       preferred_element_type=jnp.float32)
        slab = jnp.maximum(slab + pw_bias(0), 0.0)

        # -- branches 1..3: 3x3 depthwise (dilation 1/2/3) + pointwise ------
        # pw_w / pw_b are zero outside each branch's width-wide lane slice and
        # ReLU(0) == 0, so summing per-branch results == channel concat.
        # `slab` stays a local f32 value: output ref is written exactly once.
        for b in (1, 2, 3):
            dil = b
            base = 1 + 9 * (b - 1)
            acc = jnp.zeros((bn, H, W, C3), jnp.float32)
            t = 0
            for ky in range(3):
                for kx in range(3):
                    oy = P + (ky - 1) * dil
                    ox = P + (kx - 1) * dil
                    tap = xpad_ref[:, oy:oy + H, ox:ox + W, :]
                    acc = acc + tap * dw_tap(base + t)
                    t += 1
            d = jnp.maximum(acc + dw_bias(b), 0.0)
            ob = jnp.dot(d.reshape(bn * HW, C3).astype(mdt),
                         pww_ref[b].astype(mdt),
                         preferred_element_type=jnp.float32)
            slab = slab + jnp.maximum(ob + pw_bias(b), 0.0)

        # -- ChannelwiseAttention (per image; needs full HW in this block) --
        gates = []
        for im in range(bn):
            m = jnp.mean(slab[im * HW:(im + 1) * HW, :], axis=0, keepdims=True)
            h = jnp.maximum(jnp.dot(m, w1_ref[...],
                                    preferred_element_type=jnp.float32), 0.0)
            a = jnp.maximum(jnp.dot(h, w2_ref[...],
                                    preferred_element_type=jnp.float32), 0.0)
            gates.append(1.0 / (1.0 + jnp.exp(-a)))          # sigmoid (1, C4)
        if bn == 1:
            gated = slab * gates[0]                          # (HW, C4)*(1,C4)
        else:
            gate = jnp.concatenate(gates, axis=0)            # (bn, C4)
            gated = (slab.reshape(bn, HW, C4) * gate.reshape(bn, 1, C4)
                     ).reshape(bn * HW, C4)

        # -- conv3: 1x1 conv + folded BN + ReLU, single output write --------
        y = jnp.dot(gated.astype(mdt), w3_ref[...].astype(mdt),
                    preferred_element_type=jnp.float32)
        y = jnp.maximum(y + b3_ref[...], 0.0)
        o_ref[...] = y.reshape(bn, HW, Cout).astype(o_ref.dtype)

    return pl.pallas_call(
        kernel,
        out_shape=jax.ShapeDtypeStruct((N, HW, Cout), feat.dtype),
        grid=(N // bn,),
        in_specs=[
            pl.BlockSpec((bn, H, W, C3), lambda n: (n, 0, 0, 0)),
            pl.BlockSpec(dw_w.shape, lambda n: (0, 0)),
            pl.BlockSpec(dw_b.shape, lambda n: (0, 0)),
            pl.BlockSpec(pw_w.shape, lambda n: (0, 0, 0)),
            pl.BlockSpec(pw_b.shape, lambda n: (0, 0)),
            pl.BlockSpec(w1.shape, lambda n: (0, 0)),
            pl.BlockSpec(w2.shape, lambda n: (0, 0)),
            pl.BlockSpec(w3.shape, lambda n: (0, 0)),
            pl.BlockSpec(b3.shape, lambda n: (0, 0)),
        ],
        out_specs=pl.BlockSpec((bn, HW, Cout), lambda n: (n, 0, 0)),
        scratch_shapes=[pltpu.VMEM((bn, Hp, Wp, C3), jnp.float32)],
        compiler_params=pltpu.CompilerParams(
            dimension_semantics=("parallel",)),
    )(feat, dw_w, dw_b, pw_w, pw_b, w1, w2, w3, b3)


# ----------------------------------------------------------------------------
# JAX glue
# ----------------------------------------------------------------------------
def bilinear_resize(x, out_h, out_w):
    """Matches F.interpolate(mode='bilinear', align_corners=False), NHWC."""
    N, H, W_sp, C = x.shape

    def src_idx(out_size, in_size):
        scale = in_size / out_size
        src = (jnp.arange(out_size, dtype=jnp.float32) + 0.5) * scale - 0.5
        src = jnp.maximum(src, 0.0)
        i0 = jnp.floor(src).astype(jnp.int32)
        i0 = jnp.minimum(i0, in_size - 1)
        i1 = jnp.minimum(i0 + 1, in_size - 1)
        frac = src - i0.astype(jnp.float32)
        return i0, i1, frac

    y0, y1, fy = src_idx(out_h, H)
    x0, x1, fx = src_idx(out_w, W_sp)

    top, bot = x[:, y0], x[:, y1]                      # (N, out_h, W, C)
    fy = fy[None, :, None, None].astype(x.dtype)
    rows = top * (1.0 - fy) + bot * fy
    left, right = rows[:, :, x0], rows[:, :, x1]       # (N, out_h, out_w, C)
    fx = fx[None, None, :, None].astype(x.dtype)
    return left * (1.0 - fx) + right * fx


def make_bn(key, c, eps=1e-5):
    """Deterministic inference-mode BatchNorm folded to (scale, bias)."""
    k1, k2, k3, k4 = jax.random.split(key, 4)
    gamma = 1.0 + 0.1 * jax.random.normal(k1, (c,), jnp.float32)
    beta = 0.1 * jax.random.normal(k2, (c,), jnp.float32)
    mean = 0.1 * jax.random.normal(k3, (c,), jnp.float32)
    var = 1.0 + 0.1 * jax.random.uniform(k4, (c,), jnp.float32)
    scale = gamma / jnp.sqrt(var + eps)
    bias = beta - mean * scale
    return scale, bias


def init_params(key, in_channels, width):
    keys = iter(jax.random.split(key, 64))

    def w_init(shape):
        return 0.1 * jax.random.normal(next(keys), shape, jnp.float32)

    p = {}
    # conv0/1/2: 3x3 weight packed as (9*Cin, Cout) with BN scale folded in
    # (row index = (ky*3 + kx)*Cin + ci, matching the in-kernel im2col order).
    for i, cin in enumerate(in_channels):
        w = w_init((3, 3, cin, width))
        s, b = make_bn(next(keys), width)
        p[f"conv{i}_w"] = (w * s[None, None, None, :]).reshape(9 * cin, width)
        p[f"conv{i}_b"] = b.reshape(1, width)

    c3, c4 = 3 * width, 4 * width
    # SeparableConv2d branches: dw taps packed into (28, c3) with dw-BN scale
    # folded; pw weights block-embedded into (4, c3, c4) with pw-BN scale.
    dw_rows, dw_bias = [], []
    pw_w = jnp.zeros((4, c3, c4), jnp.float32)
    pw_b = jnp.zeros((4, c4), jnp.float32)
    for i, K in enumerate((1, 3, 3, 3)):
        wd = w_init((K, K, c3))
        sd, bd = make_bn(next(keys), c3)
        dw_rows.append((wd * sd).reshape(K * K, c3))
        dw_bias.append(bd)
        wp = w_init((c3, width))
        sp, bp = make_bn(next(keys), width)
        pw_w = pw_w.at[i, :, i * width:(i + 1) * width].set(wp * sp[None, :])
        pw_b = pw_b.at[i, i * width:(i + 1) * width].set(bp)
    p["dw_w"] = jnp.concatenate(dw_rows, axis=0)       # (1 + 3*9, c3) = (28, c3)
    p["dw_b"] = jnp.stack(dw_bias, axis=0)             # (4, c3)
    p["pw_w"] = pw_w                                   # (4, c3, c4)
    p["pw_b"] = pw_b                                   # (4, c4)

    hidden = c4 // 16
    p["attn_w1"] = w_init((c4, hidden))
    p["attn_w2"] = w_init((hidden, c4))

    w3 = w_init((c4, width))
    s3, b3 = make_bn(next(keys), width)
    p["conv3_w"] = w3 * s3[None, :]
    p["conv3_b"] = b3.reshape(1, width)
    return p


@functools.partial(jax.jit,
                   static_argnames=("width", "batch_block", "use_bf16"))
def cajpu_forward(params, x0, x1, x2, *, width, batch_block=1, use_bf16=False):
    xs = (x0, x1, x2)
    ws = tuple(params[f"conv{i}_w"] for i in range(3))
    bs = tuple(params[f"conv{i}_b"] for i in range(3))

    # conv0/1/2 (3x3 conv + BN + ReLU) — ONE Pallas kernel for all three.
    convs = fused_convs3x3_bn_relu(xs, ws, bs, bn=batch_block,
                                   use_bf16=use_bf16)
    feats = [c.reshape(x.shape[0], x.shape[1], x.shape[2], width)
             for c, x in zip(convs, xs)]

    N, H, W_sp = feats[0].shape[0], feats[0].shape[1], feats[0].shape[2]
    feats[1] = bilinear_resize(feats[1], H, W_sp)
    feats[2] = bilinear_resize(feats[2], H, W_sp)
    feat = jnp.concatenate(feats, axis=-1)             # (N, H, W, 3*width)

    # SeparableConv2d branches + ChannelwiseAttention + conv3 — ONE kernel.
    out = fused_branches_attn_conv3(
        feat, params["dw_w"], params["dw_b"], params["pw_w"], params["pw_b"],
        params["attn_w1"], params["attn_w2"], params["conv3_w"],
        params["conv3_b"], bn=batch_block, use_bf16=use_bf16)
    return out.reshape(N, H, W_sp, width)


if __name__ == "__main__":
    key = jax.random.PRNGKey(0)
    in_channels = (8, 8, 8)
    width = 32
    N = 2

    kp, k0, k1, k2 = jax.random.split(key, 4)
    params = init_params(kp, in_channels, width)

    # NHWC inputs (PyTorch reference would be NCHW: (2,8,16,16), (2,8,8,8), (2,8,4,4))
    x0 = jax.random.normal(k0, (N, 16, 16, in_channels[0]), jnp.float32)
    x1 = jax.random.normal(k1, (N, 8, 8, in_channels[1]), jnp.float32)
    x2 = jax.random.normal(k2, (N, 4, 4, in_channels[2]), jnp.float32)

    # batch_block=1 -> grid=(N,) "parallel" (feeds both v7x TensorCores).
    # On single-TC chips (v5e/v6e) batch_block=N merges the batch into one
    # grid step.  use_bf16=True enables the native-MXU bf16 path (opt-in).
    out = cajpu_forward(params, x0, x1, x2, width=width, batch_block=1,
                        use_bf16=False)
    jax.block_until_ready(out)
    assert out.shape == (N, 16, 16, width)
    assert bool(jnp.all(jnp.isfinite(out)))
    print("KERNEL_OK")
</pallas_src>

<mosaic_0001>
module attributes {stable_mosaic.version = 11 : i64} {
  func.func @kernel(%arg0: i32, %arg1: memref<1x16x16x8xf32, #tpu.memory_space<vmem>>, %arg2: memref<1x8x8x8xf32, #tpu.memory_space<vmem>>, %arg3: memref<1x4x4x8xf32, #tpu.memory_space<vmem>>, %arg4: memref<72x32xf32, #tpu.memory_space<vmem>>, %arg5: memref<72x32xf32, #tpu.memory_space<vmem>>, %arg6: memref<72x32xf32, #tpu.memory_space<vmem>>, %arg7: memref<1x32xf32, #tpu.memory_space<vmem>>, %arg8: memref<1x32xf32, #tpu.memory_space<vmem>>, %arg9: memref<1x32xf32, #tpu.memory_space<vmem>>, %arg10: memref<1x256x32xf32, #tpu.memory_space<vmem>>, %arg11: memref<1x64x32xf32, #tpu.memory_space<vmem>>, %arg12: memref<1x16x32xf32, #tpu.memory_space<vmem>>, %arg13: memref<1x18x18x8xf32, #tpu.memory_space<vmem>>, %arg14: memref<1x10x10x8xf32, #tpu.memory_space<vmem>>, %arg15: memref<1x6x6x8xf32, #tpu.memory_space<vmem>>) attributes {dimension_semantics = [#tpu.dimension_semantics<parallel>], iteration_bounds = array<i64: 2>, scalar_prefetch = 0 : i64, scratch_operands = 3 : i64, tpu.core_type = #tpu.core_type<tc>, window_params = [{transform_indices = @transform_0, window_bounds = array<i64: 1, 16, 16, 8>}, {transform_indices = @transform_1, window_bounds = array<i64: 1, 8, 8, 8>}, {transform_indices = @transform_2, window_bounds = array<i64: 1, 4, 4, 8>}, {pipeline_mode = #tpu.pipeline_mode<synchronous>, transform_indices = @transform_3, window_bounds = array<i64: 72, 32>}, {pipeline_mode = #tpu.pipeline_mode<synchronous>, transform_indices = @transform_4, window_bounds = array<i64: 72, 32>}, {pipeline_mode = #tpu.pipeline_mode<synchronous>, transform_indices = @transform_5, window_bounds = array<i64: 72, 32>}, {pipeline_mode = #tpu.pipeline_mode<synchronous>, transform_indices = @transform_6, window_bounds = array<i64: 1, 32>}, {pipeline_mode = #tpu.pipeline_mode<synchronous>, transform_indices = @transform_7, window_bounds = array<i64: 1, 32>}, {pipeline_mode = #tpu.pipeline_mode<synchronous>, transform_indices = @transform_8, window_bounds = array<i64: 1, 32>}, {transform_indices = @transform_9, window_bounds = array<i64: 1, 256, 32>}, {transform_indices = @transform_10, window_bounds = array<i64: 1, 64, 32>}, {transform_indices = @transform_11, window_bounds = array<i64: 1, 16, 32>}]} {
    %cst = arith.constant 0.000000e+00 : f32
    %0 = vector.broadcast %cst : f32 to vector<1x1x18x8xf32>
    %c0 = arith.constant 0 : index
    %c0_0 = arith.constant 0 : index
    %c0_1 = arith.constant 0 : index
    %c0_2 = arith.constant 0 : index
    %1 = vector.load %arg13[%c0, %c0_0, %c0_1, %c0_2] : memref<1x18x18x8xf32, #tpu.memory_space<vmem>>, vector<1x1x18x8xf32>
    tpu.vector_store %arg13[%c0, %c0_0, %c0_1, %c0_2], %0 {strides = array<i32>} : memref<1x18x18x8xf32, #tpu.memory_space<vmem>>, vector<1x1x18x8xf32>,
    %cst_3 = arith.constant 0.000000e+00 : f32
    %2 = vector.broadcast %cst_3 : f32 to vector<1x1x18x8xf32>
    %c0_4 = arith.constant 0 : index
    %c17 = arith.constant 17 : index
    %c0_5 = arith.constant 0 : index
    %c0_6 = arith.constant 0 : index
    %3 = vector.load %arg13[%c0_4, %c17, %c0_5, %c0_6] : memref<1x18x18x8xf32, #tpu.memory_space<vmem>>, vector<1x1x18x8xf32>
    tpu.vector_store %arg13[%c0_4, %c17, %c0_5, %c0_6], %2 {strides = array<i32>} : memref<1x18x18x8xf32, #tpu.memory_space<vmem>>, vector<1x1x18x8xf32>,
    %cst_7 = arith.constant 0.000000e+00 : f32
    %4 = vector.broadcast %cst_7 : f32 to vector<1x16x1x8xf32>
    %c0_8 = arith.constant 0 : index
    %c1 = arith.constant 1 : index
    %c0_9 = arith.constant 0 : index
    %c0_10 = arith.constant 0 : index
    %5 = vector.load %arg13[%c0_8, %c1, %c0_9, %c0_10] : memref<1x18x18x8xf32, #tpu.memory_space<vmem>>, vector<1x16x1x8xf32>
    tpu.vector_store %arg13[%c0_8, %c1, %c0_9, %c0_10], %4 {strides = array<i32>} : memref<1x18x18x8xf32, #tpu.memory_space<vmem>>, vector<1x16x1x8xf32>,
    %cst_11 = arith.constant 0.000000e+00 : f32
    %6 = vector.broadcast %cst_11 : f32 to vector<1x16x1x8xf32>
    %c0_12 = arith.constant 0 : index
    %c1_13 = arith.constant 1 : index
    %c17_14 = arith.constant 17 : index
    %c0_15 = arith.constant 0 : index
    %7 = vector.load %arg13[%c0_12, %c1_13, %c17_14, %c0_15] : memref<1x18x18x8xf32, #tpu.memory_space<vmem>>, vector<1x16x1x8xf32>
    tpu.vector_store %arg13[%c0_12, %c1_13, %c17_14, %c0_15], %6 {strides = array<i32>} : memref<1x18x18x8xf32, #tpu.memory_space<vmem>>, vector<1x16x1x8xf32>,
    %c0_16 = arith.constant 0 : index
    %c0_17 = arith.constant 0 : index
    %c0_18 = arith.constant 0 : index
    %c0_19 = arith.constant 0 : index
    %8 = vector.load %arg1[%c0_16, %c0_17, %c0_18, %c0_19] : memref<1x16x16x8xf32, #tpu.memory_space<vmem>>, vector<1x16x16x8xf32>
    %c0_20 = arith.constant 0 : index
    %c1_21 = arith.constant 1 : index
    %c1_22 = arith.constant 1 : index
    %c0_23 = arith.constant 0 : index
    %9 = vector.load %arg13[%c0_20, %c1_21, %c1_22, %c0_23] : memref<1x18x18x8xf32, #tpu.memory_space<vmem>>, vector<1x16x16x8xf32>
    tpu.vector_store %arg13[%c0_20, %c1_21, %c1_22, %c0_23], %8 {strides = array<i32>} : memref<1x18x18x8xf32, #tpu.memory_space<vmem>>, vector<1x16x16x8xf32>,
    %c0_24 = arith.constant 0 : index
    %c0_25 = arith.constant 0 : index
    %c0_26 = arith.constant 0 : index
    %c0_27 = arith.constant 0 : index
    %10 = vector.load %arg13[%c0_24, %c0_25, %c0_26, %c0_27] : memref<1x18x18x8xf32, #tpu.memory_space<vmem>>, vector<1x16x16x8xf32>
    %11 = vector.shape_cast %10 : vector<1x16x16x8xf32> to vector<256x8xf32>
    %c0_28 = arith.constant 0 : index
    %c0_29 = arith.constant 0 : index
    %c1_30 = arith.constant 1 : index
    %c0_31 = arith.constant 0 : index
    %12 = vector.load %arg13[%c0_28, %c0_29, %c1_30, %c0_31] : memref<1x18x18x8xf32, #tpu.memory_space<vmem>>, vector<1x16x16x8xf32>
    %13 = vector.shape_cast %12 : vector<1x16x16x8xf32> to vector<256x8xf32>
    %c0_32 = arith.constant 0 : index
    %c0_33 = arith.constant 0 : index
    %c2 = arith.constant 2 : index
    %c0_34 = arith.constant 0 : index
    %14 = vector.load %arg13[%c0_32, %c0_33, %c2, %c0_34] : memref<1x18x18x8xf32, #tpu.memory_space<vmem>>, vector<1x16x16x8xf32>
    %15 = vector.shape_cast %14 : vector<1x16x16x8xf32> to vector<256x8xf32>
    %c0_35 = arith.constant 0 : index
    %c1_36 = arith.constant 1 : index
    %c0_37 = arith.constant 0 : index
    %c0_38 = arith.constant 0 : index
    %16 = vector.load %arg13[%c0_35, %c1_36, %c0_37, %c0_38] : memref<1x18x18x8xf32, #tpu.memory_space<vmem>>, vector<1x16x16x8xf32>
    %17 = vector.shape_cast %16 : vector<1x16x16x8xf32> to vector<256x8xf32>
    %c0_39 = arith.constant 0 : index
    %c1_40 = arith.constant 1 : index
    %c1_41 = arith.constant 1 : index
    %c0_42 = arith.constant 0 : index
    %18 = vector.load %arg13[%c0_39, %c1_40, %c1_41, %c0_42] : memref<1x18x18x8xf32, #tpu.memory_space<vmem>>, vector<1x16x16x8xf32>
    %19 = vector.shape_cast %18 : vector<1x16x16x8xf32> to vector<256x8xf32>
    %c0_43 = arith.constant 0 : index
    %c1_44 = arith.constant 1 : index
    %c2_45 = arith.constant 2 : index
    %c0_46 = arith.constant 0 : index
    %20 = vector.load %arg13[%c0_43, %c1_44, %c2_45, %c0_46] : memref<1x18x18x8xf32, #tpu.memory_space<vmem>>, vector<1x16x16x8xf32>
    %21 = vector.shape_cast %20 : vector<1x16x16x8xf32> to vector<256x8xf32>
    %c0_47 = arith.constant 0 : index
    %c2_48 = arith.constant 2 : index
    %c0_49 = arith.constant 0 : index
    %c0_50 = arith.constant 0 : index
    %22 = vector.load %arg13[%c0_47, %c2_48, %c0_49, %c0_50] : memref<1x18x18x8xf32, #tpu.memory_space<vmem>>, vector<1x16x16x8xf32>
    %23 = vector.shape_cast %22 : vector<1x16x16x8xf32> to vector<256x8xf32>
    %c0_51 = arith.constant 0 : index
    %c2_52 = arith.constant 2 : index
    %c1_53 = arith.constant 1 : index
    %c0_54 = arith.constant 0 : index
    %24 = vector.load %arg13[%c0_51, %c2_52, %c1_53, %c0_54] : memref<1x18x18x8xf32, #tpu.memory_space<vmem>>, vector<1x16x16x8xf32>
    %25 = vector.shape_cast %24 : vector<1x16x16x8xf32> to vector<256x8xf32>
    %c0_55 = arith.constant 0 : index
    %c2_56 = arith.constant 2 : index
    %c2_57 = arith.constant 2 : index
    %c0_58 = arith.constant 0 : index
    %26 = vector.load %arg13[%c0_55, %c2_56, %c2_57, %c0_58] : memref<1x18x18x8xf32, #tpu.memory_space<vmem>>, vector<1x16x16x8xf32>
    %27 = vector.shape_cast %26 : vector<1x16x16x8xf32> to vector<256x8xf32>
    %28 = tpu.concatenate %11, %13, %15, %17, %19, %21, %23, %25, %27 in 1 : vector<256x8xf32>, vector<256x8xf32>, vector<256x8xf32>, vector<256x8xf32>, vector<256x8xf32>, vector<256x8xf32>, vector<256x8xf32>, vector<256x8xf32>, vector<256x8xf32> -> vector<256x72xf32>
    %c0_59 = arith.constant 0 : index
    %c0_60 = arith.constant 0 : index
    %29 = vector.load %arg4[%c0_59, %c0_60] : memref<72x32xf32, #tpu.memory_space<vmem>>, vector<72x32xf32>
    %cst_61 = arith.constant dense<0.000000e+00> : vector<256x32xf32>
    %30 = tpu.matmul %28, %29, %cst_61 {dimension_numbers = #tpu.dot_dimension_numbers<[1], [0], [0], [1], [0, 0, 1, 1], [], []>} : vector<256x72xf32>, vector<72x32xf32>, vector<256x32xf32> -> vector<256x32xf32>
    %c0_62 = arith.constant 0 : index
    %c0_63 = arith.constant 0 : index
    %31 = vector.load %arg7[%c0_62, %c0_63] : memref<1x32xf32, #tpu.memory_space<vmem>>, vector<1x32xf32>
    %32 = vector.broadcast %31 : vector<1x32xf32> to vector<256x32xf32>
    %33 = arith.addf %30, %32 : vector<256x32xf32>
    %cst_64 = arith.constant 0.000000e+00 : f32
    %34 = vector.broadcast %cst_64 : f32 to vector<256x32xf32>
    %35 = arith.maximumf %33, %34 : vector<256x32xf32>
    %36 = vector.shape_cast %35 : vector<256x32xf32> to vector<1x256x32xf32>
    %c0_65 = arith.constant 0 : index
    %c0_66 = arith.constant 0 : index
    %c0_67 = arith.constant 0 : index
    %37 = vector.load %arg10[%c0_65, %c0_66, %c0_67] : memref<1x256x32xf32, #tpu.memory_space<vmem>>, vector<1x256x32xf32>
    tpu.vector_store %arg10[%c0_65, %c0_66, %c0_67], %36 {strides = array<i32>} : memref<1x256x32xf32, #tpu.memory_space<vmem>>, vector<1x256x32xf32>,
    %cst_68 = arith.constant 0.000000e+00 : f32
    %38 = vector.broadcast %cst_68 : f32 to vector<1x1x10x8xf32>
    %c0_69 = arith.constant 0 : index
    %c0_70 = arith.constant 0 : index
    %c0_71 = arith.constant 0 : index
    %c0_72 = arith.constant 0 : index
    %39 = vector.load %arg14[%c0_69, %c0_70, %c0_71, %c0_72] : memref<1x10x10x8xf32, #tpu.memory_space<vmem>>, vector<1x1x10x8xf32>
    tpu.vector_store %arg14[%c0_69, %c0_70, %c0_71, %c0_72], %38 {strides = array<i32>} : memref<1x10x10x8xf32, #tpu.memory_space<vmem>>, vector<1x1x10x8xf32>,
    %cst_73 = arith.constant 0.000000e+00 : f32
    %40 = vector.broadcast %cst_73 : f32 to vector<1x1x10x8xf32>
    %c0_74 = arith.constant 0 : index
    %c9 = arith.constant 9 : index
    %c0_75 = arith.constant 0 : index
    %c0_76 = arith.constant 0 : index
    %41 = vector.load %arg14[%c0_74, %c9, %c0_75, %c0_76] : memref<1x10x10x8xf32, #tpu.memory_space<vmem>>, vector<1x1x10x8xf32>
    tpu.vector_store %arg14[%c0_74, %c9, %c0_75, %c0_76], %40 {strides = array<i32>} : memref<1x10x10x8xf32, #tpu.memory_space<vmem>>, vector<1x1x10x8xf32>,
    %cst_77 = arith.constant 0.000000e+00 : f32
    %42 = vector.broadcast %cst_77 : f32 to vector<1x8x1x8xf32>
    %c0_78 = arith.constant 0 : index
    %c1_79 = arith.constant 1 : index
    %c0_80 = arith.constant 0 : index
    %c0_81 = arith.constant 0 : index
    %43 = vector.load %arg14[%c0_78, %c1_79, %c0_80, %c0_81] : memref<1x10x10x8xf32, #tpu.memory_space<vmem>>, vector<1x8x1x8xf32>
    tpu.vector_store %arg14[%c0_78, %c1_79, %c0_80, %c0_81], %42 {strides = array<i32>} : memref<1x10x10x8xf32, #tpu.memory_space<vmem>>, vector<1x8x1x8xf32>,
    %cst_82 = arith.constant 0.000000e+00 : f32
    %44 = vector.broadcast %cst_82 : f32 to vector<1x8x1x8xf32>
    %c0_83 = arith.constant 0 : index
    %c1_84 = arith.constant 1 : index
    %c9_85 = arith.constant 9 : index
    %c0_86 = arith.constant 0 : index
    %45 = vector.load %arg14[%c0_83, %c1_84, %c9_85, %c0_86] : memref<1x10x10x8xf32, #tpu.memory_space<vmem>>, vector<1x8x1x8xf32>
    tpu.vector_store %arg14[%c0_83, %c1_84, %c9_85, %c0_86], %44 {strides = array<i32>} : memref<1x10x10x8xf32, #tpu.memory_space<vmem>>, vector<1x8x1x8xf32>,
    %c0_87 = arith.constant 0 : index
    %c0_88 = arith.constant 0 : index
    %c0_89 = arith.constant 0 : index
    %c0_90 = arith.constant 0 : index
    %46 = vector.load %arg2[%c0_87, %c0_88, %c0_89, %c0_90] : memref<1x8x8x8xf32, #tpu.memory_space<vmem>>, vector<1x8x8x8xf32>
    %c0_91 = arith.constant 0 : index
    %c1_92 = arith.constant 1 : index
    %c1_93 = arith.constant 1 : index
    %c0_94 = arith.constant 0 : index
    %47 = vector.load %arg14[%c0_91, %c1_92, %c1_93, %c0_94] : memref<1x10x10x8xf32, #tpu.memory_space<vmem>>, vector<1x8x8x8xf32>
    tpu.vector_store %arg14[%c0_91, %c1_92, %c1_93, %c0_94], %46 {strides = array<i32>} : memref<1x10x10x8xf32, #tpu.memory_space<vmem>>, vector<1x8x8x8xf32>,
    %c0_95 = arith.constant 0 : index
    %c0_96 = arith.constant 0 : index
    %c0_97 = arith.constant 0 : index
    %c0_98 = arith.constant 0 : index
    %48 = vector.load %arg14[%c0_95, %c0_96, %c0_97, %c0_98] : memref<1x10x10x8xf32, #tpu.memory_space<vmem>>, vector<1x8x8x8xf32>
    %49 = vector.shape_cast %48 : vector<1x8x8x8xf32> to vector<64x8xf32>
    %c0_99 = arith.constant 0 : index
    %c0_100 = arith.constant 0 : index
    %c1_101 = arith.constant 1 : index
    %c0_102 = arith.constant 0 : index
    %50 = vector.load %arg14[%c0_99, %c0_100, %c1_101, %c0_102] : memref<1x10x10x8xf32, #tpu.memory_space<vmem>>, vector<1x8x8x8xf32>
    %51 = vector.shape_cast %50 : vector<1x8x8x8xf32> to vector<64x8xf32>
    %c0_103 = arith.constant 0 : index
    %c0_104 = arith.constant 0 : index
    %c2_105 = arith.constant 2 : index
    %c0_106 = arith.constant 0 : index
    %52 = vector.load %arg14[%c0_103, %c0_104, %c2_105, %c0_106] : memref<1x10x10x8xf32, #tpu.memory_space<vmem>>, vector<1x8x8x8xf32>
    %53 = vector.shape_cast %52 : vector<1x8x8x8xf32> to vector<64x8xf32>
    %c0_107 = arith.constant 0 : index
    %c1_108 = arith.constant 1 : index
    %c0_109 = arith.constant 0 : index
    %c0_110 = arith.constant 0 : index
    %54 = vector.load %arg14[%c0_107, %c1_108, %c0_109, %c0_110] : memref<1x10x10x8xf32, #tpu.memory_space<vmem>>, vector<1x8x8x8xf32>
    %55 = vector.shape_cast %54 : vector<1x8x8x8xf32> to vector<64x8xf32>
    %c0_111 = arith.constant 0 : index
    %c1_112 = arith.constant 1 : index
    %c1_113 = arith.constant 1 : index
    %c0_114 = arith.constant 0 : index
    %56 = vector.load %arg14[%c0_111, %c1_112, %c1_113, %c0_114] : memref<1x10x10x8xf32, #tpu.memory_space<vmem>>, vector<1x8x8x8xf32>
    %57 = vector.shape_cast %56 : vector<1x8x8x8xf32> to vector<64x8xf32>
    %c0_115 = arith.constant 0 : index
    %c1_116 = arith.constant 1 : index
    %c2_117 = arith.constant 2 : index
    %c0_118 = arith.constant 0 : index
    %58 = vector.load %arg14[%c0_115, %c1_116, %c2_117, %c0_118] : memref<1x10x10x8xf32, #tpu.memory_space<vmem>>, vector<1x8x8x8xf32>
    %59 = vector.shape_cast %58 : vector<1x8x8x8xf32> to vector<64x8xf32>
    %c0_119 = arith.constant 0 : index
    %c2_120 = arith.constant 2 : index
    %c0_121 = arith.constant 0 : index
    %c0_122 = arith.constant 0 : index
    %60 = vector.load %arg14[%c0_119, %c2_120, %c0_121, %c0_122] : memref<1x10x10x8xf32, #tpu.memory_space<vmem>>, vector<1x8x8x8xf32>
    %61 = vector.shape_cast %60 : vector<1x8x8x8xf32> to vector<64x8xf32>
    %c0_123 = arith.constant 0 : index
    %c2_124 = arith.constant 2 : index
    %c1_125 = arith.constant 1 : index
    %c0_126 = arith.constant 0 : index
    %62 = vector.load %arg14[%c0_123, %c2_124, %c1_125, %c0_126] : memref<1x10x10x8xf32, #tpu.memory_space<vmem>>, vector<1x8x8x8xf32>
    %63 = vector.shape_cast %62 : vector<1x8x8x8xf32> to vector<64x8xf32>
    %c0_127 = arith.constant 0 : index
    %c2_128 = arith.constant 2 : index
    %c2_129 = arith.constant 2 : index
    %c0_130 = arith.constant 0 : index
    %64 = vector.load %arg14[%c0_127, %c2_128, %c2_129, %c0_130] : memref<1x10x10x8xf32, #tpu.memory_space<vmem>>, vector<1x8x8x8xf32>
    %65 = vector.shape_cast %64 : vector<1x8x8x8xf32> to vector<64x8xf32>
    %66 = tpu.concatenate %49, %51, %53, %55, %57, %59, %61, %63, %65 in 1 : vector<64x8xf32>, vector<64x8xf32>, vector<64x8xf32>, vector<64x8xf32>, vector<64x8xf32>, vector<64x8xf32>, vector<64x8xf32>, vector<64x8xf32>, vector<64x8xf32> -> vector<64x72xf32>
    %c0_131 = arith.constant 0 : index
    %c0_132 = arith.constant 0 : index
    %67 = vector.load %arg5[%c0_131, %c0_132] : memref<72x32xf32, #tpu.memory_space<vmem>>, vector<72x32xf32>
    %cst_133 = arith.constant dense<0.000000e+00> : vector<64x32xf32>
    %68 = tpu.matmul %66, %67, %cst_133 {dimension_numbers = #tpu.dot_dimension_numbers<[1], [0], [0], [1], [0, 0, 1, 1], [], []>} : vector<64x72xf32>, vector<72x32xf32>, vector<64x32xf32> -> vector<64x32xf32>
    %c0_134 = arith.constant 0 : index
    %c0_135 = arith.constant 0 : index
    %69 = vector.load %arg8[%c0_134, %c0_135] : memref<1x32xf32, #tpu.memory_space<vmem>>, vector<1x32xf32>
    %70 = vector.broadcast %69 : vector<1x32xf32> to vector<64x32xf32>
    %71 = arith.addf %68, %70 : vector<64x32xf32>
    %cst_136 = arith.constant 0.000000e+00 : f32
    %72 = vector.broadcast %cst_136 : f32 to vector<64x32xf32>
    %73 = arith.maximumf %71, %72 : vector<64x32xf32>
    %74 = vector.shape_cast %73 : vector<64x32xf32> to vector<1x64x32xf32>
    %c0_137 = arith.constant 0 : index
    %c0_138 = arith.constant 0 : index
    %c0_139 = arith.constant 0 : index
    %75 = vector.load %arg11[%c0_137, %c0_138, %c0_139] : memref<1x64x32xf32, #tpu.memory_space<vmem>>, vector<1x64x32xf32>
    tpu.vector_store %arg11[%c0_137, %c0_138, %c0_139], %74 {strides = array<i32>} : memref<1x64x32xf32, #tpu.memory_space<vmem>>, vector<1x64x32xf32>,
    %cst_140 = arith.constant 0.000000e+00 : f32
    %76 = vector.broadcast %cst_140 : f32 to vector<1x1x6x8xf32>
    %c0_141 = arith.constant 0 : index
    %c0_142 = arith.constant 0 : index
    %c0_143 = arith.constant 0 : index
    %c0_144 = arith.constant 0 : index
    %77 = vector.load %arg15[%c0_141, %c0_142, %c0_143, %c0_144] : memref<1x6x6x8xf32, #tpu.memory_space<vmem>>, vector<1x1x6x8xf32>
    tpu.vector_store %arg15[%c0_141, %c0_142, %c0_143, %c0_144], %76 {strides = array<i32>} : memref<1x6x6x8xf32, #tpu.memory_space<vmem>>, vector<1x1x6x8xf32>,
    %cst_145 = arith.constant 0.000000e+00 : f32
    %78 = vector.broadcast %cst_145 : f32 to vector<1x1x6x8xf32>
    %c0_146 = arith.constant 0 : index
    %c5 = arith.constant 5 : index
    %c0_147 = arith.constant 0 : index
    %c0_148 = arith.constant 0 : index
    %79 = vector.load %arg15[%c0_146, %c5, %c0_147, %c0_148] : memref<1x6x6x8xf32, #tpu.memory_space<vmem>>, vector<1x1x6x8xf32>
    tpu.vector_store %arg15[%c0_146, %c5, %c0_147, %c0_148], %78 {strides = array<i32>} : memref<1x6x6x8xf32, #tpu.memory_space<vmem>>, vector<1x1x6x8xf32>,
    %cst_149 = arith.constant 0.000000e+00 : f32
    %80 = vector.broadcast %cst_149 : f32 to vector<1x4x1x8xf32>
    %c0_150 = arith.constant 0 : index
    %c1_151 = arith.constant 1 : index
    %c0_152 = arith.constant 0 : index
    %c0_153 = arith.constant 0 : index
    %81 = vector.load %arg15[%c0_150, %c1_151, %c0_152, %c0_153] : memref<1x6x6x8xf32, #tpu.memory_space<vmem>>, vector<1x4x1x8xf32>
    tpu.vector_store %arg15[%c0_150, %c1_151, %c0_152, %c0_153], %80 {strides = array<i32>} : memref<1x6x6x8xf32, #tpu.memory_space<vmem>>, vector<1x4x1x8xf32>,
    %cst_154 = arith.constant 0.000000e+00 : f32
    %82 = vector.broadcast %cst_154 : f32 to vector<1x4x1x8xf32>
    %c0_155 = arith.constant 0 : index
    %c1_156 = arith.constant 1 : index
    %c5_157 = arith.constant 5 : index
    %c0_158 = arith.constant 0 : index
    %83 = vector.load %arg15[%c0_155, %c1_156, %c5_157, %c0_158] : memref<1x6x6x8xf32, #tpu.memory_space<vmem>>, vector<1x4x1x8xf32>
    tpu.vector_store %arg15[%c0_155, %c1_156, %c5_157, %c0_158], %82 {strides = array<i32>} : memref<1x6x6x8xf32, #tpu.memory_space<vmem>>, vector<1x4x1x8xf32>,
    %c0_159 = arith.constant 0 : index
    %c0_160 = arith.constant 0 : index
    %c0_161 = arith.constant 0 : index
    %c0_162 = arith.constant 0 : index
    %84 = vector.load %arg3[%c0_159, %c0_160, %c0_161, %c0_162] : memref<1x4x4x8xf32, #tpu.memory_space<vmem>>, vector<1x4x4x8xf32>
    %c0_163 = arith.constant 0 : index
    %c1_164 = arith.constant 1 : index
    %c1_165 = arith.constant 1 : index
    %c0_166 = arith.constant 0 : index
    %85 = vector.load %arg15[%c0_163, %c1_164, %c1_165, %c0_166] : memref<1x6x6x8xf32, #tpu.memory_space<vmem>>, vector<1x4x4x8xf32>
    tpu.vector_store %arg15[%c0_163, %c1_164, %c1_165, %c0_166], %84 {strides = array<i32>} : memref<1x6x6x8xf32, #tpu.memory_space<vmem>>, vector<1x4x4x8xf32>,
    %c0_167 = arith.constant 0 : index
    %c0_168 = arith.constant 0 : index
    %c0_169 = arith.constant 0 : index
    %c0_170 = arith.constant 0 : index
    %86 = vector.load %arg15[%c0_167, %c0_168, %c0_169, %c0_170] : memref<1x6x6x8xf32, #tpu.memory_space<vmem>>, vector<1x4x4x8xf32>
    %87 = vector.shape_cast %86 : vector<1x4x4x8xf32> to vector<16x8xf32>
    %c0_171 = arith.constant 0 : index
    %c0_172 = arith.constant 0 : index
    %c1_173 = arith.constant 1 : index
    %c0_174 = arith.constant 0 : index
    %88 = vector.load %arg15[%c0_171, %c0_172, %c1_173, %c0_174] : memref<1x6x6x8xf32, #tpu.memory_space<vmem>>, vector<1x4x4x8xf32>
    %89 = vector.shape_cast %88 : vector<1x4x4x8xf32> to vector<16x8xf32>
    %c0_175 = arith.constant 0 : index
    %c0_176 = arith.constant 0 : index
    %c2_177 = arith.constant 2 : index
    %c0_178 = arith.constant 0 : index
    %90 = vector.load %arg15[%c0_175, %c0_176, %c2_177, %c0_178] : memref<1x6x6x8xf32, #tpu.memory_space<vmem>>, vector<1x4x4x8xf32>
    %91 = vector.shape_cast %90 : vector<1x4x4x8xf32> to vector<16x8xf32>
    %c0_179 = arith.constant 0 : index
    %c1_180 = arith.constant 1 : index
    %c0_181 = arith.constant 0 : index
    %c0_182 = arith.constant 0 : index
    %92 = vector.load %arg15[%c0_179, %c1_180, %c0_181, %c0_182] : memref<1x6x6x8xf32, #tpu.memory_space<vmem>>, vector<1x4x4x8xf32>
    %93 = vector.shape_cast %92 : vector<1x4x4x8xf32> to vector<16x8xf32>
    %c0_183 = arith.constant 0 : index
    %c1_184 = arith.constant 1 : index
    %c1_185 = arith.constant 1 : index
    %c0_186 = arith.constant 0 : index
    %94 = vector.load %arg15[%c0_183, %c1_184, %c1_185, %c0_186] : memref<1x6x6x8xf32, #tpu.memory_space<vmem>>, vector<1x4x4x8xf32>
    %95 = vector.shape_cast %94 : vector<1x4x4x8xf32> to vector<16x8xf32>
    %c0_187 = arith.constant 0 : index
    %c1_188 = arith.constant 1 : index
    %c2_189 = arith.constant 2 : index
    %c0_190 = arith.constant 0 : index
    %96 = vector.load %arg15[%c0_187, %c1_188, %c2_189, %c0_190] : memref<1x6x6x8xf32, #tpu.memory_space<vmem>>, vector<1x4x4x8xf32>
    %97 = vector.shape_cast %96 : vector<1x4x4x8xf32> to vector<16x8xf32>
    %c0_191 = arith.constant 0 : index
    %c2_192 = arith.constant 2 : index
    %c0_193 = arith.constant 0 : index
    %c0_194 = arith.constant 0 : index
    %98 = vector.load %arg15[%c0_191, %c2_192, %c0_193, %c0_194] : memref<1x6x6x8xf32, #tpu.memory_space<vmem>>, vector<1x4x4x8xf32>
    %99 = vector.shape_cast %98 : vector<1x4x4x8xf32> to vector<16x8xf32>
    %c0_195 = arith.constant 0 : index
    %c2_196 = arith.constant 2 : index
    %c1_197 = arith.constant 1 : index
    %c0_198 = arith.constant 0 : index
    %100 = vector.load %arg15[%c0_195, %c2_196, %c1_197, %c0_198] : memref<1x6x6x8xf32, #tpu.memory_space<vmem>>, vector<1x4x4x8xf32>
    %101 = vector.shape_cast %100 : vector<1x4x4x8xf32> to vector<16x8xf32>
    %c0_199 = arith.constant 0 : index
    %c2_200 = arith.constant 2 : index
    %c2_201 = arith.constant 2 : index
    %c0_202 = arith.constant 0 : index
    %102 = vector.load %arg15[%c0_199, %c2_200, %c2_201, %c0_202] : memref<1x6x6x8xf32, #tpu.memory_space<vmem>>, vector<1x4x4x8xf32>
    %103 = vector.shape_cast %102 : vector<1x4x4x8xf32> to vector<16x8xf32>
    %104 = tpu.concatenate %87, %89, %91, %93, %95, %97, %99, %101, %103 in 1 : vector<16x8xf32>, vector<16x8xf32>, vector<16x8xf32>, vector<16x8xf32>, vector<16x8xf32>, vector<16x8xf32>, vector<16x8xf32>, vector<16x8xf32>, vector<16x8xf32> -> vector<16x72xf32>
    %c0_203 = arith.constant 0 : index
    %c0_204 = arith.constant 0 : index
    %105 = vector.load %arg6[%c0_203, %c0_204] : memref<72x32xf32, #tpu.memory_space<vmem>>, vector<72x32xf32>
    %cst_205 = arith.constant dense<0.000000e+00> : vector<16x32xf32>
    %106 = tpu.matmul %104, %105, %cst_205 {dimension_numbers = #tpu.dot_dimension_numbers<[1], [0], [0], [1], [0, 0, 1, 1], [], []>} : vector<16x72xf32>, vector<72x32xf32>, vector<16x32xf32> -> vector<16x32xf32>
    %c0_206 = arith.constant 0 : index
    %c0_207 = arith.constant 0 : index
    %107 = vector.load %arg9[%c0_206, %c0_207] : memref<1x32xf32, #tpu.memory_space<vmem>>, vector<1x32xf32>
    %108 = vector.broadcast %107 : vector<1x32xf32> to vector<16x32xf32>
    %109 = arith.addf %106, %108 : vector<16x32xf32>
    %cst_208 = arith.constant 0.000000e+00 : f32
    %110 = vector.broadcast %cst_208 : f32 to vector<16x32xf32>
    %111 = arith.maximumf %109, %110 : vector<16x32xf32>
    %112 = vector.shape_cast %111 : vector<16x32xf32> to vector<1x16x32xf32>
    %c0_209 = arith.constant 0 : index
    %c0_210 = arith.constant 0 : index
    %c0_211 = arith.constant 0 : index
    %113 = vector.load %arg12[%c0_209, %c0_210, %c0_211] : memref<1x16x32xf32, #tpu.memory_space<vmem>>, vector<1x16x32xf32>
    tpu.vector_store %arg12[%c0_209, %c0_210, %c0_211], %112 {strides = array<i32>} : memref<1x16x32xf32, #tpu.memory_space<vmem>>, vector<1x16x32xf32>,
    return
  }
  func.func @transform_0(%arg0: i32) -> (i32, i32, i32, i32) {
    %c0_i32 = arith.constant 0 : i32
    %c0_i32_0 = arith.constant 0 : i32
    %c0_i32_1 = arith.constant 0 : i32
    %c0_i32_2 = arith.constant 0 : i32
    return %arg0, %c0_i32, %c0_i32_0, %c0_i32_1 : i32, i32, i32, i32
  }
  func.func @transform_1(%arg0: i32) -> (i32, i32, i32, i32) {
    %c0_i32 = arith.constant 0 : i32
    %c0_i32_0 = arith.constant 0 : i32
    %c0_i32_1 = arith.constant 0 : i32
    %c0_i32_2 = arith.constant 0 : i32
    return %arg0, %c0_i32, %c0_i32_0, %c0_i32_1 : i32, i32, i32, i32
  }
  func.func @transform_2(%arg0: i32) -> (i32, i32, i32, i32) {
    %c0_i32 = arith.constant 0 : i32
    %c0_i32_0 = arith.constant 0 : i32
    %c0_i32_1 = arith.constant 0 : i32
    %c0_i32_2 = arith.constant 0 : i32
    return %arg0, %c0_i32, %c0_i32_0, %c0_i32_1 : i32, i32, i32, i32
  }
  func.func @transform_3(%arg0: i32) -> (i32, i32) {
    %c0_i32 = arith.constant 0 : i32
    %c0_i32_0 = arith.constant 0 : i32
    %c0_i32_1 = arith.constant 0 : i32
    return %c0_i32, %c0_i32_0 : i32, i32
  }
  func.func @transform_4(%arg0: i32) -> (i32, i32) {
    %c0_i32 = arith.constant 0 : i32
    %c0_i32_0 = arith.constant 0 : i32
    %c0_i32_1 = arith.constant 0 : i32
    return %c0_i32, %c0_i32_0 : i32, i32
  }
  func.func @transform_5(%arg0: i32) -> (i32, i32) {
    %c0_i32 = arith.constant 0 : i32
    %c0_i32_0 = arith.constant 0 : i32
    %c0_i32_1 = arith.constant 0 : i32
    return %c0_i32, %c0_i32_0 : i32, i32
  }
  func.func @transform_6(%arg0: i32) -> (i32, i32) {
    %c0_i32 = arith.constant 0 : i32
    %c0_i32_0 = arith.constant 0 : i32
    %c0_i32_1 = arith.constant 0 : i32
    return %c0_i32, %c0_i32_0 : i32, i32
  }
  func.func @transform_7(%arg0: i32) -> (i32, i32) {
    %c0_i32 = arith.constant 0 : i32
    %c0_i32_0 = arith.constant 0 : i32
    %c0_i32_1 = arith.constant 0 : i32
    return %c0_i32, %c0_i32_0 : i32, i32
  }
  func.func @transform_8(%arg0: i32) -> (i32, i32) {
    %c0_i32 = arith.constant 0 : i32
    %c0_i32_0 = arith.constant 0 : i32
    %c0_i32_1 = arith.constant 0 : i32
    return %c0_i32, %c0_i32_0 : i32, i32
  }
  func.func @transform_9(%arg0: i32) -> (i32, i32, i32) {
    %c0_i32 = arith.constant 0 : i32
    %c0_i32_0 = arith.constant 0 : i32
    %c0_i32_1 = arith.constant 0 : i32
    return %arg0, %c0_i32, %c0_i32_0 : i32, i32, i32
  }
  func.func @transform_10(%arg0: i32) -> (i32, i32, i32) {
    %c0_i32 = arith.constant 0 : i32
    %c0_i32_0 = arith.constant 0 : i32
    %c0_i32_1 = arith.constant 0 : i32
    return %arg0, %c0_i32, %c0_i32_0 : i32, i32, i32
  }
  func.func @transform_11(%arg0: i32) -> (i32, i32, i32) {
    %c0_i32 = arith.constant 0 : i32
    %c0_i32_0 = arith.constant 0 : i32
    %c0_i32_1 = arith.constant 0 : i32
    return %arg0, %c0_i32, %c0_i32_0 : i32, i32, i32
  }
}

module attributes {stable_mosaic.version = 11 : i64} {
  func.func @kernel(%arg0: i32, %arg1: memref<1x16x16x96xf32, #tpu.memory_space<vmem>>, %arg2: memref<28x96xf32, #tpu.memory_space<vmem>>, %arg3: memref<4x96xf32, #tpu.memory_space<vmem>>, %arg4: memref<4x96x128xf32, #tpu.memory_space<vmem>>, %arg5: memref<4x128xf32, #tpu.memory_space<vmem>>, %arg6: memref<128x8xf32, #tpu.memory_space<vmem>>, %arg7: memref<8x128xf32, #tpu.memory_space<vmem>>, %arg8: memref<128x32xf32, #tpu.memory_space<vmem>>, %arg9: memref<1x32xf32, #tpu.memory_space<vmem>>, %arg10: memref<1x256x32xf32, #tpu.memory_space<vmem>>, %arg11: memref<1x22x22x96xf32, #tpu.memory_space<vmem>>) attributes {dimension_semantics = [#tpu.dimension_semantics<parallel>], iteration_bounds = array<i64: 2>, scalar_prefetch = 0 : i64, scratch_operands = 1 : i64, tpu.core_type = #tpu.core_type<tc>, window_params = [{transform_indices = @transform_0, window_bounds = array<i64: 1, 16, 16, 96>}, {pipeline_mode = #tpu.pipeline_mode<synchronous>, transform_indices = @transform_1, window_bounds = array<i64: 28, 96>}, {pipeline_mode = #tpu.pipeline_mode<synchronous>, transform_indices = @transform_2, window_bounds = array<i64: 4, 96>}, {pipeline_mode = #tpu.pipeline_mode<synchronous>, transform_indices = @transform_3, window_bounds = array<i64: 4, 96, 128>}, {pipeline_mode = #tpu.pipeline_mode<synchronous>, transform_indices = @transform_4, window_bounds = array<i64: 4, 128>}, {pipeline_mode = #tpu.pipeline_mode<synchronous>, transform_indices = @transform_5, window_bounds = array<i64: 128, 8>}, {pipeline_mode = #tpu.pipeline_mode<synchronous>, transform_indices = @transform_6, window_bounds = array<i64: 8, 128>}, {pipeline_mode = #tpu.pipeline_mode<synchronous>, transform_indices = @transform_7, window_bounds = array<i64: 128, 32>}, {pipeline_mode = #tpu.pipeline_mode<synchronous>, transform_indices = @transform_8, window_bounds = array<i64: 1, 32>}, {transform_indices = @transform_9, window_bounds = array<i64: 1, 256, 32>}]} {
    %c0 = arith.constant 0 : index
    %c0_0 = arith.constant 0 : index
    %c0_1 = arith.constant 0 : index
    %c0_2 = arith.constant 0 : index
    %0 = vector.load %arg1[%c0, %c0_0, %c0_1, %c0_2] : memref<1x16x16x96xf32, #tpu.memory_space<vmem>>, vector<1x16x16x96xf32>
    %cst = arith.constant 0.000000e+00 : f32
    %1 = vector.broadcast %cst : f32 to vector<1x3x22x96xf32>
    %c0_3 = arith.constant 0 : index
    %c0_4 = arith.constant 0 : index
    %c0_5 = arith.constant 0 : index
    %c0_6 = arith.constant 0 : index
    %2 = vector.load %arg11[%c0_3, %c0_4, %c0_5, %c0_6] : memref<1x22x22x96xf32, #tpu.memory_space<vmem>>, vector<1x3x22x96xf32>
    tpu.vector_store %arg11[%c0_3, %c0_4, %c0_5, %c0_6], %1 {strides = array<i32>} : memref<1x22x22x96xf32, #tpu.memory_space<vmem>>, vector<1x3x22x96xf32>,
    %cst_7 = arith.constant 0.000000e+00 : f32
    %3 = vector.broadcast %cst_7 : f32 to vector<1x3x22x96xf32>
    %c0_8 = arith.constant 0 : index
    %c19 = arith.constant 19 : index
    %c0_9 = arith.constant 0 : index
    %c0_10 = arith.constant 0 : index
    %4 = vector.load %arg11[%c0_8, %c19, %c0_9, %c0_10] : memref<1x22x22x96xf32, #tpu.memory_space<vmem>>, vector<1x3x22x96xf32>
    tpu.vector_store %arg11[%c0_8, %c19, %c0_9, %c0_10], %3 {strides = array<i32>} : memref<1x22x22x96xf32, #tpu.memory_space<vmem>>, vector<1x3x22x96xf32>,
    %cst_11 = arith.constant 0.000000e+00 : f32
    %5 = vector.broadcast %cst_11 : f32 to vector<1x16x3x96xf32>
    %c0_12 = arith.constant 0 : index
    %c3 = arith.constant 3 : index
    %c0_13 = arith.constant 0 : index
    %c0_14 = arith.constant 0 : index
    %6 = vector.load %arg11[%c0_12, %c3, %c0_13, %c0_14] : memref<1x22x22x96xf32, #tpu.memory_space<vmem>>, vector<1x16x3x96xf32>
    tpu.vector_store %arg11[%c0_12, %c3, %c0_13, %c0_14], %5 {strides = array<i32>} : memref<1x22x22x96xf32, #tpu.memory_space<vmem>>, vector<1x16x3x96xf32>,
    %cst_15 = arith.constant 0.000000e+00 : f32
    %7 = vector.broadcast %cst_15 : f32 to vector<1x16x3x96xf32>
    %c0_16 = arith.constant 0 : index
    %c3_17 = arith.constant 3 : index
    %c19_18 = arith.constant 19 : index
    %c0_19 = arith.constant 0 : index
    %8 = vector.load %arg11[%c0_16, %c3_17, %c19_18, %c0_19] : memref<1x22x22x96xf32, #tpu.memory_space<vmem>>, vector<1x16x3x96xf32>
    tpu.vector_store %arg11[%c0_16, %c3_17, %c19_18, %c0_19], %7 {strides = array<i32>} : memref<1x22x22x96xf32, #tpu.memory_space<vmem>>, vector<1x16x3x96xf32>,
    %c0_20 = arith.constant 0 : index
    %c3_21 = arith.constant 3 : index
    %c3_22 = arith.constant 3 : index
    %c0_23 = arith.constant 0 : index
    %9 = vector.load %arg11[%c0_20, %c3_21, %c3_22, %c0_23] : memref<1x22x22x96xf32, #tpu.memory_space<vmem>>, vector<1x16x16x96xf32>
    tpu.vector_store %arg11[%c0_20, %c3_21, %c3_22, %c0_23], %0 {strides = array<i32>} : memref<1x22x22x96xf32, #tpu.memory_space<vmem>>, vector<1x16x16x96xf32>,
    %c0_24 = arith.constant 0 : index
    %c0_25 = arith.constant 0 : index
    %10 = vector.load %arg2[%c0_24, %c0_25] : memref<28x96xf32, #tpu.memory_space<vmem>>, vector<1x96xf32>
    %11 = vector.shape_cast %10 : vector<1x96xf32> to vector<96xf32>
    %12 = vector.shape_cast %11 : vector<96xf32> to vector<1x1x1x96xf32>
    %13 = vector.broadcast %12 : vector<1x1x1x96xf32> to vector<1x16x16x96xf32>
    %14 = arith.mulf %0, %13 : vector<1x16x16x96xf32>
    %c0_26 = arith.constant 0 : index
    %c0_27 = arith.constant 0 : index
    %15 = vector.load %arg3[%c0_26, %c0_27] : memref<4x96xf32, #tpu.memory_space<vmem>>, vector<1x96xf32>
    %16 = vector.shape_cast %15 : vector<1x96xf32> to vector<96xf32>
    %17 = vector.shape_cast %16 : vector<96xf32> to vector<1x1x1x96xf32>
    %18 = vector.broadcast %17 : vector<1x1x1x96xf32> to vector<1x16x16x96xf32>
    %19 = arith.addf %14, %18 : vector<1x16x16x96xf32>
    %cst_28 = arith.constant 0.000000e+00 : f32
    %20 = vector.broadcast %cst_28 : f32 to vector<1x16x16x96xf32>
    %21 = arith.maximumf %19, %20 : vector<1x16x16x96xf32>
    %22 = vector.shape_cast %21 : vector<1x16x16x96xf32> to vector<256x96xf32>
    %c0_29 = arith.constant 0 : index
    %c0_30 = arith.constant 0 : index
    %c0_31 = arith.constant 0 : index
    %23 = vector.load %arg4[%c0_29, %c0_30, %c0_31] : memref<4x96x128xf32, #tpu.memory_space<vmem>>, vector<1x96x128xf32>
    %24 = vector.shape_cast %23 : vector<1x96x128xf32> to vector<96x128xf32>
    %cst_32 = arith.constant dense<0.000000e+00> : vector<256x128xf32>
    %25 = tpu.matmul %22, %24, %cst_32 {dimension_numbers = #tpu.dot_dimension_numbers<[1], [0], [0], [1], [0, 0, 1, 1], [], []>} : vector<256x96xf32>, vector<96x128xf32>, vector<256x128xf32> -> vector<256x128xf32>
    %c0_33 = arith.constant 0 : index
    %c0_34 = arith.constant 0 : index
    %26 = vector.load %arg5[%c0_33, %c0_34] : memref<4x128xf32, #tpu.memory_space<vmem>>, vector<1x128xf32>
    %27 = vector.shape_cast %26 : vector<1x128xf32> to vector<128xf32>
    %28 = vector.shape_cast %27 : vector<128xf32> to vector<1x128xf32>
    %29 = vector.broadcast %28 : vector<1x128xf32> to vector<256x128xf32>
    %30 = arith.addf %25, %29 : vector<256x128xf32>
    %cst_35 = arith.constant 0.000000e+00 : f32
    %31 = vector.broadcast %cst_35 : f32 to vector<256x128xf32>
    %32 = arith.maximumf %30, %31 : vector<256x128xf32>
    %cst_36 = arith.constant 0.000000e+00 : f32
    %33 = vector.broadcast %cst_36 : f32 to vector<1x16x16x96xf32>
    %c0_37 = arith.constant 0 : index
    %c2 = arith.constant 2 : index
    %c2_38 = arith.constant 2 : index
    %c0_39 = arith.constant 0 : index
    %34 = vector.load %arg11[%c0_37, %c2, %c2_38, %c0_39] : memref<1x22x22x96xf32, #tpu.memory_space<vmem>>, vector<1x16x16x96xf32>
    %c1 = arith.constant 1 : index
    %c0_40 = arith.constant 0 : index
    %35 = vector.load %arg2[%c1, %c0_40] : memref<28x96xf32, #tpu.memory_space<vmem>>, vector<1x96xf32>
    %36 = vector.shape_cast %35 : vector<1x96xf32> to vector<96xf32>
    %37 = vector.shape_cast %36 : vector<96xf32> to vector<1x1x1x96xf32>
    %38 = vector.broadcast %37 : vector<1x1x1x96xf32> to vector<1x16x16x96xf32>
    %39 = arith.mulf %34, %38 : vector<1x16x16x96xf32>
    %40 = arith.addf %33, %39 : vector<1x16x16x96xf32>
    %c0_41 = arith.constant 0 : index
    %c2_42 = arith.constant 2 : index
    %c3_43 = arith.constant 3 : index
    %c0_44 = arith.constant 0 : index
    %41 = vector.load %arg11[%c0_41, %c2_42, %c3_43, %c0_44] : memref<1x22x22x96xf32, #tpu.memory_space<vmem>>, vector<1x16x16x96xf32>
    %c2_45 = arith.constant 2 : index
    %c0_46 = arith.constant 0 : index
    %42 = vector.load %arg2[%c2_45, %c0_46] : memref<28x96xf32, #tpu.memory_space<vmem>>, vector<1x96xf32>
    %43 = vector.shape_cast %42 : vector<1x96xf32> to vector<96xf32>
    %44 = vector.shape_cast %43 : vector<96xf32> to vector<1x1x1x96xf32>
    %45 = vector.broadcast %44 : vector<1x1x1x96xf32> to vector<1x16x16x96xf32>
    %46 = arith.mulf %41, %45 : vector<1x16x16x96xf32>
    %47 = arith.addf %40, %46 : vector<1x16x16x96xf32>
    %c0_47 = arith.constant 0 : index
    %c2_48 = arith.constant 2 : index
    %c4 = arith.constant 4 : index
    %c0_49 = arith.constant 0 : index
    %48 = vector.load %arg11[%c0_47, %c2_48, %c4, %c0_49] : memref<1x22x22x96xf32, #tpu.memory_space<vmem>>, vector<1x16x16x96xf32>
    %c3_50 = arith.constant 3 : index
    %c0_51 = arith.constant 0 : index
    %49 = vector.load %arg2[%c3_50, %c0_51] : memref<28x96xf32, #tpu.memory_space<vmem>>, vector<1x96xf32>
    %50 = vector.shape_cast %49 : vector<1x96xf32> to vector<96xf32>
    %51 = vector.shape_cast %50 : vector<96xf32> to vector<1x1x1x96xf32>
    %52 = vector.broadcast %51 : vector<1x1x1x96xf32> to vector<1x16x16x96xf32>
    %53 = arith.mulf %48, %52 : vector<1x16x16x96xf32>
    %54 = arith.addf %47, %53 : vector<1x16x16x96xf32>
    %c0_52 = arith.constant 0 : index
    %c3_53 = arith.constant 3 : index
    %c2_54 = arith.constant 2 : index
    %c0_55 = arith.constant 0 : index
    %55 = vector.load %arg11[%c0_52, %c3_53, %c2_54, %c0_55] : memref<1x22x22x96xf32, #tpu.memory_space<vmem>>, vector<1x16x16x96xf32>
    %c4_56 = arith.constant 4 : index
    %c0_57 = arith.constant 0 : index
    %56 = vector.load %arg2[%c4_56, %c0_57] : memref<28x96xf32, #tpu.memory_space<vmem>>, vector<1x96xf32>
    %57 = vector.shape_cast %56 : vector<1x96xf32> to vector<96xf32>
    %58 = vector.shape_cast %57 : vector<96xf32> to vector<1x1x1x96xf32>
    %59 = vector.broadcast %58 : vector<1x1x1x96xf32> to vector<1x16x16x96xf32>
    %60 = arith.mulf %55, %59 : vector<1x16x16x96xf32>
    %61 = arith.addf %54, %60 : vector<1x16x16x96xf32>
    %c0_58 = arith.constant 0 : index
    %c3_59 = arith.constant 3 : index
    %c3_60 = arith.constant 3 : index
    %c0_61 = arith.constant 0 : index
    %62 = vector.load %arg11[%c0_58, %c3_59, %c3_60, %c0_61] : memref<1x22x22x96xf32, #tpu.memory_space<vmem>>, vector<1x16x16x96xf32>
    %c5 = arith.constant 5 : index
    %c0_62 = arith.constant 0 : index
    %63 = vector.load %arg2[%c5, %c0_62] : memref<28x96xf32, #tpu.memory_space<vmem>>, vector<1x96xf32>
    %64 = vector.shape_cast %63 : vector<1x96xf32> to vector<96xf32>
    %65 = vector.shape_cast %64 : vector<96xf32> to vector<1x1x1x96xf32>
    %66 = vector.broadcast %65 : vector<1x1x1x96xf32> to vector<1x16x16x96xf32>
    %67 = arith.mulf %62, %66 : vector<1x16x16x96xf32>
    %68 = arith.addf %61, %67 : vector<1x16x16x96xf32>
    %c0_63 = arith.constant 0 : index
    %c3_64 = arith.constant 3 : index
    %c4_65 = arith.constant 4 : index
    %c0_66 = arith.constant 0 : index
    %69 = vector.load %arg11[%c0_63, %c3_64, %c4_65, %c0_66] : memref<1x22x22x96xf32, #tpu.memory_space<vmem>>, vector<1x16x16x96xf32>
    %c6 = arith.constant 6 : index
    %c0_67 = arith.constant 0 : index
    %70 = vector.load %arg2[%c6, %c0_67] : memref<28x96xf32, #tpu.memory_space<vmem>>, vector<1x96xf32>
    %71 = vector.shape_cast %70 : vector<1x96xf32> to vector<96xf32>
    %72 = vector.shape_cast %71 : vector<96xf32> to vector<1x1x1x96xf32>
    %73 = vector.broadcast %72 : vector<1x1x1x96xf32> to vector<1x16x16x96xf32>
    %74 = arith.mulf %69, %73 : vector<1x16x16x96xf32>
    %75 = arith.addf %68, %74 : vector<1x16x16x96xf32>
    %c0_68 = arith.constant 0 : index
    %c4_69 = arith.constant 4 : index
    %c2_70 = arith.constant 2 : index
    %c0_71 = arith.constant 0 : index
    %76 = vector.load %arg11[%c0_68, %c4_69, %c2_70, %c0_71] : memref<1x22x22x96xf32, #tpu.memory_space<vmem>>, vector<1x16x16x96xf32>
    %c7 = arith.constant 7 : index
    %c0_72 = arith.constant 0 : index
    %77 = vector.load %arg2[%c7, %c0_72] : memref<28x96xf32, #tpu.memory_space<vmem>>, vector<1x96xf32>
    %78 = vector.shape_cast %77 : vector<1x96xf32> to vector<96xf32>
    %79 = vector.shape_cast %78 : vector<96xf32> to vector<1x1x1x96xf32>
    %80 = vector.broadcast %79 : vector<1x1x1x96xf32> to vector<1x16x16x96xf32>
    %81 = arith.mulf %76, %80 : vector<1x16x16x96xf32>
    %82 = arith.addf %75, %81 : vector<1x16x16x96xf32>
    %c0_73 = arith.constant 0 : index
    %c4_74 = arith.constant 4 : index
    %c3_75 = arith.constant 3 : index
    %c0_76 = arith.constant 0 : index
    %83 = vector.load %arg11[%c0_73, %c4_74, %c3_75, %c0_76] : memref<1x22x22x96xf32, #tpu.memory_space<vmem>>, vector<1x16x16x96xf32>
    %c8 = arith.constant 8 : index
    %c0_77 = arith.constant 0 : index
    %84 = vector.load %arg2[%c8, %c0_77] : memref<28x96xf32, #tpu.memory_space<vmem>>, vector<1x96xf32>
    %85 = vector.shape_cast %84 : vector<1x96xf32> to vector<96xf32>
    %86 = vector.shape_cast %85 : vector<96xf32> to vector<1x1x1x96xf32>
    %87 = vector.broadcast %86 : vector<1x1x1x96xf32> to vector<1x16x16x96xf32>
    %88 = arith.mulf %83, %87 : vector<1x16x16x96xf32>
    %89 = arith.addf %82, %88 : vector<1x16x16x96xf32>
    %c0_78 = arith.constant 0 : index
    %c4_79 = arith.constant 4 : index
    %c4_80 = arith.constant 4 : index
    %c0_81 = arith.constant 0 : index
    %90 = vector.load %arg11[%c0_78, %c4_79, %c4_80, %c0_81] : memref<1x22x22x96xf32, #tpu.memory_space<vmem>>, vector<1x16x16x96xf32>
    %c9 = arith.constant 9 : index
    %c0_82 = arith.constant 0 : index
    %91 = vector.load %arg2[%c9, %c0_82] : memref<28x96xf32, #tpu.memory_space<vmem>>, vector<1x96xf32>
    %92 = vector.shape_cast %91 : vector<1x96xf32> to vector<96xf32>
    %93 = vector.shape_cast %92 : vector<96xf32> to vector<1x1x1x96xf32>
    %94 = vector.broadcast %93 : vector<1x1x1x96xf32> to vector<1x16x16x96xf32>
    %95 = arith.mulf %90, %94 : vector<1x16x16x96xf32>
    %96 = arith.addf %89, %95 : vector<1x16x16x96xf32>
    %c1_83 = arith.constant 1 : index
    %c0_84 = arith.constant 0 : index
    %97 = vector.load %arg3[%c1_83, %c0_84] : memref<4x96xf32, #tpu.memory_space<vmem>>, vector<1x96xf32>
    %98 = vector.shape_cast %97 : vector<1x96xf32> to vector<96xf32>
    %99 = vector.shape_cast %98 : vector<96xf32> to vector<1x1x1x96xf32>
    %100 = vector.broadcast %99 : vector<1x1x1x96xf32> to vector<1x16x16x96xf32>
    %101 = arith.addf %96, %100 : vector<1x16x16x96xf32>
    %cst_85 = arith.constant 0.000000e+00 : f32
    %102 = vector.broadcast %cst_85 : f32 to vector<1x16x16x96xf32>
    %103 = arith.maximumf %101, %102 : vector<1x16x16x96xf32>
    %104 = vector.shape_cast %103 : vector<1x16x16x96xf32> to vector<256x96xf32>
    %c1_86 = arith.constant 1 : index
    %c0_87 = arith.constant 0 : index
    %c0_88 = arith.constant 0 : index
    %105 = vector.load %arg4[%c1_86, %c0_87, %c0_88] : memref<4x96x128xf32, #tpu.memory_space<vmem>>, vector<1x96x128xf32>
    %106 = vector.shape_cast %105 : vector<1x96x128xf32> to vector<96x128xf32>
    %cst_89 = arith.constant dense<0.000000e+00> : vector<256x128xf32>
    %107 = tpu.matmul %104, %106, %cst_89 {dimension_numbers = #tpu.dot_dimension_numbers<[1], [0], [0], [1], [0, 0, 1, 1], [], []>} : vector<256x96xf32>, vector<96x128xf32>, vector<256x128xf32> -> vector<256x128xf32>
    %c1_90 = arith.constant 1 : index
    %c0_91 = arith.constant 0 : index
    %108 = vector.load %arg5[%c1_90, %c0_91] : memref<4x128xf32, #tpu.memory_space<vmem>>, vector<1x128xf32>
    %109 = vector.shape_cast %108 : vector<1x128xf32> to vector<128xf32>
    %110 = vector.shape_cast %109 : vector<128xf32> to vector<1x128xf32>
    %111 = vector.broadcast %110 : vector<1x128xf32> to vector<256x128xf32>
    %112 = arith.addf %107, %111 : vector<256x128xf32>
    %cst_92 = arith.constant 0.000000e+00 : f32
    %113 = vector.broadcast %cst_92 : f32 to vector<256x128xf32>
    %114 = arith.maximumf %112, %113 : vector<256x128xf32>
    %115 = arith.addf %32, %114 : vector<256x128xf32>
    %cst_93 = arith.constant 0.000000e+00 : f32
    %116 = vector.broadcast %cst_93 : f32 to vector<1x16x16x96xf32>
    %c0_94 = arith.constant 0 : index
    %c1_95 = arith.constant 1 : index
    %c1_96 = arith.constant 1 : index
    %c0_97 = arith.constant 0 : index
    %117 = vector.load %arg11[%c0_94, %c1_95, %c1_96, %c0_97] : memref<1x22x22x96xf32, #tpu.memory_space<vmem>>, vector<1x16x16x96xf32>
    %c10 = arith.constant 10 : index
    %c0_98 = arith.constant 0 : index
    %118 = vector.load %arg2[%c10, %c0_98] : memref<28x96xf32, #tpu.memory_space<vmem>>, vector<1x96xf32>
    %119 = vector.shape_cast %118 : vector<1x96xf32> to vector<96xf32>
    %120 = vector.shape_cast %119 : vector<96xf32> to vector<1x1x1x96xf32>
    %121 = vector.broadcast %120 : vector<1x1x1x96xf32> to vector<1x16x16x96xf32>
    %122 = arith.mulf %117, %121 : vector<1x16x16x96xf32>
    %123 = arith.addf %116, %122 : vector<1x16x16x96xf32>
    %c0_99 = arith.constant 0 : index
    %c1_100 = arith.constant 1 : index
    %c3_101 = arith.constant 3 : index
    %c0_102 = arith.constant 0 : index
    %124 = vector.load %arg11[%c0_99, %c1_100, %c3_101, %c0_102] : memref<1x22x22x96xf32, #tpu.memory_space<vmem>>, vector<1x16x16x96xf32>
    %c11 = arith.constant 11 : index
    %c0_103 = arith.constant 0 : index
    %125 = vector.load %arg2[%c11, %c0_103] : memref<28x96xf32, #tpu.memory_space<vmem>>, vector<1x96xf32>
    %126 = vector.shape_cast %125 : vector<1x96xf32> to vector<96xf32>
    %127 = vector.shape_cast %126 : vector<96xf32> to vector<1x1x1x96xf32>
    %128 = vector.broadcast %127 : vector<1x1x1x96xf32> to vector<1x16x16x96xf32>
    %129 = arith.mulf %124, %128 : vector<1x16x16x96xf32>
    %130 = arith.addf %123, %129 : vector<1x16x16x96xf32>
    %c0_104 = arith.constant 0 : index
    %c1_105 = arith.constant 1 : index
    %c5_106 = arith.constant 5 : index
    %c0_107 = arith.constant 0 : index
    %131 = vector.load %arg11[%c0_104, %c1_105, %c5_106, %c0_107] : memref<1x22x22x96xf32, #tpu.memory_space<vmem>>, vector<1x16x16x96xf32>
    %c12 = arith.constant 12 : index
    %c0_108 = arith.constant 0 : index
    %132 = vector.load %arg2[%c12, %c0_108] : memref<28x96xf32, #tpu.memory_space<vmem>>, vector<1x96xf32>
    %133 = vector.shape_cast %132 : vector<1x96xf32> to vector<96xf32>
    %134 = vector.shape_cast %133 : vector<96xf32> to vector<1x1x1x96xf32>
    %135 = vector.broadcast %134 : vector<1x1x1x96xf32> to vector<1x16x16x96xf32>
    %136 = arith.mulf %131, %135 : vector<1x16x16x96xf32>
    %137 = arith.addf %130, %136 : vector<1x16x16x96xf32>
    %c0_109 = arith.constant 0 : index
    %c3_110 = arith.constant 3 : index
    %c1_111 = arith.constant 1 : index
    %c0_112 = arith.constant 0 : index
    %138 = vector.load %arg11[%c0_109, %c3_110, %c1_111, %c0_112] : memref<1x22x22x96xf32, #tpu.memory_space<vmem>>, vector<1x16x16x96xf32>
    %c13 = arith.constant 13 : index
    %c0_113 = arith.constant 0 : index
    %139 = vector.load %arg2[%c13, %c0_113] : memref<28x96xf32, #tpu.memory_space<vmem>>, vector<1x96xf32>
    %140 = vector.shape_cast %139 : vector<1x96xf32> to vector<96xf32>
    %141 = vector.shape_cast %140 : vector<96xf32> to vector<1x1x1x96xf32>
    %142 = vector.broadcast %141 : vector<1x1x1x96xf32> to vector<1x16x16x96xf32>
    %143 = arith.mulf %138, %142 : vector<1x16x16x96xf32>
    %144 = arith.addf %137, %143 : vector<1x16x16x96xf32>
    %c0_114 = arith.constant 0 : index
    %c3_115 = arith.constant 3 : index
    %c3_116 = arith.constant 3 : index
    %c0_117 = arith.constant 0 : index
    %145 = vector.load %arg11[%c0_114, %c3_115, %c3_116, %c0_117] : memref<1x22x22x96xf32, #tpu.memory_space<vmem>>, vector<1x16x16x96xf32>
    %c14 = arith.constant 14 : index
    %c0_118 = arith.constant 0 : index
    %146 = vector.load %arg2[%c14, %c0_118] : memref<28x96xf32, #tpu.memory_space<vmem>>, vector<1x96xf32>
    %147 = vector.shape_cast %146 : vector<1x96xf32> to vector<96xf32>
    %148 = vector.shape_cast %147 : vector<96xf32> to vector<1x1x1x96xf32>
    %149 = vector.broadcast %148 : vector<1x1x1x96xf32> to vector<1x16x16x96xf32>
    %150 = arith.mulf %145, %149 : vector<1x16x16x96xf32>
    %151 = arith.addf %144, %150 : vector<1x16x16x96xf32>
    %c0_119 = arith.constant 0 : index
    %c3_120 = arith.constant 3 : index
    %c5_121 = arith.constant 5 : index
    %c0_122 = arith.constant 0 : index
    %152 = vector.load %arg11[%c0_119, %c3_120, %c5_121, %c0_122] : memref<1x22x22x96xf32, #tpu.memory_space<vmem>>, vector<1x16x16x96xf32>
    %c15 = arith.constant 15 : index
    %c0_123 = arith.constant 0 : index
    %153 = vector.load %arg2[%c15, %c0_123] : memref<28x96xf32, #tpu.memory_space<vmem>>, vector<1x96xf32>
    %154 = vector.shape_cast %153 : vector<1x96xf32> to vector<96xf32>
    %155 = vector.shape_cast %154 : vector<96xf32> to vector<1x1x1x96xf32>
    %156 = vector.broadcast %155 : vector<1x1x1x96xf32> to vector<1x16x16x96xf32>
    %157 = arith.mulf %152, %156 : vector<1x16x16x96xf32>
    %158 = arith.addf %151, %157 : vector<1x16x16x96xf32>
    %c0_124 = arith.constant 0 : index
    %c5_125 = arith.constant 5 : index
    %c1_126 = arith.constant 1 : index
    %c0_127 = arith.constant 0 : index
    %159 = vector.load %arg11[%c0_124, %c5_125, %c1_126, %c0_127] : memref<1x22x22x96xf32, #tpu.memory_space<vmem>>, vector<1x16x16x96xf32>
    %c16 = arith.constant 16 : index
    %c0_128 = arith.constant 0 : index
    %160 = vector.load %arg2[%c16, %c0_128] : memref<28x96xf32, #tpu.memory_space<vmem>>, vector<1x96xf32>
    %161 = vector.shape_cast %160 : vector<1x96xf32> to vector<96xf32>
    %162 = vector.shape_cast %161 : vector<96xf32> to vector<1x1x1x96xf32>
    %163 = vector.broadcast %162 : vector<1x1x1x96xf32> to vector<1x16x16x96xf32>
    %164 = arith.mulf %159, %163 : vector<1x16x16x96xf32>
    %165 = arith.addf %158, %164 : vector<1x16x16x96xf32>
    %c0_129 = arith.constant 0 : index
    %c5_130 = arith.constant 5 : index
    %c3_131 = arith.constant 3 : index
    %c0_132 = arith.constant 0 : index
    %166 = vector.load %arg11[%c0_129, %c5_130, %c3_131, %c0_132] : memref<1x22x22x96xf32, #tpu.memory_space<vmem>>, vector<1x16x16x96xf32>
    %c17 = arith.constant 17 : index
    %c0_133 = arith.constant 0 : index
    %167 = vector.load %arg2[%c17, %c0_133] : memref<28x96xf32, #tpu.memory_space<vmem>>, vector<1x96xf32>
    %168 = vector.shape_cast %167 : vector<1x96xf32> to vector<96xf32>
    %169 = vector.shape_cast %168 : vector<96xf32> to vector<1x1x1x96xf32>
    %170 = vector.broadcast %169 : vector<1x1x1x96xf32> to vector<1x16x16x96xf32>
    %171 = arith.mulf %166, %170 : vector<1x16x16x96xf32>
    %172 = arith.addf %165, %171 : vector<1x16x16x96xf32>
    %c0_134 = arith.constant 0 : index
    %c5_135 = arith.constant 5 : index
    %c5_136 = arith.constant 5 : index
    %c0_137 = arith.constant 0 : index
    %173 = vector.load %arg11[%c0_134, %c5_135, %c5_136, %c0_137] : memref<1x22x22x96xf32, #tpu.memory_space<vmem>>, vector<1x16x16x96xf32>
    %c18 = arith.constant 18 : index
    %c0_138 = arith.constant 0 : index
    %174 = vector.load %arg2[%c18, %c0_138] : memref<28x96xf32, #tpu.memory_space<vmem>>, vector<1x96xf32>
    %175 = vector.shape_cast %174 : vector<1x96xf32> to vector<96xf32>
    %176 = vector.shape_cast %175 : vector<96xf32> to vector<1x1x1x96xf32>
    %177 = vector.broadcast %176 : vector<1x1x1x96xf32> to vector<1x16x16x96xf32>
    %178 = arith.mulf %173, %177 : vector<1x16x16x96xf32>
    %179 = arith.addf %172, %178 : vector<1x16x16x96xf32>
    %c2_139 = arith.constant 2 : index
    %c0_140 = arith.constant 0 : index
    %180 = vector.load %arg3[%c2_139, %c0_140] : memref<4x96xf32, #tpu.memory_space<vmem>>, vector<1x96xf32>
    %181 = vector.shape_cast %180 : vector<1x96xf32> to vector<96xf32>
    %182 = vector.shape_cast %181 : vector<96xf32> to vector<1x1x1x96xf32>
    %183 = vector.broadcast %182 : vector<1x1x1x96xf32> to vector<1x16x16x96xf32>
    %184 = arith.addf %179, %183 : vector<1x16x16x96xf32>
    %cst_141 = arith.constant 0.000000e+00 : f32
    %185 = vector.broadcast %cst_141 : f32 to vector<1x16x16x96xf32>
    %186 = arith.maximumf %184, %185 : vector<1x16x16x96xf32>
    %187 = vector.shape_cast %186 : vector<1x16x16x96xf32> to vector<256x96xf32>
    %c2_142 = arith.constant 2 : index
    %c0_143 = arith.constant 0 : index
    %c0_144 = arith.constant 0 : index
    %188 = vector.load %arg4[%c2_142, %c0_143, %c0_144] : memref<4x96x128xf32, #tpu.memory_space<vmem>>, vector<1x96x128xf32>
    %189 = vector.shape_cast %188 : vector<1x96x128xf32> to vector<96x128xf32>
    %cst_145 = arith.constant dense<0.000000e+00> : vector<256x128xf32>
    %190 = tpu.matmul %187, %189, %cst_145 {dimension_numbers = #tpu.dot_dimension_numbers<[1], [0], [0], [1], [0, 0, 1, 1], [], []>} : vector<256x96xf32>, vector<96x128xf32>, vector<256x128xf32> -> vector<256x128xf32>
    %c2_146 = arith.constant 2 : index
    %c0_147 = arith.constant 0 : index
    %191 = vector.load %arg5[%c2_146, %c0_147] : memref<4x128xf32, #tpu.memory_space<vmem>>, vector<1x128xf32>
    %192 = vector.shape_cast %191 : vector<1x128xf32> to vector<128xf32>
    %193 = vector.shape_cast %192 : vector<128xf32> to vector<1x128xf32>
    %194 = vector.broadcast %193 : vector<1x128xf32> to vector<256x128xf32>
    %195 = arith.addf %190, %194 : vector<256x128xf32>
    %cst_148 = arith.constant 0.000000e+00 : f32
    %196 = vector.broadcast %cst_148 : f32 to vector<256x128xf32>
    %197 = arith.maximumf %195, %196 : vector<256x128xf32>
    %198 = arith.addf %115, %197 : vector<256x128xf32>
    %cst_149 = arith.constant 0.000000e+00 : f32
    %199 = vector.broadcast %cst_149 : f32 to vector<1x16x16x96xf32>
    %c0_150 = arith.constant 0 : index
    %c0_151 = arith.constant 0 : index
    %c0_152 = arith.constant 0 : index
    %c0_153 = arith.constant 0 : index
    %200 = vector.load %arg11[%c0_150, %c0_151, %c0_152, %c0_153] : memref<1x22x22x96xf32, #tpu.memory_space<vmem>>, vector<1x16x16x96xf32>
    %c19_154 = arith.constant 19 : index
    %c0_155 = arith.constant 0 : index
    %201 = vector.load %arg2[%c19_154, %c0_155] : memref<28x96xf32, #tpu.memory_space<vmem>>, vector<1x96xf32>
    %202 = vector.shape_cast %201 : vector<1x96xf32> to vector<96xf32>
    %203 = vector.shape_cast %202 : vector<96xf32> to vector<1x1x1x96xf32>
    %204 = vector.broadcast %203 : vector<1x1x1x96xf32> to vector<1x16x16x96xf32>
    %205 = arith.mulf %200, %204 : vector<1x16x16x96xf32>
    %206 = arith.addf %199, %205 : vector<1x16x16x96xf32>
    %c0_156 = arith.constant 0 : index
    %c0_157 = arith.constant 0 : index
    %c3_158 = arith.constant 3 : index
    %c0_159 = arith.constant 0 : index
    %207 = vector.load %arg11[%c0_156, %c0_157, %c3_158, %c0_159] : memref<1x22x22x96xf32, #tpu.memory_space<vmem>>, vector<1x16x16x96xf32>
    %c20 = arith.constant 20 : index
    %c0_160 = arith.constant 0 : index
    %208 = vector.load %arg2[%c20, %c0_160] : memref<28x96xf32, #tpu.memory_space<vmem>>, vector<1x96xf32>
    %209 = vector.shape_cast %208 : vector<1x96xf32> to vector<96xf32>
    %210 = vector.shape_cast %209 : vector<96xf32> to vector<1x1x1x96xf32>
    %211 = vector.broadcast %210 : vector<1x1x1x96xf32> to vector<1x16x16x96xf32>
    %212 = arith.mulf %207, %211 : vector<1x16x16x96xf32>
    %213 = arith.addf %206, %212 : vector<1x16x16x96xf32>
    %c0_161 = arith.constant 0 : index
    %c0_162 = arith.constant 0 : index
    %c6_163 = arith.constant 6 : index
    %c0_164 = arith.constant 0 : index
    %214 = vector.load %arg11[%c0_161, %c0_162, %c6_163, %c0_164] : memref<1x22x22x96xf32, #tpu.memory_space<vmem>>, vector<1x16x16x96xf32>
    %c21 = arith.constant 21 : index
    %c0_165 = arith.constant 0 : index
    %215 = vector.load %arg2[%c21, %c0_165] : memref<28x96xf32, #tpu.memory_space<vmem>>, vector<1x96xf32>
    %216 = vector.shape_cast %215 : vector<1x96xf32> to vector<96xf32>
    %217 = vector.shape_cast %216 : vector<96xf32> to vector<1x1x1x96xf32>
    %218 = vector.broadcast %217 : vector<1x1x1x96xf32> to vector<1x16x16x96xf32>
    %219 = arith.mulf %214, %218 : vector<1x16x16x96xf32>
    %220 = arith.addf %213, %219 : vector<1x16x16x96xf32>
    %c0_166 = arith.constant 0 : index
    %c3_167 = arith.constant 3 : index
    %c0_168 = arith.constant 0 : index
    %c0_169 = arith.constant 0 : index
    %221 = vector.load %arg11[%c0_166, %c3_167, %c0_168, %c0_169] : memref<1x22x22x96xf32, #tpu.memory_space<vmem>>, vector<1x16x16x96xf32>
    %c22 = arith.constant 22 : index
    %c0_170 = arith.constant 0 : index
    %222 = vector.load %arg2[%c22, %c0_170] : memref<28x96xf32, #tpu.memory_space<vmem>>, vector<1x96xf32>
    %223 = vector.shape_cast %222 : vector<1x96xf32> to vector<96xf32>
    %224 = vector.shape_cast %223 : vector<96xf32> to vector<1x1x1x96xf32>
    %225 = vector.broadcast %224 : vector<1x1x1x96xf32> to vector<1x16x16x96xf32>
    %226 = arith.mulf %221, %225 : vector<1x16x16x96xf32>
    %227 = arith.addf %220, %226 : vector<1x16x16x96xf32>
    %c0_171 = arith.constant 0 : index
    %c3_172 = arith.constant 3 : index
    %c3_173 = arith.constant 3 : index
    %c0_174 = arith.constant 0 : index
    %228 = vector.load %arg11[%c0_171, %c3_172, %c3_173, %c0_174] : memref<1x22x22x96xf32, #tpu.memory_space<vmem>>, vector<1x16x16x96xf32>
    %c23 = arith.constant 23 : index
    %c0_175 = arith.constant 0 : index
    %229 = vector.load %arg2[%c23, %c0_175] : memref<28x96xf32, #tpu.memory_space<vmem>>, vector<1x96xf32>
    %230 = vector.shape_cast %229 : vector<1x96xf32> to vector<96xf32>
    %231 = vector.shape_cast %230 : vector<96xf32> to vector<1x1x1x96xf32>
    %232 = vector.broadcast %231 : vector<1x1x1x96xf32> to vector<1x16x16x96xf32>
    %233 = arith.mulf %228, %232 : vector<1x16x16x96xf32>
    %234 = arith.addf %227, %233 : vector<1x16x16x96xf32>
    %c0_176 = arith.constant 0 : index
    %c3_177 = arith.constant 3 : index
    %c6_178 = arith.constant 6 : index
    %c0_179 = arith.constant 0 : index
    %235 = vector.load %arg11[%c0_176, %c3_177, %c6_178, %c0_179] : memref<1x22x22x96xf32, #tpu.memory_space<vmem>>, vector<1x16x16x96xf32>
    %c24 = arith.constant 24 : index
    %c0_180 = arith.constant 0 : index
    %236 = vector.load %arg2[%c24, %c0_180] : memref<28x96xf32, #tpu.memory_space<vmem>>, vector<1x96xf32>
    %237 = vector.shape_cast %236 : vector<1x96xf32> to vector<96xf32>
    %238 = vector.shape_cast %237 : vector<96xf32> to vector<1x1x1x96xf32>
    %239 = vector.broadcast %238 : vector<1x1x1x96xf32> to vector<1x16x16x96xf32>
    %240 = arith.mulf %235, %239 : vector<1x16x16x96xf32>
    %241 = arith.addf %234, %240 : vector<1x16x16x96xf32>
    %c0_181 = arith.constant 0 : index
    %c6_182 = arith.constant 6 : index
    %c0_183 = arith.constant 0 : index
    %c0_184 = arith.constant 0 : index
    %242 = vector.load %arg11[%c0_181, %c6_182, %c0_183, %c0_184] : memref<1x22x22x96xf32, #tpu.memory_space<vmem>>, vector<1x16x16x96xf32>
    %c25 = arith.constant 25 : index
    %c0_185 = arith.constant 0 : index
    %243 = vector.load %arg2[%c25, %c0_185] : memref<28x96xf32, #tpu.memory_space<vmem>>, vector<1x96xf32>
    %244 = vector.shape_cast %243 : vector<1x96xf32> to vector<96xf32>
    %245 = vector.shape_cast %244 : vector<96xf32> to vector<1x1x1x96xf32>
    %246 = vector.broadcast %245 : vector<1x1x1x96xf32> to vector<1x16x16x96xf32>
    %247 = arith.mulf %242, %246 : vector<1x16x16x96xf32>
    %248 = arith.addf %241, %247 : vector<1x16x16x96xf32>
    %c0_186 = arith.constant 0 : index
    %c6_187 = arith.constant 6 : index
    %c3_188 = arith.constant 3 : index
    %c0_189 = arith.constant 0 : index
    %249 = vector.load %arg11[%c0_186, %c6_187, %c3_188, %c0_189] : memref<1x22x22x96xf32, #tpu.memory_space<vmem>>, vector<1x16x16x96xf32>
    %c26 = arith.constant 26 : index
    %c0_190 = arith.constant 0 : index
    %250 = vector.load %arg2[%c26, %c0_190] : memref<28x96xf32, #tpu.memory_space<vmem>>, vector<1x96xf32>
    %251 = vector.shape_cast %250 : vector<1x96xf32> to vector<96xf32>
    %252 = vector.shape_cast %251 : vector<96xf32> to vector<1x1x1x96xf32>
    %253 = vector.broadcast %252 : vector<1x1x1x96xf32> to vector<1x16x16x96xf32>
    %254 = arith.mulf %249, %253 : vector<1x16x16x96xf32>
    %255 = arith.addf %248, %254 : vector<1x16x16x96xf32>
    %c0_191 = arith.constant 0 : index
    %c6_192 = arith.constant 6 : index
    %c6_193 = arith.constant 6 : index
    %c0_194 = arith.constant 0 : index
    %256 = vector.load %arg11[%c0_191, %c6_192, %c6_193, %c0_194] : memref<1x22x22x96xf32, #tpu.memory_space<vmem>>, vector<1x16x16x96xf32>
    %c27 = arith.constant 27 : index
    %c0_195 = arith.constant 0 : index
    %257 = vector.load %arg2[%c27, %c0_195] : memref<28x96xf32, #tpu.memory_space<vmem>>, vector<1x96xf32>
    %258 = vector.shape_cast %257 : vector<1x96xf32> to vector<96xf32>
    %259 = vector.shape_cast %258 : vector<96xf32> to vector<1x1x1x96xf32>
    %260 = vector.broadcast %259 : vector<1x1x1x96xf32> to vector<1x16x16x96xf32>
    %261 = arith.mulf %256, %260 : vector<1x16x16x96xf32>
    %262 = arith.addf %255, %261 : vector<1x16x16x96xf32>
    %c3_196 = arith.constant 3 : index
    %c0_197 = arith.constant 0 : index
    %263 = vector.load %arg3[%c3_196, %c0_197] : memref<4x96xf32, #tpu.memory_space<vmem>>, vector<1x96xf32>
    %264 = vector.shape_cast %263 : vector<1x96xf32> to vector<96xf32>
    %265 = vector.shape_cast %264 : vector<96xf32> to vector<1x1x1x96xf32>
    %266 = vector.broadcast %265 : vector<1x1x1x96xf32> to vector<1x16x16x96xf32>
    %267 = arith.addf %262, %266 : vector<1x16x16x96xf32>
    %cst_198 = arith.constant 0.000000e+00 : f32
    %268 = vector.broadcast %cst_198 : f32 to vector<1x16x16x96xf32>
    %269 = arith.maximumf %267, %268 : vector<1x16x16x96xf32>
    %270 = vector.shape_cast %269 : vector<1x16x16x96xf32> to vector<256x96xf32>
    %c3_199 = arith.constant 3 : index
    %c0_200 = arith.constant 0 : index
    %c0_201 = arith.constant 0 : index
    %271 = vector.load %arg4[%c3_199, %c0_200, %c0_201] : memref<4x96x128xf32, #tpu.memory_space<vmem>>, vector<1x96x128xf32>
    %272 = vector.shape_cast %271 : vector<1x96x128xf32> to vector<96x128xf32>
    %cst_202 = arith.constant dense<0.000000e+00> : vector<256x128xf32>
    %273 = tpu.matmul %270, %272, %cst_202 {dimension_numbers = #tpu.dot_dimension_numbers<[1], [0], [0], [1], [0, 0, 1, 1], [], []>} : vector<256x96xf32>, vector<96x128xf32>, vector<256x128xf32> -> vector<256x128xf32>
    %c3_203 = arith.constant 3 : index
    %c0_204 = arith.constant 0 : index
    %274 = vector.load %arg5[%c3_203, %c0_204] : memref<4x128xf32, #tpu.memory_space<vmem>>, vector<1x128xf32>
    %275 = vector.shape_cast %274 : vector<1x128xf32> to vector<128xf32>
    %276 = vector.shape_cast %275 : vector<128xf32> to vector<1x128xf32>
    %277 = vector.broadcast %276 : vector<1x128xf32> to vector<256x128xf32>
    %278 = arith.addf %273, %277 : vector<256x128xf32>
    %cst_205 = arith.constant 0.000000e+00 : f32
    %279 = vector.broadcast %cst_205 : f32 to vector<256x128xf32>
    %280 = arith.maximumf %278, %279 : vector<256x128xf32>
    %281 = arith.addf %198, %280 : vector<256x128xf32>
    %cst_206 = arith.constant dense<0.000000e+00> : vector<128xf32>
    %282 = vector.multi_reduction <add>, %281, %cst_206 [0] : vector<256x128xf32> to vector<128xf32>
    %283 = vector.shape_cast %282 : vector<128xf32> to vector<1x128xf32>
    %cst_207 = arith.constant 2.560000e+02 : f32
    %284 = vector.broadcast %cst_207 : f32 to vector<1x128xf32>
    %285 = arith.divf %283, %284 : vector<1x128xf32>
    %c0_208 = arith.constant 0 : index
    %c0_209 = arith.constant 0 : index
    %286 = vector.load %arg6[%c0_208, %c0_209] : memref<128x8xf32, #tpu.memory_space<vmem>>, vector<128x8xf32>
    %cst_210 = arith.constant dense<0.000000e+00> : vector<1x8xf32>
    %287 = tpu.matmul %285, %286, %cst_210 {dimension_numbers = #tpu.dot_dimension_numbers<[1], [0], [0], [1], [0, 0, 1, 1], [], []>} : vector<1x128xf32>, vector<128x8xf32>, vector<1x8xf32> -> vector<1x8xf32>
    %cst_211 = arith.constant 0.000000e+00 : f32
    %288 = vector.broadcast %cst_211 : f32 to vector<1x8xf32>
    %289 = arith.maximumf %287, %288 : vector<1x8xf32>
    %c0_212 = arith.constant 0 : index
    %c0_213 = arith.constant 0 : index
    %290 = vector.load %arg7[%c0_212, %c0_213] : memref<8x128xf32, #tpu.memory_space<vmem>>, vector<8x128xf32>
    %cst_214 = arith.constant dense<0.000000e+00> : vector<1x128xf32>
    %291 = tpu.matmul %289, %290, %cst_214 {dimension_numbers = #tpu.dot_dimension_numbers<[1], [0], [0], [1], [0, 0, 1, 1], [], []>} : vector<1x8xf32>, vector<8x128xf32>, vector<1x128xf32> -> vector<1x128xf32>
    %cst_215 = arith.constant 0.000000e+00 : f32
    %292 = vector.broadcast %cst_215 : f32 to vector<1x128xf32>
    %293 = arith.maximumf %291, %292 : vector<1x128xf32>
    %cst_216 = arith.constant 0.000000e+00 : f32
    %294 = vector.broadcast %cst_216 : f32 to vector<1x128xf32>
    %295 = arith.subf %294, %293 : vector<1x128xf32>
    %296 = math.exp %295 : vector<1x128xf32>
    %cst_217 = arith.constant 1.000000e+00 : f32
    %297 = vector.broadcast %cst_217 : f32 to vector<1x128xf32>
    %298 = arith.addf %297, %296 : vector<1x128xf32>
    %cst_218 = arith.constant 1.000000e+00 : f32
    %299 = vector.broadcast %cst_218 : f32 to vector<1x128xf32>
    %300 = arith.divf %299, %298 : vector<1x128xf32>
    %301 = vector.broadcast %300 : vector<1x128xf32> to vector<256x128xf32>
    %302 = arith.mulf %281, %301 : vector<256x128xf32>
    %c0_219 = arith.constant 0 : index
    %c0_220 = arith.constant 0 : index
    %303 = vector.load %arg8[%c0_219, %c0_220] : memref<128x32xf32, #tpu.memory_space<vmem>>, vector<128x32xf32>
    %cst_221 = arith.constant dense<0.000000e+00> : vector<256x32xf32>
    %304 = tpu.matmul %302, %303, %cst_221 {dimension_numbers = #tpu.dot_dimension_numbers<[1], [0], [0], [1], [0, 0, 1, 1], [], []>} : vector<256x128xf32>, vector<128x32xf32>, vector<256x32xf32> -> vector<256x32xf32>
    %c0_222 = arith.constant 0 : index
    %c0_223 = arith.constant 0 : index
    %305 = vector.load %arg9[%c0_222, %c0_223] : memref<1x32xf32, #tpu.memory_space<vmem>>, vector<1x32xf32>
    %306 = vector.broadcast %305 : vector<1x32xf32> to vector<256x32xf32>
    %307 = arith.addf %304, %306 : vector<256x32xf32>
    %cst_224 = arith.constant 0.000000e+00 : f32
    %308 = vector.broadcast %cst_224 : f32 to vector<256x32xf32>
    %309 = arith.maximumf %307, %308 : vector<256x32xf32>
    %310 = vector.shape_cast %309 : vector<256x32xf32> to vector<1x256x32xf32>
    %c0_225 = arith.constant 0 : index
    %c0_226 = arith.constant 0 : index
    %c0_227 = arith.constant 0 : index
    %311 = vector.load %arg10[%c0_225, %c0_226, %c0_227] : memref<1x256x32xf32, #tpu.memory_space<vmem>>, vector<1x256x32xf32>
    tpu.vector_store %arg10[%c0_225, %c0_226, %c0_227], %310 {strides = array<i32>} : memref<1x256x32xf32, #tpu.memory_space<vmem>>, vector<1x256x32xf32>,
    return
  }
  func.func @transform_0(%arg0: i32) -> (i32, i32, i32, i32) {
    %c0_i32 = arith.constant 0 : i32
    %c0_i32_0 = arith.constant 0 : i32
    %c0_i32_1 = arith.constant 0 : i32
    %c0_i32_2 = arith.constant 0 : i32
    return %arg0, %c0_i32, %c0_i32_0, %c0_i32_1 : i32, i32, i32, i32
  }
  func.func @transform_1(%arg0: i32) -> (i32, i32) {
    %c0_i32 = arith.constant 0 : i32
    %c0_i32_0 = arith.constant 0 : i32
    %c0_i32_1 = arith.constant 0 : i32
    return %c0_i32, %c0_i32_0 : i32, i32
  }
  func.func @transform_2(%arg0: i32) -> (i32, i32) {
    %c0_i32 = arith.constant 0 : i32
    %c0_i32_0 = arith.constant 0 : i32
    %c0_i32_1 = arith.constant 0 : i32
    return %c0_i32, %c0_i32_0 : i32, i32
  }
  func.func @transform_3(%arg0: i32) -> (i32, i32, i32) {
    %c0_i32 = arith.constant 0 : i32
    %c0_i32_0 = arith.constant 0 : i32
    %c0_i32_1 = arith.constant 0 : i32
    %c0_i32_2 = arith.constant 0 : i32
    return %c0_i32, %c0_i32_0, %c0_i32_1 : i32, i32, i32
  }
  func.func @transform_4(%arg0: i32) -> (i32, i32) {
    %c0_i32 = arith.constant 0 : i32
    %c0_i32_0 = arith.constant 0 : i32
    %c0_i32_1 = arith.constant 0 : i32
    return %c0_i32, %c0_i32_0 : i32, i32
  }
  func.func @transform_5(%arg0: i32) -> (i32, i32) {
    %c0_i32 = arith.constant 0 : i32
    %c0_i32_0 = arith.constant 0 : i32
    %c0_i32_1 = arith.constant 0 : i32
    return %c0_i32, %c0_i32_0 : i32, i32
  }
  func.func @transform_6(%arg0: i32) -> (i32, i32) {
    %c0_i32 = arith.constant 0 : i32
    %c0_i32_0 = arith.constant 0 : i32
    %c0_i32_1 = arith.constant 0 : i32
    return %c0_i32, %c0_i32_0 : i32, i32
  }
  func.func @transform_7(%arg0: i32) -> (i32, i32) {
    %c0_i32 = arith.constant 0 : i32
    %c0_i32_0 = arith.constant 0 : i32
    %c0_i32_1 = arith.constant 0 : i32
    return %c0_i32, %c0_i32_0 : i32, i32
  }
  func.func @transform_8(%arg0: i32) -> (i32, i32) {
    %c0_i32 = arith.constant 0 : i32
    %c0_i32_0 = arith.constant 0 : i32
    %c0_i32_1 = arith.constant 0 : i32
    return %c0_i32, %c0_i32_0 : i32, i32
  }
  func.func @transform_9(%arg0: i32) -> (i32, i32, i32) {
    %c0_i32 = arith.constant 0 : i32
    %c0_i32_0 = arith.constant 0 : i32
    %c0_i32_1 = arith.constant 0 : i32
    return %arg0, %c0_i32, %c0_i32_0 : i32, i32, i32
  }
}

</mosaic_0001>

<llo_original>
// kernel: cajpu_forward.2
$region0: #{cajpu_forward.2}
  #allocation0 [shape = 'u32[]', space=smem, size = 0x4, offset = 0x4, fixed_abs, tag = 'smem constant byte address 0x4 - core index']
  #allocation1 [shape = 'u32[144,128]{1,0:T(1,128)}', space=vmem, size = 0x12000, scoped, tag = 'internal scratch']
  #allocation2 [shape = 'f32[1,18,18,8]{3,2,1,0:T(8,128)}', space=vmem, size = 0x36000, scoped, tag = 'scratch operand']
  #allocation3 [shape = 'f32[1,10,10,8]{3,2,1,0:T(8,128)}', space=vmem, size = 0x14000, scoped, tag = 'scratch operand']
  #allocation4 [shape = 'f32[1,6,6,8]{3,2,1,0:T(8,128)}', space=vmem, size = 0x6000, scoped, tag = 'scratch operand']
  %s0 = inlined_call_operand.vmem [shape: f32[2,16,16,8], index: 0, kind: input, shape index: {}]
  %s1 = inlined_call_operand.vmem [shape: f32[2,8,8,8], index: 1, kind: input, shape index: {}]
  %s2 = inlined_call_operand.vmem [shape: f32[2,4,4,8], index: 2, kind: input, shape index: {}]
  %s3 = inlined_call_operand.vmem [shape: f32[72,32], index: 3, kind: input, shape index: {}]
  %s4 = inlined_call_operand.vmem [shape: f32[72,32], index: 4, kind: input, shape index: {}]
  %s5 = inlined_call_operand.vmem [shape: f32[72,32], index: 5, kind: input, shape index: {}]
  %s6 = inlined_call_operand.vmem [shape: f32[1,32], index: 6, kind: input, shape index: {}]
  %s7 = inlined_call_operand.vmem [shape: f32[1,32], index: 7, kind: input, shape index: {}]
  %s8 = inlined_call_operand.vmem [shape: f32[1,32], index: 8, kind: input, shape index: {}]
  %s9 = inlined_call_operand.vmem [shape: f32[2,256,32], index: 9, kind: output, shape index: {0}]
  %s10 = inlined_call_operand.vmem [shape: f32[2,64,32], index: 10, kind: output, shape index: {1}]
  %s11 = inlined_call_operand.vmem [shape: f32[2,16,32], index: 11, kind: output, shape index: {2}]
  %12 = xla_tuple %s9, %s10, %s11
  %s13 = sld [smem:[#allocation0]]
  $region85: #{cajpu_forward.2} parent=0
    _
  %s15 = ssub.s32 1, %s13
  %s16 = scalar_select 0, %s15, %s13
  loop: start=0, step=1, limit=4
  $region2: #{cajpu_forward.2} parent=0 // loop_pre_header
    _
  $region3: #{cajpu_forward.2} parent=0 // loop_header
    %s18 = sphi 0, %s22
    %p19 = scmp.ge.s32.totalorder %s18, 4
    %s28 = sphi 0, %s30
    %s31 = sphi 0, %s28
    %s32 = sphi 0, %s31
    %s48 = sphi 0, %s32
    %s54 = sphi 0, %s56
    %s57 = sphi 0, %s54
    %s58 = sphi 0, %s57
    %s74 = sphi 0, %s58
    %s80 = sphi 0, %s82
    %s83 = sphi 0, %s80
    %s84 = sphi 0, %s83
    %s100 = sphi 0, %s84
    %s104 = sphi 0, %s104
    %s106 = sphi 0, %s104
    %s107 = sphi 0, %s106
    %s121 = sphi 0, %s107
    %s125 = sphi 0, %s125
    %s127 = sphi 0, %s125
    %s128 = sphi 0, %s127
    %s142 = sphi 0, %s128
    %s146 = sphi 0, %s146
    %s148 = sphi 0, %s146
    %s149 = sphi 0, %s148
    %s163 = sphi 0, %s149
    %s167 = sphi 0, %s167
    %s169 = sphi 0, %s167
    %s170 = sphi 0, %s169
    %s184 = sphi 0, %s170
    %s188 = sphi 0, %s188
    %s190 = sphi 0, %s188
    %s191 = sphi 0, %s190
    %s205 = sphi 0, %s191
    %s209 = sphi 0, %s209
    %s211 = sphi 0, %s209
    %s212 = sphi 0, %s211
    %s226 = sphi 0, %s212
    %s232 = sphi 0, %s234
    %s235 = sphi 0, %s232
    %s236 = sphi 0, %s235
    %s252 = sphi 0, %s236
    %s258 = sphi 0, %s260
    %s261 = sphi 0, %s258
    %s262 = sphi 0, %s261
    %s278 = sphi 0, %s262
    %s284 = sphi 0, %s286
    %s287 = sphi 0, %s284
    %s288 = sphi 0, %s287
    %s304 = sphi 0, %s288
  $region4: #{cajpu_forward.2} parent=0 // loop_header_branch
    %21 = sbr.rel (%p19) target = $region8
  $region5: #{cajpu_forward.2} parent=0 // loop_body
    %s23 = ssub.s32 %s18, 1
    %s24 = ssub.s32 %s18, 2
    %s25 = sadd.s32 %s18, 1
    %s26 = ssub.s32 %s18, %s25
    %p27 = scmp.eq.s32.totalorder %s26, 0
    %s29 = sadd.s32 %s28, 1
    %s30 = scalar_select %p27, %s28, %s29
    %p33 = pneg %p27
    %p34 = scmp.eq.s32.totalorder %s18, 1
    %p35 = por %p33, %p34
    %p36 = scmp.ne.s32.totalorder %s28, %s31
    %p37 = scmp.eq.s32.totalorder %s18, 0
    %p38 = por %p36, %p37
    %p39 = scmp.ne.s32.totalorder %s28, %s31
    %p40 = scmp.eq.s32.totalorder %s23, 1
    %p41 = por %p39, %p40
    %p42 = scmp.ne.s32.totalorder %s31, %s32
    %p43 = scmp.eq.s32.totalorder %s23, 0
    %p44 = por %p42, %p43
    %p45 = scmp.ne.s32.totalorder %s31, %s32
    %p46 = scmp.eq.s32.totalorder %s24, 1
    %p47 = por %p45, %p46
    %p49 = scmp.ne.s32.totalorder %s32, %s48
    %p50 = scmp.eq.s32.totalorder %s24, 0
    %p51 = por %p49, %p50
    %s52 = ssub.s32 %s18, %s25
    %p53 = scmp.eq.s32.totalorder %s52, 0
    %s55 = sadd.s32 %s54, 1
    %s56 = scalar_select %p53, %s54, %s55
    %p59 = pneg %p53
    %p60 = scmp.eq.s32.totalorder %s18, 1
    %p61 = por %p59, %p60
    %p62 = scmp.ne.s32.totalorder %s54, %s57
    %p63 = scmp.eq.s32.totalorder %s18, 0
    %p64 = por %p62, %p63
    %p65 = scmp.ne.s32.totalorder %s54, %s57
    %p66 = scmp.eq.s32.totalorder %s23, 1
    %p67 = por %p65, %p66
    %p68 = scmp.ne.s32.totalorder %s57, %s58
    %p69 = scmp.eq.s32.totalorder %s23, 0
    %p70 = por %p68, %p69
    %p71 = scmp.ne.s32.totalorder %s57, %s58
    %p72 = scmp.eq.s32.totalorder %s24, 1
    %p73 = por %p71, %p72
    %p75 = scmp.ne.s32.totalorder %s58, %s74
    %p76 = scmp.eq.s32.totalorder %s24, 0
    %p77 = por %p75, %p76
    %s78 = ssub.s32 %s18, %s25
    %p79 = scmp.eq.s32.totalorder %s78, 0
    %s81 = sadd.s32 %s80, 1
    %s82 = scalar_select %p79, %s80, %s81
    %p85 = pneg %p79
    %p86 = scmp.eq.s32.totalorder %s18, 1
    %p87 = por %p85, %p86
    %p88 = scmp.ne.s32.totalorder %s80, %s83
    %p89 = scmp.eq.s32.totalorder %s18, 0
    %p90 = por %p88, %p89
    %p91 = scmp.ne.s32.totalorder %s80, %s83
    %p92 = scmp.eq.s32.totalorder %s23, 1
    %p93 = por %p91, %p92
    %p94 = scmp.ne.s32.totalorder %s83, %s84
    %p95 = scmp.eq.s32.totalorder %s23, 0
    %p96 = por %p94, %p95
    %p97 = scmp.ne.s32.totalorder %s83, %s84
    %p98 = scmp.eq.s32.totalorder %s24, 1
    %p99 = por %p97, %p98
    %p101 = scmp.ne.s32.totalorder %s84, %s100
    %p102 = scmp.eq.s32.totalorder %s24, 0
    %p103 = por %p101, %p102
    %s105 = sadd.s32 %s104, 1
    %p108 = scmp.eq.s32.totalorder %s18, 1
    %p109 = scmp.ne.s32.totalorder %s104, %s106
    %p110 = scmp.eq.s32.totalorder %s18, 0
    %p111 = por %p109, %p110
    %p112 = scmp.ne.s32.totalorder %s104, %s106
    %p113 = scmp.eq.s32.totalorder %s23, 1
    %p114 = por %p112, %p113
    %p115 = scmp.ne.s32.totalorder %s106, %s107
    %p116 = scmp.eq.s32.totalorder %s23, 0
    %p117 = por %p115, %p116
    %p118 = scmp.ne.s32.totalorder %s106, %s107
    %p119 = scmp.eq.s32.totalorder %s24, 1
    %p120 = por %p118, %p119
    %p122 = scmp.ne.s32.totalorder %s107, %s121
    %p123 = scmp.eq.s32.totalorder %s24, 0
    %p124 = por %p122, %p123
    %s126 = sadd.s32 %s125, 1
    %p129 = scmp.eq.s32.totalorder %s18, 1
    %p130 = scmp.ne.s32.totalorder %s125, %s127
    %p131 = scmp.eq.s32.totalorder %s18, 0
    %p132 = por %p130, %p131
    %p133 = scmp.ne.s32.totalorder %s125, %s127
    %p134 = scmp.eq.s32.totalorder %s23, 1
    %p135 = por %p133, %p134
    %p136 = scmp.ne.s32.totalorder %s127, %s128
    %p137 = scmp.eq.s32.totalorder %s23, 0
    %p138 = por %p136, %p137
    %p139 = scmp.ne.s32.totalorder %s127, %s128
    %p140 = scmp.eq.s32.totalorder %s24, 1
    %p141 = por %p139, %p140
    %p143 = scmp.ne.s32.totalorder %s128, %s142
    %p144 = scmp.eq.s32.totalorder %s24, 0
    %p145 = por %p143, %p144
    %s147 = sadd.s32 %s146, 1
    %p150 = scmp.eq.s32.totalorder %s18, 1
    %p151 = scmp.ne.s32.totalorder %s146, %s148
    %p152 = scmp.eq.s32.totalorder %s18, 0
    %p153 = por %p151, %p152
    %p154 = scmp.ne.s32.totalorder %s146, %s148
    %p155 = scmp.eq.s32.totalorder %s23, 1
    %p156 = por %p154, %p155
    %p157 = scmp.ne.s32.totalorder %s148, %s149
    %p158 = scmp.eq.s32.totalorder %s23, 0
    %p159 = por %p157, %p158
    %p160 = scmp.ne.s32.totalorder %s148, %s149
    %p161 = scmp.eq.s32.totalorder %s24, 1
    %p162 = por %p160, %p161
    %p164 = scmp.ne.s32.totalorder %s149, %s163
    %p165 = scmp.eq.s32.totalorder %s24, 0
    %p166 = por %p164, %p165
    %s168 = sadd.s32 %s167, 1
    %p171 = scmp.eq.s32.totalorder %s18, 1
    %p172 = scmp.ne.s32.totalorder %s167, %s169
    %p173 = scmp.eq.s32.totalorder %s18, 0
    %p174 = por %p172, %p173
    %p175 = scmp.ne.s32.totalorder %s167, %s169
    %p176 = scmp.eq.s32.totalorder %s23, 1
    %p177 = por %p175, %p176
    %p178 = scmp.ne.s32.totalorder %s169, %s170
    %p179 = scmp.eq.s32.totalorder %s23, 0
    %p180 = por %p178, %p179
    %p181 = scmp.ne.s32.totalorder %s169, %s170
    %p182 = scmp.eq.s32.totalorder %s24, 1
    %p183 = por %p181, %p182
    %p185 = scmp.ne.s32.totalorder %s170, %s184
    %p186 = scmp.eq.s32.totalorder %s24, 0
    %p187 = por %p185, %p186
    %s189 = sadd.s32 %s188, 1
    %p192 = scmp.eq.s32.totalorder %s18, 1
    %p193 = scmp.ne.s32.totalorder %s188, %s190
    %p194 = scmp.eq.s32.totalorder %s18, 0
    %p195 = por %p193, %p194
    %p196 = scmp.ne.s32.totalorder %s188, %s190
    %p197 = scmp.eq.s32.totalorder %s23, 1
    %p198 = por %p196, %p197
    %p199 = scmp.ne.s32.totalorder %s190, %s191
    %p200 = scmp.eq.s32.totalorder %s23, 0
    %p201 = por %p199, %p200
    %p202 = scmp.ne.s32.totalorder %s190, %s191
    %p203 = scmp.eq.s32.totalorder %s24, 1
    %p204 = por %p202, %p203
    %p206 = scmp.ne.s32.totalorder %s191, %s205
    %p207 = scmp.eq.s32.totalorder %s24, 0
    %p208 = por %p206, %p207
    %s210 = sadd.s32 %s209, 1
    %p213 = scmp.eq.s32.totalorder %s18, 1
    %p214 = scmp.ne.s32.totalorder %s209, %s211
    %p215 = scmp.eq.s32.totalorder %s18, 0
    %p216 = por %p214, %p215
    %p217 = scmp.ne.s32.totalorder %s209, %s211
    %p218 = scmp.eq.s32.totalorder %s23, 1
    %p219 = por %p217, %p218
    %p220 = scmp.ne.s32.totalorder %s211, %s212
    %p221 = scmp.eq.s32.totalorder %s23, 0
    %p222 = por %p220, %p221
    %p223 = scmp.ne.s32.totalorder %s211, %s212
    %p224 = scmp.eq.s32.totalorder %s24, 1
    %p225 = por %p223, %p224
    %p227 = scmp.ne.s32.totalorder %s212, %s226
    %p228 = scmp.eq.s32.totalorder %s24, 0
    %p229 = por %p227, %p228
    %s230 = ssub.s32 %s18, %s25
    %p231 = scmp.eq.s32.totalorder %s230, 0
    %s233 = sadd.s32 %s232, 1
    %s234 = scalar_select %p231, %s232, %s233
    %p237 = pneg %p231
    %p238 = scmp.eq.s32.totalorder %s18, 1
    %p239 = por %p237, %p238
    %p240 = scmp.ne.s32.totalorder %s232, %s235
    %p241 = scmp.eq.s32.totalorder %s18, 0
    %p242 = por %p240, %p241
    %p243 = scmp.ne.s32.totalorder %s232, %s235
    %p244 = scmp.eq.s32.totalorder %s23, 1
    %p245 = por %p243, %p244
    %p246 = scmp.ne.s32.totalorder %s235, %s236
    %p247 = scmp.eq.s32.totalorder %s23, 0
    %p248 = por %p246, %p247
    %p249 = scmp.ne.s32.totalorder %s235, %s236
    %p250 = scmp.eq.s32.totalorder %s24, 1
    %p251 = por %p249, %p250
    %p253 = scmp.ne.s32.totalorder %s236, %s252
    %p254 = scmp.eq.s32.totalorder %s24, 0
    %p255 = por %p253, %p254
    %s256 = ssub.s32 %s18, %s25
    %p257 = scmp.eq.s32.totalorder %s256, 0
    %s259 = sadd.s32 %s258, 1
    %s260 = scalar_select %p257, %s258, %s259
    %p263 = pneg %p257
    %p264 = scmp.eq.s32.totalorder %s18, 1
    %p265 = por %p263, %p264
    %p266 = scmp.ne.s32.totalorder %s258, %s261
    %p267 = scmp.eq.s32.totalorder %s18, 0
    %p268 = por %p266, %p267
    %p269 = scmp.ne.s32.totalorder %s258, %s261
    %p270 = scmp.eq.s32.totalorder %s23, 1
    %p271 = por %p269, %p270
    %p272 = scmp.ne.s32.totalorder %s261, %s262
    %p273 = scmp.eq.s32.totalorder %s23, 0
    %p274 = por %p272, %p273
    %p275 = scmp.ne.s32.totalorder %s261, %s262
    %p276 = scmp.eq.s32.totalorder %s24, 1
    %p277 = por %p275, %p276
    %p279 = scmp.ne.s32.totalorder %s262, %s278
    %p280 = scmp.eq.s32.totalorder %s24, 0
    %p281 = por %p279, %p280
    %s282 = ssub.s32 %s18, %s25
    %p283 = scmp.eq.s32.totalorder %s282, 0
    %s285 = sadd.s32 %s284, 1
    %s286 = scalar_select %p283, %s284, %s285
    %p289 = pneg %p283
    %p290 = scmp.eq.s32.totalorder %s18, 1
    %p291 = por %p289, %p290
    %p292 = scmp.ne.s32.totalorder %s284, %s287
    %p293 = scmp.eq.s32.totalorder %s18, 0
    %p294 = por %p292, %p293
    %p295 = scmp.ne.s32.totalorder %s284, %s287
    %p296 = scmp.eq.s32.totalorder %s23, 1
    %p297 = por %p295, %p296
    %p298 = scmp.ne.s32.totalorder %s287, %s288
    %p299 = scmp.eq.s32.totalorder %s23, 0
    %p300 = por %p298, %p299
    %p301 = scmp.ne.s32.totalorder %s287, %s288
    %p302 = scmp.eq.s32.totalorder %s24, 1
    %p303 = por %p301, %p302
    %p305 = scmp.ne.s32.totalorder %s288, %s304
    %p306 = scmp.eq.s32.totalorder %s24, 0
    %p307 = por %p305, %p306
    %p308 = scmp.le.s32.totalorder 1, %s18
    %p309 = scmp.lt.s32.totalorder %s18, 3
    %p310 = pnand %p308, %p309
    %p311 = pneg %p310
    // Predicated region
    $region9: #{cajpu_forward.2} parent=5 // pred_check
      _
    $region10: #{cajpu_forward.2} parent=5 // pred_check_branch
      %313 = sbr.rel (%p310) target = $region12
    $region11: #{cajpu_forward.2} parent=5 // pred_region
      %s314 = ssub.s32 %s18, 1
      // Predicated region
      $region13: #{cajpu_forward.2} parent=11 // pred_check
        %p315 = pneg %p117
      $region14: #{cajpu_forward.2} parent=11 // pred_check_branch
        %317 = sbr.rel (%p315) target = $region16
      $region15: #{cajpu_forward.2} parent=11 // pred_region
        _
      $region16: #{cajpu_forward.2} parent=11 // pred_fallthru
        _
      // Predicated region
      $region17: #{cajpu_forward.2} parent=11 // pred_check
        %p318 = pneg %p138
      $region18: #{cajpu_forward.2} parent=11 // pred_check_branch
        %320 = sbr.rel (%p318) target = $region20
      $region19: #{cajpu_forward.2} parent=11 // pred_region
        _
      $region20: #{cajpu_forward.2} parent=11 // pred_fallthru
        _
      // Predicated region
      $region21: #{cajpu_forward.2} parent=11 // pred_check
        %p321 = pneg %p159
      $region22: #{cajpu_forward.2} parent=11 // pred_check_branch
        %323 = sbr.rel (%p321) target = $region24
      $region23: #{cajpu_forward.2} parent=11 // pred_region
        _
      $region24: #{cajpu_forward.2} parent=11 // pred_fallthru
        _
      // Predicated region
      $region25: #{cajpu_forward.2} parent=11 // pred_check
        %p324 = pneg %p180
      $region26: #{cajpu_forward.2} parent=11 // pred_check_branch
        %326 = sbr.rel (%p324) target = $region28
      $region27: #{cajpu_forward.2} parent=11 // pred_region
        _
      $region28: #{cajpu_forward.2} parent=11 // pred_fallthru
        _
      // Predicated region
      $region29: #{cajpu_forward.2} parent=11 // pred_check
        %p327 = pneg %p201
      $region30: #{cajpu_forward.2} parent=11 // pred_check_branch
        %329 = sbr.rel (%p327) target = $region32
      $region31: #{cajpu_forward.2} parent=11 // pred_region
        _
      $region32: #{cajpu_forward.2} parent=11 // pred_fallthru
        _
      // Predicated region
      $region33: #{cajpu_forward.2} parent=11 // pred_check
        %p330 = pneg %p222
      $region34: #{cajpu_forward.2} parent=11 // pred_check_branch
        %332 = sbr.rel (%p330) target = $region36
      $region35: #{cajpu_forward.2} parent=11 // pred_region
        _
      $region36: #{cajpu_forward.2} parent=11 // pred_fallthru
        _
    $region12: #{cajpu_forward.2} parent=5 // pred_fallthru
      _
    %p333 = scmp.lt.s32.totalorder %s18, 2
    // Predicated region
    $region37: #{cajpu_forward.2} parent=5 // pred_check
      %p334 = pneg %p333
    $region38: #{cajpu_forward.2} parent=5 // pred_check_branch
      %336 = sbr.rel (%p334) target = $region40
    $region39: #{cajpu_forward.2} parent=5 // pred_region
      // Predicated region
      $region41: #{cajpu_forward.2} parent=39 // pred_check
        %p337 = pneg %p38
      $region42: #{cajpu_forward.2} parent=39 // pred_check_branch
        %339 = sbr.rel (%p337) target = $region44
      $region43: #{cajpu_forward.2} parent=39 // pred_region
        %p340 = scmp.lt.s32.totalorder %s18, 1
        %s341 = scalar_select %p340, %s18, 1
        %s342 = smul.addr %s341, 32
        %s343 = smul.addr %s342, 8
        %s344 = scalar_lea.vmem %s0, %s343
      $region44: #{cajpu_forward.2} parent=39 // pred_fallthru
        _
      // Predicated region
      $region45: #{cajpu_forward.2} parent=39 // pred_check
        %p345 = pneg %p64
      $region46: #{cajpu_forward.2} parent=39 // pred_check_branch
        %347 = sbr.rel (%p345) target = $region48
      $region47: #{cajpu_forward.2} parent=39 // pred_region
        %p348 = scmp.lt.s32.totalorder %s18, 1
        %s349 = scalar_select %p348, %s18, 1
        %s350 = smul.addr %s349, 8
        %s351 = smul.addr %s350, 8
        %s352 = scalar_lea.vmem %s1, %s351
      $region48: #{cajpu_forward.2} parent=39 // pred_fallthru
        _
      // Predicated region
      $region49: #{cajpu_forward.2} parent=39 // pred_check
        %p353 = pneg %p90
      $region50: #{cajpu_forward.2} parent=39 // pred_check_branch
        %355 = sbr.rel (%p353) target = $region52
      $region51: #{cajpu_forward.2} parent=39 // pred_region
        %p356 = scmp.lt.s32.totalorder %s18, 1
        %s357 = scalar_select %p356, %s18, 1
        %s358 = smul.addr %s357, 4
        %s359 = smul.addr %s358, 4
        %s360 = scalar_lea.vmem %s2, %s359
      $region52: #{cajpu_forward.2} parent=39 // pred_fallthru
        _
    $region40: #{cajpu_forward.2} parent=5 // pred_fallthru
      _
    %p361 = scmp.le.s32.totalorder 1, %s18
    %p362 = scmp.lt.s32.totalorder %s18, 3
    %p363 = pnand %p361, %p362
    %p364 = pneg %p363
    // Predicated region
    $region53: #{cajpu_forward.2} parent=5 // pred_check
      _
    $region54: #{cajpu_forward.2} parent=5 // pred_check_branch
      %366 = sbr.rel (%p363) target = $region56
    $region55: #{cajpu_forward.2} parent=5 // pred_region
      %s367 = ssub.s32 %s18, 1
      %p368 = scmp.lt.s32.totalorder %s23, 1
      %s369 = scalar_select %p368, %s23, 1
      %s370 = smul.addr %s369, 32
      %s371 = smul.addr %s370, 8
      %s372 = scalar_lea.vmem %s0, %s371
      %p373 = pneg %p44
      %p374 = pneg %p41
      %p375 = scmp.lt.s32.totalorder %s23, 1
      %s376 = scalar_select %p375, %s23, 1
      %s377 = smul.addr %s376, 8
      %s378 = smul.addr %s377, 8
      %s379 = scalar_lea.vmem %s1, %s378
      %p380 = pneg %p70
      %p381 = pneg %p67
      %p382 = scmp.lt.s32.totalorder %s23, 1
      %s383 = scalar_select %p382, %s23, 1
      %s384 = smul.addr %s383, 4
      %s385 = smul.addr %s384, 4
      %s386 = scalar_lea.vmem %s2, %s385
      %p387 = pneg %p96
      %p388 = pneg %p93
      %p389 = pneg %p117
      %p390 = pneg %p114
      %p391 = pneg %p138
      %p392 = pneg %p135
      %p393 = pneg %p159
      %p394 = pneg %p156
      %p395 = pneg %p180
      %p396 = pneg %p177
      %p397 = pneg %p201
      %p398 = pneg %p198
      %p399 = pneg %p222
      %p400 = pneg %p219
      %p401 = pneg %p248
      %p402 = pneg %p245
      %p403 = scmp.lt.s32.totalorder %s23, 1
      %s404 = scalar_select %p403, %s23, 1
      %s405 = smul.addr %s404, 32
      %s406 = smul.addr %s405, 8
      %s407 = scalar_lea.vmem %s9, %s406
      %p408 = pneg %p274
      %p409 = pneg %p271
      %p410 = scmp.lt.s32.totalorder %s23, 1
      %s411 = scalar_select %p410, %s23, 1
      %s412 = smul.addr %s411, 8
      %s413 = smul.addr %s412, 8
      %s414 = scalar_lea.vmem %s10, %s413
      %p415 = pneg %p300
      %p416 = pneg %p297
      %p417 = scmp.lt.s32.totalorder %s23, 1
      %s418 = scalar_select %p417, %s23, 1
      %s419 = smul.addr %s418, 2
      %s420 = smul.addr %s419, 8
      %s421 = scalar_lea.vmem %s11, %s420
      %p422 = scmp.lt.s32.totalorder %s23, 1
      %s423 = scalar_select %p422, %s23, 1
      %s424 = smul.addr %s423, 32
      %s425 = smul.addr %s424, 8
      %s426 = scalar_lea.vmem %s0, %s425
      %p427 = scmp.lt.s32.totalorder %s23, 1
      %s428 = scalar_select %p427, %s23, 1
      %s429 = smul.addr %s428, 8
      %s430 = smul.addr %s429, 8
      %s431 = scalar_lea.vmem %s1, %s430
      %p432 = scmp.lt.s32.totalorder %s23, 1
      %s433 = scalar_select %p432, %s23, 1
      %s434 = smul.addr %s433, 4
      %s435 = smul.addr %s434, 4
      %s436 = scalar_lea.vmem %s2, %s435
      %p437 = scmp.lt.s32.totalorder %s23, 1
      %s438 = scalar_select %p437, %s23, 1
      %s439 = smul.addr %s438, 32
      %s440 = smul.addr %s439, 8
      %s441 = scalar_lea.vmem %s9, %s440
      %p442 = scmp.lt.s32.totalorder %s23, 1
      %s443 = scalar_select %p442, %s23, 1
      %s444 = smul.addr %s443, 8
      %s445 = smul.addr %s444, 8
      %s446 = scalar_lea.vmem %s10, %s445
      %p447 = scmp.lt.s32.totalorder %s23, 1
      %s448 = scalar_select %p447, %s23, 1
      %s449 = smul.addr %s448, 2
      %s450 = smul.addr %s449, 8
      %s451 = scalar_lea.vmem %s11, %s450
      %vm452 = vcmask 64512
      %453 = vst.msk [vmem:[#allocation2] sm:$0xff] %vm452, 0.0
      %454 = vst.msk [vmem:[#allocation2 + $0x8] sm:$0xff] %vm452, 0.0
      %vm455 = vcmask 58368
      %456 = vst.msk [vmem:[#allocation2 + $0x10] sm:$0x3] %vm455, 0.0
      %s457 = scalar_lea.vmem [#allocation2], 408
      %458 = vst.msk [vmem:[%s457] sm:$0xff] %vm452, 0.0
      %459 = vst.msk [vmem:[%s457 + $0x8] sm:$0xff] %vm452, 0.0
      %460 = vst.msk [vmem:[%s457 + $0x10] sm:$0x3] %vm455, 0.0
      %s461 = scalar_lea.vmem [#allocation2], 24
      %vm462 = vcmask 57344
      %463 = vst.msk [vmem:[%s461] sm:$0x1] %vm462, 0.0
      %464 = vst.msk [vmem:[%s461 + $0x18] sm:$0x1] %vm462, 0.0
      %465 = vst.msk [vmem:[%s461 + $0x30] sm:$0x1] %vm462, 0.0
      %466 = vst.msk [vmem:[%s461 + $0x48] sm:$0x1] %vm462, 0.0
      %467 = vst.msk [vmem:[%s461 + $0x60] sm:$0x1] %vm462, 0.0
      %468 = vst.msk [vmem:[%s461 + $0x78] sm:$0x1] %vm462, 0.0
      %469 = vst.msk [vmem:[%s461 + $0x90] sm:$0x1] %vm462, 0.0
      %470 = vst.msk [vmem:[%s461 + $0xa8] sm:$0x1] %vm462, 0.0
      %471 = vst.msk [vmem:[%s461 + $0xc0] sm:$0x1] %vm462, 0.0
      %472 = vst.msk [vmem:[%s461 + $0xd8] sm:$0x1] %vm462, 0.0
      %473 = vst.msk [vmem:[%s461 + $0xf0] sm:$0x1] %vm462, 0.0
      %474 = vst.msk [vmem:[%s461 + $0x108] sm:$0x1] %vm462, 0.0
      %475 = vst.msk [vmem:[%s461 + $0x120] sm:$0x1] %vm462, 0.0
      %476 = vst.msk [vmem:[%s461 + $0x138] sm:$0x1] %vm462, 0.0
      %477 = vst.msk [vmem:[%s461 + $0x150] sm:$0x1] %vm462, 0.0
      %478 = vst.msk [vmem:[%s461 + $0x168] sm:$0x1] %vm462, 0.0
      %479 = vst.msk [vmem:[%s461 + $0x11] sm:$0x1] %vm462, 0.0
      %480 = vst.msk [vmem:[%s461 + $0x29] sm:$0x1] %vm462, 0.0
      %481 = vst.msk [vmem:[%s461 + $0x41] sm:$0x1] %vm462, 0.0
      %482 = vst.msk [vmem:[%s461 + $0x59] sm:$0x1] %vm462, 0.0
      %483 = vst.msk [vmem:[%s461 + $0x71] sm:$0x1] %vm462, 0.0
      %484 = vst.msk [vmem:[%s461 + $0x89] sm:$0x1] %vm462, 0.0
      %485 = vst.msk [vmem:[%s461 + $0xa1] sm:$0x1] %vm462, 0.0
      %486 = vst.msk [vmem:[%s461 + $0xb9] sm:$0x1] %vm462, 0.0
      %487 = vst.msk [vmem:[%s461 + $0xd1] sm:$0x1] %vm462, 0.0
      %488 = vst.msk [vmem:[%s461 + $0xe9] sm:$0x1] %vm462, 0.0
      %489 = vst.msk [vmem:[%s461 + $0x101] sm:$0x1] %vm462, 0.0
      %490 = vst.msk [vmem:[%s461 + $0x119] sm:$0x1] %vm462, 0.0
      %491 = vst.msk [vmem:[%s461 + $0x131] sm:$0x1] %vm462, 0.0
      %492 = vst.msk [vmem:[%s461 + $0x149] sm:$0x1] %vm462, 0.0
      %493 = vst.msk [vmem:[%s461 + $0x161] sm:$0x1] %vm462, 0.0
      %494 = vst.msk [vmem:[%s461 + $0x179] sm:$0x1] %vm462, 0.0
      %v495 = vld [vmem:[%s426] sm:$0xff]
      %v496 = vld [vmem:[%s426 + $0x8] sm:$0xff]
      %v497 = vld [vmem:[%s426 + $0x10] sm:$0xff]
      %v498 = vld [vmem:[%s426 + $0x18] sm:$0xff]
      %v499 = vld [vmem:[%s426 + $0x20] sm:$0xff]
      %v500 = vld [vmem:[%s426 + $0x28] sm:$0xff]
      %v501 = vld [vmem:[%s426 + $0x30] sm:$0xff]
      %v502 = vld [vmem:[%s426 + $0x38] sm:$0xff]
      %v503 = vld [vmem:[%s426 + $0x40] sm:$0xff]
      %v504 = vld [vmem:[%s426 + $0x48] sm:$0xff]
      %v505 = vld [vmem:[%s426 + $0x50] sm:$0xff]
      %v506 = vld [vmem:[%s426 + $0x58] sm:$0xff]
      %v507 = vld [vmem:[%s426 + $0x60] sm:$0xff]
      %v508 = vld [vmem:[%s426 + $0x68] sm:$0xff]
      %v509 = vld [vmem:[%s426 + $0x70] sm:$0xff]
      %v510 = vld [vmem:[%s426 + $0x78] sm:$0xff]
      %v511 = vld [vmem:[%s426 + $0x80] sm:$0xff]
      %v512 = vld [vmem:[%s426 + $0x88] sm:$0xff]
      %v513 = vld [vmem:[%s426 + $0x90] sm:$0xff]
      %v514 = vld [vmem:[%s426 + $0x98] sm:$0xff]
      %v515 = vld [vmem:[%s426 + $0xa0] sm:$0xff]
      %v516 = vld [vmem:[%s426 + $0xa8] sm:$0xff]
      %v517 = vld [vmem:[%s426 + $0xb0] sm:$0xff]
      %v518 = vld [vmem:[%s426 + $0xb8] sm:$0xff]
      %v519 = vld [vmem:[%s426 + $0xc0] sm:$0xff]
      %v520 = vld [vmem:[%s426 + $0xc8] sm:$0xff]
      %v521 = vld [vmem:[%s426 + $0xd0] sm:$0xff]
      %v522 = vld [vmem:[%s426 + $0xd8] sm:$0xff]
      %v523 = vld [vmem:[%s426 + $0xe0] sm:$0xff]
      %v524 = vld [vmem:[%s426 + $0xe8] sm:$0xff]
      %v525 = vld [vmem:[%s426 + $0xf0] sm:$0xff]
      %v526 = vld [vmem:[%s426 + $0xf8] sm:$0xff]
      %527 = vst.msk [vmem:[%s461 + $0x1] sm:$0xff] %vm452, %v495
      %528 = vst.msk [vmem:[%s461 + $0x9] sm:$0xff] %vm452, %v496
      %529 = vst.msk [vmem:[%s461 + $0x19] sm:$0xff] %vm452, %v497
      %530 = vst.msk [vmem:[%s461 + $0x21] sm:$0xff] %vm452, %v498
      %531 = vst.msk [vmem:[%s461 + $0x31] sm:$0xff] %vm452, %v499
      %532 = vst.msk [vmem:[%s461 + $0x39] sm:$0xff] %vm452, %v500
      %533 = vst.msk [vmem:[%s461 + $0x49] sm:$0xff] %vm452, %v501
      %534 = vst.msk [vmem:[%s461 + $0x51] sm:$0xff] %vm452, %v502
      %535 = vst.msk [vmem:[%s461 + $0x61] sm:$0xff] %vm452, %v503
      %536 = vst.msk [vmem:[%s461 + $0x69] sm:$0xff] %vm452, %v504
      %537 = vst.msk [vmem:[%s461 + $0x79] sm:$0xff] %vm452, %v505
      %538 = vst.msk [vmem:[%s461 + $0x81] sm:$0xff] %vm452, %v506
      %539 = vst.msk [vmem:[%s461 + $0x91] sm:$0xff] %vm452, %v507
      %540 = vst.msk [vmem:[%s461 + $0x99] sm:$0xff] %vm452, %v508
      %541 = vst.msk [vmem:[%s461 + $0xa9] sm:$0xff] %vm452, %v509
      %542 = vst.msk [vmem:[%s461 + $0xb1] sm:$0xff] %vm452, %v510
      %543 = vst.msk [vmem:[%s461 + $0xc1] sm:$0xff] %vm452, %v511
      %544 = vst.msk [vmem:[%s461 + $0xc9] sm:$0xff] %vm452, %v512
      %545 = vst.msk [vmem:[%s461 + $0xd9] sm:$0xff] %vm452, %v513
      %546 = vst.msk [vmem:[%s461 + $0xe1] sm:$0xff] %vm452, %v514
      %547 = vst.msk [vmem:[%s461 + $0xf1] sm:$0xff] %vm452, %v515
      %548 = vst.msk [vmem:[%s461 + $0xf9] sm:$0xff] %vm452, %v516
      %549 = vst.msk [vmem:[%s461 + $0x109] sm:$0xff] %vm452, %v517
      %550 = vst.msk [vmem:[%s461 + $0x111] sm:$0xff] %vm452, %v518
      %551 = vst.msk [vmem:[%s461 + $0x121] sm:$0xff] %vm452, %v519
      %552 = vst.msk [vmem:[%s461 + $0x129] sm:$0xff] %vm452, %v520
      %553 = vst.msk [vmem:[%s461 + $0x139] sm:$0xff] %vm452, %v521
      %554 = vst.msk [vmem:[%s461 + $0x141] sm:$0xff] %vm452, %v522
      %555 = vst.msk [vmem:[%s461 + $0x151] sm:$0xff] %vm452, %v523
      %556 = vst.msk [vmem:[%s461 + $0x159] sm:$0xff] %vm452, %v524
      %557 = vst.msk [vmem:[%s461 + $0x169] sm:$0xff] %vm452, %v525
      %558 = vst.msk [vmem:[%s461 + $0x171] sm:$0xff] %vm452, %v526
      %v559 = vld [vmem:[#allocation2] sm:$0xff]
      %v560 = vld [vmem:[#allocation2 + $0x8] sm:$0xff]
      %v561 = vld [vmem:[#allocation2 + $0x18] sm:$0xff]
      %v562 = vld [vmem:[#allocation2 + $0x20] sm:$0xff]
      %v563 = vld [vmem:[#allocation2 + $0x30] sm:$0xff]
      %v564 = vld [vmem:[#allocation2 + $0x38] sm:$0xff]
      %v565 = vld [vmem:[#allocation2 + $0x48] sm:$0xff]
      %v566 = vld [vmem:[#allocation2 + $0x50] sm:$0xff]
      %v567 = vld [vmem:[#allocation2 + $0x60] sm:$0xff]
      %v568 = vld [vmem:[#allocation2 + $0x68] sm:$0xff]
      %v569 = vld [vmem:[#allocation2 + $0x78] sm:$0xff]
      %v570 = vld [vmem:[#allocation2 + $0x80] sm:$0xff]
      %v571 = vld [vmem:[#allocation2 + $0x90] sm:$0xff]
      %v572 = vld [vmem:[#allocation2 + $0x98] sm:$0xff]
      %v573 = vld [vmem:[#allocation2 + $0xa8] sm:$0xff]
      %v574 = vld [vmem:[#allocation2 + $0xb0] sm:$0xff]
      %v575 = vld [vmem:[#allocation2 + $0xc0] sm:$0xff]
      %v576 = vld [vmem:[#allocation2 + $0xc8] sm:$0xff]
      %v577 = vld [vmem:[#allocation2 + $0xd8] sm:$0xff]
      %v578 = vld [vmem:[#allocation2 + $0xe0] sm:$0xff]
      %v579 = vld [vmem:[#allocation2 + $0xf0] sm:$0xff]
      %v580 = vld [vmem:[#allocation2 + $0xf8] sm:$0xff]
      %v581 = vld [vmem:[#allocation2 + $0x108] sm:$0xff]
      %v582 = vld [vmem:[#allocation2 + $0x110] sm:$0xff]
      %v583 = vld [vmem:[#allocation2 + $0x120] sm:$0xff]
      %v584 = vld [vmem:[#allocation2 + $0x128] sm:$0xff]
      %v585 = vld [vmem:[#allocation2 + $0x138] sm:$0xff]
      %v586 = vld [vmem:[#allocation2 + $0x140] sm:$0xff]
      %v587 = vld [vmem:[#allocation2 + $0x150] sm:$0xff]
      %v588 = vld [vmem:[#allocation2 + $0x158] sm:$0xff]
      %v589 = vld [vmem:[#allocation2 + $0x168] sm:$0xff]
      %v590 = vld [vmem:[#allocation2 + $0x170] sm:$0xff]
      %v591 = vld [vmem:[#allocation2 + $0x1] sm:$0xff]
      %v592 = vld [vmem:[#allocation2 + $0x9] sm:$0xff]
      %v593 = vld [vmem:[#allocation2 + $0x19] sm:$0xff]
      %v594 = vld [vmem:[#allocation2 + $0x21] sm:$0xff]
      %v595 = vld [vmem:[#allocation2 + $0x31] sm:$0xff]
      %v596 = vld [vmem:[#allocation2 + $0x39] sm:$0xff]
      %v597 = vld [vmem:[#allocation2 + $0x49] sm:$0xff]
      %v598 = vld [vmem:[#allocation2 + $0x51] sm:$0xff]
      %v599 = vld [vmem:[#allocation2 + $0x61] sm:$0xff]
      %v600 = vld [vmem:[#allocation2 + $0x69] sm:$0xff]
      %v601 = vld [vmem:[#allocation2 + $0x79] sm:$0xff]
      %v602 = vld [vmem:[#allocation2 + $0x81] sm:$0xff]
      %v603 = vld [vmem:[#allocation2 + $0x91] sm:$0xff]
      %v604 = vld [vmem:[#allocation2 + $0x99] sm:$0xff]
      %v605 = vld [vmem:[#allocation2 + $0xa9] sm:$0xff]
      %v606 = vld [vmem:[#allocation2 + $0xb1] sm:$0xff]
      %v607 = vld [vmem:[#allocation2 + $0xc1] sm:$0xff]
      %v608 = vld [vmem:[#allocation2 + $0xc9] sm:$0xff]
      %v609 = vld [vmem:[#allocation2 + $0xd9] sm:$0xff]
      %v610 = vld [vmem:[#allocation2 + $0xe1] sm:$0xff]
      %v611 = vld [vmem:[#allocation2 + $0xf1] sm:$0xff]
      %v612 = vld [vmem:[#allocation2 + $0xf9] sm:$0xff]
      %v613 = vld [vmem:[#allocation2 + $0x109] sm:$0xff]
      %v614 = vld [vmem:[#allocation2 + $0x111] sm:$0xff]
      %v615 = vld [vmem:[#allocation2 + $0x121] sm:$0xff]
      %v616 = vld [vmem:[#allocation2 + $0x129] sm:$0xff]
      %v617 = vld [vmem:[#allocation2 + $0x139] sm:$0xff]
      %v618 = vld [vmem:[#allocation2 + $0x141] sm:$0xff]
      %v619 = vld [vmem:[#allocation2 + $0x151] sm:$0xff]
      %v620 = vld [vmem:[#allocation2 + $0x159] sm:$0xff]
      %v621 = vld [vmem:[#allocation2 + $0x169] sm:$0xff]
      %v622 = vld [vmem:[#allocation2 + $0x171] sm:$0xff]
      %v623 = vld [vmem:[#allocation2 + $0x2] sm:$0xff]
      %v624 = vld [vmem:[#allocation2 + $0xa] sm:$0xff]
      %v625 = vld [vmem:[#allocation2 + $0x1a] sm:$0xff]
      %v626 = vld [vmem:[#allocation2 + $0x22] sm:$0xff]
      %v627 = vld [vmem:[#allocation2 + $0x32] sm:$0xff]
      %v628 = vld [vmem:[#allocation2 + $0x3a] sm:$0xff]
      %v629 = vld [vmem:[#allocation2 + $0x4a] sm:$0xff]
      %v630 = vld [vmem:[#allocation2 + $0x52] sm:$0xff]
      %v631 = vld [vmem:[#allocation2 + $0x62] sm:$0xff]
      %v632 = vld [vmem:[#allocation2 + $0x6a] sm:$0xff]
      %v633 = vld [vmem:[#allocation2 + $0x7a] sm:$0xff]
      %v634 = vld [vmem:[#allocation2 + $0x82] sm:$0xff]
      %v635 = vld [vmem:[#allocation2 + $0x92] sm:$0xff]
      %v636 = vld [vmem:[#allocation2 + $0x9a] sm:$0xff]
      %v637 = vld [vmem:[#allocation2 + $0xaa] sm:$0xff]
      %v638 = vld [vmem:[#allocation2 + $0xb2] sm:$0xff]
      %v639 = vld [vmem:[#allocation2 + $0xc2] sm:$0xff]
      %v640 = vld [vmem:[#allocation2 + $0xca] sm:$0xff]
      %v641 = vld [vmem:[#allocation2 + $0xda] sm:$0xff]
      %v642 = vld [vmem:[#allocation2 + $0xe2] sm:$0xff]
      %v643 = vld [vmem:[#allocation2 + $0xf2] sm:$0xff]
      %v644 = vld [vmem:[#allocation2 + $0xfa] sm:$0xff]
      %v645 = vld [vmem:[#allocation2 + $0x10a] sm:$0xff]
      %v646 = vld [vmem:[#allocation2 + $0x112] sm:$0xff]
      %v647 = vld [vmem:[#allocation2 + $0x122] sm:$0xff]
      %v648 = vld [vmem:[#allocation2 + $0x12a] sm:$0xff]
      %v649 = vld [vmem:[#allocation2 + $0x13a] sm:$0xff]
      %v650 = vld [vmem:[#allocation2 + $0x142] sm:$0xff]
      %v651 = vld [vmem:[#allocation2 + $0x152] sm:$0xff]
      %v652 = vld [vmem:[#allocation2 + $0x15a] sm:$0xff]
      %v653 = vld [vmem:[#allocation2 + $0x16a] sm:$0xff]
      %v654 = vld [vmem:[#allocation2 + $0x172] sm:$0xff]
      %v655 = vld [vmem:[%s461] sm:$0xff]
      %v656 = vld [vmem:[%s461 + $0x8] sm:$0xff]
      %v657 = vld [vmem:[%s461 + $0x18] sm:$0xff]
      %v658 = vld [vmem:[%s461 + $0x20] sm:$0xff]
      %v659 = vld [vmem:[%s461 + $0x30] sm:$0xff]
      %v660 = vld [vmem:[%s461 + $0x38] sm:$0xff]
      %v661 = vld [vmem:[%s461 + $0x48] sm:$0xff]
      %v662 = vld [vmem:[%s461 + $0x50] sm:$0xff]
      %v663 = vld [vmem:[%s461 + $0x60] sm:$0xff]
      %v664 = vld [vmem:[%s461 + $0x68] sm:$0xff]
      %v665 = vld [vmem:[%s461 + $0x78] sm:$0xff]
      %v666 = vld [vmem:[%s461 + $0x80] sm:$0xff]
      %v667 = vld [vmem:[%s461 + $0x90] sm:$0xff]
      %v668 = vld [vmem:[%s461 + $0x98] sm:$0xff]
      %v669 = vld [vmem:[%s461 + $0xa8] sm:$0xff]
      %v670 = vld [vmem:[%s461 + $0xb0] sm:$0xff]
      %v671 = vld [vmem:[%s461 + $0xc0] sm:$0xff]
      %v672 = vld [vmem:[%s461 + $0xc8] sm:$0xff]
      %v673 = vld [vmem:[%s461 + $0xd8] sm:$0xff]
      %v674 = vld [vmem:[%s461 + $0xe0] sm:$0xff]
      %v675 = vld [vmem:[%s461 + $0xf0] sm:$0xff]
      %v676 = vld [vmem:[%s461 + $0xf8] sm:$0xff]
      %v677 = vld [vmem:[%s461 + $0x108] sm:$0xff]
      %v678 = vld [vmem:[%s461 + $0x110] sm:$0xff]
      %v679 = vld [vmem:[%s461 + $0x120] sm:$0xff]
      %v680 = vld [vmem:[%s461 + $0x128] sm:$0xff]
      %v681 = vld [vmem:[%s461 + $0x138] sm:$0xff]
      %v682 = vld [vmem:[%s461 + $0x140] sm:$0xff]
      %v683 = vld [vmem:[%s461 + $0x150] sm:$0xff]
      %v684 = vld [vmem:[%s461 + $0x158] sm:$0xff]
      %v685 = vld [vmem:[%s461 + $0x168] sm:$0xff]
      %v686 = vld [vmem:[%s461 + $0x170] sm:$0xff]
      %v687 = vld [vmem:[%s461 + $0x1] sm:$0xff]
      %v688 = vld [vmem:[%s461 + $0x9] sm:$0xff]
      %v689 = vld [vmem:[%s461 + $0x19] sm:$0xff]
      %v690 = vld [vmem:[%s461 + $0x21] sm:$0xff]
      %v691 = vld [vmem:[%s461 + $0x31] sm:$0xff]
      %v692 = vld [vmem:[%s461 + $0x39] sm:$0xff]
      %v693 = vld [vmem:[%s461 + $0x49] sm:$0xff]
      %v694 = vld [vmem:[%s461 + $0x51] sm:$0xff]
      %v695 = vld [vmem:[%s461 + $0x61] sm:$0xff]
      %v696 = vld [vmem:[%s461 + $0x69] sm:$0xff]
      %v697 = vld [vmem:[%s461 + $0x79] sm:$0xff]
      %v698 = vld [vmem:[%s461 + $0x81] sm:$0xff]
      %v699 = vld [vmem:[%s461 + $0x91] sm:$0xff]
      %v700 = vld [vmem:[%s461 + $0x99] sm:$0xff]
      %v701 = vld [vmem:[%s461 + $0xa9] sm:$0xff]
      %v702 = vld [vmem:[%s461 + $0xb1] sm:$0xff]
      %v703 = vld [vmem:[%s461 + $0xc1] sm:$0xff]
      %v704 = vld [vmem:[%s461 + $0xc9] sm:$0xff]
      %v705 = vld [vmem:[%s461 + $0xd9] sm:$0xff]
      %v706 = vld [vmem:[%s461 + $0xe1] sm:$0xff]
      %v707 = vld [vmem:[%s461 + $0xf1] sm:$0xff]
      %v708 = vld [vmem:[%s461 + $0xf9] sm:$0xff]
      %v709 = vld [vmem:[%s461 + $0x109] sm:$0xff]
      %v710 = vld [vmem:[%s461 + $0x111] sm:$0xff]
      %v711 = vld [vmem:[%s461 + $0x121] sm:$0xff]
      %v712 = vld [vmem:[%s461 + $0x129] sm:$0xff]
      %v713 = vld [vmem:[%s461 + $0x139] sm:$0xff]
      %v714 = vld [vmem:[%s461 + $0x141] sm:$0xff]
      %v715 = vld [vmem:[%s461 + $0x151] sm:$0xff]
      %v716 = vld [vmem:[%s461 + $0x159] sm:$0xff]
      %v717 = vld [vmem:[%s461 + $0x169] sm:$0xff]
      %v718 = vld [vmem:[%s461 + $0x171] sm:$0xff]
      %v719 = vld [vmem:[%s461 + $0x2] sm:$0xff]
      %v720 = vld [vmem:[%s461 + $0xa] sm:$0xff]
      %v721 = vld [vmem:[%s461 + $0x1a] sm:$0xff]
      %v722 = vld [vmem:[%s461 + $0x22] sm:$0xff]
      %v723 = vld [vmem:[%s461 + $0x32] sm:$0xff]
      %v724 = vld [vmem:[%s461 + $0x3a] sm:$0xff]
      %v725 = vld [vmem:[%s461 + $0x4a] sm:$0xff]
      %v726 = vld [vmem:[%s461 + $0x52] sm:$0xff]
      %v727 = vld [vmem:[%s461 + $0x62] sm:$0xff]
      %v728 = vld [vmem:[%s461 + $0x6a] sm:$0xff]
      %v729 = vld [vmem:[%s461 + $0x7a] sm:$0xff]
      %v730 = vld [vmem:[%s461 + $0x82] sm:$0xff]
      %v731 = vld [vmem:[%s461 + $0x92] sm:$0xff]
      %v732 = vld [vmem:[%s461 + $0x9a] sm:$0xff]
      %v733 = vld [vmem:[%s461 + $0xaa] sm:$0xff]
      %v734 = vld [vmem:[%s461 + $0xb2] sm:$0xff]
      %v735 = vld [vmem:[%s461 + $0xc2] sm:$0xff]
      %v736 = vld [vmem:[%s461 + $0xca] sm:$0xff]
      %v737 = vld [vmem:[%s461 + $0xda] sm:$0xff]
      %v738 = vld [vmem:[%s461 + $0xe2] sm:$0xff]
      %v739 = vld [vmem:[%s461 + $0xf2] sm:$0xff]
      %v740 = vld [vmem:[%s461 + $0xfa] sm:$0xff]
      %v741 = vld [vmem:[%s461 + $0x10a] sm:$0xff]
      %v742 = vld [vmem:[%s461 + $0x112] sm:$0xff]
      %v743 = vld [vmem:[%s461 + $0x122] sm:$0xff]
      %v744 = vld [vmem:[%s461 + $0x12a] sm:$0xff]
      %v745 = vld [vmem:[%s461 + $0x13a] sm:$0xff]
      %v746 = vld [vmem:[%s461 + $0x142] sm:$0xff]
      %v747 = vld [vmem:[%s461 + $0x152] sm:$0xff]
      %v748 = vld [vmem:[%s461 + $0x15a] sm:$0xff]
      %v749 = vld [vmem:[%s461 + $0x16a] sm:$0xff]
      %v750 = vld [vmem:[%s461 + $0x172] sm:$0xff]
      %s751 = scalar_lea.vmem [#allocation2], 48
      %v752 = vld [vmem:[%s751] sm:$0xff]
      %v753 = vld [vmem:[%s751 + $0x8] sm:$0xff]
      %v754 = vld [vmem:[%s751 + $0x18] sm:$0xff]
      %v755 = vld [vmem:[%s751 + $0x20] sm:$0xff]
      %v756 = vld [vmem:[%s751 + $0x30] sm:$0xff]
      %v757 = vld [vmem:[%s751 + $0x38] sm:$0xff]
      %v758 = vld [vmem:[%s751 + $0x48] sm:$0xff]
      %v759 = vld [vmem:[%s751 + $0x50] sm:$0xff]
      %v760 = vld [vmem:[%s751 + $0x60] sm:$0xff]
      %v761 = vld [vmem:[%s751 + $0x68] sm:$0xff]
      %v762 = vld [vmem:[%s751 + $0x78] sm:$0xff]
      %v763 = vld [vmem:[%s751 + $0x80] sm:$0xff]
      %v764 = vld [vmem:[%s751 + $0x90] sm:$0xff]
      %v765 = vld [vmem:[%s751 + $0x98] sm:$0xff]
      %v766 = vld [vmem:[%s751 + $0xa8] sm:$0xff]
      %v767 = vld [vmem:[%s751 + $0xb0] sm:$0xff]
      %v768 = vld [vmem:[%s751 + $0xc0] sm:$0xff]
      %v769 = vld [vmem:[%s751 + $0xc8] sm:$0xff]
      %v770 = vld [vmem:[%s751 + $0xd8] sm:$0xff]
      %v771 = vld [vmem:[%s751 + $0xe0] sm:$0xff]
      %v772 = vld [vmem:[%s751 + $0xf0] sm:$0xff]
      %v773 = vld [vmem:[%s751 + $0xf8] sm:$0xff]
      %v774 = vld [vmem:[%s751 + $0x108] sm:$0xff]
      %v775 = vld [vmem:[%s751 + $0x110] sm:$0xff]
      %v776 = vld [vmem:[%s751 + $0x120] sm:$0xff]
      %v777 = vld [vmem:[%s751 + $0x128] sm:$0xff]
      %v778 = vld [vmem:[%s751 + $0x138] sm:$0xff]
      %v779 = vld [vmem:[%s751 + $0x140] sm:$0xff]
      %v780 = vld [vmem:[%s751 + $0x150] sm:$0xff]
      %v781 = vld [vmem:[%s751 + $0x158] sm:$0xff]
      %v782 = vld [vmem:[%s751 + $0x168] sm:$0xff]
      %v783 = vld [vmem:[%s751 + $0x170] sm:$0xff]
      %v784 = vld [vmem:[%s751 + $0x1] sm:$0xff]
      %v785 = vld [vmem:[%s751 + $0x9] sm:$0xff]
      %v786 = vld [vmem:[%s751 + $0x19] sm:$0xff]
      %v787 = vld [vmem:[%s751 + $0x21] sm:$0xff]
      %v788 = vld [vmem:[%s751 + $0x31] sm:$0xff]
      %v789 = vld [vmem:[%s751 + $0x39] sm:$0xff]
      %v790 = vld [vmem:[%s751 + $0x49] sm:$0xff]
      %v791 = vld [vmem:[%s751 + $0x51] sm:$0xff]
      %v792 = vld [vmem:[%s751 + $0x61] sm:$0xff]
      %v793 = vld [vmem:[%s751 + $0x69] sm:$0xff]
      %v794 = vld [vmem:[%s751 + $0x79] sm:$0xff]
      %v795 = vld [vmem:[%s751 + $0x81] sm:$0xff]
      %v796 = vld [vmem:[%s751 + $0x91] sm:$0xff]
      %v797 = vld [vmem:[%s751 + $0x99] sm:$0xff]
      %v798 = vld [vmem:[%s751 + $0xa9] sm:$0xff]
      %v799 = vld [vmem:[%s751 + $0xb1] sm:$0xff]
      %v800 = vld [vmem:[%s751 + $0xc1] sm:$0xff]
      %v801 = vld [vmem:[%s751 + $0xc9] sm:$0xff]
      %v802 = vld [vmem:[%s751 + $0xd9] sm:$0xff]
      %v803 = vld [vmem:[%s751 + $0xe1] sm:$0xff]
      %v804 = vld [vmem:[%s751 + $0xf1] sm:$0xff]
      %v805 = vld [vmem:[%s751 + $0xf9] sm:$0xff]
      %v806 = vld [vmem:[%s751 + $0x109] sm:$0xff]
      %v807 = vld [vmem:[%s751 + $0x111] sm:$0xff]
      %v808 = vld [vmem:[%s751 + $0x121] sm:$0xff]
      %v809 = vld [vmem:[%s751 + $0x129] sm:$0xff]
      %v810 = vld [vmem:[%s751 + $0x139] sm:$0xff]
      %v811 = vld [vmem:[%s751 + $0x141] sm:$0xff]
      %v812 = vld [vmem:[%s751 + $0x151] sm:$0xff]
      %v813 = vld [vmem:[%s751 + $0x159] sm:$0xff]
      %v814 = vld [vmem:[%s751 + $0x169] sm:$0xff]
      %v815 = vld [vmem:[%s751 + $0x171] sm:$0xff]
      %v816 = vld [vmem:[%s751 + $0x2] sm:$0xff]
      %v817 = vld [vmem:[%s751 + $0xa] sm:$0xff]
      %v818 = vld [vmem:[%s751 + $0x1a] sm:$0xff]
      %v819 = vld [vmem:[%s751 + $0x22] sm:$0xff]
      %v820 = vld [vmem:[%s751 + $0x32] sm:$0xff]
      %v821 = vld [vmem:[%s751 + $0x3a] sm:$0xff]
      %v822 = vld [vmem:[%s751 + $0x4a] sm:$0xff]
      %v823 = vld [vmem:[%s751 + $0x52] sm:$0xff]
      %v824 = vld [vmem:[%s751 + $0x62] sm:$0xff]
      %v825 = vld [vmem:[%s751 + $0x6a] sm:$0xff]
      %v826 = vld [vmem:[%s751 + $0x7a] sm:$0xff]
      %v827 = vld [vmem:[%s751 + $0x82] sm:$0xff]
      %v828 = vld [vmem:[%s751 + $0x92] sm:$0xff]
      %v829 = vld [vmem:[%s751 + $0x9a] sm:$0xff]
      %v830 = vld [vmem:[%s751 + $0xaa] sm:$0xff]
      %v831 = vld [vmem:[%s751 + $0xb2] sm:$0xff]
      %v832 = vld [vmem:[%s751 + $0xc2] sm:$0xff]
      %v833 = vld [vmem:[%s751 + $0xca] sm:$0xff]
      %v834 = vld [vmem:[%s751 + $0xda] sm:$0xff]
      %v835 = vld [vmem:[%s751 + $0xe2] sm:$0xff]
      %v836 = vld [vmem:[%s751 + $0xf2] sm:$0xff]
      %v837 = vld [vmem:[%s751 + $0xfa] sm:$0xff]
      %v838 = vld [vmem:[%s751 + $0x10a] sm:$0xff]
      %v839 = vld [vmem:[%s751 + $0x112] sm:$0xff]
      %v840 = vld [vmem:[%s751 + $0x122] sm:$0xff]
      %v841 = vld [vmem:[%s751 + $0x12a] sm:$0xff]
      %v842 = vld [vmem:[%s751 + $0x13a] sm:$0xff]
      %v843 = vld [vmem:[%s751 + $0x142] sm:$0xff]
      %v844 = vld [vmem:[%s751 + $0x152] sm:$0xff]
      %v845 = vld [vmem:[%s751 + $0x15a] sm:$0xff]
      %v846 = vld [vmem:[%s751 + $0x16a] sm:$0xff]
      %v847 = vld [vmem:[%s751 + $0x172] sm:$0xff]
      %880 = vrot.lane.b32.xlu0 %v591, 8
      %v881 = vpop.permute.xlu0 %880
      %882 = vrot.lane.b32.xlu0 %v592, 8
      %v883 = vpop.permute.xlu0 %882
      %884 = vrot.lane.b32.xlu0 %v593, 8
      %v885 = vpop.permute.xlu0 %884
      %886 = vrot.lane.b32.xlu0 %v594, 8
      %v887 = vpop.permute.xlu0 %886
      %888 = vrot.lane.b32.xlu0 %v595, 8
      %v889 = vpop.permute.xlu0 %888
      %890 = vrot.lane.b32.xlu0 %v596, 8
      %v891 = vpop.permute.xlu0 %890
      %892 = vrot.lane.b32.xlu0 %v597, 8
      %v893 = vpop.permute.xlu0 %892
      %894 = vrot.lane.b32.xlu0 %v598, 8
      %v895 = vpop.permute.xlu0 %894
      %896 = vrot.lane.b32.xlu0 %v599, 8
      %v897 = vpop.permute.xlu0 %896
      %898 = vrot.lane.b32.xlu0 %v600, 8
      %v899 = vpop.permute.xlu0 %898
      %900 = vrot.lane.b32.xlu0 %v601, 8
      %v901 = vpop.permute.xlu0 %900
      %902 = vrot.lane.b32.xlu0 %v602, 8
      %v903 = vpop.permute.xlu0 %902
      %904 = vrot.lane.b32.xlu0 %v603, 8
      %v905 = vpop.permute.xlu0 %904
      %906 = vrot.lane.b32.xlu0 %v604, 8
      %v907 = vpop.permute.xlu0 %906
      %908 = vrot.lane.b32.xlu0 %v605, 8
      %v909 = vpop.permute.xlu0 %908
      %910 = vrot.lane.b32.xlu0 %v606, 8
      %v911 = vpop.permute.xlu0 %910
      %912 = vrot.lane.b32.xlu0 %v607, 8
      %v913 = vpop.permute.xlu0 %912
      %914 = vrot.lane.b32.xlu0 %v608, 8
      %v915 = vpop.permute.xlu0 %914
      %916 = vrot.lane.b32.xlu0 %v609, 8
      %v917 = vpop.permute.xlu0 %916
      %918 = vrot.lane.b32.xlu0 %v610, 8
      %v919 = vpop.permute.xlu0 %918
      %920 = vrot.lane.b32.xlu0 %v611, 8
      %v921 = vpop.permute.xlu0 %920
      %922 = vrot.lane.b32.xlu0 %v612, 8
      %v923 = vpop.permute.xlu0 %922
      %924 = vrot.lane.b32.xlu0 %v613, 8
      %v925 = vpop.permute.xlu0 %924
      %926 = vrot.lane.b32.xlu0 %v614, 8
      %v927 = vpop.permute.xlu0 %926
      %928 = vrot.lane.b32.xlu0 %v615, 8
      %v929 = vpop.permute.xlu0 %928
      %930 = vrot.lane.b32.xlu0 %v616, 8
      %v931 = vpop.permute.xlu0 %930
      %932 = vrot.lane.b32.xlu0 %v617, 8
      %v933 = vpop.permute.xlu0 %932
      %934 = vrot.lane.b32.xlu0 %v618, 8
      %v935 = vpop.permute.xlu0 %934
      %936 = vrot.lane.b32.xlu0 %v619, 8
      %v937 = vpop.permute.xlu0 %936
      %938 = vrot.lane.b32.xlu0 %v620, 8
      %v939 = vpop.permute.xlu0 %938
      %940 = vrot.lane.b32.xlu0 %v621, 8
      %v941 = vpop.permute.xlu0 %940
      %942 = vrot.lane.b32.xlu0 %v622, 8
      %v943 = vpop.permute.xlu0 %942
      %1008 = vrot.lane.b32.xlu0 %v623, 16
      %v1009 = vpop.permute.xlu0 %1008
      %1010 = vrot.lane.b32.xlu0 %v624, 16
      %v1011 = vpop.permute.xlu0 %1010
      %1012 = vrot.lane.b32.xlu0 %v625, 16
      %v1013 = vpop.permute.xlu0 %1012
      %1014 = vrot.lane.b32.xlu0 %v626, 16
      %v1015 = vpop.permute.xlu0 %1014
      %1016 = vrot.lane.b32.xlu0 %v627, 16
      %v1017 = vpop.permute.xlu0 %1016
      %1018 = vrot.lane.b32.xlu0 %v628, 16
      %v1019 = vpop.permute.xlu0 %1018
      %1020 = vrot.lane.b32.xlu0 %v629, 16
      %v1021 = vpop.permute.xlu0 %1020
      %1022 = vrot.lane.b32.xlu0 %v630, 16
      %v1023 = vpop.permute.xlu0 %1022
      %1024 = vrot.lane.b32.xlu0 %v631, 16
      %v1025 = vpop.permute.xlu0 %1024
      %1026 = vrot.lane.b32.xlu0 %v632, 16
      %v1027 = vpop.permute.xlu0 %1026
      %1028 = vrot.lane.b32.xlu0 %v633, 16
      %v1029 = vpop.permute.xlu0 %1028
      %1030 = vrot.lane.b32.xlu0 %v634, 16
      %v1031 = vpop.permute.xlu0 %1030
      %1032 = vrot.lane.b32.xlu0 %v635, 16
      %v1033 = vpop.permute.xlu0 %1032
      %1034 = vrot.lane.b32.xlu0 %v636, 16
      %v1035 = vpop.permute.xlu0 %1034
      %1036 = vrot.lane.b32.xlu0 %v637, 16
      %v1037 = vpop.permute.xlu0 %1036
      %1038 = vrot.lane.b32.xlu0 %v638, 16
      %v1039 = vpop.permute.xlu0 %1038
      %1040 = vrot.lane.b32.xlu0 %v639, 16
      %v1041 = vpop.permute.xlu0 %1040
      %1042 = vrot.lane.b32.xlu0 %v640, 16
      %v1043 = vpop.permute.xlu0 %1042
      %1044 = vrot.lane.b32.xlu0 %v641, 16
      %v1045 = vpop.permute.xlu0 %1044
      %1046 = vrot.lane.b32.xlu0 %v642, 16
      %v1047 = vpop.permute.xlu0 %1046
      %1048 = vrot.lane.b32.xlu0 %v643, 16
      %v1049 = vpop.permute.xlu0 %1048
      %1050 = vrot.lane.b32.xlu0 %v644, 16
      %v1051 = vpop.permute.xlu0 %1050
      %1052 = vrot.lane.b32.xlu0 %v645, 16
      %v1053 = vpop.permute.xlu0 %1052
      %1054 = vrot.lane.b32.xlu0 %v646, 16
      %v1055 = vpop.permute.xlu0 %1054
      %1056 = vrot.lane.b32.xlu0 %v647, 16
      %v1057 = vpop.permute.xlu0 %1056
      %1058 = vrot.lane.b32.xlu0 %v648, 16
      %v1059 = vpop.permute.xlu0 %1058
      %1060 = vrot.lane.b32.xlu0 %v649, 16
      %v1061 = vpop.permute.xlu0 %1060
      %1062 = vrot.lane.b32.xlu0 %v650, 16
      %v1063 = vpop.permute.xlu0 %1062
      %1064 = vrot.lane.b32.xlu0 %v651, 16
      %v1065 = vpop.permute.xlu0 %1064
      %1066 = vrot.lane.b32.xlu0 %v652, 16
      %v1067 = vpop.permute.xlu0 %1066
      %1068 = vrot.lane.b32.xlu0 %v653, 16
      %v1069 = vpop.permute.xlu0 %1068
      %1070 = vrot.lane.b32.xlu0 %v654, 16
      %v1071 = vpop.permute.xlu0 %1070
      %1136 = vrot.lane.b32.xlu0 %v655, 24
      %v1137 = vpop.permute.xlu0 %1136
      %1138 = vrot.lane.b32.xlu0 %v656, 24
      %v1139 = vpop.permute.xlu0 %1138
      %1140 = vrot.lane.b32.xlu0 %v657, 24
      %v1141 = vpop.permute.xlu0 %1140
      %1142 = vrot.lane.b32.xlu0 %v658, 24
      %v1143 = vpop.permute.xlu0 %1142
      %1144 = vrot.lane.b32.xlu0 %v659, 24
      %v1145 = vpop.permute.xlu0 %1144
      %1146 = vrot.lane.b32.xlu0 %v660, 24
      %v1147 = vpop.permute.xlu0 %1146
      %1148 = vrot.lane.b32.xlu0 %v661, 24
      %v1149 = vpop.permute.xlu0 %1148
      %1150 = vrot.lane.b32.xlu0 %v662, 24
      %v1151 = vpop.permute.xlu0 %1150
      %1152 = vrot.lane.b32.xlu0 %v663, 24
      %v1153 = vpop.permute.xlu0 %1152
      %1154 = vrot.lane.b32.xlu0 %v664, 24
      %v1155 = vpop.permute.xlu0 %1154
      %1156 = vrot.lane.b32.xlu0 %v665, 24
      %v1157 = vpop.permute.xlu0 %1156
      %1158 = vrot.lane.b32.xlu0 %v666, 24
      %v1159 = vpop.permute.xlu0 %1158
      %1160 = vrot.lane.b32.xlu0 %v667, 24
      %v1161 = vpop.permute.xlu0 %1160
      %1162 = vrot.lane.b32.xlu0 %v668, 24
      %v1163 = vpop.permute.xlu0 %1162
      %1164 = vrot.lane.b32.xlu0 %v669, 24
      %v1165 = vpop.permute.xlu0 %1164
      %1166 = vrot.lane.b32.xlu0 %v670, 24
      %v1167 = vpop.permute.xlu0 %1166
      %1168 = vrot.lane.b32.xlu0 %v671, 24
      %v1169 = vpop.permute.xlu0 %1168
      %1170 = vrot.lane.b32.xlu0 %v672, 24
      %v1171 = vpop.permute.xlu0 %1170
      %1172 = vrot.lane.b32.xlu0 %v673, 24
      %v1173 = vpop.permute.xlu0 %1172
      %1174 = vrot.lane.b32.xlu0 %v674, 24
      %v1175 = vpop.permute.xlu0 %1174
      %1176 = vrot.lane.b32.xlu0 %v675, 24
      %v1177 = vpop.permute.xlu0 %1176
      %1178 = vrot.lane.b32.xlu0 %v676, 24
      %v1179 = vpop.permute.xlu0 %1178
      %1180 = vrot.lane.b32.xlu0 %v677, 24
      %v1181 = vpop.permute.xlu0 %1180
      %1182 = vrot.lane.b32.xlu0 %v678, 24
      %v1183 = vpop.permute.xlu0 %1182
      %1184 = vrot.lane.b32.xlu0 %v679, 24
      %v1185 = vpop.permute.xlu0 %1184
      %1186 = vrot.lane.b32.xlu0 %v680, 24
      %v1187 = vpop.permute.xlu0 %1186
      %1188 = vrot.lane.b32.xlu0 %v681, 24
      %v1189 = vpop.permute.xlu0 %1188
      %1190 = vrot.lane.b32.xlu0 %v682, 24
      %v1191 = vpop.permute.xlu0 %1190
      %1192 = vrot.lane.b32.xlu0 %v683, 24
      %v1193 = vpop.permute.xlu0 %1192
      %1194 = vrot.lane.b32.xlu0 %v684, 24
      %v1195 = vpop.permute.xlu0 %1194
      %1196 = vrot.lane.b32.xlu0 %v685, 24
      %v1197 = vpop.permute.xlu0 %1196
      %1198 = vrot.lane.b32.xlu0 %v686, 24
      %v1199 = vpop.permute.xlu0 %1198
      %1264 = vrot.lane.b32.xlu0 %v687, 32
      %v1265 = vpop.permute.xlu0 %1264
      %1266 = vrot.lane.b32.xlu0 %v688, 32
      %v1267 = vpop.permute.xlu0 %1266
      %1268 = vrot.lane.b32.xlu0 %v689, 32
      %v1269 = vpop.permute.xlu0 %1268
      %1270 = vrot.lane.b32.xlu0 %v690, 32
      %v1271 = vpop.permute.xlu0 %1270
      %1272 = vrot.lane.b32.xlu0 %v691, 32
      %v1273 = vpop.permute.xlu0 %1272
      %1274 = vrot.lane.b32.xlu0 %v692, 32
      %v1275 = vpop.permute.xlu0 %1274
      %1276 = vrot.lane.b32.xlu0 %v693, 32
      %v1277 = vpop.permute.xlu0 %1276
      %1278 = vrot.lane.b32.xlu0 %v694, 32
      %v1279 = vpop.permute.xlu0 %1278
      %1280 = vrot.lane.b32.xlu0 %v695, 32
      %v1281 = vpop.permute.xlu0 %1280
      %1282 = vrot.lane.b32.xlu0 %v696, 32
      %v1283 = vpop.permute.xlu0 %1282
      %1284 = vrot.lane.b32.xlu0 %v697, 32
      %v1285 = vpop.permute.xlu0 %1284
      %1286 = vrot.lane.b32.xlu0 %v698, 32
      %v1287 = vpop.permute.xlu0 %1286
      %1288 = vrot.lane.b32.xlu0 %v699, 32
      %v1289 = vpop.permute.xlu0 %1288
      %1290 = vrot.lane.b32.xlu0 %v700, 32
      %v1291 = vpop.permute.xlu0 %1290
      %1292 = vrot.lane.b32.xlu0 %v701, 32
      %v1293 = vpop.permute.xlu0 %1292
      %1294 = vrot.lane.b32.xlu0 %v702, 32
      %v1295 = vpop.permute.xlu0 %1294
      %1296 = vrot.lane.b32.xlu0 %v703, 32
      %v1297 = vpop.permute.xlu0 %1296
      %1298 = vrot.lane.b32.xlu0 %v704, 32
      %v1299 = vpop.permute.xlu0 %1298
      %1300 = vrot.lane.b32.xlu0 %v705, 32
      %v1301 = vpop.permute.xlu0 %1300
      %1302 = vrot.lane.b32.xlu0 %v706, 32
      %v1303 = vpop.permute.xlu0 %1302
      %1304 = vrot.lane.b32.xlu0 %v707, 32
      %v1305 = vpop.permute.xlu0 %1304
      %1306 = vrot.lane.b32.xlu0 %v708, 32
      %v1307 = vpop.permute.xlu0 %1306
      %1308 = vrot.lane.b32.xlu0 %v709, 32
      %v1309 = vpop.permute.xlu0 %1308
      %1310 = vrot.lane.b32.xlu0 %v710, 32
      %v1311 = vpop.permute.xlu0 %1310
      %1312 = vrot.lane.b32.xlu0 %v711, 32
      %v1313 = vpop.permute.xlu0 %1312
      %1314 = vrot.lane.b32.xlu0 %v712, 32
      %v1315 = vpop.permute.xlu0 %1314
      %1316 = vrot.lane.b32.xlu0 %v713, 32
      %v1317 = vpop.permute.xlu0 %1316
      %1318 = vrot.lane.b32.xlu0 %v714, 32
      %v1319 = vpop.permute.xlu0 %1318
      %1320 = vrot.lane.b32.xlu0 %v715, 32
      %v1321 = vpop.permute.xlu0 %1320
      %1322 = vrot.lane.b32.xlu0 %v716, 32
      %v1323 = vpop.permute.xlu0 %1322
      %1324 = vrot.lane.b32.xlu0 %v717, 32
      %v1325 = vpop.permute.xlu0 %1324
      %1326 = vrot.lane.b32.xlu0 %v718, 32
      %v1327 = vpop.permute.xlu0 %1326
      %1392 = vrot.lane.b32.xlu0 %v719, 40
      %v1393 = vpop.permute.xlu0 %1392
      %1394 = vrot.lane.b32.xlu0 %v720, 40
      %v1395 = vpop.permute.xlu0 %1394
      %1396 = vrot.lane.b32.xlu0 %v721, 40
      %v1397 = vpop.permute.xlu0 %1396
      %1398 = vrot.lane.b32.xlu0 %v722, 40
      %v1399 = vpop.permute.xlu0 %1398
      %1400 = vrot.lane.b32.xlu0 %v723, 40
      %v1401 = vpop.permute.xlu0 %1400
      %1402 = vrot.lane.b32.xlu0 %v724, 40
      %v1403 = vpop.permute.xlu0 %1402
      %1404 = vrot.lane.b32.xlu0 %v725, 40
      %v1405 = vpop.permute.xlu0 %1404
      %1406 = vrot.lane.b32.xlu0 %v726, 40
      %v1407 = vpop.permute.xlu0 %1406
      %1408 = vrot.lane.b32.xlu0 %v727, 40
      %v1409 = vpop.permute.xlu0 %1408
      %1410 = vrot.lane.b32.xlu0 %v728, 40
      %v1411 = vpop.permute.xlu0 %1410
      %1412 = vrot.lane.b32.xlu0 %v729, 40
      %v1413 = vpop.permute.xlu0 %1412
      %1414 = vrot.lane.b32.xlu0 %v730, 40
      %v1415 = vpop.permute.xlu0 %1414
      %1416 = vrot.lane.b32.xlu0 %v731, 40
      %v1417 = vpop.permute.xlu0 %1416
      %1418 = vrot.lane.b32.xlu0 %v732, 40
      %v1419 = vpop.permute.xlu0 %1418
      %1420 = vrot.lane.b32.xlu0 %v733, 40
      %v1421 = vpop.permute.xlu0 %1420
      %1422 = vrot.lane.b32.xlu0 %v734, 40
      %v1423 = vpop.permute.xlu0 %1422
      %1424 = vrot.lane.b32.xlu0 %v735, 40
      %v1425 = vpop.permute.xlu0 %1424
      %1426 = vrot.lane.b32.xlu0 %v736, 40
      %v1427 = vpop.permute.xlu0 %1426
      %1428 = vrot.lane.b32.xlu0 %v737, 40
      %v1429 = vpop.permute.xlu0 %1428
      %1430 = vrot.lane.b32.xlu0 %v738, 40
      %v1431 = vpop.permute.xlu0 %1430
      %1432 = vrot.lane.b32.xlu0 %v739, 40
      %v1433 = vpop.permute.xlu0 %1432
      %1434 = vrot.lane.b32.xlu0 %v740, 40
      %v1435 = vpop.permute.xlu0 %1434
      %1436 = vrot.lane.b32.xlu0 %v741, 40
      %v1437 = vpop.permute.xlu0 %1436
      %1438 = vrot.lane.b32.xlu0 %v742, 40
      %v1439 = vpop.permute.xlu0 %1438
      %1440 = vrot.lane.b32.xlu0 %v743, 40
      %v1441 = vpop.permute.xlu0 %1440
      %1442 = vrot.lane.b32.xlu0 %v744, 40
      %v1443 = vpop.permute.xlu0 %1442
      %1444 = vrot.lane.b32.xlu0 %v745, 40
      %v1445 = vpop.permute.xlu0 %1444
      %1446 = vrot.lane.b32.xlu0 %v746, 40
      %v1447 = vpop.permute.xlu0 %1446
      %1448 = vrot.lane.b32.xlu0 %v747, 40
      %v1449 = vpop.permute.xlu0 %1448
      %1450 = vrot.lane.b32.xlu0 %v748, 40
      %v1451 = vpop.permute.xlu0 %1450
      %1452 = vrot.lane.b32.xlu0 %v749, 40
      %v1453 = vpop.permute.xlu0 %1452
      %1454 = vrot.lane.b32.xlu0 %v750, 40
      %v1455 = vpop.permute.xlu0 %1454
      %1520 = vrot.lane.b32.xlu0 %v752, 48
      %v1521 = vpop.permute.xlu0 %1520
      %1522 = vrot.lane.b32.xlu0 %v753, 48
      %v1523 = vpop.permute.xlu0 %1522
      %1524 = vrot.lane.b32.xlu0 %v754, 48
      %v1525 = vpop.permute.xlu0 %1524
      %1526 = vrot.lane.b32.xlu0 %v755, 48
      %v1527 = vpop.permute.xlu0 %1526
      %1528 = vrot.lane.b32.xlu0 %v756, 48
      %v1529 = vpop.permute.xlu0 %1528
      %1530 = vrot.lane.b32.xlu0 %v757, 48
      %v1531 = vpop.permute.xlu0 %1530
      %1532 = vrot.lane.b32.xlu0 %v758, 48
      %v1533 = vpop.permute.xlu0 %1532
      %1534 = vrot.lane.b32.xlu0 %v759, 48
      %v1535 = vpop.permute.xlu0 %1534
      %1536 = vrot.lane.b32.xlu0 %v760, 48
      %v1537 = vpop.permute.xlu0 %1536
      %1538 = vrot.lane.b32.xlu0 %v761, 48
      %v1539 = vpop.permute.xlu0 %1538
      %1540 = vrot.lane.b32.xlu0 %v762, 48
      %v1541 = vpop.permute.xlu0 %1540
      %1542 = vrot.lane.b32.xlu0 %v763, 48
      %v1543 = vpop.permute.xlu0 %1542
      %1544 = vrot.lane.b32.xlu0 %v764, 48
      %v1545 = vpop.permute.xlu0 %1544
      %1546 = vrot.lane.b32.xlu0 %v765, 48
      %v1547 = vpop.permute.xlu0 %1546
      %1548 = vrot.lane.b32.xlu0 %v766, 48
      %v1549 = vpop.permute.xlu0 %1548
      %1550 = vrot.lane.b32.xlu0 %v767, 48
      %v1551 = vpop.permute.xlu0 %1550
      %1552 = vrot.lane.b32.xlu0 %v768, 48
      %v1553 = vpop.permute.xlu0 %1552
      %1554 = vrot.lane.b32.xlu0 %v769, 48
      %v1555 = vpop.permute.xlu0 %1554
      %1556 = vrot.lane.b32.xlu0 %v770, 48
      %v1557 = vpop.permute.xlu0 %1556
      %1558 = vrot.lane.b32.xlu0 %v771, 48
      %v1559 = vpop.permute.xlu0 %1558
      %1560 = vrot.lane.b32.xlu0 %v772, 48
      %v1561 = vpop.permute.xlu0 %1560
      %1562 = vrot.lane.b32.xlu0 %v773, 48
      %v1563 = vpop.permute.xlu0 %1562
      %1564 = vrot.lane.b32.xlu0 %v774, 48
      %v1565 = vpop.permute.xlu0 %1564
      %1566 = vrot.lane.b32.xlu0 %v775, 48
      %v1567 = vpop.permute.xlu0 %1566
      %1568 = vrot.lane.b32.xlu0 %v776, 48
      %v1569 = vpop.permute.xlu0 %1568
      %1570 = vrot.lane.b32.xlu0 %v777, 48
      %v1571 = vpop.permute.xlu0 %1570
      %1572 = vrot.lane.b32.xlu0 %v778, 48
      %v1573 = vpop.permute.xlu0 %1572
      %1574 = vrot.lane.b32.xlu0 %v779, 48
      %v1575 = vpop.permute.xlu0 %1574
      %1576 = vrot.lane.b32.xlu0 %v780, 48
      %v1577 = vpop.permute.xlu0 %1576
      %1578 = vrot.lane.b32.xlu0 %v781, 48
      %v1579 = vpop.permute.xlu0 %1578
      %1580 = vrot.lane.b32.xlu0 %v782, 48
      %v1581 = vpop.permute.xlu0 %1580
      %1582 = vrot.lane.b32.xlu0 %v783, 48
      %v1583 = vpop.permute.xlu0 %1582
      %1648 = vrot.lane.b32.xlu0 %v784, 56
      %v1649 = vpop.permute.xlu0 %1648
      %1650 = vrot.lane.b32.xlu0 %v785, 56
      %v1651 = vpop.permute.xlu0 %1650
      %1652 = vrot.lane.b32.xlu0 %v786, 56
      %v1653 = vpop.permute.xlu0 %1652
      %1654 = vrot.lane.b32.xlu0 %v787, 56
      %v1655 = vpop.permute.xlu0 %1654
      %1656 = vrot.lane.b32.xlu0 %v788, 56
      %v1657 = vpop.permute.xlu0 %1656
      %1658 = vrot.lane.b32.xlu0 %v789, 56
      %v1659 = vpop.permute.xlu0 %1658
      %1660 = vrot.lane.b32.xlu0 %v790, 56
      %v1661 = vpop.permute.xlu0 %1660
      %1662 = vrot.lane.b32.xlu0 %v791, 56
      %v1663 = vpop.permute.xlu0 %1662
      %1664 = vrot.lane.b32.xlu0 %v792, 56
      %v1665 = vpop.permute.xlu0 %1664
      %1666 = vrot.lane.b32.xlu0 %v793, 56
      %v1667 = vpop.permute.xlu0 %1666
      %1668 = vrot.lane.b32.xlu0 %v794, 56
      %v1669 = vpop.permute.xlu0 %1668
      %1670 = vrot.lane.b32.xlu0 %v795, 56
      %v1671 = vpop.permute.xlu0 %1670
      %1672 = vrot.lane.b32.xlu0 %v796, 56
      %v1673 = vpop.permute.xlu0 %1672
      %1674 = vrot.lane.b32.xlu0 %v797, 56
      %v1675 = vpop.permute.xlu0 %1674
      %1676 = vrot.lane.b32.xlu0 %v798, 56
      %v1677 = vpop.permute.xlu0 %1676
      %1678 = vrot.lane.b32.xlu0 %v799, 56
      %v1679 = vpop.permute.xlu0 %1678
      %1680 = vrot.lane.b32.xlu0 %v800, 56
      %v1681 = vpop.permute.xlu0 %1680
      %1682 = vrot.lane.b32.xlu0 %v801, 56
      %v1683 = vpop.permute.xlu0 %1682
      %1684 = vrot.lane.b32.xlu0 %v802, 56
      %v1685 = vpop.permute.xlu0 %1684
      %1686 = vrot.lane.b32.xlu0 %v803, 56
      %v1687 = vpop.permute.xlu0 %1686
      %1688 = vrot.lane.b32.xlu0 %v804, 56
      %v1689 = vpop.permute.xlu0 %1688
      %1690 = vrot.lane.b32.xlu0 %v805, 56
      %v1691 = vpop.permute.xlu0 %1690
      %1692 = vrot.lane.b32.xlu0 %v806, 56
      %v1693 = vpop.permute.xlu0 %1692
      %1694 = vrot.lane.b32.xlu0 %v807, 56
      %v1695 = vpop.permute.xlu0 %1694
      %1696 = vrot.lane.b32.xlu0 %v808, 56
      %v1697 = vpop.permute.xlu0 %1696
      %1698 = vrot.lane.b32.xlu0 %v809, 56
      %v1699 = vpop.permute.xlu0 %1698
      %1700 = vrot.lane.b32.xlu0 %v810, 56
      %v1701 = vpop.permute.xlu0 %1700
      %1702 = vrot.lane.b32.xlu0 %v811, 56
      %v1703 = vpop.permute.xlu0 %1702
      %1704 = vrot.lane.b32.xlu0 %v812, 56
      %v1705 = vpop.permute.xlu0 %1704
      %1706 = vrot.lane.b32.xlu0 %v813, 56
      %v1707 = vpop.permute.xlu0 %1706
      %1708 = vrot.lane.b32.xlu0 %v814, 56
      %v1709 = vpop.permute.xlu0 %1708
      %1710 = vrot.lane.b32.xlu0 %v815, 56
      %v1711 = vpop.permute.xlu0 %1710
      %1776 = vrot.lane.b32.xlu0 %v816, 64
      %v1777 = vpop.permute.xlu0 %1776
      %1778 = vrot.lane.b32.xlu0 %v817, 64
      %v1779 = vpop.permute.xlu0 %1778
      %1780 = vrot.lane.b32.xlu0 %v818, 64
      %v1781 = vpop.permute.xlu0 %1780
      %1782 = vrot.lane.b32.xlu0 %v819, 64
      %v1783 = vpop.permute.xlu0 %1782
      %1784 = vrot.lane.b32.xlu0 %v820, 64
      %v1785 = vpop.permute.xlu0 %1784
      %1786 = vrot.lane.b32.xlu0 %v821, 64
      %v1787 = vpop.permute.xlu0 %1786
      %1788 = vrot.lane.b32.xlu0 %v822, 64
      %v1789 = vpop.permute.xlu0 %1788
      %1790 = vrot.lane.b32.xlu0 %v823, 64
      %v1791 = vpop.permute.xlu0 %1790
      %1792 = vrot.lane.b32.xlu0 %v824, 64
      %v1793 = vpop.permute.xlu0 %1792
      %1794 = vrot.lane.b32.xlu0 %v825, 64
      %v1795 = vpop.permute.xlu0 %1794
      %1796 = vrot.lane.b32.xlu0 %v826, 64
      %v1797 = vpop.permute.xlu0 %1796
      %1798 = vrot.lane.b32.xlu0 %v827, 64
      %v1799 = vpop.permute.xlu0 %1798
      %1800 = vrot.lane.b32.xlu0 %v828, 64
      %v1801 = vpop.permute.xlu0 %1800
      %1802 = vrot.lane.b32.xlu0 %v829, 64
      %v1803 = vpop.permute.xlu0 %1802
      %1804 = vrot.lane.b32.xlu0 %v830, 64
      %v1805 = vpop.permute.xlu0 %1804
      %1806 = vrot.lane.b32.xlu0 %v831, 64
      %v1807 = vpop.permute.xlu0 %1806
      %1808 = vrot.lane.b32.xlu0 %v832, 64
      %v1809 = vpop.permute.xlu0 %1808
      %1810 = vrot.lane.b32.xlu0 %v833, 64
      %v1811 = vpop.permute.xlu0 %1810
      %1812 = vrot.lane.b32.xlu0 %v834, 64
      %v1813 = vpop.permute.xlu0 %1812
      %1814 = vrot.lane.b32.xlu0 %v835, 64
      %v1815 = vpop.permute.xlu0 %1814
      %1816 = vrot.lane.b32.xlu0 %v836, 64
      %v1817 = vpop.permute.xlu0 %1816
      %1818 = vrot.lane.b32.xlu0 %v837, 64
      %v1819 = vpop.permute.xlu0 %1818
      %1820 = vrot.lane.b32.xlu0 %v838, 64
      %v1821 = vpop.permute.xlu0 %1820
      %1822 = vrot.lane.b32.xlu0 %v839, 64
      %v1823 = vpop.permute.xlu0 %1822
      %1824 = vrot.lane.b32.xlu0 %v840, 64
      %v1825 = vpop.permute.xlu0 %1824
      %1826 = vrot.lane.b32.xlu0 %v841, 64
      %v1827 = vpop.permute.xlu0 %1826
      %1828 = vrot.lane.b32.xlu0 %v842, 64
      %v1829 = vpop.permute.xlu0 %1828
      %1830 = vrot.lane.b32.xlu0 %v843, 64
      %v1831 = vpop.permute.xlu0 %1830
      %1832 = vrot.lane.b32.xlu0 %v844, 64
      %v1833 = vpop.permute.xlu0 %1832
      %1834 = vrot.lane.b32.xlu0 %v845, 64
      %v1835 = vpop.permute.xlu0 %1834
      %1836 = vrot.lane.b32.xlu0 %v846, 64
      %v1837 = vpop.permute.xlu0 %1836
      %1838 = vrot.lane.b32.xlu0 %v847, 64
      %v1839 = vpop.permute.xlu0 %1838
      %v1872 = vsel %vm452, %v559, %v881
      %v1873 = vsel %vm452, %v560, %v883
      %v1874 = vsel %vm452, %v561, %v885
      %v1875 = vsel %vm452, %v562, %v887
      %v1876 = vsel %vm452, %v563, %v889
      %v1877 = vsel %vm452, %v564, %v891
      %v1878 = vsel %vm452, %v565, %v893
      %v1879 = vsel %vm452, %v566, %v895
      %v1880 = vsel %vm452, %v567, %v897
      %v1881 = vsel %vm452, %v568, %v899
      %v1882 = vsel %vm452, %v569, %v901
      %v1883 = vsel %vm452, %v570, %v903
      %v1884 = vsel %vm452, %v571, %v905
      %v1885 = vsel %vm452, %v572, %v907
      %v1886 = vsel %vm452, %v573, %v909
      %v1887 = vsel %vm452, %v574, %v911
      %v1888 = vsel %vm452, %v575, %v913
      %v1889 = vsel %vm452, %v576, %v915
      %v1890 = vsel %vm452, %v577, %v917
      %v1891 = vsel %vm452, %v578, %v919
      %v1892 = vsel %vm452, %v579, %v921
      %v1893 = vsel %vm452, %v580, %v923
      %v1894 = vsel %vm452, %v581, %v925
      %v1895 = vsel %vm452, %v582, %v927
      %v1896 = vsel %vm452, %v583, %v929
      %v1897 = vsel %vm452, %v584, %v931
      %v1898 = vsel %vm452, %v585, %v933
      %v1899 = vsel %vm452, %v586, %v935
      %v1900 = vsel %vm452, %v587, %v937
      %v1901 = vsel %vm452, %v588, %v939
      %v1902 = vsel %vm452, %v589, %v941
      %v1903 = vsel %vm452, %v590, %v943
      %vm1904 = vcmask 130048
      %v1905 = vsel %vm1904, %v1872, %v1009
      %v1906 = vsel %vm1904, %v1873, %v1011
      %v1907 = vsel %vm1904, %v1874, %v1013
      %v1908 = vsel %vm1904, %v1875, %v1015
      %v1909 = vsel %vm1904, %v1876, %v1017
      %v1910 = vsel %vm1904, %v1877, %v1019
      %v1911 = vsel %vm1904, %v1878, %v1021
      %v1912 = vsel %vm1904, %v1879, %v1023
      %v1913 = vsel %vm1904, %v1880, %v1025
      %v1914 = vsel %vm1904, %v1881, %v1027
      %v1915 = vsel %vm1904, %v1882, %v1029
      %v1916 = vsel %vm1904, %v1883, %v1031
      %v1917 = vsel %vm1904, %v1884, %v1033
      %v1918 = vsel %vm1904, %v1885, %v1035
      %v1919 = vsel %vm1904, %v1886, %v1037
      %v1920 = vsel %vm1904, %v1887, %v1039
      %v1921 = vsel %vm1904, %v1888, %v1041
      %v1922 = vsel %vm1904, %v1889, %v1043
      %v1923 = vsel %vm1904, %v1890, %v1045
      %v1924 = vsel %vm1904, %v1891, %v1047
      %v1925 = vsel %vm1904, %v1892, %v1049
      %v1926 = vsel %vm1904, %v1893, %v1051
      %v1927 = vsel %vm1904, %v1894, %v1053
      %v1928 = vsel %vm1904, %v1895, %v1055
      %v1929 = vsel %vm1904, %v1896, %v1057
      %v1930 = vsel %vm1904, %v1897, %v1059
      %v1931 = vsel %vm1904, %v1898, %v1061
      %v1932 = vsel %vm1904, %v1899, %v1063
      %v1933 = vsel %vm1904, %v1900, %v1065
      %v1934 = vsel %vm1904, %v1901, %v1067
      %v1935 = vsel %vm1904, %v1902, %v1069
      %v1936 = vsel %vm1904, %v1903, %v1071
      %vm1937 = vcmask 195584
      %v1938 = vsel %vm1937, %v1905, %v1137
      %v1939 = vsel %vm1937, %v1906, %v1139
      %v1940 = vsel %vm1937, %v1907, %v1141
      %v1941 = vsel %vm1937, %v1908, %v1143
      %v1942 = vsel %vm1937, %v1909, %v1145
      %v1943 = vsel %vm1937, %v1910, %v1147
      %v1944 = vsel %vm1937, %v1911, %v1149
      %v1945 = vsel %vm1937, %v1912, %v1151
      %v1946 = vsel %vm1937, %v1913, %v1153
      %v1947 = vsel %vm1937, %v1914, %v1155
      %v1948 = vsel %vm1937, %v1915, %v1157
      %v1949 = vsel %vm1937, %v1916, %v1159
      %v1950 = vsel %vm1937, %v1917, %v1161
      %v1951 = vsel %vm1937, %v1918, %v1163
      %v1952 = vsel %vm1937, %v1919, %v1165
      %v1953 = vsel %vm1937, %v1920, %v1167
      %v1954 = vsel %vm1937, %v1921, %v1169
      %v1955 = vsel %vm1937, %v1922, %v1171
      %v1956 = vsel %vm1937, %v1923, %v1173
      %v1957 = vsel %vm1937, %v1924, %v1175
      %v1958 = vsel %vm1937, %v1925, %v1177
      %v1959 = vsel %vm1937, %v1926, %v1179
      %v1960 = vsel %vm1937, %v1927, %v1181
      %v1961 = vsel %vm1937, %v1928, %v1183
      %v1962 = vsel %vm1937, %v1929, %v1185
      %v1963 = vsel %vm1937, %v1930, %v1187
      %v1964 = vsel %vm1937, %v1931, %v1189
      %v1965 = vsel %vm1937, %v1932, %v1191
      %v1966 = vsel %vm1937, %v1933, %v1193
      %v1967 = vsel %vm1937, %v1934, %v1195
      %v1968 = vsel %vm1937, %v1935, %v1197
      %v1969 = vsel %vm1937, %v1936, %v1199
      %vm1970 = vcmask 261120
      %v1971 = vsel %vm1970, %v1938, %v1265
      %v1972 = vsel %vm1970, %v1939, %v1267
      %v1973 = vsel %vm1970, %v1940, %v1269
      %v1974 = vsel %vm1970, %v1941, %v1271
      %v1975 = vsel %vm1970, %v1942, %v1273
      %v1976 = vsel %vm1970, %v1943, %v1275
      %v1977 = vsel %vm1970, %v1944, %v1277
      %v1978 = vsel %vm1970, %v1945, %v1279
      %v1979 = vsel %vm1970, %v1946, %v1281
      %v1980 = vsel %vm1970, %v1947, %v1283
      %v1981 = vsel %vm1970, %v1948, %v1285
      %v1982 = vsel %vm1970, %v1949, %v1287
      %v1983 = vsel %vm1970, %v1950, %v1289
      %v1984 = vsel %vm1970, %v1951, %v1291
      %v1985 = vsel %vm1970, %v1952, %v1293
      %v1986 = vsel %vm1970, %v1953, %v1295
      %v1987 = vsel %vm1970, %v1954, %v1297
      %v1988 = vsel %vm1970, %v1955, %v1299
      %v1989 = vsel %vm1970, %v1956, %v1301
      %v1990 = vsel %vm1970, %v1957, %v1303
      %v1991 = vsel %vm1970, %v1958, %v1305
      %v1992 = vsel %vm1970, %v1959, %v1307
      %v1993 = vsel %vm1970, %v1960, %v1309
      %v1994 = vsel %vm1970, %v1961, %v1311
      %v1995 = vsel %vm1970, %v1962, %v1313
      %v1996 = vsel %vm1970, %v1963, %v1315
      %v1997 = vsel %vm1970, %v1964, %v1317
      %v1998 = vsel %vm1970, %v1965, %v1319
      %v1999 = vsel %vm1970, %v1966, %v1321
      %v2000 = vsel %vm1970, %v1967, %v1323
      %v2001 = vsel %vm1970, %v1968, %v1325
      %v2002 = vsel %vm1970, %v1969, %v1327
      %vm2003 = vcmask 326656
      %v2004 = vsel %vm2003, %v1971, %v1393
      %v2005 = vsel %vm2003, %v1972, %v1395
      %v2006 = vsel %vm2003, %v1973, %v1397
      %v2007 = vsel %vm2003, %v1974, %v1399
      %v2008 = vsel %vm2003, %v1975, %v1401
      %v2009 = vsel %vm2003, %v1976, %v1403
      %v2010 = vsel %vm2003, %v1977, %v1405
      %v2011 = vsel %vm2003, %v1978, %v1407
      %v2012 = vsel %vm2003, %v1979, %v1409
      %v2013 = vsel %vm2003, %v1980, %v1411
      %v2014 = vsel %vm2003, %v1981, %v1413
      %v2015 = vsel %vm2003, %v1982, %v1415
      %v2016 = vsel %vm2003, %v1983, %v1417
      %v2017 = vsel %vm2003, %v1984, %v1419
      %v2018 = vsel %vm2003, %v1985, %v1421
      %v2019 = vsel %vm2003, %v1986, %v1423
      %v2020 = vsel %vm2003, %v1987, %v1425
      %v2021 = vsel %vm2003, %v1988, %v1427
      %v2022 = vsel %vm2003, %v1989, %v1429
      %v2023 = vsel %vm2003, %v1990, %v1431
      %v2024 = vsel %vm2003, %v1991, %v1433
      %v2025 = vsel %vm2003, %v1992, %v1435
      %v2026 = vsel %vm2003, %v1993, %v1437
      %v2027 = vsel %vm2003, %v1994, %v1439
      %v2028 = vsel %vm2003, %v1995, %v1441
      %v2029 = vsel %vm2003, %v1996, %v1443
      %v2030 = vsel %vm2003, %v1997, %v1445
      %v2031 = vsel %vm2003, %v1998, %v1447
      %v2032 = vsel %vm2003, %v1999, %v1449
      %v2033 = vsel %vm2003, %v2000, %v1451
      %v2034 = vsel %vm2003, %v2001, %v1453
      %v2035 = vsel %vm2003, %v2002, %v1455
      %vm2036 = vcmask 392192
      %v2037 = vsel %vm2036, %v2004, %v1521
      %v2038 = vsel %vm2036, %v2005, %v1523
      %v2039 = vsel %vm2036, %v2006, %v1525
      %v2040 = vsel %vm2036, %v2007, %v1527
      %v2041 = vsel %vm2036, %v2008, %v1529
      %v2042 = vsel %vm2036, %v2009, %v1531
      %v2043 = vsel %vm2036, %v2010, %v1533
      %v2044 = vsel %vm2036, %v2011, %v1535
      %v2045 = vsel %vm2036, %v2012, %v1537
      %v2046 = vsel %vm2036, %v2013, %v1539
      %v2047 = vsel %vm2036, %v2014, %v1541
      %v2048 = vsel %vm2036, %v2015, %v1543
      %v2049 = vsel %vm2036, %v2016, %v1545
      %v2050 = vsel %vm2036, %v2017, %v1547
      %v2051 = vsel %vm2036, %v2018, %v1549
      %v2052 = vsel %vm2036, %v2019, %v1551
      %v2053 = vsel %vm2036, %v2020, %v1553
      %v2054 = vsel %vm2036, %v2021, %v1555
      %v2055 = vsel %vm2036, %v2022, %v1557
      %v2056 = vsel %vm2036, %v2023, %v1559
      %v2057 = vsel %vm2036, %v2024, %v1561
      %v2058 = vsel %vm2036, %v2025, %v1563
      %v2059 = vsel %vm2036, %v2026, %v1565
      %v2060 = vsel %vm2036, %v2027, %v1567
      %v2061 = vsel %vm2036, %v2028, %v1569
      %v2062 = vsel %vm2036, %v2029, %v1571
      %v2063 = vsel %vm2036, %v2030, %v1573
      %v2064 = vsel %vm2036, %v2031, %v1575
      %v2065 = vsel %vm2036, %v2032, %v1577
      %v2066 = vsel %vm2036, %v2033, %v1579
      %v2067 = vsel %vm2036, %v2034, %v1581
      %v2068 = vsel %vm2036, %v2035, %v1583
      %vm2069 = vcmask 457728
      %v2070 = vsel %vm2069, %v2037, %v1649
      %v2071 = vsel %vm2069, %v2038, %v1651
      %v2072 = vsel %vm2069, %v2039, %v1653
      %v2073 = vsel %vm2069, %v2040, %v1655
      %v2074 = vsel %vm2069, %v2041, %v1657
      %v2075 = vsel %vm2069, %v2042, %v1659
      %v2076 = vsel %vm2069, %v2043, %v1661
      %v2077 = vsel %vm2069, %v2044, %v1663
      %v2078 = vsel %vm2069, %v2045, %v1665
      %v2079 = vsel %vm2069, %v2046, %v1667
      %v2080 = vsel %vm2069, %v2047, %v1669
      %v2081 = vsel %vm2069, %v2048, %v1671
      %v2082 = vsel %vm2069, %v2049, %v1673
      %v2083 = vsel %vm2069, %v2050, %v1675
      %v2084 = vsel %vm2069, %v2051, %v1677
      %v2085 = vsel %vm2069, %v2052, %v1679
      %v2086 = vsel %vm2069, %v2053, %v1681
      %v2087 = vsel %vm2069, %v2054, %v1683
      %v2088 = vsel %vm2069, %v2055, %v1685
      %v2089 = vsel %vm2069, %v2056, %v1687
      %v2090 = vsel %vm2069, %v2057, %v1689
      %v2091 = vsel %vm2069, %v2058, %v1691
      %v2092 = vsel %vm2069, %v2059, %v1693
      %v2093 = vsel %vm2069, %v2060, %v1695
      %v2094 = vsel %vm2069, %v2061, %v1697
      %v2095 = vsel %vm2069, %v2062, %v1699
      %v2096 = vsel %vm2069, %v2063, %v1701
      %v2097 = vsel %vm2069, %v2064, %v1703
      %v2098 = vsel %vm2069, %v2065, %v1705
      %v2099 = vsel %vm2069, %v2066, %v1707
      %v2100 = vsel %vm2069, %v2067, %v1709
      %v2101 = vsel %vm2069, %v2068, %v1711
      %vm2102 = vcmask 523264
      %v2103 = vsel %vm2102, %v2070, %v1777
      %v2104 = vsel %vm2102, %v2071, %v1779
      %v2105 = vsel %vm2102, %v2072, %v1781
      %v2106 = vsel %vm2102, %v2073, %v1783
      %v2107 = vsel %vm2102, %v2074, %v1785
      %v2108 = vsel %vm2102, %v2075, %v1787
      %v2109 = vsel %vm2102, %v2076, %v1789
      %v2110 = vsel %vm2102, %v2077, %v1791
      %v2111 = vsel %vm2102, %v2078, %v1793
      %v2112 = vsel %vm2102, %v2079, %v1795
      %v2113 = vsel %vm2102, %v2080, %v1797
      %v2114 = vsel %vm2102, %v2081, %v1799
      %v2115 = vsel %vm2102, %v2082, %v1801
      %v2116 = vsel %vm2102, %v2083, %v1803
      %v2117 = vsel %vm2102, %v2084, %v1805
      %v2118 = vsel %vm2102, %v2085, %v1807
      %v2119 = vsel %vm2102, %v2086, %v1809
      %v2120 = vsel %vm2102, %v2087, %v1811
      %v2121 = vsel %vm2102, %v2088, %v1813
      %v2122 = vsel %vm2102, %v2089, %v1815
      %v2123 = vsel %vm2102, %v2090, %v1817
      %v2124 = vsel %vm2102, %v2091, %v1819
      %v2125 = vsel %vm2102, %v2092, %v1821
      %v2126 = vsel %vm2102, %v2093, %v1823
      %v2127 = vsel %vm2102, %v2094, %v1825
      %v2128 = vsel %vm2102, %v2095, %v1827
      %v2129 = vsel %vm2102, %v2096, %v1829
      %v2130 = vsel %vm2102, %v2097, %v1831
      %v2131 = vsel %vm2102, %v2098, %v1833
      %v2132 = vsel %vm2102, %v2099, %v1835
      %v2133 = vsel %vm2102, %v2100, %v1837
      %v2134 = vsel %vm2102, %v2101, %v1839
      %v2135 = vld [vmem:[%s3] sm:$0xff]
      %v2136 = vld [vmem:[%s3 + $0x8] sm:$0xff]
      %v2137 = vld [vmem:[%s3 + $0x10] sm:$0xff]
      %v2138 = vld [vmem:[%s3 + $0x18] sm:$0xff]
      %v2139 = vld [vmem:[%s3 + $0x20] sm:$0xff]
      %v2140 = vld [vmem:[%s3 + $0x28] sm:$0xff]
      %v2141 = vld [vmem:[%s3 + $0x30] sm:$0xff]
      %v2142 = vld [vmem:[%s3 + $0x38] sm:$0xff]
      %v2143 = vld [vmem:[%s3 + $0x40] sm:$0xff]
      %v2144 = vld [vmem:[%s6] sm:$0x1]
      %v2146 = vlaneseq
      %v2147 = vshrl.u32 %v2146, 7
      %v2148 = vsub.s32 0, %v2147
      %v2149 = vrot.slane %v2144, %v2148
      %vm2151 = vcmask 588800
      %v2153 = vsel %vm2151, %v2103, 0
      %v2156 = vsel %vm2151, %v2104, 0
      %v2159 = vsel %vm2151, %v2105, 0
      %v2162 = vsel %vm2151, %v2106, 0
      %v2165 = vsel %vm2151, %v2107, 0
      %v2168 = vsel %vm2151, %v2108, 0
      %v2171 = vsel %vm2151, %v2109, 0
      %v2174 = vsel %vm2151, %v2110, 0
      %v2177 = vsel %vm2151, %v2111, 0
      %v2180 = vsel %vm2151, %v2112, 0
      %v2183 = vsel %vm2151, %v2113, 0
      %v2186 = vsel %vm2151, %v2114, 0
      %v2189 = vsel %vm2151, %v2115, 0
      %v2192 = vsel %vm2151, %v2116, 0
      %v2195 = vsel %vm2151, %v2117, 0
      %v2198 = vsel %vm2151, %v2118, 0
      %v2201 = vsel %vm2151, %v2119, 0
      %v2204 = vsel %vm2151, %v2120, 0
      %v2207 = vsel %vm2151, %v2121, 0
      %v2210 = vsel %vm2151, %v2122, 0
      %v2213 = vsel %vm2151, %v2123, 0
      %v2216 = vsel %vm2151, %v2124, 0
      %v2219 = vsel %vm2151, %v2125, 0
      %v2222 = vsel %vm2151, %v2126, 0
      %v2225 = vsel %vm2151, %v2127, 0
      %v2228 = vsel %vm2151, %v2128, 0
      %v2231 = vsel %vm2151, %v2129, 0
      %v2234 = vsel %vm2151, %v2130, 0
      %v2237 = vsel %vm2151, %v2131, 0
      %v2240 = vsel %vm2151, %v2132, 0
      %v2243 = vsel %vm2151, %v2133, 0
      %v2246 = vsel %vm2151, %v2134, 0
      %2248 = vmatprep.subr.mxu0 0.0
      %2249 = vmatpush1.msra.mxu0 %v2135
      %2250 = vmatprep.subr.mxu0 0.0
      %2251 = vmatpush1.msra.mxu0 %v2136
      %2252 = vmatprep.subr.mxu0 0.0
      %2253 = vmatpush1.msra.mxu0 %v2137
      %2254 = vmatprep.subr.mxu0 0.0
      %2255 = vmatpush1.msra.mxu0 %v2138
      %2256 = vmatprep.subr.mxu0 0.0
      %2257 = vmatpush1.msra.mxu0 %v2139
      %2258 = vmatprep.subr.mxu0 0.0
      %2259 = vmatpush1.msra.mxu0 %v2140
      %2260 = vmatprep.subr.mxu0 0.0
      %2261 = vmatpush1.msra.mxu0 %v2141
      %2262 = vmatprep.subr.mxu0 0.0
      %2263 = vmatpush1.msra.mxu0 %v2142
      %2264 = vmatprep.subr.mxu0 0.0
      %2265 = vmatpush1.msra.mxu0 %v2143
      %2266 = vmatprep.subr.mxu0 0.0
      %2267 = vmatpush1.msra.mxu0 0.0
      %2268 = vmatprep.subr.mxu0 0.0
      %2269 = vmatpush1.msra.mxu0 0.0
      %2270 = vmatprep.subr.mxu0 0.0
      %2271 = vmatpush1.msra.mxu0 0.0
      %2272 = vmatprep.subr.mxu0 0.0
      %2273 = vmatpush1.msra.mxu0 0.0
      %2274 = vmatprep.subr.mxu0 0.0
      %2275 = vmatpush1.msra.mxu0 0.0
      %2276 = vmatprep.subr.mxu0 0.0
      %2277 = vmatpush1.msra.mxu0 0.0
      %2278 = vmatprep.subr.mxu0 0.0
      %2279 = vmatpush1.msra.mxu0 0.0
      %2280 = vmatprep.subr.mxu0 0.0
      %2281 = vmatpush1.msra.mxu0 0.0
      %2282 = vmatprep.subr.mxu0 0.0
      %2283 = vmatpush1.msra.mxu0 0.0
      %2284 = vmatprep.subr.mxu0 0.0
      %2285 = vmatpush1.msra.mxu0 0.0
      %2286 = vmatprep.subr.mxu0 0.0
      %2287 = vmatpush1.msra.mxu0 0.0
      %2288 = vmatprep.subr.mxu0 0.0
      %2289 = vmatpush1.msra.mxu0 0.0
      %2290 = vmatprep.subr.mxu0 0.0
      %2291 = vmatpush1.msra.mxu0 0.0
      %2292 = vmatprep.subr.mxu0 0.0
      %2293 = vmatpush1.msra.mxu0 0.0
      %2294 = vmatprep.subr.mxu0 0.0
      %2295 = vmatpush1.msra.mxu0 0.0
      %2296 = vmatprep.subr.mxu0 0.0
      %2297 = vmatpush1.msra.mxu0 0.0
      %2298 = vmatprep.subr.mxu0 0.0
      %2299 = vmatpush1.msra.mxu0 0.0
      %2300 = vmatprep.subr.mxu0 0.0
      %2301 = vmatpush1.msra.mxu0 0.0
      %2302 = vmatprep.subr.mxu0 0.0
      %2303 = vmatpush1.msra.mxu0 0.0
      %2304 = vmatprep.subr.mxu0 0.0
      %2305 = vmatpush1.msra.mxu0 0.0
      %2306 = vmatprep.subr.mxu0 0.0
      %2307 = vmatpush1.msra.mxu0 0.0
      %2308 = vmatprep.subr.mxu0 0.0
      %2309 = vmatpush1.msra.mxu0 0.0
      %2310 = vmatprep.subr.mxu0 0.0
      %2311 = vmatpush1.msra.mxu0 0.0
      %2312 = vmatprep.mubr.f32.mxu0 0.0
      %2313 = vmatmul.mubr.f32.gmra.mrb[0].mxu0 %v2153
      %v2314 = vpop.f32.mrb[0].mxu0
      %v2315 = vadd.f32 %v2149, %v2314
      %v2316 = vpop.f32.mrb[0].mxu0
      %2317 = vmatprep.mubr.f32.mxu0 0.0
      %2318 = vmatmul.mubr.f32.gmra.mrb[0].mxu0 %v2156
      %v2319 = vpop.f32.mrb[0].mxu0
      %v2320 = vadd.f32 %v2149, %v2319
      %v2321 = vpop.f32.mrb[0].mxu0
      %2322 = vmatprep.mubr.f32.mxu0 0.0
      %2323 = vmatmul.mubr.f32.gmra.mrb[0].mxu0 %v2159
      %v2324 = vpop.f32.mrb[0].mxu0
      %v2325 = vadd.f32 %v2149, %v2324
      %v2326 = vpop.f32.mrb[0].mxu0
      %2327 = vmatprep.mubr.f32.mxu0 0.0
      %2328 = vmatmul.mubr.f32.gmra.mrb[0].mxu0 %v2162
      %v2329 = vpop.f32.mrb[0].mxu0
      %v2330 = vadd.f32 %v2149, %v2329
      %v2331 = vpop.f32.mrb[0].mxu0
      %2332 = vmatprep.mubr.f32.mxu0 0.0
      %2333 = vmatmul.mubr.f32.gmra.mrb[0].mxu0 %v2165
      %v2334 = vpop.f32.mrb[0].mxu0
      %v2335 = vadd.f32 %v2149, %v2334
      %v2336 = vpop.f32.mrb[0].mxu0
      %2337 = vmatprep.mubr.f32.mxu0 0.0
      %2338 = vmatmul.mubr.f32.gmra.mrb[0].mxu0 %v2168
      %v2339 = vpop.f32.mrb[0].mxu0
      %v2340 = vadd.f32 %v2149, %v2339
      %v2341 = vpop.f32.mrb[0].mxu0
      %2342 = vmatprep.mubr.f32.mxu0 0.0
      %2343 = vmatmul.mubr.f32.gmra.mrb[0].mxu0 %v2171
      %v2344 = vpop.f32.mrb[0].mxu0
      %v2345 = vadd.f32 %v2149, %v2344
      %v2346 = vpop.f32.mrb[0].mxu0
      %2347 = vmatprep.mubr.f32.mxu0 0.0
      %2348 = vmatmul.mubr.f32.gmra.mrb[0].mxu0 %v2174
      %v2349 = vpop.f32.mrb[0].mxu0
      %v2350 = vadd.f32 %v2149, %v2349
      %v2351 = vpop.f32.mrb[0].mxu0
      %2352 = vmatprep.mubr.f32.mxu0 0.0
      %2353 = vmatmul.mubr.f32.gmra.mrb[0].mxu0 %v2177
      %v2354 = vpop.f32.mrb[0].mxu0
      %v2355 = vadd.f32 %v2149, %v2354
      %v2356 = vpop.f32.mrb[0].mxu0
      %2357 = vmatprep.mubr.f32.mxu0 0.0
      %2358 = vmatmul.mubr.f32.gmra.mrb[0].mxu0 %v2180
      %v2359 = vpop.f32.mrb[0].mxu0
      %v2360 = vadd.f32 %v2149, %v2359
      %v2361 = vpop.f32.mrb[0].mxu0
      %2362 = vmatprep.mubr.f32.mxu0 0.0
      %2363 = vmatmul.mubr.f32.gmra.mrb[0].mxu0 %v2183
      %v2364 = vpop.f32.mrb[0].mxu0
      %v2365 = vadd.f32 %v2149, %v2364
      %v2366 = vpop.f32.mrb[0].mxu0
      %2367 = vmatprep.mubr.f32.mxu0 0.0
      %2368 = vmatmul.mubr.f32.gmra.mrb[0].mxu0 %v2186
      %v2369 = vpop.f32.mrb[0].mxu0
      %v2370 = vadd.f32 %v2149, %v2369
      %v2371 = vpop.f32.mrb[0].mxu0
      %2372 = vmatprep.mubr.f32.mxu0 0.0
      %2373 = vmatmul.mubr.f32.gmra.mrb[0].mxu0 %v2189
      %v2374 = vpop.f32.mrb[0].mxu0
      %v2375 = vadd.f32 %v2149, %v2374
      %v2376 = vpop.f32.mrb[0].mxu0
      %2377 = vmatprep.mubr.f32.mxu0 0.0
      %2378 = vmatmul.mubr.f32.gmra.mrb[0].mxu0 %v2192
      %v2379 = vpop.f32.mrb[0].mxu0
      %v2380 = vadd.f32 %v2149, %v2379
      %v2381 = vpop.f32.mrb[0].mxu0
      %2382 = vmatprep.mubr.f32.mxu0 0.0
      %2383 = vmatmul.mubr.f32.gmra.mrb[0].mxu0 %v2195
      %v2384 = vpop.f32.mrb[0].mxu0
      %v2385 = vadd.f32 %v2149, %v2384
      %v2386 = vpop.f32.mrb[0].mxu0
      %2387 = vmatprep.mubr.f32.mxu0 0.0
      %2388 = vmatmul.mubr.f32.gmra.mrb[0].mxu0 %v2198
      %v2389 = vpop.f32.mrb[0].mxu0
      %v2390 = vadd.f32 %v2149, %v2389
      %v2391 = vpop.f32.mrb[0].mxu0
      %2392 = vmatprep.mubr.f32.mxu0 0.0
      %2393 = vmatmul.mubr.f32.gmra.mrb[0].mxu0 %v2201
      %v2394 = vpop.f32.mrb[0].mxu0
      %v2395 = vadd.f32 %v2149, %v2394
      %v2396 = vpop.f32.mrb[0].mxu0
      %2397 = vmatprep.mubr.f32.mxu0 0.0
      %2398 = vmatmul.mubr.f32.gmra.mrb[0].mxu0 %v2204
      %v2399 = vpop.f32.mrb[0].mxu0
      %v2400 = vadd.f32 %v2149, %v2399
      %v2401 = vpop.f32.mrb[0].mxu0
      %2402 = vmatprep.mubr.f32.mxu0 0.0
      %2403 = vmatmul.mubr.f32.gmra.mrb[0].mxu0 %v2207
      %v2404 = vpop.f32.mrb[0].mxu0
      %v2405 = vadd.f32 %v2149, %v2404
      %v2406 = vpop.f32.mrb[0].mxu0
      %2407 = vmatprep.mubr.f32.mxu0 0.0
      %2408 = vmatmul.mubr.f32.gmra.mrb[0].mxu0 %v2210
      %v2409 = vpop.f32.mrb[0].mxu0
      %v2410 = vadd.f32 %v2149, %v2409
      %v2411 = vpop.f32.mrb[0].mxu0
      %2412 = vmatprep.mubr.f32.mxu0 0.0
      %2413 = vmatmul.mubr.f32.gmra.mrb[0].mxu0 %v2213
      %v2414 = vpop.f32.mrb[0].mxu0
      %v2415 = vadd.f32 %v2149, %v2414
      %v2416 = vpop.f32.mrb[0].mxu0
      %2417 = vmatprep.mubr.f32.mxu0 0.0
      %2418 = vmatmul.mubr.f32.gmra.mrb[0].mxu0 %v2216
      %v2419 = vpop.f32.mrb[0].mxu0
      %v2420 = vadd.f32 %v2149, %v2419
      %v2421 = vpop.f32.mrb[0].mxu0
      %2422 = vmatprep.mubr.f32.mxu0 0.0
      %2423 = vmatmul.mubr.f32.gmra.mrb[0].mxu0 %v2219
      %v2424 = vpop.f32.mrb[0].mxu0
      %v2425 = vadd.f32 %v2149, %v2424
      %v2426 = vpop.f32.mrb[0].mxu0
      %2427 = vmatprep.mubr.f32.mxu0 0.0
      %2428 = vmatmul.mubr.f32.gmra.mrb[0].mxu0 %v2222
      %v2429 = vpop.f32.mrb[0].mxu0
      %v2430 = vadd.f32 %v2149, %v2429
      %v2431 = vpop.f32.mrb[0].mxu0
      %2432 = vmatprep.mubr.f32.mxu0 0.0
      %2433 = vmatmul.mubr.f32.gmra.mrb[0].mxu0 %v2225
      %v2434 = vpop.f32.mrb[0].mxu0
      %v2435 = vadd.f32 %v2149, %v2434
      %v2436 = vpop.f32.mrb[0].mxu0
      %2437 = vmatprep.mubr.f32.mxu0 0.0
      %2438 = vmatmul.mubr.f32.gmra.mrb[0].mxu0 %v2228
      %v2439 = vpop.f32.mrb[0].mxu0
      %v2440 = vadd.f32 %v2149, %v2439
      %v2441 = vpop.f32.mrb[0].mxu0
      %2442 = vmatprep.mubr.f32.mxu0 0.0
      %2443 = vmatmul.mubr.f32.gmra.mrb[0].mxu0 %v2231
      %v2444 = vpop.f32.mrb[0].mxu0
      %v2445 = vadd.f32 %v2149, %v2444
      %v2446 = vpop.f32.mrb[0].mxu0
      %2447 = vmatprep.mubr.f32.mxu0 0.0
      %2448 = vmatmul.mubr.f32.gmra.mrb[0].mxu0 %v2234
      %v2449 = vpop.f32.mrb[0].mxu0
      %v2450 = vadd.f32 %v2149, %v2449
      %v2451 = vpop.f32.mrb[0].mxu0
      %2452 = vmatprep.mubr.f32.mxu0 0.0
      %2453 = vmatmul.mubr.f32.gmra.mrb[0].mxu0 %v2237
      %v2454 = vpop.f32.mrb[0].mxu0
      %v2455 = vadd.f32 %v2149, %v2454
      %v2456 = vpop.f32.mrb[0].mxu0
      %2457 = vmatprep.mubr.f32.mxu0 0.0
      %2458 = vmatmul.mubr.f32.gmra.mrb[0].mxu0 %v2240
      %v2459 = vpop.f32.mrb[0].mxu0
      %v2460 = vadd.f32 %v2149, %v2459
      %v2461 = vpop.f32.mrb[0].mxu0
      %2462 = vmatprep.mubr.f32.mxu0 0.0
      %2463 = vmatmul.mubr.f32.gmra.mrb[0].mxu0 %v2243
      %v2464 = vpop.f32.mrb[0].mxu0
      %v2465 = vadd.f32 %v2149, %v2464
      %v2466 = vpop.f32.mrb[0].mxu0
      %2467 = vmatprep.mubr.f32.mxu0 0.0
      %2468 = vmatmul.mubr.f32.gmra.mrb[0].mxu0 %v2246
      %v2469 = vpop.f32.mrb[0].mxu0
      %v2470 = vadd.f32 %v2149, %v2469
      %v2471 = vpop.f32.mrb[0].mxu0
      %2472 = vdwg.mxu0
      %v2473 = vmax.f32 %v2315, 0.0
      %v2474 = vmax.f32 %v2320, 0.0
      %v2475 = vmax.f32 %v2325, 0.0
      %v2476 = vmax.f32 %v2330, 0.0
      %v2477 = vmax.f32 %v2335, 0.0
      %v2478 = vmax.f32 %v2340, 0.0
      %v2479 = vmax.f32 %v2345, 0.0
      %v2480 = vmax.f32 %v2350, 0.0
      %v2481 = vmax.f32 %v2355, 0.0
      %v2482 = vmax.f32 %v2360, 0.0
      %v2483 = vmax.f32 %v2365, 0.0
      %v2484 = vmax.f32 %v2370, 0.0
      %v2485 = vmax.f32 %v2375, 0.0
      %v2486 = vmax.f32 %v2380, 0.0
      %v2487 = vmax.f32 %v2385, 0.0
      %v2488 = vmax.f32 %v2390, 0.0
      %v2489 = vmax.f32 %v2395, 0.0
      %v2490 = vmax.f32 %v2400, 0.0
      %v2491 = vmax.f32 %v2405, 0.0
      %v2492 = vmax.f32 %v2410, 0.0
      %v2493 = vmax.f32 %v2415, 0.0
      %v2494 = vmax.f32 %v2420, 0.0
      %v2495 = vmax.f32 %v2425, 0.0
      %v2496 = vmax.f32 %v2430, 0.0
      %v2497 = vmax.f32 %v2435, 0.0
      %v2498 = vmax.f32 %v2440, 0.0
      %v2499 = vmax.f32 %v2445, 0.0
      %v2500 = vmax.f32 %v2450, 0.0
      %v2501 = vmax.f32 %v2455, 0.0
      %v2502 = vmax.f32 %v2460, 0.0
      %v2503 = vmax.f32 %v2465, 0.0
      %v2504 = vmax.f32 %v2470, 0.0
      %2505 = vst.msk [vmem:[%s441] sm:$0xff] %vm1970, %v2473
      %2506 = vst.msk [vmem:[%s441 + $0x8] sm:$0xff] %vm1970, %v2474
      %2507 = vst.msk [vmem:[%s441 + $0x10] sm:$0xff] %vm1970, %v2475
      %2508 = vst.msk [vmem:[%s441 + $0x18] sm:$0xff] %vm1970, %v2476
      %2509 = vst.msk [vmem:[%s441 + $0x20] sm:$0xff] %vm1970, %v2477
      %2510 = vst.msk [vmem:[%s441 + $0x28] sm:$0xff] %vm1970, %v2478
      %2511 = vst.msk [vmem:[%s441 + $0x30] sm:$0xff] %vm1970, %v2479
      %2512 = vst.msk [vmem:[%s441 + $0x38] sm:$0xff] %vm1970, %v2480
      %2513 = vst.msk [vmem:[%s441 + $0x40] sm:$0xff] %vm1970, %v2481
      %2514 = vst.msk [vmem:[%s441 + $0x48] sm:$0xff] %vm1970, %v2482
      %2515 = vst.msk [vmem:[%s441 + $0x50] sm:$0xff] %vm1970, %v2483
      %2516 = vst.msk [vmem:[%s441 + $0x58] sm:$0xff] %vm1970, %v2484
      %2517 = vst.msk [vmem:[%s441 + $0x60] sm:$0xff] %vm1970, %v2485
      %2518 = vst.msk [vmem:[%s441 + $0x68] sm:$0xff] %vm1970, %v2486
      %2519 = vst.msk [vmem:[%s441 + $0x70] sm:$0xff] %vm1970, %v2487
      %2520 = vst.msk [vmem:[%s441 + $0x78] sm:$0xff] %vm1970, %v2488
      %2521 = vst.msk [vmem:[%s441 + $0x80] sm:$0xff] %vm1970, %v2489
      %2522 = vst.msk [vmem:[%s441 + $0x88] sm:$0xff] %vm1970, %v2490
      %2523 = vst.msk [vmem:[%s441 + $0x90] sm:$0xff] %vm1970, %v2491
      %2524 = vst.msk [vmem:[%s441 + $0x98] sm:$0xff] %vm1970, %v2492
      %2525 = vst.msk [vmem:[%s441 + $0xa0] sm:$0xff] %vm1970, %v2493
      %2526 = vst.msk [vmem:[%s441 + $0xa8] sm:$0xff] %vm1970, %v2494
      %2527 = vst.msk [vmem:[%s441 + $0xb0] sm:$0xff] %vm1970, %v2495
      %2528 = vst.msk [vmem:[%s441 + $0xb8] sm:$0xff] %vm1970, %v2496
      %2529 = vst.msk [vmem:[%s441 + $0xc0] sm:$0xff] %vm1970, %v2497
      %2530 = vst.msk [vmem:[%s441 + $0xc8] sm:$0xff] %vm1970, %v2498
      %2531 = vst.msk [vmem:[%s441 + $0xd0] sm:$0xff] %vm1970, %v2499
      %2532 = vst.msk [vmem:[%s441 + $0xd8] sm:$0xff] %vm1970, %v2500
      %2533 = vst.msk [vmem:[%s441 + $0xe0] sm:$0xff] %vm1970, %v2501
      %2534 = vst.msk [vmem:[%s441 + $0xe8] sm:$0xff] %vm1970, %v2502
      %2535 = vst.msk [vmem:[%s441 + $0xf0] sm:$0xff] %vm1970, %v2503
      %2536 = vst.msk [vmem:[%s441 + $0xf8] sm:$0xff] %vm1970, %v2504
      %2537 = vst.msk [vmem:[#allocation3] sm:$0xff] %vm452, 0.0
      %2538 = vst.msk [vmem:[#allocation3 + $0x8] sm:$0x3] %vm455, 0.0
      %s2539 = scalar_lea.vmem [#allocation3], 144
      %2540 = vst.msk [vmem:[%s2539] sm:$0xff] %vm452, 0.0
      %2541 = vst.msk [vmem:[%s2539 + $0x8] sm:$0x3] %vm455, 0.0
      %s2542 = scalar_lea.vmem [#allocation3], 16
      %2543 = vst.msk [vmem:[%s2542] sm:$0x1] %vm462, 0.0
      %2544 = vst.msk [vmem:[%s2542 + $0x10] sm:$0x1] %vm462, 0.0
      %2545 = vst.msk [vmem:[%s2542 + $0x20] sm:$0x1] %vm462, 0.0
      %2546 = vst.msk [vmem:[%s2542 + $0x30] sm:$0x1] %vm462, 0.0
      %2547 = vst.msk [vmem:[%s2542 + $0x40] sm:$0x1] %vm462, 0.0
      %2548 = vst.msk [vmem:[%s2542 + $0x50] sm:$0x1] %vm462, 0.0
      %2549 = vst.msk [vmem:[%s2542 + $0x60] sm:$0x1] %vm462, 0.0
      %2550 = vst.msk [vmem:[%s2542 + $0x70] sm:$0x1] %vm462, 0.0
      %2551 = vst.msk [vmem:[%s2542 + $0x9] sm:$0x1] %vm462, 0.0
      %2552 = vst.msk [vmem:[%s2542 + $0x19] sm:$0x1] %vm462, 0.0
      %2553 = vst.msk [vmem:[%s2542 + $0x29] sm:$0x1] %vm462, 0.0
      %2554 = vst.msk [vmem:[%s2542 + $0x39] sm:$0x1] %vm462, 0.0
      %2555 = vst.msk [vmem:[%s2542 + $0x49] sm:$0x1] %vm462, 0.0
      %2556 = vst.msk [vmem:[%s2542 + $0x59] sm:$0x1] %vm462, 0.0
      %2557 = vst.msk [vmem:[%s2542 + $0x69] sm:$0x1] %vm462, 0.0
      %2558 = vst.msk [vmem:[%s2542 + $0x79] sm:$0x1] %vm462, 0.0
      %v2559 = vld [vmem:[%s431] sm:$0xff]
      %v2560 = vld [vmem:[%s431 + $0x8] sm:$0xff]
      %v2561 = vld [vmem:[%s431 + $0x10] sm:$0xff]
      %v2562 = vld [vmem:[%s431 + $0x18] sm:$0xff]
      %v2563 = vld [vmem:[%s431 + $0x20] sm:$0xff]
      %v2564 = vld [vmem:[%s431 + $0x28] sm:$0xff]
      %v2565 = vld [vmem:[%s431 + $0x30] sm:$0xff]
      %v2566 = vld [vmem:[%s431 + $0x38] sm:$0xff]
      %2567 = vst.msk [vmem:[%s2542 + $0x1] sm:$0xff] %vm452, %v2559
      %2568 = vst.msk [vmem:[%s2542 + $0x11] sm:$0xff] %vm452, %v2560
      %2569 = vst.msk [vmem:[%s2542 + $0x21] sm:$0xff] %vm452, %v2561
      %2570 = vst.msk [vmem:[%s2542 + $0x31] sm:$0xff] %vm452, %v2562
      %2571 = vst.msk [vmem:[%s2542 + $0x41] sm:$0xff] %vm452, %v2563
      %2572 = vst.msk [vmem:[%s2542 + $0x51] sm:$0xff] %vm452, %v2564
      %2573 = vst.msk [vmem:[%s2542 + $0x61] sm:$0xff] %vm452, %v2565
      %2574 = vst.msk [vmem:[%s2542 + $0x71] sm:$0xff] %vm452, %v2566
      %v2575 = vld [vmem:[#allocation3] sm:$0xff]
      %v2576 = vld [vmem:[#allocation3 + $0x10] sm:$0xff]
      %v2577 = vld [vmem:[#allocation3 + $0x20] sm:$0xff]
      %v2578 = vld [vmem:[#allocation3 + $0x30] sm:$0xff]
      %v2579 = vld [vmem:[#allocation3 + $0x40] sm:$0xff]
      %v2580 = vld [vmem:[#allocation3 + $0x50] sm:$0xff]
      %v2581 = vld [vmem:[#allocation3 + $0x60] sm:$0xff]
      %v2582 = vld [vmem:[#allocation3 + $0x70] sm:$0xff]
      %v2583 = vld [vmem:[#allocation3 + $0x1] sm:$0xff]
      %v2584 = vld [vmem:[#allocation3 + $0x11] sm:$0xff]
      %v2585 = vld [vmem:[#allocation3 + $0x21] sm:$0xff]
      %v2586 = vld [vmem:[#allocation3 + $0x31] sm:$0xff]
      %v2587 = vld [vmem:[#allocation3 + $0x41] sm:$0xff]
      %v2588 = vld [vmem:[#allocation3 + $0x51] sm:$0xff]
      %v2589 = vld [vmem:[#allocation3 + $0x61] sm:$0xff]
      %v2590 = vld [vmem:[#allocation3 + $0x71] sm:$0xff]
      %v2591 = vld [vmem:[#allocation3 + $0x2] sm:$0xff]
      %v2592 = vld [vmem:[#allocation3 + $0x12] sm:$0xff]
      %v2593 = vld [vmem:[#allocation3 + $0x22] sm:$0xff]
      %v2594 = vld [vmem:[#allocation3 + $0x32] sm:$0xff]
      %v2595 = vld [vmem:[#allocation3 + $0x42] sm:$0xff]
      %v2596 = vld [vmem:[#allocation3 + $0x52] sm:$0xff]
      %v2597 = vld [vmem:[#allocation3 + $0x62] sm:$0xff]
      %v2598 = vld [vmem:[#allocation3 + $0x72] sm:$0xff]
      %v2599 = vld [vmem:[%s2542] sm:$0xff]
      %v2600 = vld [vmem:[%s2542 + $0x10] sm:$0xff]
      %v2601 = vld [vmem:[%s2542 + $0x20] sm:$0xff]
      %v2602 = vld [vmem:[%s2542 + $0x30] sm:$0xff]
      %v2603 = vld [vmem:[%s2542 + $0x40] sm:$0xff]
      %v2604 = vld [vmem:[%s2542 + $0x50] sm:$0xff]
      %v2605 = vld [vmem:[%s2542 + $0x60] sm:$0xff]
      %v2606 = vld [vmem:[%s2542 + $0x70] sm:$0xff]
      %v2607 = vld [vmem:[%s2542 + $0x1] sm:$0xff]
      %v2608 = vld [vmem:[%s2542 + $0x11] sm:$0xff]
      %v2609 = vld [vmem:[%s2542 + $0x21] sm:$0xff]
      %v2610 = vld [vmem:[%s2542 + $0x31] sm:$0xff]
      %v2611 = vld [vmem:[%s2542 + $0x41] sm:$0xff]
      %v2612 = vld [vmem:[%s2542 + $0x51] sm:$0xff]
      %v2613 = vld [vmem:[%s2542 + $0x61] sm:$0xff]
      %v2614 = vld [vmem:[%s2542 + $0x71] sm:$0xff]
      %v2615 = vld [vmem:[%s2542 + $0x2] sm:$0xff]
      %v2616 = vld [vmem:[%s2542 + $0x12] sm:$0xff]
      %v2617 = vld [vmem:[%s2542 + $0x22] sm:$0xff]
      %v2618 = vld [vmem:[%s2542 + $0x32] sm:$0xff]
      %v2619 = vld [vmem:[%s2542 + $0x42] sm:$0xff]
      %v2620 = vld [vmem:[%s2542 + $0x52] sm:$0xff]
      %v2621 = vld [vmem:[%s2542 + $0x62] sm:$0xff]
      %v2622 = vld [vmem:[%s2542 + $0x72] sm:$0xff]
      %s2623 = scalar_lea.vmem [#allocation3], 32
      %v2624 = vld [vmem:[%s2623] sm:$0xff]
      %v2625 = vld [vmem:[%s2623 + $0x10] sm:$0xff]
      %v2626 = vld [vmem:[%s2623 + $0x20] sm:$0xff]
      %v2627 = vld [vmem:[%s2623 + $0x30] sm:$0xff]
      %v2628 = vld [vmem:[%s2623 + $0x40] sm:$0xff]
      %v2629 = vld [vmem:[%s2623 + $0x50] sm:$0xff]
      %v2630 = vld [vmem:[%s2623 + $0x60] sm:$0xff]
      %v2631 = vld [vmem:[%s2623 + $0x70] sm:$0xff]
      %v2632 = vld [vmem:[%s2623 + $0x1] sm:$0xff]
      %v2633 = vld [vmem:[%s2623 + $0x11] sm:$0xff]
      %v2634 = vld [vmem:[%s2623 + $0x21] sm:$0xff]
      %v2635 = vld [vmem:[%s2623 + $0x31] sm:$0xff]
      %v2636 = vld [vmem:[%s2623 + $0x41] sm:$0xff]
      %v2637 = vld [vmem:[%s2623 + $0x51] sm:$0xff]
      %v2638 = vld [vmem:[%s2623 + $0x61] sm:$0xff]
      %v2639 = vld [vmem:[%s2623 + $0x71] sm:$0xff]
      %v2640 = vld [vmem:[%s2623 + $0x2] sm:$0xff]
      %v2641 = vld [vmem:[%s2623 + $0x12] sm:$0xff]
      %v2642 = vld [vmem:[%s2623 + $0x22] sm:$0xff]
      %v2643 = vld [vmem:[%s2623 + $0x32] sm:$0xff]
      %v2644 = vld [vmem:[%s2623 + $0x42] sm:$0xff]
      %v2645 = vld [vmem:[%s2623 + $0x52] sm:$0xff]
      %v2646 = vld [vmem:[%s2623 + $0x62] sm:$0xff]
      %v2647 = vld [vmem:[%s2623 + $0x72] sm:$0xff]
      %2656 = vrot.lane.b32.xlu0 %v2583, 8
      %v2657 = vpop.permute.xlu0 %2656
      %2658 = vrot.lane.b32.xlu0 %v2584, 8
      %v2659 = vpop.permute.xlu0 %2658
      %2660 = vrot.lane.b32.xlu0 %v2585, 8
      %v2661 = vpop.permute.xlu0 %2660
      %2662 = vrot.lane.b32.xlu0 %v2586, 8
      %v2663 = vpop.permute.xlu0 %2662
      %2664 = vrot.lane.b32.xlu0 %v2587, 8
      %v2665 = vpop.permute.xlu0 %2664
      %2666 = vrot.lane.b32.xlu0 %v2588, 8
      %v2667 = vpop.permute.xlu0 %2666
      %2668 = vrot.lane.b32.xlu0 %v2589, 8
      %v2669 = vpop.permute.xlu0 %2668
      %2670 = vrot.lane.b32.xlu0 %v2590, 8
      %v2671 = vpop.permute.xlu0 %2670
      %2688 = vrot.lane.b32.xlu0 %v2591, 16
      %v2689 = vpop.permute.xlu0 %2688
      %2690 = vrot.lane.b32.xlu0 %v2592, 16
      %v2691 = vpop.permute.xlu0 %2690
      %2692 = vrot.lane.b32.xlu0 %v2593, 16
      %v2693 = vpop.permute.xlu0 %2692
      %2694 = vrot.lane.b32.xlu0 %v2594, 16
      %v2695 = vpop.permute.xlu0 %2694
      %2696 = vrot.lane.b32.xlu0 %v2595, 16
      %v2697 = vpop.permute.xlu0 %2696
      %2698 = vrot.lane.b32.xlu0 %v2596, 16
      %v2699 = vpop.permute.xlu0 %2698
      %2700 = vrot.lane.b32.xlu0 %v2597, 16
      %v2701 = vpop.permute.xlu0 %2700
      %2702 = vrot.lane.b32.xlu0 %v2598, 16
      %v2703 = vpop.permute.xlu0 %2702
      %2720 = vrot.lane.b32.xlu0 %v2599, 24
      %v2721 = vpop.permute.xlu0 %2720
      %2722 = vrot.lane.b32.xlu0 %v2600, 24
      %v2723 = vpop.permute.xlu0 %2722
      %2724 = vrot.lane.b32.xlu0 %v2601, 24
      %v2725 = vpop.permute.xlu0 %2724
      %2726 = vrot.lane.b32.xlu0 %v2602, 24
      %v2727 = vpop.permute.xlu0 %2726
      %2728 = vrot.lane.b32.xlu0 %v2603, 24
      %v2729 = vpop.permute.xlu0 %2728
      %2730 = vrot.lane.b32.xlu0 %v2604, 24
      %v2731 = vpop.permute.xlu0 %2730
      %2732 = vrot.lane.b32.xlu0 %v2605, 24
      %v2733 = vpop.permute.xlu0 %2732
      %2734 = vrot.lane.b32.xlu0 %v2606, 24
      %v2735 = vpop.permute.xlu0 %2734
      %2752 = vrot.lane.b32.xlu0 %v2607, 32
      %v2753 = vpop.permute.xlu0 %2752
      %2754 = vrot.lane.b32.xlu0 %v2608, 32
      %v2755 = vpop.permute.xlu0 %2754
      %2756 = vrot.lane.b32.xlu0 %v2609, 32
      %v2757 = vpop.permute.xlu0 %2756
      %2758 = vrot.lane.b32.xlu0 %v2610, 32
      %v2759 = vpop.permute.xlu0 %2758
      %2760 = vrot.lane.b32.xlu0 %v2611, 32
      %v2761 = vpop.permute.xlu0 %2760
      %2762 = vrot.lane.b32.xlu0 %v2612, 32
      %v2763 = vpop.permute.xlu0 %2762
      %2764 = vrot.lane.b32.xlu0 %v2613, 32
      %v2765 = vpop.permute.xlu0 %2764
      %2766 = vrot.lane.b32.xlu0 %v2614, 32
      %v2767 = vpop.permute.xlu0 %2766
      %2784 = vrot.lane.b32.xlu0 %v2615, 40
      %v2785 = vpop.permute.xlu0 %2784
      %2786 = vrot.lane.b32.xlu0 %v2616, 40
      %v2787 = vpop.permute.xlu0 %2786
      %2788 = vrot.lane.b32.xlu0 %v2617, 40
      %v2789 = vpop.permute.xlu0 %2788
      %2790 = vrot.lane.b32.xlu0 %v2618, 40
      %v2791 = vpop.permute.xlu0 %2790
      %2792 = vrot.lane.b32.xlu0 %v2619, 40
      %v2793 = vpop.permute.xlu0 %2792
      %2794 = vrot.lane.b32.xlu0 %v2620, 40
      %v2795 = vpop.permute.xlu0 %2794
      %2796 = vrot.lane.b32.xlu0 %v2621, 40
      %v2797 = vpop.permute.xlu0 %2796
      %2798 = vrot.lane.b32.xlu0 %v2622, 40
      %v2799 = vpop.permute.xlu0 %2798
      %2816 = vrot.lane.b32.xlu0 %v2624, 48
      %v2817 = vpop.permute.xlu0 %2816
      %2818 = vrot.lane.b32.xlu0 %v2625, 48
      %v2819 = vpop.permute.xlu0 %2818
      %2820 = vrot.lane.b32.xlu0 %v2626, 48
      %v2821 = vpop.permute.xlu0 %2820
      %2822 = vrot.lane.b32.xlu0 %v2627, 48
      %v2823 = vpop.permute.xlu0 %2822
      %2824 = vrot.lane.b32.xlu0 %v2628, 48
      %v2825 = vpop.permute.xlu0 %2824
      %2826 = vrot.lane.b32.xlu0 %v2629, 48
      %v2827 = vpop.permute.xlu0 %2826
      %2828 = vrot.lane.b32.xlu0 %v2630, 48
      %v2829 = vpop.permute.xlu0 %2828
      %2830 = vrot.lane.b32.xlu0 %v2631, 48
      %v2831 = vpop.permute.xlu0 %2830
      %2848 = vrot.lane.b32.xlu0 %v2632, 56
      %v2849 = vpop.permute.xlu0 %2848
      %2850 = vrot.lane.b32.xlu0 %v2633, 56
      %v2851 = vpop.permute.xlu0 %2850
      %2852 = vrot.lane.b32.xlu0 %v2634, 56
      %v2853 = vpop.permute.xlu0 %2852
      %2854 = vrot.lane.b32.xlu0 %v2635, 56
      %v2855 = vpop.permute.xlu0 %2854
      %2856 = vrot.lane.b32.xlu0 %v2636, 56
      %v2857 = vpop.permute.xlu0 %2856
      %2858 = vrot.lane.b32.xlu0 %v2637, 56
      %v2859 = vpop.permute.xlu0 %2858
      %2860 = vrot.lane.b32.xlu0 %v2638, 56
      %v2861 = vpop.permute.xlu0 %2860
      %2862 = vrot.lane.b32.xlu0 %v2639, 56
      %v2863 = vpop.permute.xlu0 %2862
      %2880 = vrot.lane.b32.xlu0 %v2640, 64
      %v2881 = vpop.permute.xlu0 %2880
      %2882 = vrot.lane.b32.xlu0 %v2641, 64
      %v2883 = vpop.permute.xlu0 %2882
      %2884 = vrot.lane.b32.xlu0 %v2642, 64
      %v2885 = vpop.permute.xlu0 %2884
      %2886 = vrot.lane.b32.xlu0 %v2643, 64
      %v2887 = vpop.permute.xlu0 %2886
      %2888 = vrot.lane.b32.xlu0 %v2644, 64
      %v2889 = vpop.permute.xlu0 %2888
      %2890 = vrot.lane.b32.xlu0 %v2645, 64
      %v2891 = vpop.permute.xlu0 %2890
      %2892 = vrot.lane.b32.xlu0 %v2646, 64
      %v2893 = vpop.permute.xlu0 %2892
      %2894 = vrot.lane.b32.xlu0 %v2647, 64
      %v2895 = vpop.permute.xlu0 %2894
      %v2904 = vsel %vm452, %v2575, %v2657
      %v2905 = vsel %vm452, %v2576, %v2659
      %v2906 = vsel %vm452, %v2577, %v2661
      %v2907 = vsel %vm452, %v2578, %v2663
      %v2908 = vsel %vm452, %v2579, %v2665
      %v2909 = vsel %vm452, %v2580, %v2667
      %v2910 = vsel %vm452, %v2581, %v2669
      %v2911 = vsel %vm452, %v2582, %v2671
      %v2912 = vsel %vm1904, %v2904, %v2689
      %v2913 = vsel %vm1904, %v2905, %v2691
      %v2914 = vsel %vm1904, %v2906, %v2693
      %v2915 = vsel %vm1904, %v2907, %v2695
      %v2916 = vsel %vm1904, %v2908, %v2697
      %v2917 = vsel %vm1904, %v2909, %v2699
      %v2918 = vsel %vm1904, %v2910, %v2701
      %v2919 = vsel %vm1904, %v2911, %v2703
      %v2920 = vsel %vm1937, %v2912, %v2721
      %v2921 = vsel %vm1937, %v2913, %v2723
      %v2922 = vsel %vm1937, %v2914, %v2725
      %v2923 = vsel %vm1937, %v2915, %v2727
      %v2924 = vsel %vm1937, %v2916, %v2729
      %v2925 = vsel %vm1937, %v2917, %v2731
      %v2926 = vsel %vm1937, %v2918, %v2733
      %v2927 = vsel %vm1937, %v2919, %v2735
      %v2928 = vsel %vm1970, %v2920, %v2753
      %v2929 = vsel %vm1970, %v2921, %v2755
      %v2930 = vsel %vm1970, %v2922, %v2757
      %v2931 = vsel %vm1970, %v2923, %v2759
      %v2932 = vsel %vm1970, %v2924, %v2761
      %v2933 = vsel %vm1970, %v2925, %v2763
      %v2934 = vsel %vm1970, %v2926, %v2765
      %v2935 = vsel %vm1970, %v2927, %v2767
      %v2936 = vsel %vm2003, %v2928, %v2785
      %v2937 = vsel %vm2003, %v2929, %v2787
      %v2938 = vsel %vm2003, %v2930, %v2789
      %v2939 = vsel %vm2003, %v2931, %v2791
      %v2940 = vsel %vm2003, %v2932, %v2793
      %v2941 = vsel %vm2003, %v2933, %v2795
      %v2942 = vsel %vm2003, %v2934, %v2797
      %v2943 = vsel %vm2003, %v2935, %v2799
      %v2944 = vsel %vm2036, %v2936, %v2817
      %v2945 = vsel %vm2036, %v2937, %v2819
      %v2946 = vsel %vm2036, %v2938, %v2821
      %v2947 = vsel %vm2036, %v2939, %v2823
      %v2948 = vsel %vm2036, %v2940, %v2825
      %v2949 = vsel %vm2036, %v2941, %v2827
      %v2950 = vsel %vm2036, %v2942, %v2829
      %v2951 = vsel %vm2036, %v2943, %v2831
      %v2952 = vsel %vm2069, %v2944, %v2849
      %v2953 = vsel %vm2069, %v2945, %v2851
      %v2954 = vsel %vm2069, %v2946, %v2853
      %v2955 = vsel %vm2069, %v2947, %v2855
      %v2956 = vsel %vm2069, %v2948, %v2857
      %v2957 = vsel %vm2069, %v2949, %v2859
      %v2958 = vsel %vm2069, %v2950, %v2861
      %v2959 = vsel %vm2069, %v2951, %v2863
      %v2960 = vsel %vm2102, %v2952, %v2881
      %v2961 = vsel %vm2102, %v2953, %v2883
      %v2962 = vsel %vm2102, %v2954, %v2885
      %v2963 = vsel %vm2102, %v2955, %v2887
      %v2964 = vsel %vm2102, %v2956, %v2889
      %v2965 = vsel %vm2102, %v2957, %v2891
      %v2966 = vsel %vm2102, %v2958, %v2893
      %v2967 = vsel %vm2102, %v2959, %v2895
      %v2968 = vld [vmem:[%s4] sm:$0xff]
      %v2969 = vld [vmem:[%s4 + $0x8] sm:$0xff]
      %v2970 = vld [vmem:[%s4 + $0x10] sm:$0xff]
      %v2971 = vld [vmem:[%s4 + $0x18] sm:$0xff]
      %v2972 = vld [vmem:[%s4 + $0x20] sm:$0xff]
      %v2973 = vld [vmem:[%s4 + $0x28] sm:$0xff]
      %v2974 = vld [vmem:[%s4 + $0x30] sm:$0xff]
      %v2975 = vld [vmem:[%s4 + $0x38] sm:$0xff]
      %v2976 = vld [vmem:[%s4 + $0x40] sm:$0xff]
      %v2977 = vld [vmem:[%s7] sm:$0x1]
      %v2979 = vlaneseq
      %v2980 = vshrl.u32 %v2979, 7
      %v2981 = vsub.s32 0, %v2980
      %v2982 = vrot.slane %v2977, %v2981
      %v2985 = vsel %vm2151, %v2960, 0
      %v2988 = vsel %vm2151, %v2961, 0
      %v2991 = vsel %vm2151, %v2962, 0
      %v2994 = vsel %vm2151, %v2963, 0
      %v2997 = vsel %vm2151, %v2964, 0
      %v3000 = vsel %vm2151, %v2965, 0
      %v3003 = vsel %vm2151, %v2966, 0
      %v3006 = vsel %vm2151, %v2967, 0
      %3008 = vmatprep.subr.mxu0 0.0
      %3009 = vmatpush1.msra.mxu0 %v2968
      %3010 = vmatprep.subr.mxu0 0.0
      %3011 = vmatpush1.msra.mxu0 %v2969
      %3012 = vmatprep.subr.mxu0 0.0
      %3013 = vmatpush1.msra.mxu0 %v2970
      %3014 = vmatprep.subr.mxu0 0.0
      %3015 = vmatpush1.msra.mxu0 %v2971
      %3016 = vmatprep.subr.mxu0 0.0
      %3017 = vmatpush1.msra.mxu0 %v2972
      %3018 = vmatprep.subr.mxu0 0.0
      %3019 = vmatpush1.msra.mxu0 %v2973
      %3020 = vmatprep.subr.mxu0 0.0
      %3021 = vmatpush1.msra.mxu0 %v2974
      %3022 = vmatprep.subr.mxu0 0.0
      %3023 = vmatpush1.msra.mxu0 %v2975
      %3024 = vmatprep.subr.mxu0 0.0
      %3025 = vmatpush1.msra.mxu0 %v2976
      %3026 = vmatprep.subr.mxu0 0.0
      %3027 = vmatpush1.msra.mxu0 0.0
      %3028 = vmatprep.subr.mxu0 0.0
      %3029 = vmatpush1.msra.mxu0 0.0
      %3030 = vmatprep.subr.mxu0 0.0
      %3031 = vmatpush1.msra.mxu0 0.0
      %3032 = vmatprep.subr.mxu0 0.0
      %3033 = vmatpush1.msra.mxu0 0.0
      %3034 = vmatprep.subr.mxu0 0.0
      %3035 = vmatpush1.msra.mxu0 0.0
      %3036 = vmatprep.subr.mxu0 0.0
      %3037 = vmatpush1.msra.mxu0 0.0
      %3038 = vmatprep.subr.mxu0 0.0
      %3039 = vmatpush1.msra.mxu0 0.0
      %3040 = vmatprep.subr.mxu0 0.0
      %3041 = vmatpush1.msra.mxu0 0.0
      %3042 = vmatprep.subr.mxu0 0.0
      %3043 = vmatpush1.msra.mxu0 0.0
      %3044 = vmatprep.subr.mxu0 0.0
      %3045 = vmatpush1.msra.mxu0 0.0
      %3046 = vmatprep.subr.mxu0 0.0
      %3047 = vmatpush1.msra.mxu0 0.0
      %3048 = vmatprep.subr.mxu0 0.0
      %3049 = vmatpush1.msra.mxu0 0.0
      %3050 = vmatprep.subr.mxu0 0.0
      %3051 = vmatpush1.msra.mxu0 0.0
      %3052 = vmatprep.subr.mxu0 0.0
      %3053 = vmatpush1.msra.mxu0 0.0
      %3054 = vmatprep.subr.mxu0 0.0
      %3055 = vmatpush1.msra.mxu0 0.0
      %3056 = vmatprep.subr.mxu0 0.0
      %3057 = vmatpush1.msra.mxu0 0.0
      %3058 = vmatprep.subr.mxu0 0.0
      %3059 = vmatpush1.msra.mxu0 0.0
      %3060 = vmatprep.subr.mxu0 0.0
      %3061 = vmatpush1.msra.mxu0 0.0
      %3062 = vmatprep.subr.mxu0 0.0
      %3063 = vmatpush1.msra.mxu0 0.0
      %3064 = vmatprep.subr.mxu0 0.0
      %3065 = vmatpush1.msra.mxu0 0.0
      %3066 = vmatprep.subr.mxu0 0.0
      %3067 = vmatpush1.msra.mxu0 0.0
      %3068 = vmatprep.subr.mxu0 0.0
      %3069 = vmatpush1.msra.mxu0 0.0
      %3070 = vmatprep.subr.mxu0 0.0
      %3071 = vmatpush1.msra.mxu0 0.0
      %3072 = vmatprep.mubr.f32.mxu0 0.0
      %3073 = vmatmul.mubr.f32.gmra.mrb[0].mxu0 %v2985
      %v3074 = vpop.f32.mrb[0].mxu0
      %v3075 = vadd.f32 %v2982, %v3074
      %v3076 = vpop.f32.mrb[0].mxu0
      %3077 = vmatprep.mubr.f32.mxu0 0.0
      %3078 = vmatmul.mubr.f32.gmra.mrb[0].mxu0 %v2988
      %v3079 = vpop.f32.mrb[0].mxu0
      %v3080 = vadd.f32 %v2982, %v3079
      %v3081 = vpop.f32.mrb[0].mxu0
      %3082 = vmatprep.mubr.f32.mxu0 0.0
      %3083 = vmatmul.mubr.f32.gmra.mrb[0].mxu0 %v2991
      %v3084 = vpop.f32.mrb[0].mxu0
      %v3085 = vadd.f32 %v2982, %v3084
      %v3086 = vpop.f32.mrb[0].mxu0
      %3087 = vmatprep.mubr.f32.mxu0 0.0
      %3088 = vmatmul.mubr.f32.gmra.mrb[0].mxu0 %v2994
      %v3089 = vpop.f32.mrb[0].mxu0
      %v3090 = vadd.f32 %v2982, %v3089
      %v3091 = vpop.f32.mrb[0].mxu0
      %3092 = vmatprep.mubr.f32.mxu0 0.0
      %3093 = vmatmul.mubr.f32.gmra.mrb[0].mxu0 %v2997
      %v3094 = vpop.f32.mrb[0].mxu0
      %v3095 = vadd.f32 %v2982, %v3094
      %v3096 = vpop.f32.mrb[0].mxu0
      %3097 = vmatprep.mubr.f32.mxu0 0.0
      %3098 = vmatmul.mubr.f32.gmra.mrb[0].mxu0 %v3000
      %v3099 = vpop.f32.mrb[0].mxu0
      %v3100 = vadd.f32 %v2982, %v3099
      %v3101 = vpop.f32.mrb[0].mxu0
      %3102 = vmatprep.mubr.f32.mxu0 0.0
      %3103 = vmatmul.mubr.f32.gmra.mrb[0].mxu0 %v3003
      %v3104 = vpop.f32.mrb[0].mxu0
      %v3105 = vadd.f32 %v2982, %v3104
      %v3106 = vpop.f32.mrb[0].mxu0
      %3107 = vmatprep.mubr.f32.mxu0 0.0
      %3108 = vmatmul.mubr.f32.gmra.mrb[0].mxu0 %v3006
      %v3109 = vpop.f32.mrb[0].mxu0
      %v3110 = vadd.f32 %v2982, %v3109
      %v3111 = vpop.f32.mrb[0].mxu0
      %3112 = vdwg.mxu0
      %v3113 = vmax.f32 %v3075, 0.0
      %v3114 = vmax.f32 %v3080, 0.0
      %v3115 = vmax.f32 %v3085, 0.0
      %v3116 = vmax.f32 %v3090, 0.0
      %v3117 = vmax.f32 %v3095, 0.0
      %v3118 = vmax.f32 %v3100, 0.0
      %v3119 = vmax.f32 %v3105, 0.0
      %v3120 = vmax.f32 %v3110, 0.0
      %3121 = vst.msk [vmem:[%s446] sm:$0xff] %vm1970, %v3113
      %3122 = vst.msk [vmem:[%s446 + $0x8] sm:$0xff] %vm1970, %v3114
      %3123 = vst.msk [vmem:[%s446 + $0x10] sm:$0xff] %vm1970, %v3115
      %3124 = vst.msk [vmem:[%s446 + $0x18] sm:$0xff] %vm1970, %v3116
      %3125 = vst.msk [vmem:[%s446 + $0x20] sm:$0xff] %vm1970, %v3117
      %3126 = vst.msk [vmem:[%s446 + $0x28] sm:$0xff] %vm1970, %v3118
      %3127 = vst.msk [vmem:[%s446 + $0x30] sm:$0xff] %vm1970, %v3119
      %3128 = vst.msk [vmem:[%s446 + $0x38] sm:$0xff] %vm1970, %v3120
      %vm3129 = vcmask 62464
      %3130 = vst.msk [vmem:[#allocation4] sm:$0x3f] %vm3129, 0.0
      %s3131 = scalar_lea.vmem [#allocation4], 40
      %3132 = vst.msk [vmem:[%s3131] sm:$0x3f] %vm3129, 0.0
      %s3133 = scalar_lea.vmem [#allocation4], 8
      %3134 = vst.msk [vmem:[%s3133] sm:$0x1] %vm462, 0.0
      %3135 = vst.msk [vmem:[%s3133 + $0x8] sm:$0x1] %vm462, 0.0
      %3136 = vst.msk [vmem:[%s3133 + $0x10] sm:$0x1] %vm462, 0.0
      %3137 = vst.msk [vmem:[%s3133 + $0x18] sm:$0x1] %vm462, 0.0
      %3138 = vst.msk [vmem:[%s3133 + $0x5] sm:$0x1] %vm462, 0.0
      %3139 = vst.msk [vmem:[%s3133 + $0xd] sm:$0x1] %vm462, 0.0
      %3140 = vst.msk [vmem:[%s3133 + $0x15] sm:$0x1] %vm462, 0.0
      %3141 = vst.msk [vmem:[%s3133 + $0x1d] sm:$0x1] %vm462, 0.0
      %v3142 = vld [vmem:[%s436] sm:$0xf]
      %v3143 = vld [vmem:[%s436 + $0x4] sm:$0xf]
      %v3144 = vld [vmem:[%s436 + $0x8] sm:$0xf]
      %v3145 = vld [vmem:[%s436 + $0xc] sm:$0xf]
      %vm3146 = vcmask 60416
      %3147 = vst.msk [vmem:[%s3133 + $0x1] sm:$0xf] %vm3146, %v3142
      %3148 = vst.msk [vmem:[%s3133 + $0x9] sm:$0xf] %vm3146, %v3143
      %3149 = vst.msk [vmem:[%s3133 + $0x11] sm:$0xf] %vm3146, %v3144
      %3150 = vst.msk [vmem:[%s3133 + $0x19] sm:$0xf] %vm3146, %v3145
      %v3151 = vld [vmem:[#allocation4] sm:$0xf]
      %v3152 = vld [vmem:[#allocation4 + $0x8] sm:$0xf]
      %v3153 = vld [vmem:[#allocation4 + $0x10] sm:$0xf]
      %v3154 = vld [vmem:[#allocation4 + $0x18] sm:$0xf]
      %v3155 = vld [vmem:[#allocation4 + $0x1] sm:$0xf]
      %v3156 = vld [vmem:[#allocation4 + $0x9] sm:$0xf]
      %v3157 = vld [vmem:[#allocation4 + $0x11] sm:$0xf]
      %v3158 = vld [vmem:[#allocation4 + $0x19] sm:$0xf]
      %v3159 = vld [vmem:[#allocation4 + $0x2] sm:$0xf]
      %v3160 = vld [vmem:[#allocation4 + $0xa] sm:$0xf]
      %v3161 = vld [vmem:[#allocation4 + $0x12] sm:$0xf]
      %v3162 = vld [vmem:[#allocation4 + $0x1a] sm:$0xf]
      %v3163 = vld [vmem:[%s3133] sm:$0xf]
      %v3164 = vld [vmem:[%s3133 + $0x8] sm:$0xf]
      %v3165 = vld [vmem:[%s3133 + $0x10] sm:$0xf]
      %v3166 = vld [vmem:[%s3133 + $0x18] sm:$0xf]
      %v3167 = vld [vmem:[%s3133 + $0x1] sm:$0xf]
      %v3168 = vld [vmem:[%s3133 + $0x9] sm:$0xf]
      %v3169 = vld [vmem:[%s3133 + $0x11] sm:$0xf]
      %v3170 = vld [vmem:[%s3133 + $0x19] sm:$0xf]
      %v3171 = vld [vmem:[%s3133 + $0x2] sm:$0xf]
      %v3172 = vld [vmem:[%s3133 + $0xa] sm:$0xf]
      %v3173 = vld [vmem:[%s3133 + $0x12] sm:$0xf]
      %v3174 = vld [vmem:[%s3133 + $0x1a] sm:$0xf]
      %s3175 = scalar_lea.vmem [#allocation4], 16
      %v3176 = vld [vmem:[%s3175] sm:$0xf]
      %v3177 = vld [vmem:[%s3175 + $0x8] sm:$0xf]
      %v3178 = vld [vmem:[%s3175 + $0x10] sm:$0xf]
      %v3179 = vld [vmem:[%s3175 + $0x18] sm:$0xf]
      %v3180 = vld [vmem:[%s3175 + $0x1] sm:$0xf]
      %v3181 = vld [vmem:[%s3175 + $0x9] sm:$0xf]
      %v3182 = vld [vmem:[%s3175 + $0x11] sm:$0xf]
      %v3183 = vld [vmem:[%s3175 + $0x19] sm:$0xf]
      %v3184 = vld [vmem:[%s3175 + $0x2] sm:$0xf]
      %v3185 = vld [vmem:[%s3175 + $0xa] sm:$0xf]
      %v3186 = vld [vmem:[%s3175 + $0x12] sm:$0xf]
      %v3187 = vld [vmem:[%s3175 + $0x1a] sm:$0xf]
      %v3192 = vcombine.low %v3151, %v3152
      %v3193 = vcombine.low %v3153, %v3154
      %v3200 = vcombine.low %v3155, %v3156
      %v3201 = vcombine.low %v3157, %v3158
      %3202 = vrot.lane.b32.xlu0 %v3200, 8
      %v3203 = vpop.permute.xlu0 %3202
      %3204 = vrot.lane.b32.xlu0 %v3201, 8
      %v3205 = vpop.permute.xlu0 %3204
      %v3212 = vcombine.low %v3159, %v3160
      %v3213 = vcombine.low %v3161, %v3162
      %3214 = vrot.lane.b32.xlu0 %v3212, 16
      %v3215 = vpop.permute.xlu0 %3214
      %3216 = vrot.lane.b32.xlu0 %v3213, 16
      %v3217 = vpop.permute.xlu0 %3216
      %v3224 = vcombine.low %v3163, %v3164
      %v3225 = vcombine.low %v3165, %v3166
      %3226 = vrot.lane.b32.xlu0 %v3224, 24
      %v3227 = vpop.permute.xlu0 %3226
      %3228 = vrot.lane.b32.xlu0 %v3225, 24
      %v3229 = vpop.permute.xlu0 %3228
      %v3236 = vcombine.low %v3167, %v3168
      %v3237 = vcombine.low %v3169, %v3170
      %3238 = vrot.lane.b32.xlu0 %v3236, 32
      %v3239 = vpop.permute.xlu0 %3238
      %3240 = vrot.lane.b32.xlu0 %v3237, 32
      %v3241 = vpop.permute.xlu0 %3240
      %v3248 = vcombine.low %v3171, %v3172
      %v3249 = vcombine.low %v3173, %v3174
      %3250 = vrot.lane.b32.xlu0 %v3248, 40
      %v3251 = vpop.permute.xlu0 %3250
      %3252 = vrot.lane.b32.xlu0 %v3249, 40
      %v3253 = vpop.permute.xlu0 %3252
      %v3260 = vcombine.low %v3176, %v3177
      %v3261 = vcombine.low %v3178, %v3179
      %3262 = vrot.lane.b32.xlu0 %v3260, 48
      %v3263 = vpop.permute.xlu0 %3262
      %3264 = vrot.lane.b32.xlu0 %v3261, 48
      %v3265 = vpop.permute.xlu0 %3264
      %v3272 = vcombine.low %v3180, %v3181
      %v3273 = vcombine.low %v3182, %v3183
      %3274 = vrot.lane.b32.xlu0 %v3272, 56
      %v3275 = vpop.permute.xlu0 %3274
      %3276 = vrot.lane.b32.xlu0 %v3273, 56
      %v3277 = vpop.permute.xlu0 %3276
      %v3284 = vcombine.low %v3184, %v3185
      %v3285 = vcombine.low %v3186, %v3187
      %3286 = vrot.lane.b32.xlu0 %v3284, 64
      %v3287 = vpop.permute.xlu0 %3286
      %3288 = vrot.lane.b32.xlu0 %v3285, 64
      %v3289 = vpop.permute.xlu0 %3288
      %v3292 = vsel %vm452, %v3192, %v3203
      %v3293 = vsel %vm452, %v3193, %v3205
      %v3294 = vsel %vm1904, %v3292, %v3215
      %v3295 = vsel %vm1904, %v3293, %v3217
      %v3296 = vsel %vm1937, %v3294, %v3227
      %v3297 = vsel %vm1937, %v3295, %v3229
      %v3298 = vsel %vm1970, %v3296, %v3239
      %v3299 = vsel %vm1970, %v3297, %v3241
      %v3300 = vsel %vm2003, %v3298, %v3251
      %v3301 = vsel %vm2003, %v3299, %v3253
      %v3302 = vsel %vm2036, %v3300, %v3263
      %v3303 = vsel %vm2036, %v3301, %v3265
      %v3304 = vsel %vm2069, %v3302, %v3275
      %v3305 = vsel %vm2069, %v3303, %v3277
      %v3306 = vsel %vm2102, %v3304, %v3287
      %v3307 = vsel %vm2102, %v3305, %v3289
      %v3308 = vld [vmem:[%s5] sm:$0xff]
      %v3309 = vld [vmem:[%s5 + $0x8] sm:$0xff]
      %v3310 = vld [vmem:[%s5 + $0x10] sm:$0xff]
      %v3311 = vld [vmem:[%s5 + $0x18] sm:$0xff]
      %v3312 = vld [vmem:[%s5 + $0x20] sm:$0xff]
      %v3313 = vld [vmem:[%s5 + $0x28] sm:$0xff]
      %v3314 = vld [vmem:[%s5 + $0x30] sm:$0xff]
      %v3315 = vld [vmem:[%s5 + $0x38] sm:$0xff]
      %v3316 = vld [vmem:[%s5 + $0x40] sm:$0xff]
      %v3317 = vld [vmem:[%s8] sm:$0x1]
      %v3319 = vlaneseq
      %v3320 = vshrl.u32 %v3319, 7
      %v3321 = vsub.s32 0, %v3320
      %v3322 = vrot.slane %v3317, %v3321
      %v3325 = vsel %vm2151, %v3306, 0
      %v3328 = vsel %vm2151, %v3307, 0
      %3330 = vmatprep.subr.mxu0 0.0
      %3331 = vmatpush1.msra.mxu0 %v3308
      %3332 = vmatprep.subr.mxu0 0.0
      %3333 = vmatpush1.msra.mxu0 %v3309
      %3334 = vmatprep.subr.mxu0 0.0
      %3335 = vmatpush1.msra.mxu0 %v3310
      %3336 = vmatprep.subr.mxu0 0.0
      %3337 = vmatpush1.msra.mxu0 %v3311
      %3338 = vmatprep.subr.mxu0 0.0
      %3339 = vmatpush1.msra.mxu0 %v3312
      %3340 = vmatprep.subr.mxu0 0.0
      %3341 = vmatpush1.msra.mxu0 %v3313
      %3342 = vmatprep.subr.mxu0 0.0
      %3343 = vmatpush1.msra.mxu0 %v3314
      %3344 = vmatprep.subr.mxu0 0.0
      %3345 = vmatpush1.msra.mxu0 %v3315
      %3346 = vmatprep.subr.mxu0 0.0
      %3347 = vmatpush1.msra.mxu0 %v3316
      %3348 = vmatprep.subr.mxu0 0.0
      %3349 = vmatpush1.msra.mxu0 0.0
      %3350 = vmatprep.subr.mxu0 0.0
      %3351 = vmatpush1.msra.mxu0 0.0
      %3352 = vmatprep.subr.mxu0 0.0
      %3353 = vmatpush1.msra.mxu0 0.0
      %3354 = vmatprep.subr.mxu0 0.0
      %3355 = vmatpush1.msra.mxu0 0.0
      %3356 = vmatprep.subr.mxu0 0.0
      %3357 = vmatpush1.msra.mxu0 0.0
      %3358 = vmatprep.subr.mxu0 0.0
      %3359 = vmatpush1.msra.mxu0 0.0
      %3360 = vmatprep.subr.mxu0 0.0
      %3361 = vmatpush1.msra.mxu0 0.0
      %3362 = vmatprep.subr.mxu0 0.0
      %3363 = vmatpush1.msra.mxu0 0.0
      %3364 = vmatprep.subr.mxu0 0.0
      %3365 = vmatpush1.msra.mxu0 0.0
      %3366 = vmatprep.subr.mxu0 0.0
      %3367 = vmatpush1.msra.mxu0 0.0
      %3368 = vmatprep.subr.mxu0 0.0
      %3369 = vmatpush1.msra.mxu0 0.0
      %3370 = vmatprep.subr.mxu0 0.0
      %3371 = vmatpush1.msra.mxu0 0.0
      %3372 = vmatprep.subr.mxu0 0.0
      %3373 = vmatpush1.msra.mxu0 0.0
      %3374 = vmatprep.subr.mxu0 0.0
      %3375 = vmatpush1.msra.mxu0 0.0
      %3376 = vmatprep.subr.mxu0 0.0
      %3377 = vmatpush1.msra.mxu0 0.0
      %3378 = vmatprep.subr.mxu0 0.0
      %3379 = vmatpush1.msra.mxu0 0.0
      %3380 = vmatprep.subr.mxu0 0.0
      %3381 = vmatpush1.msra.mxu0 0.0
      %3382 = vmatprep.subr.mxu0 0.0
      %3383 = vmatpush1.msra.mxu0 0.0
      %3384 = vmatprep.subr.mxu0 0.0
      %3385 = vmatpush1.msra.mxu0 0.0
      %3386 = vmatprep.subr.mxu0 0.0
      %3387 = vmatpush1.msra.mxu0 0.0
      %3388 = vmatprep.subr.mxu0 0.0
      %3389 = vmatpush1.msra.mxu0 0.0
      %3390 = vmatprep.subr.mxu0 0.0
      %3391 = vmatpush1.msra.mxu0 0.0
      %3392 = vmatprep.subr.mxu0 0.0
      %3393 = vmatpush1.msra.mxu0 0.0
      %3394 = vmatprep.mubr.f32.mxu0 0.0
      %3395 = vmatmul.mubr.f32.gmra.mrb[0].mxu0 %v3325
      %v3396 = vpop.f32.mrb[0].mxu0
      %v3397 = vadd.f32 %v3322, %v3396
      %v3398 = vpop.f32.mrb[0].mxu0
      %3399 = vmatprep.mubr.f32.mxu0 0.0
      %3400 = vmatmul.mubr.f32.gmra.mrb[0].mxu0 %v3328
      %v3401 = vpop.f32.mrb[0].mxu0
      %v3402 = vadd.f32 %v3322, %v3401
      %v3403 = vpop.f32.mrb[0].mxu0
      %3404 = vdwg.mxu0
      %v3405 = vmax.f32 %v3397, 0.0
      %v3406 = vmax.f32 %v3402, 0.0
      %3407 = vst.msk [vmem:[%s451] sm:$0xff] %vm1970, %v3405
      %3408 = vst.msk [vmem:[%s451 + $0x8] sm:$0xff] %vm1970, %v3406
      %p3409 = scmp.lt.s32.totalorder %s23, 1
      %s3410 = scalar_select %p3409, %s23, 1
      %s3411 = smul.addr %s3410, 32
      %s3412 = smul.addr %s3411, 8
      %s3413 = scalar_lea.vmem %s9, %s3412
      %p3414 = scmp.lt.s32.totalorder %s23, 1
      %s3415 = scalar_select %p3414, %s23, 1
      %s3416 = smul.addr %s3415, 8
      %s3417 = smul.addr %s3416, 8
      %s3418 = scalar_lea.vmem %s10, %s3417
      %p3419 = scmp.lt.s32.totalorder %s23, 1
      %s3420 = scalar_select %p3419, %s23, 1
      %s3421 = smul.addr %s3420, 2
      %s3422 = smul.addr %s3421, 8
      %s3423 = scalar_lea.vmem %s11, %s3422
      // Predicated region
      $region57: #{cajpu_forward.2} parent=55 // pred_check
        %p3424 = pneg %p245
      $region58: #{cajpu_forward.2} parent=55 // pred_check_branch
        %3426 = sbr.rel (%p3424) target = $region60
      $region59: #{cajpu_forward.2} parent=55 // pred_region
        _
      $region60: #{cajpu_forward.2} parent=55 // pred_fallthru
        _
      // Predicated region
      $region61: #{cajpu_forward.2} parent=55 // pred_check
        %p3427 = pneg %p271
      $region62: #{cajpu_forward.2} parent=55 // pred_check_branch
        %3429 = sbr.rel (%p3427) target = $region64
      $region63: #{cajpu_forward.2} parent=55 // pred_region
        _
      $region64: #{cajpu_forward.2} parent=55 // pred_fallthru
        _
      // Predicated region
      $region65: #{cajpu_forward.2} parent=55 // pred_check
        %p3430 = pneg %p297
      $region66: #{cajpu_forward.2} parent=55 // pred_check_branch
        %3432 = sbr.rel (%p3430) target = $region68
      $region67: #{cajpu_forward.2} parent=55 // pred_region
        _
      $region68: #{cajpu_forward.2} parent=55 // pred_fallthru
        _
    $region56: #{cajpu_forward.2} parent=5 // pred_fallthru
      _
    %p3433 = scmp.le.s32.totalorder 2, %s18
    // Predicated region
    $region69: #{cajpu_forward.2} parent=5 // pred_check
      %p3434 = pneg %p3433
    $region70: #{cajpu_forward.2} parent=5 // pred_check_branch
      %3436 = sbr.rel (%p3434) target = $region72
    $region71: #{cajpu_forward.2} parent=5 // pred_region
      %s3437 = ssub.s32 %s18, 2
      // Predicated region
      $region73: #{cajpu_forward.2} parent=71 // pred_check
        %p3438 = pneg %p251
      $region74: #{cajpu_forward.2} parent=71 // pred_check_branch
        %3440 = sbr.rel (%p3438) target = $region76
      $region75: #{cajpu_forward.2} parent=71 // pred_region
        %p3441 = scmp.lt.s32.totalorder %s24, 1
        %s3442 = scalar_select %p3441, %s24, 1
        %s3443 = smul.addr %s3442, 32
        %s3444 = smul.addr %s3443, 8
        %s3445 = scalar_lea.vmem %s9, %s3444
      $region76: #{cajpu_forward.2} parent=71 // pred_fallthru
        _
      // Predicated region
      $region77: #{cajpu_forward.2} parent=71 // pred_check
        %p3446 = pneg %p277
      $region78: #{cajpu_forward.2} parent=71 // pred_check_branch
        %3448 = sbr.rel (%p3446) target = $region80
      $region79: #{cajpu_forward.2} parent=71 // pred_region
        %p3449 = scmp.lt.s32.totalorder %s24, 1
        %s3450 = scalar_select %p3449, %s24, 1
        %s3451 = smul.addr %s3450, 8
        %s3452 = smul.addr %s3451, 8
        %s3453 = scalar_lea.vmem %s10, %s3452
      $region80: #{cajpu_forward.2} parent=71 // pred_fallthru
        _
      // Predicated region
      $region81: #{cajpu_forward.2} parent=71 // pred_check
        %p3454 = pneg %p303
      $region82: #{cajpu_forward.2} parent=71 // pred_check_branch
        %3456 = sbr.rel (%p3454) target = $region84
      $region83: #{cajpu_forward.2} parent=71 // pred_region
        %p3457 = scmp.lt.s32.totalorder %s24, 1
        %s3458 = scalar_select %p3457, %s24, 1
        %s3459 = smul.addr %s3458, 2
        %s3460 = smul.addr %s3459, 8
        %s3461 = scalar_lea.vmem %s11, %s3460
      $region84: #{cajpu_forward.2} parent=71 // pred_fallthru
        _
    $region72: #{cajpu_forward.2} parent=5 // pred_fallthru
      _
  $region6: #{cajpu_forward.2} parent=0 // loop_footer
    %s22 = sadd.s32 1, %s18
  $region7: #{cajpu_forward.2} parent=0 // loop_footer_branch
    %17 = sbr.rel target = $region3
  $region8: #{cajpu_forward.2} parent=0 // loop_exit
    _

// kernel: cajpu_forward.3
$region0: #{cajpu_forward.3}
  #allocation0 [shape = 'u32[]', space=smem, size = 0x4, offset = 0x4, fixed_abs, tag = 'smem constant byte address 0x4 - core index']
  #allocation1 [shape = 'u32[144,128]{1,0:T(1,128)}', space=vmem, size = 0x12000, scoped, tag = 'internal scratch']
  #allocation2 [shape = 'f32[1,22,22,96]{3,2,1,0:T(8,128)}', space=vmem, size = 0x42000, scoped, tag = 'scratch operand']
  %s0 = inlined_call_operand.vmem [shape: f32[2,16,16,96], index: 0, kind: input, shape index: {}]
  %s1 = inlined_call_operand.vmem [shape: f32[28,96], index: 1, kind: input, shape index: {}]
  %s2 = inlined_call_operand.vmem [shape: f32[4,96], index: 2, kind: input, shape index: {}]
  %s3 = inlined_call_operand.vmem [shape: f32[4,96,128], index: 3, kind: input, shape index: {}]
  %s4 = inlined_call_operand.vmem [shape: f32[4,128], index: 4, kind: input, shape index: {}]
  %s5 = inlined_call_operand.vmem [shape: f32[128,8], index: 5, kind: input, shape index: {}]
  %s6 = inlined_call_operand.vmem [shape: f32[8,128], index: 6, kind: input, shape index: {}]
  %s7 = inlined_call_operand.vmem [shape: f32[128,32], index: 7, kind: input, shape index: {}]
  %s8 = inlined_call_operand.vmem [shape: f32[1,32], index: 8, kind: input, shape index: {}]
  %s9 = inlined_call_operand.hbm [shape: f32[2,256,32], index: 9, kind: output, shape index: {}]
  %s10 = sld [smem:[#allocation0]]
  $region69: #{cajpu_forward.3} parent=0
    _
  %s12 = ssub.s32 1, %s10
  %s13 = scalar_select 0, %s12, %s10
  $region1: #{cajpu_forward.3} parent=0
    #allocation3 [shape = 'u8[262144]{0}', space=vmem, size = 0x40000, scoped, tag = 'output window, operand 0']
    #allocation4 [shape = 's32[2]{0}', space=sflag, size = 0x8, scoped, tag = 'scoped memory for cajpu_forward.3']
    %14 = vsyncpa [#allocation4], 0
    %s15 = scalar_lea.sflag [#allocation4], 1
    %16 = vsyncpa %s15, 0
    loop: start=0, step=1, limit=4
    $region2: #{cajpu_forward.3} parent=1 // loop_pre_header
      _
    $region3: #{cajpu_forward.3} parent=1 // loop_header
      %s18 = sphi 0, %s22
      %p19 = scmp.ge.s32.totalorder %s18, 4
      %s28 = sphi 0, %s30
      %s31 = sphi 0, %s28
      %s32 = sphi 0, %s31
      %s48 = sphi 0, %s32
      %s52 = sphi 0, %s52
      %s54 = sphi 0, %s52
      %s55 = sphi 0, %s54
      %s69 = sphi 0, %s55
      %s73 = sphi 0, %s73
      %s75 = sphi 0, %s73
      %s76 = sphi 0, %s75
      %s90 = sphi 0, %s76
      %s94 = sphi 0, %s94
      %s96 = sphi 0, %s94
      %s97 = sphi 0, %s96
      %s111 = sphi 0, %s97
      %s115 = sphi 0, %s115
      %s117 = sphi 0, %s115
      %s118 = sphi 0, %s117
      %s132 = sphi 0, %s118
      %s136 = sphi 0, %s136
      %s138 = sphi 0, %s136
      %s139 = sphi 0, %s138
      %s153 = sphi 0, %s139
      %s157 = sphi 0, %s157
      %s159 = sphi 0, %s157
      %s160 = sphi 0, %s159
      %s174 = sphi 0, %s160
      %s178 = sphi 0, %s178
      %s180 = sphi 0, %s178
      %s181 = sphi 0, %s180
      %s195 = sphi 0, %s181
      %s199 = sphi 0, %s199
      %s201 = sphi 0, %s199
      %s202 = sphi 0, %s201
      %s216 = sphi 0, %s202
      %s222 = sphi 0, %s224
      %s225 = sphi 0, %s222
      %s226 = sphi 0, %s225
      %s242 = sphi 0, %s226
    $region4: #{cajpu_forward.3} parent=1 // loop_header_branch
      %21 = sbr.rel (%p19) target = $region8
    $region5: #{cajpu_forward.3} parent=1 // loop_body
      %s23 = ssub.s32 %s18, 1
      %s24 = ssub.s32 %s18, 2
      %s25 = sadd.s32 %s18, 1
      %s26 = ssub.s32 %s18, %s25
      %p27 = scmp.eq.s32.totalorder %s26, 0
      %s29 = sadd.s32 %s28, 1
      %s30 = scalar_select %p27, %s28, %s29
      %p33 = pneg %p27
      %p34 = scmp.eq.s32.totalorder %s18, 1
      %p35 = por %p33, %p34
      %p36 = scmp.ne.s32.totalorder %s28, %s31
      %p37 = scmp.eq.s32.totalorder %s18, 0
      %p38 = por %p36, %p37
      %p39 = scmp.ne.s32.totalorder %s28, %s31
      %p40 = scmp.eq.s32.totalorder %s23, 1
      %p41 = por %p39, %p40
      %p42 = scmp.ne.s32.totalorder %s31, %s32
      %p43 = scmp.eq.s32.totalorder %s23, 0
      %p44 = por %p42, %p43
      %p45 = scmp.ne.s32.totalorder %s31, %s32
      %p46 = scmp.eq.s32.totalorder %s24, 1
      %p47 = por %p45, %p46
      %p49 = scmp.ne.s32.totalorder %s32, %s48
      %p50 = scmp.eq.s32.totalorder %s24, 0
      %p51 = por %p49, %p50
      %s53 = sadd.s32 %s52, 1
      %p56 = scmp.eq.s32.totalorder %s18, 1
      %p57 = scmp.ne.s32.totalorder %s52, %s54
      %p58 = scmp.eq.s32.totalorder %s18, 0
      %p59 = por %p57, %p58
      %p60 = scmp.ne.s32.totalorder %s52, %s54
      %p61 = scmp.eq.s32.totalorder %s23, 1
      %p62 = por %p60, %p61
      %p63 = scmp.ne.s32.totalorder %s54, %s55
      %p64 = scmp.eq.s32.totalorder %s23, 0
      %p65 = por %p63, %p64
      %p66 = scmp.ne.s32.totalorder %s54, %s55
      %p67 = scmp.eq.s32.totalorder %s24, 1
      %p68 = por %p66, %p67
      %p70 = scmp.ne.s32.totalorder %s55, %s69
      %p71 = scmp.eq.s32.totalorder %s24, 0
      %p72 = por %p70, %p71
      %s74 = sadd.s32 %s73, 1
      %p77 = scmp.eq.s32.totalorder %s18, 1
      %p78 = scmp.ne.s32.totalorder %s73, %s75
      %p79 = scmp.eq.s32.totalorder %s18, 0
      %p80 = por %p78, %p79
      %p81 = scmp.ne.s32.totalorder %s73, %s75
      %p82 = scmp.eq.s32.totalorder %s23, 1
      %p83 = por %p81, %p82
      %p84 = scmp.ne.s32.totalorder %s75, %s76
      %p85 = scmp.eq.s32.totalorder %s23, 0
      %p86 = por %p84, %p85
      %p87 = scmp.ne.s32.totalorder %s75, %s76
      %p88 = scmp.eq.s32.totalorder %s24, 1
      %p89 = por %p87, %p88
      %p91 = scmp.ne.s32.totalorder %s76, %s90
      %p92 = scmp.eq.s32.totalorder %s24, 0
      %p93 = por %p91, %p92
      %s95 = sadd.s32 %s94, 1
      %p98 = scmp.eq.s32.totalorder %s18, 1
      %p99 = scmp.ne.s32.totalorder %s94, %s96
      %p100 = scmp.eq.s32.totalorder %s18, 0
      %p101 = por %p99, %p100
      %p102 = scmp.ne.s32.totalorder %s94, %s96
      %p103 = scmp.eq.s32.totalorder %s23, 1
      %p104 = por %p102, %p103
      %p105 = scmp.ne.s32.totalorder %s96, %s97
      %p106 = scmp.eq.s32.totalorder %s23, 0
      %p107 = por %p105, %p106
      %p108 = scmp.ne.s32.totalorder %s96, %s97
      %p109 = scmp.eq.s32.totalorder %s24, 1
      %p110 = por %p108, %p109
      %p112 = scmp.ne.s32.totalorder %s97, %s111
      %p113 = scmp.eq.s32.totalorder %s24, 0
      %p114 = por %p112, %p113
      %s116 = sadd.s32 %s115, 1
      %p119 = scmp.eq.s32.totalorder %s18, 1
      %p120 = scmp.ne.s32.totalorder %s115, %s117
      %p121 = scmp.eq.s32.totalorder %s18, 0
      %p122 = por %p120, %p121
      %p123 = scmp.ne.s32.totalorder %s115, %s117
      %p124 = scmp.eq.s32.totalorder %s23, 1
      %p125 = por %p123, %p124
      %p126 = scmp.ne.s32.totalorder %s117, %s118
      %p127 = scmp.eq.s32.totalorder %s23, 0
      %p128 = por %p126, %p127
      %p129 = scmp.ne.s32.totalorder %s117, %s118
      %p130 = scmp.eq.s32.totalorder %s24, 1
      %p131 = por %p129, %p130
      %p133 = scmp.ne.s32.totalorder %s118, %s132
      %p134 = scmp.eq.s32.totalorder %s24, 0
      %p135 = por %p133, %p134
      %s137 = sadd.s32 %s136, 1
      %p140 = scmp.eq.s32.totalorder %s18, 1
      %p141 = scmp.ne.s32.totalorder %s136, %s138
      %p142 = scmp.eq.s32.totalorder %s18, 0
      %p143 = por %p141, %p142
      %p144 = scmp.ne.s32.totalorder %s136, %s138
      %p145 = scmp.eq.s32.totalorder %s23, 1
      %p146 = por %p144, %p145
      %p147 = scmp.ne.s32.totalorder %s138, %s139
      %p148 = scmp.eq.s32.totalorder %s23, 0
      %p149 = por %p147, %p148
      %p150 = scmp.ne.s32.totalorder %s138, %s139
      %p151 = scmp.eq.s32.totalorder %s24, 1
      %p152 = por %p150, %p151
      %p154 = scmp.ne.s32.totalorder %s139, %s153
      %p155 = scmp.eq.s32.totalorder %s24, 0
      %p156 = por %p154, %p155
      %s158 = sadd.s32 %s157, 1
      %p161 = scmp.eq.s32.totalorder %s18, 1
      %p162 = scmp.ne.s32.totalorder %s157, %s159
      %p163 = scmp.eq.s32.totalorder %s18, 0
      %p164 = por %p162, %p163
      %p165 = scmp.ne.s32.totalorder %s157, %s159
      %p166 = scmp.eq.s32.totalorder %s23, 1
      %p167 = por %p165, %p166
      %p168 = scmp.ne.s32.totalorder %s159, %s160
      %p169 = scmp.eq.s32.totalorder %s23, 0
      %p170 = por %p168, %p169
      %p171 = scmp.ne.s32.totalorder %s159, %s160
      %p172 = scmp.eq.s32.totalorder %s24, 1
      %p173 = por %p171, %p172
      %p175 = scmp.ne.s32.totalorder %s160, %s174
      %p176 = scmp.eq.s32.totalorder %s24, 0
      %p177 = por %p175, %p176
      %s179 = sadd.s32 %s178, 1
      %p182 = scmp.eq.s32.totalorder %s18, 1
      %p183 = scmp.ne.s32.totalorder %s178, %s180
      %p184 = scmp.eq.s32.totalorder %s18, 0
      %p185 = por %p183, %p184
      %p186 = scmp.ne.s32.totalorder %s178, %s180
      %p187 = scmp.eq.s32.totalorder %s23, 1
      %p188 = por %p186, %p187
      %p189 = scmp.ne.s32.totalorder %s180, %s181
      %p190 = scmp.eq.s32.totalorder %s23, 0
      %p191 = por %p189, %p190
      %p192 = scmp.ne.s32.totalorder %s180, %s181
      %p193 = scmp.eq.s32.totalorder %s24, 1
      %p194 = por %p192, %p193
      %p196 = scmp.ne.s32.totalorder %s181, %s195
      %p197 = scmp.eq.s32.totalorder %s24, 0
      %p198 = por %p196, %p197
      %s200 = sadd.s32 %s199, 1
      %p203 = scmp.eq.s32.totalorder %s18, 1
      %p204 = scmp.ne.s32.totalorder %s199, %s201
      %p205 = scmp.eq.s32.totalorder %s18, 0
      %p206 = por %p204, %p205
      %p207 = scmp.ne.s32.totalorder %s199, %s201
      %p208 = scmp.eq.s32.totalorder %s23, 1
      %p209 = por %p207, %p208
      %p210 = scmp.ne.s32.totalorder %s201, %s202
      %p211 = scmp.eq.s32.totalorder %s23, 0
      %p212 = por %p210, %p211
      %p213 = scmp.ne.s32.totalorder %s201, %s202
      %p214 = scmp.eq.s32.totalorder %s24, 1
      %p215 = por %p213, %p214
      %p217 = scmp.ne.s32.totalorder %s202, %s216
      %p218 = scmp.eq.s32.totalorder %s24, 0
      %p219 = por %p217, %p218
      %s220 = ssub.s32 %s18, %s25
      %p221 = scmp.eq.s32.totalorder %s220, 0
      %s223 = sadd.s32 %s222, 1
      %s224 = scalar_select %p221, %s222, %s223
      %p227 = pneg %p221
      %p228 = scmp.eq.s32.totalorder %s18, 1
      %p229 = por %p227, %p228
      %p230 = scmp.ne.s32.totalorder %s222, %s225
      %p231 = scmp.eq.s32.totalorder %s18, 0
      %p232 = por %p230, %p231
      %p233 = scmp.ne.s32.totalorder %s222, %s225
      %p234 = scmp.eq.s32.totalorder %s23, 1
      %p235 = por %p233, %p234
      %p236 = scmp.ne.s32.totalorder %s225, %s226
      %p237 = scmp.eq.s32.totalorder %s23, 0
      %p238 = por %p236, %p237
      %p239 = scmp.ne.s32.totalorder %s225, %s226
      %p240 = scmp.eq.s32.totalorder %s24, 1
      %p241 = por %p239, %p240
      %p243 = scmp.ne.s32.totalorder %s226, %s242
      %p244 = scmp.eq.s32.totalorder %s24, 0
      %p245 = por %p243, %p244
      %p246 = scmp.le.s32.totalorder 1, %s18
      %p247 = scmp.lt.s32.totalorder %s18, 3
      %p248 = pnand %p246, %p247
      %p249 = pneg %p248
      // Predicated region
      $region9: #{cajpu_forward.3} parent=5 // pred_check
        _
      $region10: #{cajpu_forward.3} parent=5 // pred_check_branch
        %251 = sbr.rel (%p248) target = $region12
      $region11: #{cajpu_forward.3} parent=5 // pred_region
        %s252 = ssub.s32 %s18, 1
        // Predicated region
        $region13: #{cajpu_forward.3} parent=11 // pred_check
          %p253 = pneg %p65
        $region14: #{cajpu_forward.3} parent=11 // pred_check_branch
          %255 = sbr.rel (%p253) target = $region16
        $region15: #{cajpu_forward.3} parent=11 // pred_region
          _
        $region16: #{cajpu_forward.3} parent=11 // pred_fallthru
          _
        // Predicated region
        $region17: #{cajpu_forward.3} parent=11 // pred_check
          %p256 = pneg %p86
        $region18: #{cajpu_forward.3} parent=11 // pred_check_branch
          %258 = sbr.rel (%p256) target = $region20
        $region19: #{cajpu_forward.3} parent=11 // pred_region
          _
        $region20: #{cajpu_forward.3} parent=11 // pred_fallthru
          _
        // Predicated region
        $region21: #{cajpu_forward.3} parent=11 // pred_check
          %p259 = pneg %p107
        $region22: #{cajpu_forward.3} parent=11 // pred_check_branch
          %261 = sbr.rel (%p259) target = $region24
        $region23: #{cajpu_forward.3} parent=11 // pred_region
          _
        $region24: #{cajpu_forward.3} parent=11 // pred_fallthru
          _
        // Predicated region
        $region25: #{cajpu_forward.3} parent=11 // pred_check
          %p262 = pneg %p128
        $region26: #{cajpu_forward.3} parent=11 // pred_check_branch
          %264 = sbr.rel (%p262) target = $region28
        $region27: #{cajpu_forward.3} parent=11 // pred_region
          _
        $region28: #{cajpu_forward.3} parent=11 // pred_fallthru
          _
        // Predicated region
        $region29: #{cajpu_forward.3} parent=11 // pred_check
          %p265 = pneg %p149
        $region30: #{cajpu_forward.3} parent=11 // pred_check_branch
          %267 = sbr.rel (%p265) target = $region32
        $region31: #{cajpu_forward.3} parent=11 // pred_region
          _
        $region32: #{cajpu_forward.3} parent=11 // pred_fallthru
          _
        // Predicated region
        $region33: #{cajpu_forward.3} parent=11 // pred_check
          %p268 = pneg %p170
        $region34: #{cajpu_forward.3} parent=11 // pred_check_branch
          %270 = sbr.rel (%p268) target = $region36
        $region35: #{cajpu_forward.3} parent=11 // pred_region
          _
        $region36: #{cajpu_forward.3} parent=11 // pred_fallthru
          _
        // Predicated region
        $region37: #{cajpu_forward.3} parent=11 // pred_check
          %p271 = pneg %p191
        $region38: #{cajpu_forward.3} parent=11 // pred_check_branch
          %273 = sbr.rel (%p271) target = $region40
        $region39: #{cajpu_forward.3} parent=11 // pred_region
          _
        $region40: #{cajpu_forward.3} parent=11 // pred_fallthru
          _
        // Predicated region
        $region41: #{cajpu_forward.3} parent=11 // pred_check
          %p274 = pneg %p212
        $region42: #{cajpu_forward.3} parent=11 // pred_check_branch
          %276 = sbr.rel (%p274) target = $region44
        $region43: #{cajpu_forward.3} parent=11 // pred_region
          _
        $region44: #{cajpu_forward.3} parent=11 // pred_fallthru
          _
      $region12: #{cajpu_forward.3} parent=5 // pred_fallthru
        _
      %p277 = scmp.lt.s32.totalorder %s18, 2
      // Predicated region
      $region45: #{cajpu_forward.3} parent=5 // pred_check
        %p278 = pneg %p277
      $region46: #{cajpu_forward.3} parent=5 // pred_check_branch
        %280 = sbr.rel (%p278) target = $region48
      $region47: #{cajpu_forward.3} parent=5 // pred_region
        // Predicated region
        $region49: #{cajpu_forward.3} parent=47 // pred_check
          %p281 = pneg %p38
        $region50: #{cajpu_forward.3} parent=47 // pred_check_branch
          %283 = sbr.rel (%p281) target = $region52
        $region51: #{cajpu_forward.3} parent=47 // pred_region
          %p284 = scmp.lt.s32.totalorder %s18, 1
          %s285 = scalar_select %p284, %s18, 1
          %s286 = smul.addr %s285, 32
          %s287 = smul.addr %s286, 8
          %s288 = scalar_lea.vmem %s0, %s287
        $region52: #{cajpu_forward.3} parent=47 // pred_fallthru
          _
      $region48: #{cajpu_forward.3} parent=5 // pred_fallthru
        _
      %p289 = scmp.le.s32.totalorder 1, %s18
      %p290 = scmp.lt.s32.totalorder %s18, 3
      %p291 = pnand %p289, %p290
      %p292 = pneg %p291
      // Predicated region
      $region53: #{cajpu_forward.3} parent=5 // pred_check
        _
      $region54: #{cajpu_forward.3} parent=5 // pred_check_branch
        %294 = sbr.rel (%p291) target = $region56
      $region55: #{cajpu_forward.3} parent=5 // pred_region
        %s295 = ssub.s32 %s18, 1
        %p296 = scmp.lt.s32.totalorder %s23, 1
        %s297 = scalar_select %p296, %s23, 1
        %s298 = smul.addr %s297, 32
        %s299 = smul.addr %s298, 8
        %s300 = scalar_lea.vmem %s0, %s299
        %p301 = pneg %p44
        %p302 = pneg %p41
        %p303 = pneg %p65
        %p304 = pneg %p62
        %p305 = pneg %p86
        %p306 = pneg %p83
        %p307 = pneg %p107
        %p308 = pneg %p104
        %p309 = pneg %p128
        %p310 = pneg %p125
        %p311 = pneg %p149
        %p312 = pneg %p146
        %p313 = pneg %p170
        %p314 = pneg %p167
        %p315 = pneg %p191
        %p316 = pneg %p188
        %p317 = pneg %p212
        %p318 = pneg %p209
        %p319 = pneg %p238
        %p320 = pneg %p235
        %s321 = sand.u32 %s225, 1
        %s322 = scalar_lea.sflag [#allocation4], %s321
        %s323 = sand.u32 %s225, 1
        %s324 = smul.addr %s323, 256
        %s325 = scalar_lea.vmem [#allocation3], %s324
        %p326 = scmp.lt.s32.totalorder %s23, 1
        %s327 = scalar_select %p326, %s23, 1
        %s328 = smul.addr %s327, 32
        %s329 = smul.addr %s328, 8
        %s330 = scalar_lea.vmem %s0, %s329
        %v331 = vld [vmem:[%s330] sm:$0xff]
        %v332 = vld [vmem:[%s330 + $0x8] sm:$0xff]
        %v333 = vld [vmem:[%s330 + $0x10] sm:$0xff]
        %v334 = vld [vmem:[%s330 + $0x18] sm:$0xff]
        %v335 = vld [vmem:[%s330 + $0x20] sm:$0xff]
        %v336 = vld [vmem:[%s330 + $0x28] sm:$0xff]
        %v337 = vld [vmem:[%s330 + $0x30] sm:$0xff]
        %v338 = vld [vmem:[%s330 + $0x38] sm:$0xff]
        %v339 = vld [vmem:[%s330 + $0x40] sm:$0xff]
        %v340 = vld [vmem:[%s330 + $0x48] sm:$0xff]
        %v341 = vld [vmem:[%s330 + $0x50] sm:$0xff]
        %v342 = vld [vmem:[%s330 + $0x58] sm:$0xff]
        %v343 = vld [vmem:[%s330 + $0x60] sm:$0xff]
        %v344 = vld [vmem:[%s330 + $0x68] sm:$0xff]
        %v345 = vld [vmem:[%s330 + $0x70] sm:$0xff]
        %v346 = vld [vmem:[%s330 + $0x78] sm:$0xff]
        %v347 = vld [vmem:[%s330 + $0x80] sm:$0xff]
        %v348 = vld [vmem:[%s330 + $0x88] sm:$0xff]
        %v349 = vld [vmem:[%s330 + $0x90] sm:$0xff]
        %v350 = vld [vmem:[%s330 + $0x98] sm:$0xff]
        %v351 = vld [vmem:[%s330 + $0xa0] sm:$0xff]
        %v352 = vld [vmem:[%s330 + $0xa8] sm:$0xff]
        %v353 = vld [vmem:[%s330 + $0xb0] sm:$0xff]
        %v354 = vld [vmem:[%s330 + $0xb8] sm:$0xff]
        %v355 = vld [vmem:[%s330 + $0xc0] sm:$0xff]
        %v356 = vld [vmem:[%s330 + $0xc8] sm:$0xff]
        %v357 = vld [vmem:[%s330 + $0xd0] sm:$0xff]
        %v358 = vld [vmem:[%s330 + $0xd8] sm:$0xff]
        %v359 = vld [vmem:[%s330 + $0xe0] sm:$0xff]
        %v360 = vld [vmem:[%s330 + $0xe8] sm:$0xff]
        %v361 = vld [vmem:[%s330 + $0xf0] sm:$0xff]
        %v362 = vld [vmem:[%s330 + $0xf8] sm:$0xff]
        %vm363 = vcmask 785408
        %364 = vst.msk [vmem:[#allocation2] sm:$0xff] %vm363, 0.0
        %365 = vst.msk [vmem:[#allocation2 + $0x8] sm:$0xff] %vm363, 0.0
        %vm366 = vcmask 783360
        %367 = vst.msk [vmem:[#allocation2 + $0x10] sm:$0x3f] %vm366, 0.0
        %368 = vst.msk [vmem:[#allocation2 + $0x18] sm:$0xff] %vm363, 0.0
        %369 = vst.msk [vmem:[#allocation2 + $0x20] sm:$0xff] %vm363, 0.0
        %370 = vst.msk [vmem:[#allocation2 + $0x28] sm:$0x3f] %vm366, 0.0
        %371 = vst.msk [vmem:[#allocation2 + $0x30] sm:$0xff] %vm363, 0.0
        %372 = vst.msk [vmem:[#allocation2 + $0x38] sm:$0xff] %vm363, 0.0
        %373 = vst.msk [vmem:[#allocation2 + $0x40] sm:$0x3f] %vm366, 0.0
        %s374 = scalar_lea.vmem [#allocation2], 456
        %375 = vst.msk [vmem:[%s374] sm:$0xff] %vm363, 0.0
        %376 = vst.msk [vmem:[%s374 + $0x8] sm:$0xff] %vm363, 0.0
        %377 = vst.msk [vmem:[%s374 + $0x10] sm:$0x3f] %vm366, 0.0
        %378 = vst.msk [vmem:[%s374 + $0x18] sm:$0xff] %vm363, 0.0
        %379 = vst.msk [vmem:[%s374 + $0x20] sm:$0xff] %vm363, 0.0
        %380 = vst.msk [vmem:[%s374 + $0x28] sm:$0x3f] %vm366, 0.0
        %381 = vst.msk [vmem:[%s374 + $0x30] sm:$0xff] %vm363, 0.0
        %382 = vst.msk [vmem:[%s374 + $0x38] sm:$0xff] %vm363, 0.0
        %383 = vst.msk [vmem:[%s374 + $0x40] sm:$0x3f] %vm366, 0.0
        %s384 = scalar_lea.vmem [#allocation2], 72
        %vm385 = vcmask 780288
        %386 = vst.msk [vmem:[%s384] sm:$0x7] %vm385, 0.0
        %387 = vst.msk [vmem:[%s384 + $0x18] sm:$0x7] %vm385, 0.0
        %388 = vst.msk [vmem:[%s384 + $0x30] sm:$0x7] %vm385, 0.0
        %389 = vst.msk [vmem:[%s384 + $0x48] sm:$0x7] %vm385, 0.0
        %390 = vst.msk [vmem:[%s384 + $0x60] sm:$0x7] %vm385, 0.0
        %391 = vst.msk [vmem:[%s384 + $0x78] sm:$0x7] %vm385, 0.0
        %392 = vst.msk [vmem:[%s384 + $0x90] sm:$0x7] %vm385, 0.0
        %393 = vst.msk [vmem:[%s384 + $0xa8] sm:$0x7] %vm385, 0.0
        %394 = vst.msk [vmem:[%s384 + $0xc0] sm:$0x7] %vm385, 0.0
        %395 = vst.msk [vmem:[%s384 + $0xd8] sm:$0x7] %vm385, 0.0
        %396 = vst.msk [vmem:[%s384 + $0xf0] sm:$0x7] %vm385, 0.0
        %397 = vst.msk [vmem:[%s384 + $0x108] sm:$0x7] %vm385, 0.0
        %398 = vst.msk [vmem:[%s384 + $0x120] sm:$0x7] %vm385, 0.0
        %399 = vst.msk [vmem:[%s384 + $0x138] sm:$0x7] %vm385, 0.0
        %400 = vst.msk [vmem:[%s384 + $0x150] sm:$0x7] %vm385, 0.0
        %401 = vst.msk [vmem:[%s384 + $0x168] sm:$0x7] %vm385, 0.0
        %402 = vst.msk [vmem:[%s384 + $0x13] sm:$0x7] %vm385, 0.0
        %403 = vst.msk [vmem:[%s384 + $0x2b] sm:$0x7] %vm385, 0.0
        %404 = vst.msk [vmem:[%s384 + $0x43] sm:$0x7] %vm385, 0.0
        %405 = vst.msk [vmem:[%s384 + $0x5b] sm:$0x7] %vm385, 0.0
        %406 = vst.msk [vmem:[%s384 + $0x73] sm:$0x7] %vm385, 0.0
        %407 = vst.msk [vmem:[%s384 + $0x8b] sm:$0x7] %vm385, 0.0
        %408 = vst.msk [vmem:[%s384 + $0xa3] sm:$0x7] %vm385, 0.0
        %409 = vst.msk [vmem:[%s384 + $0xbb] sm:$0x7] %vm385, 0.0
        %410 = vst.msk [vmem:[%s384 + $0xd3] sm:$0x7] %vm385, 0.0
        %411 = vst.msk [vmem:[%s384 + $0xeb] sm:$0x7] %vm385, 0.0
        %412 = vst.msk [vmem:[%s384 + $0x103] sm:$0x7] %vm385, 0.0
        %413 = vst.msk [vmem:[%s384 + $0x11b] sm:$0x7] %vm385, 0.0
        %414 = vst.msk [vmem:[%s384 + $0x133] sm:$0x7] %vm385, 0.0
        %415 = vst.msk [vmem:[%s384 + $0x14b] sm:$0x7] %vm385, 0.0
        %416 = vst.msk [vmem:[%s384 + $0x163] sm:$0x7] %vm385, 0.0
        %417 = vst.msk [vmem:[%s384 + $0x17b] sm:$0x7] %vm385, 0.0
        %418 = vst.msk [vmem:[%s384 + $0x3] sm:$0xff] %vm363, %v331
        %419 = vst.msk [vmem:[%s384 + $0xb] sm:$0xff] %vm363, %v332
        %420 = vst.msk [vmem:[%s384 + $0x1b] sm:$0xff] %vm363, %v333
        %421 = vst.msk [vmem:[%s384 + $0x23] sm:$0xff] %vm363, %v334
        %422 = vst.msk [vmem:[%s384 + $0x33] sm:$0xff] %vm363, %v335
        %423 = vst.msk [vmem:[%s384 + $0x3b] sm:$0xff] %vm363, %v336
        %424 = vst.msk [vmem:[%s384 + $0x4b] sm:$0xff] %vm363, %v337
        %425 = vst.msk [vmem:[%s384 + $0x53] sm:$0xff] %vm363, %v338
        %426 = vst.msk [vmem:[%s384 + $0x63] sm:$0xff] %vm363, %v339
        %427 = vst.msk [vmem:[%s384 + $0x6b] sm:$0xff] %vm363, %v340
        %428 = vst.msk [vmem:[%s384 + $0x7b] sm:$0xff] %vm363, %v341
        %429 = vst.msk [vmem:[%s384 + $0x83] sm:$0xff] %vm363, %v342
        %430 = vst.msk [vmem:[%s384 + $0x93] sm:$0xff] %vm363, %v343
        %431 = vst.msk [vmem:[%s384 + $0x9b] sm:$0xff] %vm363, %v344
        %432 = vst.msk [vmem:[%s384 + $0xab] sm:$0xff] %vm363, %v345
        %433 = vst.msk [vmem:[%s384 + $0xb3] sm:$0xff] %vm363, %v346
        %434 = vst.msk [vmem:[%s384 + $0xc3] sm:$0xff] %vm363, %v347
        %435 = vst.msk [vmem:[%s384 + $0xcb] sm:$0xff] %vm363, %v348
        %436 = vst.msk [vmem:[%s384 + $0xdb] sm:$0xff] %vm363, %v349
        %437 = vst.msk [vmem:[%s384 + $0xe3] sm:$0xff] %vm363, %v350
        %438 = vst.msk [vmem:[%s384 + $0xf3] sm:$0xff] %vm363, %v351
        %439 = vst.msk [vmem:[%s384 + $0xfb] sm:$0xff] %vm363, %v352
        %440 = vst.msk [vmem:[%s384 + $0x10b] sm:$0xff] %vm363, %v353
        %441 = vst.msk [vmem:[%s384 + $0x113] sm:$0xff] %vm363, %v354
        %442 = vst.msk [vmem:[%s384 + $0x123] sm:$0xff] %vm363, %v355
        %443 = vst.msk [vmem:[%s384 + $0x12b] sm:$0xff] %vm363, %v356
        %444 = vst.msk [vmem:[%s384 + $0x13b] sm:$0xff] %vm363, %v357
        %445 = vst.msk [vmem:[%s384 + $0x143] sm:$0xff] %vm363, %v358
        %446 = vst.msk [vmem:[%s384 + $0x153] sm:$0xff] %vm363, %v359
        %447 = vst.msk [vmem:[%s384 + $0x15b] sm:$0xff] %vm363, %v360
        %448 = vst.msk [vmem:[%s384 + $0x16b] sm:$0xff] %vm363, %v361
        %449 = vst.msk [vmem:[%s384 + $0x173] sm:$0xff] %vm363, %v362
        %v450 = vld [vmem:[%s1] sm:$0x1]
        %v451 = vlaneseq
        %v452 = vshrl.u32 %v451, 7
        %v453 = vsub.s32 0, %v452
        %v454 = vrot.slane %v450, %v453
        %v455 = vmul.f32 %v331, %v454
        %v456 = vmul.f32 %v332, %v454
        %v457 = vmul.f32 %v333, %v454
        %v458 = vmul.f32 %v334, %v454
        %v459 = vmul.f32 %v335, %v454
        %v460 = vmul.f32 %v336, %v454
        %v461 = vmul.f32 %v337, %v454
        %v462 = vmul.f32 %v338, %v454
        %v463 = vmul.f32 %v339, %v454
        %v464 = vmul.f32 %v340, %v454
        %v465 = vmul.f32 %v341, %v454
        %v466 = vmul.f32 %v342, %v454
        %v467 = vmul.f32 %v343, %v454
        %v468 = vmul.f32 %v344, %v454
        %v469 = vmul.f32 %v345, %v454
        %v470 = vmul.f32 %v346, %v454
        %v471 = vmul.f32 %v347, %v454
        %v472 = vmul.f32 %v348, %v454
        %v473 = vmul.f32 %v349, %v454
        %v474 = vmul.f32 %v350, %v454
        %v475 = vmul.f32 %v351, %v454
        %v476 = vmul.f32 %v352, %v454
        %v477 = vmul.f32 %v353, %v454
        %v478 = vmul.f32 %v354, %v454
        %v479 = vmul.f32 %v355, %v454
        %v480 = vmul.f32 %v356, %v454
        %v481 = vmul.f32 %v357, %v454
        %v482 = vmul.f32 %v358, %v454
        %v483 = vmul.f32 %v359, %v454
        %v484 = vmul.f32 %v360, %v454
        %v485 = vmul.f32 %v361, %v454
        %v486 = vmul.f32 %v362, %v454
        %v487 = vld [vmem:[%s2] sm:$0x1]
        %v488 = vlaneseq
        %v489 = vshrl.u32 %v488, 7
        %v490 = vsub.s32 0, %v489
        %v491 = vrot.slane %v487, %v490
        %v492 = vadd.f32 %v455, %v491
        %v493 = vadd.f32 %v456, %v491
        %v494 = vadd.f32 %v457, %v491
        %v495 = vadd.f32 %v458, %v491
        %v496 = vadd.f32 %v459, %v491
        %v497 = vadd.f32 %v460, %v491
        %v498 = vadd.f32 %v461, %v491
        %v499 = vadd.f32 %v462, %v491
        %v500 = vadd.f32 %v463, %v491
        %v501 = vadd.f32 %v464, %v491
        %v502 = vadd.f32 %v465, %v491
        %v503 = vadd.f32 %v466, %v491
        %v504 = vadd.f32 %v467, %v491
        %v505 = vadd.f32 %v468, %v491
        %v506 = vadd.f32 %v469, %v491
        %v507 = vadd.f32 %v470, %v491
        %v508 = vadd.f32 %v471, %v491
        %v509 = vadd.f32 %v472, %v491
        %v510 = vadd.f32 %v473, %v491
        %v511 = vadd.f32 %v474, %v491
        %v512 = vadd.f32 %v475, %v491
        %v513 = vadd.f32 %v476, %v491
        %v514 = vadd.f32 %v477, %v491
        %v515 = vadd.f32 %v478, %v491
        %v516 = vadd.f32 %v479, %v491
        %v517 = vadd.f32 %v480, %v491
        %v518 = vadd.f32 %v481, %v491
        %v519 = vadd.f32 %v482, %v491
        %v520 = vadd.f32 %v483, %v491
        %v521 = vadd.f32 %v484, %v491
        %v522 = vadd.f32 %v485, %v491
        %v523 = vadd.f32 %v486, %v491
        %v524 = vmax.f32 %v492, 0.0
        %v525 = vmax.f32 %v493, 0.0
        %v526 = vmax.f32 %v494, 0.0
        %v527 = vmax.f32 %v495, 0.0
        %v528 = vmax.f32 %v496, 0.0
        %v529 = vmax.f32 %v497, 0.0
        %v530 = vmax.f32 %v498, 0.0
        %v531 = vmax.f32 %v499, 0.0
        %v532 = vmax.f32 %v500, 0.0
        %v533 = vmax.f32 %v501, 0.0
        %v534 = vmax.f32 %v502, 0.0
        %v535 = vmax.f32 %v503, 0.0
        %v536 = vmax.f32 %v504, 0.0
        %v537 = vmax.f32 %v505, 0.0
        %v538 = vmax.f32 %v506, 0.0
        %v539 = vmax.f32 %v507, 0.0
        %v540 = vmax.f32 %v508, 0.0
        %v541 = vmax.f32 %v509, 0.0
        %v542 = vmax.f32 %v510, 0.0
        %v543 = vmax.f32 %v511, 0.0
        %v544 = vmax.f32 %v512, 0.0
        %v545 = vmax.f32 %v513, 0.0
        %v546 = vmax.f32 %v514, 0.0
        %v547 = vmax.f32 %v515, 0.0
        %v548 = vmax.f32 %v516, 0.0
        %v549 = vmax.f32 %v517, 0.0
        %v550 = vmax.f32 %v518, 0.0
        %v551 = vmax.f32 %v519, 0.0
        %v552 = vmax.f32 %v520, 0.0
        %v553 = vmax.f32 %v521, 0.0
        %v554 = vmax.f32 %v522, 0.0
        %v555 = vmax.f32 %v523, 0.0
        %v556 = vld [vmem:[%s3] sm:$0xff]
        %v557 = vld [vmem:[%s3 + $0x8] sm:$0xff]
        %v558 = vld [vmem:[%s3 + $0x10] sm:$0xff]
        %v559 = vld [vmem:[%s3 + $0x18] sm:$0xff]
        %v560 = vld [vmem:[%s3 + $0x20] sm:$0xff]
        %v561 = vld [vmem:[%s3 + $0x28] sm:$0xff]
        %v562 = vld [vmem:[%s3 + $0x30] sm:$0xff]
        %v563 = vld [vmem:[%s3 + $0x38] sm:$0xff]
        %v564 = vld [vmem:[%s3 + $0x40] sm:$0xff]
        %v565 = vld [vmem:[%s3 + $0x48] sm:$0xff]
        %v566 = vld [vmem:[%s3 + $0x50] sm:$0xff]
        %v567 = vld [vmem:[%s3 + $0x58] sm:$0xff]
        %v568 = vld [vmem:[%s4] sm:$0x1]
        %v569 = vlaneseq
        %v570 = vshrl.u32 %v569, 7
        %v571 = vsub.s32 0, %v570
        %v572 = vrot.slane %v568, %v571
        %v574 = vsel %vm363, %v524, 0
        %v577 = vsel %vm363, %v525, 0
        %v580 = vsel %vm363, %v526, 0
        %v583 = vsel %vm363, %v527, 0
        %v586 = vsel %vm363, %v528, 0
        %v589 = vsel %vm363, %v529, 0
        %v592 = vsel %vm363, %v530, 0
        %v595 = vsel %vm363, %v531, 0
        %v598 = vsel %vm363, %v532, 0
        %v601 = vsel %vm363, %v533, 0
        %v604 = vsel %vm363, %v534, 0
        %v607 = vsel %vm363, %v535, 0
        %v610 = vsel %vm363, %v536, 0
        %v613 = vsel %vm363, %v537, 0
        %v616 = vsel %vm363, %v538, 0
        %v619 = vsel %vm363, %v539, 0
        %v622 = vsel %vm363, %v540, 0
        %v625 = vsel %vm363, %v541, 0
        %v628 = vsel %vm363, %v542, 0
        %v631 = vsel %vm363, %v543, 0
        %v634 = vsel %vm363, %v544, 0
        %v637 = vsel %vm363, %v545, 0
        %v640 = vsel %vm363, %v546, 0
        %v643 = vsel %vm363, %v547, 0
        %v646 = vsel %vm363, %v548, 0
        %v649 = vsel %vm363, %v549, 0
        %v652 = vsel %vm363, %v550, 0
        %v655 = vsel %vm363, %v551, 0
        %v658 = vsel %vm363, %v552, 0
        %v661 = vsel %vm363, %v553, 0
        %v664 = vsel %vm363, %v554, 0
        %v667 = vsel %vm363, %v555, 0
        %669 = vmatprep.subr.mxu0 0.0
        %670 = vmatpush1.msra.mxu0 %v556
        %671 = vmatprep.subr.mxu0 0.0
        %672 = vmatpush1.msra.mxu0 %v557
        %673 = vmatprep.subr.mxu0 0.0
        %674 = vmatpush1.msra.mxu0 %v558
        %675 = vmatprep.subr.mxu0 0.0
        %676 = vmatpush1.msra.mxu0 %v559
        %677 = vmatprep.subr.mxu0 0.0
        %678 = vmatpush1.msra.mxu0 %v560
        %679 = vmatprep.subr.mxu0 0.0
        %680 = vmatpush1.msra.mxu0 %v561
        %681 = vmatprep.subr.mxu0 0.0
        %682 = vmatpush1.msra.mxu0 %v562
        %683 = vmatprep.subr.mxu0 0.0
        %684 = vmatpush1.msra.mxu0 %v563
        %685 = vmatprep.subr.mxu0 0.0
        %686 = vmatpush1.msra.mxu0 %v564
        %687 = vmatprep.subr.mxu0 0.0
        %688 = vmatpush1.msra.mxu0 %v565
        %689 = vmatprep.subr.mxu0 0.0
        %690 = vmatpush1.msra.mxu0 %v566
        %691 = vmatprep.subr.mxu0 0.0
        %692 = vmatpush1.msra.mxu0 %v567
        %693 = vmatprep.subr.mxu0 0.0
        %694 = vmatpush1.msra.mxu0 0.0
        %695 = vmatprep.subr.mxu0 0.0
        %696 = vmatpush1.msra.mxu0 0.0
        %697 = vmatprep.subr.mxu0 0.0
        %698 = vmatpush1.msra.mxu0 0.0
        %699 = vmatprep.subr.mxu0 0.0
        %700 = vmatpush1.msra.mxu0 0.0
        %701 = vmatprep.subr.mxu0 0.0
        %702 = vmatpush1.msra.mxu0 0.0
        %703 = vmatprep.subr.mxu0 0.0
        %704 = vmatpush1.msra.mxu0 0.0
        %705 = vmatprep.subr.mxu0 0.0
        %706 = vmatpush1.msra.mxu0 0.0
        %707 = vmatprep.subr.mxu0 0.0
        %708 = vmatpush1.msra.mxu0 0.0
        %709 = vmatprep.subr.mxu0 0.0
        %710 = vmatpush1.msra.mxu0 0.0
        %711 = vmatprep.subr.mxu0 0.0
        %712 = vmatpush1.msra.mxu0 0.0
        %713 = vmatprep.subr.mxu0 0.0
        %714 = vmatpush1.msra.mxu0 0.0
        %715 = vmatprep.subr.mxu0 0.0
        %716 = vmatpush1.msra.mxu0 0.0
        %717 = vmatprep.subr.mxu0 0.0
        %718 = vmatpush1.msra.mxu0 0.0
        %719 = vmatprep.subr.mxu0 0.0
        %720 = vmatpush1.msra.mxu0 0.0
        %721 = vmatprep.subr.mxu0 0.0
        %722 = vmatpush1.msra.mxu0 0.0
        %723 = vmatprep.subr.mxu0 0.0
        %724 = vmatpush1.msra.mxu0 0.0
        %725 = vmatprep.subr.mxu0 0.0
        %726 = vmatpush1.msra.mxu0 0.0
        %727 = vmatprep.subr.mxu0 0.0
        %728 = vmatpush1.msra.mxu0 0.0
        %729 = vmatprep.subr.mxu0 0.0
        %730 = vmatpush1.msra.mxu0 0.0
        %731 = vmatprep.subr.mxu0 0.0
        %732 = vmatpush1.msra.mxu0 0.0
        %733 = vmatprep.mubr.f32.mxu0 0.0
        %734 = vmatmul.mubr.f32.gmra.mrb[0].mxu0 %v574
        %v735 = vpop.f32.mrb[0].mxu0
        %v736 = vadd.f32 %v572, %v735
        %v737 = vpop.f32.mrb[0].mxu0
        %738 = vmatprep.mubr.f32.mxu0 0.0
        %739 = vmatmul.mubr.f32.gmra.mrb[0].mxu0 %v577
        %v740 = vpop.f32.mrb[0].mxu0
        %v741 = vadd.f32 %v572, %v740
        %v742 = vpop.f32.mrb[0].mxu0
        %743 = vmatprep.mubr.f32.mxu0 0.0
        %744 = vmatmul.mubr.f32.gmra.mrb[0].mxu0 %v580
        %v745 = vpop.f32.mrb[0].mxu0
        %v746 = vadd.f32 %v572, %v745
        %v747 = vpop.f32.mrb[0].mxu0
        %748 = vmatprep.mubr.f32.mxu0 0.0
        %749 = vmatmul.mubr.f32.gmra.mrb[0].mxu0 %v583
        %v750 = vpop.f32.mrb[0].mxu0
        %v751 = vadd.f32 %v572, %v750
        %v752 = vpop.f32.mrb[0].mxu0
        %753 = vmatprep.mubr.f32.mxu0 0.0
        %754 = vmatmul.mubr.f32.gmra.mrb[0].mxu0 %v586
        %v755 = vpop.f32.mrb[0].mxu0
        %v756 = vadd.f32 %v572, %v755
        %v757 = vpop.f32.mrb[0].mxu0
        %758 = vmatprep.mubr.f32.mxu0 0.0
        %759 = vmatmul.mubr.f32.gmra.mrb[0].mxu0 %v589
        %v760 = vpop.f32.mrb[0].mxu0
        %v761 = vadd.f32 %v572, %v760
        %v762 = vpop.f32.mrb[0].mxu0
        %763 = vmatprep.mubr.f32.mxu0 0.0
        %764 = vmatmul.mubr.f32.gmra.mrb[0].mxu0 %v592
        %v765 = vpop.f32.mrb[0].mxu0
        %v766 = vadd.f32 %v572, %v765
        %v767 = vpop.f32.mrb[0].mxu0
        %768 = vmatprep.mubr.f32.mxu0 0.0
        %769 = vmatmul.mubr.f32.gmra.mrb[0].mxu0 %v595
        %v770 = vpop.f32.mrb[0].mxu0
        %v771 = vadd.f32 %v572, %v770
        %v772 = vpop.f32.mrb[0].mxu0
        %773 = vmatprep.mubr.f32.mxu0 0.0
        %774 = vmatmul.mubr.f32.gmra.mrb[0].mxu0 %v598
        %v775 = vpop.f32.mrb[0].mxu0
        %v776 = vadd.f32 %v572, %v775
        %v777 = vpop.f32.mrb[0].mxu0
        %778 = vmatprep.mubr.f32.mxu0 0.0
        %779 = vmatmul.mubr.f32.gmra.mrb[0].mxu0 %v601
        %v780 = vpop.f32.mrb[0].mxu0
        %v781 = vadd.f32 %v572, %v780
        %v782 = vpop.f32.mrb[0].mxu0
        %783 = vmatprep.mubr.f32.mxu0 0.0
        %784 = vmatmul.mubr.f32.gmra.mrb[0].mxu0 %v604
        %v785 = vpop.f32.mrb[0].mxu0
        %v786 = vadd.f32 %v572, %v785
        %v787 = vpop.f32.mrb[0].mxu0
        %788 = vmatprep.mubr.f32.mxu0 0.0
        %789 = vmatmul.mubr.f32.gmra.mrb[0].mxu0 %v607
        %v790 = vpop.f32.mrb[0].mxu0
        %v791 = vadd.f32 %v572, %v790
        %v792 = vpop.f32.mrb[0].mxu0
        %793 = vmatprep.mubr.f32.mxu0 0.0
        %794 = vmatmul.mubr.f32.gmra.mrb[0].mxu0 %v610
        %v795 = vpop.f32.mrb[0].mxu0
        %v796 = vadd.f32 %v572, %v795
        %v797 = vpop.f32.mrb[0].mxu0
        %798 = vmatprep.mubr.f32.mxu0 0.0
        %799 = vmatmul.mubr.f32.gmra.mrb[0].mxu0 %v613
        %v800 = vpop.f32.mrb[0].mxu0
        %v801 = vadd.f32 %v572, %v800
        %v802 = vpop.f32.mrb[0].mxu0
        %803 = vmatprep.mubr.f32.mxu0 0.0
        %804 = vmatmul.mubr.f32.gmra.mrb[0].mxu0 %v616
        %v805 = vpop.f32.mrb[0].mxu0
        %v806 = vadd.f32 %v572, %v805
        %v807 = vpop.f32.mrb[0].mxu0
        %808 = vmatprep.mubr.f32.mxu0 0.0
        %809 = vmatmul.mubr.f32.gmra.mrb[0].mxu0 %v619
        %v810 = vpop.f32.mrb[0].mxu0
        %v811 = vadd.f32 %v572, %v810
        %v812 = vpop.f32.mrb[0].mxu0
        %813 = vmatprep.mubr.f32.mxu0 0.0
        %814 = vmatmul.mubr.f32.gmra.mrb[0].mxu0 %v622
        %v815 = vpop.f32.mrb[0].mxu0
        %v816 = vadd.f32 %v572, %v815
        %v817 = vpop.f32.mrb[0].mxu0
        %818 = vmatprep.mubr.f32.mxu0 0.0
        %819 = vmatmul.mubr.f32.gmra.mrb[0].mxu0 %v625
        %v820 = vpop.f32.mrb[0].mxu0
        %v821 = vadd.f32 %v572, %v820
        %v822 = vpop.f32.mrb[0].mxu0
        %823 = vmatprep.mubr.f32.mxu0 0.0
        %824 = vmatmul.mubr.f32.gmra.mrb[0].mxu0 %v628
        %v825 = vpop.f32.mrb[0].mxu0
        %v826 = vadd.f32 %v572, %v825
        %v827 = vpop.f32.mrb[0].mxu0
        %828 = vmatprep.mubr.f32.mxu0 0.0
        %829 = vmatmul.mubr.f32.gmra.mrb[0].mxu0 %v631
        %v830 = vpop.f32.mrb[0].mxu0
        %v831 = vadd.f32 %v572, %v830
        %v832 = vpop.f32.mrb[0].mxu0
        %833 = vmatprep.mubr.f32.mxu0 0.0
        %834 = vmatmul.mubr.f32.gmra.mrb[0].mxu0 %v634
        %v835 = vpop.f32.mrb[0].mxu0
        %v836 = vadd.f32 %v572, %v835
        %v837 = vpop.f32.mrb[0].mxu0
        %838 = vmatprep.mubr.f32.mxu0 0.0
        %839 = vmatmul.mubr.f32.gmra.mrb[0].mxu0 %v637
        %v840 = vpop.f32.mrb[0].mxu0
        %v841 = vadd.f32 %v572, %v840
        %v842 = vpop.f32.mrb[0].mxu0
        %843 = vmatprep.mubr.f32.mxu0 0.0
        %844 = vmatmul.mubr.f32.gmra.mrb[0].mxu0 %v640
        %v845 = vpop.f32.mrb[0].mxu0
        %v846 = vadd.f32 %v572, %v845
        %v847 = vpop.f32.mrb[0].mxu0
        %848 = vmatprep.mubr.f32.mxu0 0.0
        %849 = vmatmul.mubr.f32.gmra.mrb[0].mxu0 %v643
        %v850 = vpop.f32.mrb[0].mxu0
        %v851 = vadd.f32 %v572, %v850
        %v852 = vpop.f32.mrb[0].mxu0
        %853 = vmatprep.mubr.f32.mxu0 0.0
        %854 = vmatmul.mubr.f32.gmra.mrb[0].mxu0 %v646
        %v855 = vpop.f32.mrb[0].mxu0
        %v856 = vadd.f32 %v572, %v855
        %v857 = vpop.f32.mrb[0].mxu0
        %858 = vmatprep.mubr.f32.mxu0 0.0
        %859 = vmatmul.mubr.f32.gmra.mrb[0].mxu0 %v649
        %v860 = vpop.f32.mrb[0].mxu0
        %v861 = vadd.f32 %v572, %v860
        %v862 = vpop.f32.mrb[0].mxu0
        %863 = vmatprep.mubr.f32.mxu0 0.0
        %864 = vmatmul.mubr.f32.gmra.mrb[0].mxu0 %v652
        %v865 = vpop.f32.mrb[0].mxu0
        %v866 = vadd.f32 %v572, %v865
        %v867 = vpop.f32.mrb[0].mxu0
        %868 = vmatprep.mubr.f32.mxu0 0.0
        %869 = vmatmul.mubr.f32.gmra.mrb[0].mxu0 %v655
        %v870 = vpop.f32.mrb[0].mxu0
        %v871 = vadd.f32 %v572, %v870
        %v872 = vpop.f32.mrb[0].mxu0
        %873 = vmatprep.mubr.f32.mxu0 0.0
        %874 = vmatmul.mubr.f32.gmra.mrb[0].mxu0 %v658
        %v875 = vpop.f32.mrb[0].mxu0
        %v876 = vadd.f32 %v572, %v875
        %v877 = vpop.f32.mrb[0].mxu0
        %878 = vmatprep.mubr.f32.mxu0 0.0
        %879 = vmatmul.mubr.f32.gmra.mrb[0].mxu0 %v661
        %v880 = vpop.f32.mrb[0].mxu0
        %v881 = vadd.f32 %v572, %v880
        %v882 = vpop.f32.mrb[0].mxu0
        %883 = vmatprep.mubr.f32.mxu0 0.0
        %884 = vmatmul.mubr.f32.gmra.mrb[0].mxu0 %v664
        %v885 = vpop.f32.mrb[0].mxu0
        %v886 = vadd.f32 %v572, %v885
        %v887 = vpop.f32.mrb[0].mxu0
        %888 = vmatprep.mubr.f32.mxu0 0.0
        %889 = vmatmul.mubr.f32.gmra.mrb[0].mxu0 %v667
        %v890 = vpop.f32.mrb[0].mxu0
        %v891 = vadd.f32 %v572, %v890
        %v892 = vpop.f32.mrb[0].mxu0
        %893 = vdwg.mxu0
        %v894 = vmax.f32 %v736, 0.0
        %v895 = vmax.f32 %v741, 0.0
        %v896 = vmax.f32 %v746, 0.0
        %v897 = vmax.f32 %v751, 0.0
        %v898 = vmax.f32 %v756, 0.0
        %v899 = vmax.f32 %v761, 0.0
        %v900 = vmax.f32 %v766, 0.0
        %v901 = vmax.f32 %v771, 0.0
        %v902 = vmax.f32 %v776, 0.0
        %v903 = vmax.f32 %v781, 0.0
        %v904 = vmax.f32 %v786, 0.0
        %v905 = vmax.f32 %v791, 0.0
        %v906 = vmax.f32 %v796, 0.0
        %v907 = vmax.f32 %v801, 0.0
        %v908 = vmax.f32 %v806, 0.0
        %v909 = vmax.f32 %v811, 0.0
        %v910 = vmax.f32 %v816, 0.0
        %v911 = vmax.f32 %v821, 0.0
        %v912 = vmax.f32 %v826, 0.0
        %v913 = vmax.f32 %v831, 0.0
        %v914 = vmax.f32 %v836, 0.0
        %v915 = vmax.f32 %v841, 0.0
        %v916 = vmax.f32 %v846, 0.0
        %v917 = vmax.f32 %v851, 0.0
        %v918 = vmax.f32 %v856, 0.0
        %v919 = vmax.f32 %v861, 0.0
        %v920 = vmax.f32 %v866, 0.0
        %v921 = vmax.f32 %v871, 0.0
        %v922 = vmax.f32 %v876, 0.0
        %v923 = vmax.f32 %v881, 0.0
        %v924 = vmax.f32 %v886, 0.0
        %v925 = vmax.f32 %v891, 0.0
        %s926 = scalar_lea.vmem [#allocation2], 48
        %v927 = vld [vmem:[%s926 + $0x2] sm:$0xff]
        %v928 = vld [vmem:[%s926 + $0xa] sm:$0xff]
        %v929 = vld [vmem:[%s926 + $0x1a] sm:$0xff]
        %v930 = vld [vmem:[%s926 + $0x22] sm:$0xff]
        %v931 = vld [vmem:[%s926 + $0x32] sm:$0xff]
        %v932 = vld [vmem:[%s926 + $0x3a] sm:$0xff]
        %v933 = vld [vmem:[%s926 + $0x4a] sm:$0xff]
        %v934 = vld [vmem:[%s926 + $0x52] sm:$0xff]
        %v935 = vld [vmem:[%s926 + $0x62] sm:$0xff]
        %v936 = vld [vmem:[%s926 + $0x6a] sm:$0xff]
        %v937 = vld [vmem:[%s926 + $0x7a] sm:$0xff]
        %v938 = vld [vmem:[%s926 + $0x82] sm:$0xff]
        %v939 = vld [vmem:[%s926 + $0x92] sm:$0xff]
        %v940 = vld [vmem:[%s926 + $0x9a] sm:$0xff]
        %v941 = vld [vmem:[%s926 + $0xaa] sm:$0xff]
        %v942 = vld [vmem:[%s926 + $0xb2] sm:$0xff]
        %v943 = vld [vmem:[%s926 + $0xc2] sm:$0xff]
        %v944 = vld [vmem:[%s926 + $0xca] sm:$0xff]
        %v945 = vld [vmem:[%s926 + $0xda] sm:$0xff]
        %v946 = vld [vmem:[%s926 + $0xe2] sm:$0xff]
        %v947 = vld [vmem:[%s926 + $0xf2] sm:$0xff]
        %v948 = vld [vmem:[%s926 + $0xfa] sm:$0xff]
        %v949 = vld [vmem:[%s926 + $0x10a] sm:$0xff]
        %v950 = vld [vmem:[%s926 + $0x112] sm:$0xff]
        %v951 = vld [vmem:[%s926 + $0x122] sm:$0xff]
        %v952 = vld [vmem:[%s926 + $0x12a] sm:$0xff]
        %v953 = vld [vmem:[%s926 + $0x13a] sm:$0xff]
        %v954 = vld [vmem:[%s926 + $0x142] sm:$0xff]
        %v955 = vld [vmem:[%s926 + $0x152] sm:$0xff]
        %v956 = vld [vmem:[%s926 + $0x15a] sm:$0xff]
        %v957 = vld [vmem:[%s926 + $0x16a] sm:$0xff]
        %v958 = vld [vmem:[%s926 + $0x172] sm:$0xff]
        %v959 = vld [vmem:[%s1 + $0x1] sm:$0x1]
        %v960 = vlaneseq
        %v961 = vshrl.u32 %v960, 7
        %v962 = vsub.s32 0, %v961
        %v963 = vrot.slane %v959, %v962
        %v964 = vmul.f32 %v927, %v963
        %v965 = vmul.f32 %v928, %v963
        %v966 = vmul.f32 %v929, %v963
        %v967 = vmul.f32 %v930, %v963
        %v968 = vmul.f32 %v931, %v963
        %v969 = vmul.f32 %v932, %v963
        %v970 = vmul.f32 %v933, %v963
        %v971 = vmul.f32 %v934, %v963
        %v972 = vmul.f32 %v935, %v963
        %v973 = vmul.f32 %v936, %v963
        %v974 = vmul.f32 %v937, %v963
        %v975 = vmul.f32 %v938, %v963
        %v976 = vmul.f32 %v939, %v963
        %v977 = vmul.f32 %v940, %v963
        %v978 = vmul.f32 %v941, %v963
        %v979 = vmul.f32 %v942, %v963
        %v980 = vmul.f32 %v943, %v963
        %v981 = vmul.f32 %v944, %v963
        %v982 = vmul.f32 %v945, %v963
        %v983 = vmul.f32 %v946, %v963
        %v984 = vmul.f32 %v947, %v963
        %v985 = vmul.f32 %v948, %v963
        %v986 = vmul.f32 %v949, %v963
        %v987 = vmul.f32 %v950, %v963
        %v988 = vmul.f32 %v951, %v963
        %v989 = vmul.f32 %v952, %v963
        %v990 = vmul.f32 %v953, %v963
        %v991 = vmul.f32 %v954, %v963
        %v992 = vmul.f32 %v955, %v963
        %v993 = vmul.f32 %v956, %v963
        %v994 = vmul.f32 %v957, %v963
        %v995 = vmul.f32 %v958, %v963
        %v996 = vadd.f32 %v964, 0.0
        %v997 = vadd.f32 %v965, 0.0
        %v998 = vadd.f32 %v966, 0.0
        %v999 = vadd.f32 %v967, 0.0
        %v1000 = vadd.f32 %v968, 0.0
        %v1001 = vadd.f32 %v969, 0.0
        %v1002 = vadd.f32 %v970, 0.0
        %v1003 = vadd.f32 %v971, 0.0
        %v1004 = vadd.f32 %v972, 0.0
        %v1005 = vadd.f32 %v973, 0.0
        %v1006 = vadd.f32 %v974, 0.0
        %v1007 = vadd.f32 %v975, 0.0
        %v1008 = vadd.f32 %v976, 0.0
        %v1009 = vadd.f32 %v977, 0.0
        %v1010 = vadd.f32 %v978, 0.0
        %v1011 = vadd.f32 %v979, 0.0
        %v1012 = vadd.f32 %v980, 0.0
        %v1013 = vadd.f32 %v981, 0.0
        %v1014 = vadd.f32 %v982, 0.0
        %v1015 = vadd.f32 %v983, 0.0
        %v1016 = vadd.f32 %v984, 0.0
        %v1017 = vadd.f32 %v985, 0.0
        %v1018 = vadd.f32 %v986, 0.0
        %v1019 = vadd.f32 %v987, 0.0
        %v1020 = vadd.f32 %v988, 0.0
        %v1021 = vadd.f32 %v989, 0.0
        %v1022 = vadd.f32 %v990, 0.0
        %v1023 = vadd.f32 %v991, 0.0
        %v1024 = vadd.f32 %v992, 0.0
        %v1025 = vadd.f32 %v993, 0.0
        %v1026 = vadd.f32 %v994, 0.0
        %v1027 = vadd.f32 %v995, 0.0
        %v1028 = vld [vmem:[%s926 + $0x3] sm:$0xff]
        %v1029 = vld [vmem:[%s926 + $0xb] sm:$0xff]
        %v1030 = vld [vmem:[%s926 + $0x1b] sm:$0xff]
        %v1031 = vld [vmem:[%s926 + $0x23] sm:$0xff]
        %v1032 = vld [vmem:[%s926 + $0x33] sm:$0xff]
        %v1033 = vld [vmem:[%s926 + $0x3b] sm:$0xff]
        %v1034 = vld [vmem:[%s926 + $0x4b] sm:$0xff]
        %v1035 = vld [vmem:[%s926 + $0x53] sm:$0xff]
        %v1036 = vld [vmem:[%s926 + $0x63] sm:$0xff]
        %v1037 = vld [vmem:[%s926 + $0x6b] sm:$0xff]
        %v1038 = vld [vmem:[%s926 + $0x7b] sm:$0xff]
        %v1039 = vld [vmem:[%s926 + $0x83] sm:$0xff]
        %v1040 = vld [vmem:[%s926 + $0x93] sm:$0xff]
        %v1041 = vld [vmem:[%s926 + $0x9b] sm:$0xff]
        %v1042 = vld [vmem:[%s926 + $0xab] sm:$0xff]
        %v1043 = vld [vmem:[%s926 + $0xb3] sm:$0xff]
        %v1044 = vld [vmem:[%s926 + $0xc3] sm:$0xff]
        %v1045 = vld [vmem:[%s926 + $0xcb] sm:$0xff]
        %v1046 = vld [vmem:[%s926 + $0xdb] sm:$0xff]
        %v1047 = vld [vmem:[%s926 + $0xe3] sm:$0xff]
        %v1048 = vld [vmem:[%s926 + $0xf3] sm:$0xff]
        %v1049 = vld [vmem:[%s926 + $0xfb] sm:$0xff]
        %v1050 = vld [vmem:[%s926 + $0x10b] sm:$0xff]
        %v1051 = vld [vmem:[%s926 + $0x113] sm:$0xff]
        %v1052 = vld [vmem:[%s926 + $0x123] sm:$0xff]
        %v1053 = vld [vmem:[%s926 + $0x12b] sm:$0xff]
        %v1054 = vld [vmem:[%s926 + $0x13b] sm:$0xff]
        %v1055 = vld [vmem:[%s926 + $0x143] sm:$0xff]
        %v1056 = vld [vmem:[%s926 + $0x153] sm:$0xff]
        %v1057 = vld [vmem:[%s926 + $0x15b] sm:$0xff]
        %v1058 = vld [vmem:[%s926 + $0x16b] sm:$0xff]
        %v1059 = vld [vmem:[%s926 + $0x173] sm:$0xff]
        %v1060 = vld [vmem:[%s1 + $0x2] sm:$0x1]
        %v1061 = vlaneseq
        %v1062 = vshrl.u32 %v1061, 7
        %v1063 = vsub.s32 0, %v1062
        %v1064 = vrot.slane %v1060, %v1063
        %v1065 = vmul.f32 %v1028, %v1064
        %v1066 = vmul.f32 %v1029, %v1064
        %v1067 = vmul.f32 %v1030, %v1064
        %v1068 = vmul.f32 %v1031, %v1064
        %v1069 = vmul.f32 %v1032, %v1064
        %v1070 = vmul.f32 %v1033, %v1064
        %v1071 = vmul.f32 %v1034, %v1064
        %v1072 = vmul.f32 %v1035, %v1064
        %v1073 = vmul.f32 %v1036, %v1064
        %v1074 = vmul.f32 %v1037, %v1064
        %v1075 = vmul.f32 %v1038, %v1064
        %v1076 = vmul.f32 %v1039, %v1064
        %v1077 = vmul.f32 %v1040, %v1064
        %v1078 = vmul.f32 %v1041, %v1064
        %v1079 = vmul.f32 %v1042, %v1064
        %v1080 = vmul.f32 %v1043, %v1064
        %v1081 = vmul.f32 %v1044, %v1064
        %v1082 = vmul.f32 %v1045, %v1064
        %v1083 = vmul.f32 %v1046, %v1064
        %v1084 = vmul.f32 %v1047, %v1064
        %v1085 = vmul.f32 %v1048, %v1064
        %v1086 = vmul.f32 %v1049, %v1064
        %v1087 = vmul.f32 %v1050, %v1064
        %v1088 = vmul.f32 %v1051, %v1064
        %v1089 = vmul.f32 %v1052, %v1064
        %v1090 = vmul.f32 %v1053, %v1064
        %v1091 = vmul.f32 %v1054, %v1064
        %v1092 = vmul.f32 %v1055, %v1064
        %v1093 = vmul.f32 %v1056, %v1064
        %v1094 = vmul.f32 %v1057, %v1064
        %v1095 = vmul.f32 %v1058, %v1064
        %v1096 = vmul.f32 %v1059, %v1064
        %v1097 = vadd.f32 %v996, %v1065
        %v1098 = vadd.f32 %v997, %v1066
        %v1099 = vadd.f32 %v998, %v1067
        %v1100 = vadd.f32 %v999, %v1068
        %v1101 = vadd.f32 %v1000, %v1069
        %v1102 = vadd.f32 %v1001, %v1070
        %v1103 = vadd.f32 %v1002, %v1071
        %v1104 = vadd.f32 %v1003, %v1072
        %v1105 = vadd.f32 %v1004, %v1073
        %v1106 = vadd.f32 %v1005, %v1074
        %v1107 = vadd.f32 %v1006, %v1075
        %v1108 = vadd.f32 %v1007, %v1076
        %v1109 = vadd.f32 %v1008, %v1077
        %v1110 = vadd.f32 %v1009, %v1078
        %v1111 = vadd.f32 %v1010, %v1079
        %v1112 = vadd.f32 %v1011, %v1080
        %v1113 = vadd.f32 %v1012, %v1081
        %v1114 = vadd.f32 %v1013, %v1082
        %v1115 = vadd.f32 %v1014, %v1083
        %v1116 = vadd.f32 %v1015, %v1084
        %v1117 = vadd.f32 %v1016, %v1085
        %v1118 = vadd.f32 %v1017, %v1086
        %v1119 = vadd.f32 %v1018, %v1087
        %v1120 = vadd.f32 %v1019, %v1088
        %v1121 = vadd.f32 %v1020, %v1089
        %v1122 = vadd.f32 %v1021, %v1090
        %v1123 = vadd.f32 %v1022, %v1091
        %v1124 = vadd.f32 %v1023, %v1092
        %v1125 = vadd.f32 %v1024, %v1093
        %v1126 = vadd.f32 %v1025, %v1094
        %v1127 = vadd.f32 %v1026, %v1095
        %v1128 = vadd.f32 %v1027, %v1096
        %v1129 = vld [vmem:[%s926 + $0x4] sm:$0xff]
        %v1130 = vld [vmem:[%s926 + $0xc] sm:$0xff]
        %v1131 = vld [vmem:[%s926 + $0x1c] sm:$0xff]
        %v1132 = vld [vmem:[%s926 + $0x24] sm:$0xff]
        %v1133 = vld [vmem:[%s926 + $0x34] sm:$0xff]
        %v1134 = vld [vmem:[%s926 + $0x3c] sm:$0xff]
        %v1135 = vld [vmem:[%s926 + $0x4c] sm:$0xff]
        %v1136 = vld [vmem:[%s926 + $0x54] sm:$0xff]
        %v1137 = vld [vmem:[%s926 + $0x64] sm:$0xff]
        %v1138 = vld [vmem:[%s926 + $0x6c] sm:$0xff]
        %v1139 = vld [vmem:[%s926 + $0x7c] sm:$0xff]
        %v1140 = vld [vmem:[%s926 + $0x84] sm:$0xff]
        %v1141 = vld [vmem:[%s926 + $0x94] sm:$0xff]
        %v1142 = vld [vmem:[%s926 + $0x9c] sm:$0xff]
        %v1143 = vld [vmem:[%s926 + $0xac] sm:$0xff]
        %v1144 = vld [vmem:[%s926 + $0xb4] sm:$0xff]
        %v1145 = vld [vmem:[%s926 + $0xc4] sm:$0xff]
        %v1146 = vld [vmem:[%s926 + $0xcc] sm:$0xff]
        %v1147 = vld [vmem:[%s926 + $0xdc] sm:$0xff]
        %v1148 = vld [vmem:[%s926 + $0xe4] sm:$0xff]
        %v1149 = vld [vmem:[%s926 + $0xf4] sm:$0xff]
        %v1150 = vld [vmem:[%s926 + $0xfc] sm:$0xff]
        %v1151 = vld [vmem:[%s926 + $0x10c] sm:$0xff]
        %v1152 = vld [vmem:[%s926 + $0x114] sm:$0xff]
        %v1153 = vld [vmem:[%s926 + $0x124] sm:$0xff]
        %v1154 = vld [vmem:[%s926 + $0x12c] sm:$0xff]
        %v1155 = vld [vmem:[%s926 + $0x13c] sm:$0xff]
        %v1156 = vld [vmem:[%s926 + $0x144] sm:$0xff]
        %v1157 = vld [vmem:[%s926 + $0x154] sm:$0xff]
        %v1158 = vld [vmem:[%s926 + $0x15c] sm:$0xff]
        %v1159 = vld [vmem:[%s926 + $0x16c] sm:$0xff]
        %v1160 = vld [vmem:[%s926 + $0x174] sm:$0xff]
        %v1161 = vld [vmem:[%s1 + $0x3] sm:$0x1]
        %v1162 = vlaneseq
        %v1163 = vshrl.u32 %v1162, 7
        %v1164 = vsub.s32 0, %v1163
        %v1165 = vrot.slane %v1161, %v1164
        %v1166 = vmul.f32 %v1129, %v1165
        %v1167 = vmul.f32 %v1130, %v1165
        %v1168 = vmul.f32 %v1131, %v1165
        %v1169 = vmul.f32 %v1132, %v1165
        %v1170 = vmul.f32 %v1133, %v1165
        %v1171 = vmul.f32 %v1134, %v1165
        %v1172 = vmul.f32 %v1135, %v1165
        %v1173 = vmul.f32 %v1136, %v1165
        %v1174 = vmul.f32 %v1137, %v1165
        %v1175 = vmul.f32 %v1138, %v1165
        %v1176 = vmul.f32 %v1139, %v1165
        %v1177 = vmul.f32 %v1140, %v1165
        %v1178 = vmul.f32 %v1141, %v1165
        %v1179 = vmul.f32 %v1142, %v1165
        %v1180 = vmul.f32 %v1143, %v1165
        %v1181 = vmul.f32 %v1144, %v1165
        %v1182 = vmul.f32 %v1145, %v1165
        %v1183 = vmul.f32 %v1146, %v1165
        %v1184 = vmul.f32 %v1147, %v1165
        %v1185 = vmul.f32 %v1148, %v1165
        %v1186 = vmul.f32 %v1149, %v1165
        %v1187 = vmul.f32 %v1150, %v1165
        %v1188 = vmul.f32 %v1151, %v1165
        %v1189 = vmul.f32 %v1152, %v1165
        %v1190 = vmul.f32 %v1153, %v1165
        %v1191 = vmul.f32 %v1154, %v1165
        %v1192 = vmul.f32 %v1155, %v1165
        %v1193 = vmul.f32 %v1156, %v1165
        %v1194 = vmul.f32 %v1157, %v1165
        %v1195 = vmul.f32 %v1158, %v1165
        %v1196 = vmul.f32 %v1159, %v1165
        %v1197 = vmul.f32 %v1160, %v1165
        %v1198 = vadd.f32 %v1097, %v1166
        %v1199 = vadd.f32 %v1098, %v1167
        %v1200 = vadd.f32 %v1099, %v1168
        %v1201 = vadd.f32 %v1100, %v1169
        %v1202 = vadd.f32 %v1101, %v1170
        %v1203 = vadd.f32 %v1102, %v1171
        %v1204 = vadd.f32 %v1103, %v1172
        %v1205 = vadd.f32 %v1104, %v1173
        %v1206 = vadd.f32 %v1105, %v1174
        %v1207 = vadd.f32 %v1106, %v1175
        %v1208 = vadd.f32 %v1107, %v1176
        %v1209 = vadd.f32 %v1108, %v1177
        %v1210 = vadd.f32 %v1109, %v1178
        %v1211 = vadd.f32 %v1110, %v1179
        %v1212 = vadd.f32 %v1111, %v1180
        %v1213 = vadd.f32 %v1112, %v1181
        %v1214 = vadd.f32 %v1113, %v1182
        %v1215 = vadd.f32 %v1114, %v1183
        %v1216 = vadd.f32 %v1115, %v1184
        %v1217 = vadd.f32 %v1116, %v1185
        %v1218 = vadd.f32 %v1117, %v1186
        %v1219 = vadd.f32 %v1118, %v1187
        %v1220 = vadd.f32 %v1119, %v1188
        %v1221 = vadd.f32 %v1120, %v1189
        %v1222 = vadd.f32 %v1121, %v1190
        %v1223 = vadd.f32 %v1122, %v1191
        %v1224 = vadd.f32 %v1123, %v1192
        %v1225 = vadd.f32 %v1124, %v1193
        %v1226 = vadd.f32 %v1125, %v1194
        %v1227 = vadd.f32 %v1126, %v1195
        %v1228 = vadd.f32 %v1127, %v1196
        %v1229 = vadd.f32 %v1128, %v1197
        %v1230 = vld [vmem:[%s384 + $0x2] sm:$0xff]
        %v1231 = vld [vmem:[%s384 + $0xa] sm:$0xff]
        %v1232 = vld [vmem:[%s384 + $0x1a] sm:$0xff]
        %v1233 = vld [vmem:[%s384 + $0x22] sm:$0xff]
        %v1234 = vld [vmem:[%s384 + $0x32] sm:$0xff]
        %v1235 = vld [vmem:[%s384 + $0x3a] sm:$0xff]
        %v1236 = vld [vmem:[%s384 + $0x4a] sm:$0xff]
        %v1237 = vld [vmem:[%s384 + $0x52] sm:$0xff]
        %v1238 = vld [vmem:[%s384 + $0x62] sm:$0xff]
        %v1239 = vld [vmem:[%s384 + $0x6a] sm:$0xff]
        %v1240 = vld [vmem:[%s384 + $0x7a] sm:$0xff]
        %v1241 = vld [vmem:[%s384 + $0x82] sm:$0xff]
        %v1242 = vld [vmem:[%s384 + $0x92] sm:$0xff]
        %v1243 = vld [vmem:[%s384 + $0x9a] sm:$0xff]
        %v1244 = vld [vmem:[%s384 + $0xaa] sm:$0xff]
        %v1245 = vld [vmem:[%s384 + $0xb2] sm:$0xff]
        %v1246 = vld [vmem:[%s384 + $0xc2] sm:$0xff]
        %v1247 = vld [vmem:[%s384 + $0xca] sm:$0xff]
        %v1248 = vld [vmem:[%s384 + $0xda] sm:$0xff]
        %v1249 = vld [vmem:[%s384 + $0xe2] sm:$0xff]
        %v1250 = vld [vmem:[%s384 + $0xf2] sm:$0xff]
        %v1251 = vld [vmem:[%s384 + $0xfa] sm:$0xff]
        %v1252 = vld [vmem:[%s384 + $0x10a] sm:$0xff]
        %v1253 = vld [vmem:[%s384 + $0x112] sm:$0xff]
        %v1254 = vld [vmem:[%s384 + $0x122] sm:$0xff]
        %v1255 = vld [vmem:[%s384 + $0x12a] sm:$0xff]
        %v1256 = vld [vmem:[%s384 + $0x13a] sm:$0xff]
        %v1257 = vld [vmem:[%s384 + $0x142] sm:$0xff]
        %v1258 = vld [vmem:[%s384 + $0x152] sm:$0xff]
        %v1259 = vld [vmem:[%s384 + $0x15a] sm:$0xff]
        %v1260 = vld [vmem:[%s384 + $0x16a] sm:$0xff]
        %v1261 = vld [vmem:[%s384 + $0x172] sm:$0xff]
        %v1262 = vld [vmem:[%s1 + $0x4] sm:$0x1]
        %v1263 = vlaneseq
        %v1264 = vshrl.u32 %v1263, 7
        %v1265 = vsub.s32 0, %v1264
        %v1266 = vrot.slane %v1262, %v1265
        %v1267 = vmul.f32 %v1230, %v1266
        %v1268 = vmul.f32 %v1231, %v1266
        %v1269 = vmul.f32 %v1232, %v1266
        %v1270 = vmul.f32 %v1233, %v1266
        %v1271 = vmul.f32 %v1234, %v1266
        %v1272 = vmul.f32 %v1235, %v1266
        %v1273 = vmul.f32 %v1236, %v1266
        %v1274 = vmul.f32 %v1237, %v1266
        %v1275 = vmul.f32 %v1238, %v1266
        %v1276 = vmul.f32 %v1239, %v1266
        %v1277 = vmul.f32 %v1240, %v1266
        %v1278 = vmul.f32 %v1241, %v1266
        %v1279 = vmul.f32 %v1242, %v1266
        %v1280 = vmul.f32 %v1243, %v1266
        %v1281 = vmul.f32 %v1244, %v1266
        %v1282 = vmul.f32 %v1245, %v1266
        %v1283 = vmul.f32 %v1246, %v1266
        %v1284 = vmul.f32 %v1247, %v1266
        %v1285 = vmul.f32 %v1248, %v1266
        %v1286 = vmul.f32 %v1249, %v1266
        %v1287 = vmul.f32 %v1250, %v1266
        %v1288 = vmul.f32 %v1251, %v1266
        %v1289 = vmul.f32 %v1252, %v1266
        %v1290 = vmul.f32 %v1253, %v1266
        %v1291 = vmul.f32 %v1254, %v1266
        %v1292 = vmul.f32 %v1255, %v1266
        %v1293 = vmul.f32 %v1256, %v1266
        %v1294 = vmul.f32 %v1257, %v1266
        %v1295 = vmul.f32 %v1258, %v1266
        %v1296 = vmul.f32 %v1259, %v1266
        %v1297 = vmul.f32 %v1260, %v1266
        %v1298 = vmul.f32 %v1261, %v1266
        %v1299 = vadd.f32 %v1198, %v1267
        %v1300 = vadd.f32 %v1199, %v1268
        %v1301 = vadd.f32 %v1200, %v1269
        %v1302 = vadd.f32 %v1201, %v1270
        %v1303 = vadd.f32 %v1202, %v1271
        %v1304 = vadd.f32 %v1203, %v1272
        %v1305 = vadd.f32 %v1204, %v1273
        %v1306 = vadd.f32 %v1205, %v1274
        %v1307 = vadd.f32 %v1206, %v1275
        %v1308 = vadd.f32 %v1207, %v1276
        %v1309 = vadd.f32 %v1208, %v1277
        %v1310 = vadd.f32 %v1209, %v1278
        %v1311 = vadd.f32 %v1210, %v1279
        %v1312 = vadd.f32 %v1211, %v1280
        %v1313 = vadd.f32 %v1212, %v1281
        %v1314 = vadd.f32 %v1213, %v1282
        %v1315 = vadd.f32 %v1214, %v1283
        %v1316 = vadd.f32 %v1215, %v1284
        %v1317 = vadd.f32 %v1216, %v1285
        %v1318 = vadd.f32 %v1217, %v1286
        %v1319 = vadd.f32 %v1218, %v1287
        %v1320 = vadd.f32 %v1219, %v1288
        %v1321 = vadd.f32 %v1220, %v1289
        %v1322 = vadd.f32 %v1221, %v1290
        %v1323 = vadd.f32 %v1222, %v1291
        %v1324 = vadd.f32 %v1223, %v1292
        %v1325 = vadd.f32 %v1224, %v1293
        %v1326 = vadd.f32 %v1225, %v1294
        %v1327 = vadd.f32 %v1226, %v1295
        %v1328 = vadd.f32 %v1227, %v1296
        %v1329 = vadd.f32 %v1228, %v1297
        %v1330 = vadd.f32 %v1229, %v1298
        %v1331 = vld [vmem:[%s384 + $0x3] sm:$0xff]
        %v1332 = vld [vmem:[%s384 + $0xb] sm:$0xff]
        %v1333 = vld [vmem:[%s384 + $0x1b] sm:$0xff]
        %v1334 = vld [vmem:[%s384 + $0x23] sm:$0xff]
        %v1335 = vld [vmem:[%s384 + $0x33] sm:$0xff]
        %v1336 = vld [vmem:[%s384 + $0x3b] sm:$0xff]
        %v1337 = vld [vmem:[%s384 + $0x4b] sm:$0xff]
        %v1338 = vld [vmem:[%s384 + $0x53] sm:$0xff]
        %v1339 = vld [vmem:[%s384 + $0x63] sm:$0xff]
        %v1340 = vld [vmem:[%s384 + $0x6b] sm:$0xff]
        %v1341 = vld [vmem:[%s384 + $0x7b] sm:$0xff]
        %v1342 = vld [vmem:[%s384 + $0x83] sm:$0xff]
        %v1343 = vld [vmem:[%s384 + $0x93] sm:$0xff]
        %v1344 = vld [vmem:[%s384 + $0x9b] sm:$0xff]
        %v1345 = vld [vmem:[%s384 + $0xab] sm:$0xff]
        %v1346 = vld [vmem:[%s384 + $0xb3] sm:$0xff]
        %v1347 = vld [vmem:[%s384 + $0xc3] sm:$0xff]
        %v1348 = vld [vmem:[%s384 + $0xcb] sm:$0xff]
        %v1349 = vld [vmem:[%s384 + $0xdb] sm:$0xff]
        %v1350 = vld [vmem:[%s384 + $0xe3] sm:$0xff]
        %v1351 = vld [vmem:[%s384 + $0xf3] sm:$0xff]
        %v1352 = vld [vmem:[%s384 + $0xfb] sm:$0xff]
        %v1353 = vld [vmem:[%s384 + $0x10b] sm:$0xff]
        %v1354 = vld [vmem:[%s384 + $0x113] sm:$0xff]
        %v1355 = vld [vmem:[%s384 + $0x123] sm:$0xff]
        %v1356 = vld [vmem:[%s384 + $0x12b] sm:$0xff]
        %v1357 = vld [vmem:[%s384 + $0x13b] sm:$0xff]
        %v1358 = vld [vmem:[%s384 + $0x143] sm:$0xff]
        %v1359 = vld [vmem:[%s384 + $0x153] sm:$0xff]
        %v1360 = vld [vmem:[%s384 + $0x15b] sm:$0xff]
        %v1361 = vld [vmem:[%s384 + $0x16b] sm:$0xff]
        %v1362 = vld [vmem:[%s384 + $0x173] sm:$0xff]
        %v1363 = vld [vmem:[%s1 + $0x5] sm:$0x1]
        %v1364 = vlaneseq
        %v1365 = vshrl.u32 %v1364, 7
        %v1366 = vsub.s32 0, %v1365
        %v1367 = vrot.slane %v1363, %v1366
        %v1368 = vmul.f32 %v1331, %v1367
        %v1369 = vmul.f32 %v1332, %v1367
        %v1370 = vmul.f32 %v1333, %v1367
        %v1371 = vmul.f32 %v1334, %v1367
        %v1372 = vmul.f32 %v1335, %v1367
        %v1373 = vmul.f32 %v1336, %v1367
        %v1374 = vmul.f32 %v1337, %v1367
        %v1375 = vmul.f32 %v1338, %v1367
        %v1376 = vmul.f32 %v1339, %v1367
        %v1377 = vmul.f32 %v1340, %v1367
        %v1378 = vmul.f32 %v1341, %v1367
        %v1379 = vmul.f32 %v1342, %v1367
        %v1380 = vmul.f32 %v1343, %v1367
        %v1381 = vmul.f32 %v1344, %v1367
        %v1382 = vmul.f32 %v1345, %v1367
        %v1383 = vmul.f32 %v1346, %v1367
        %v1384 = vmul.f32 %v1347, %v1367
        %v1385 = vmul.f32 %v1348, %v1367
        %v1386 = vmul.f32 %v1349, %v1367
        %v1387 = vmul.f32 %v1350, %v1367
        %v1388 = vmul.f32 %v1351, %v1367
        %v1389 = vmul.f32 %v1352, %v1367
        %v1390 = vmul.f32 %v1353, %v1367
        %v1391 = vmul.f32 %v1354, %v1367
        %v1392 = vmul.f32 %v1355, %v1367
        %v1393 = vmul.f32 %v1356, %v1367
        %v1394 = vmul.f32 %v1357, %v1367
        %v1395 = vmul.f32 %v1358, %v1367
        %v1396 = vmul.f32 %v1359, %v1367
        %v1397 = vmul.f32 %v1360, %v1367
        %v1398 = vmul.f32 %v1361, %v1367
        %v1399 = vmul.f32 %v1362, %v1367
        %v1400 = vadd.f32 %v1299, %v1368
        %v1401 = vadd.f32 %v1300, %v1369
        %v1402 = vadd.f32 %v1301, %v1370
        %v1403 = vadd.f32 %v1302, %v1371
        %v1404 = vadd.f32 %v1303, %v1372
        %v1405 = vadd.f32 %v1304, %v1373
        %v1406 = vadd.f32 %v1305, %v1374
        %v1407 = vadd.f32 %v1306, %v1375
        %v1408 = vadd.f32 %v1307, %v1376
        %v1409 = vadd.f32 %v1308, %v1377
        %v1410 = vadd.f32 %v1309, %v1378
        %v1411 = vadd.f32 %v1310, %v1379
        %v1412 = vadd.f32 %v1311, %v1380
        %v1413 = vadd.f32 %v1312, %v1381
        %v1414 = vadd.f32 %v1313, %v1382
        %v1415 = vadd.f32 %v1314, %v1383
        %v1416 = vadd.f32 %v1315, %v1384
        %v1417 = vadd.f32 %v1316, %v1385
        %v1418 = vadd.f32 %v1317, %v1386
        %v1419 = vadd.f32 %v1318, %v1387
        %v1420 = vadd.f32 %v1319, %v1388
        %v1421 = vadd.f32 %v1320, %v1389
        %v1422 = vadd.f32 %v1321, %v1390
        %v1423 = vadd.f32 %v1322, %v1391
        %v1424 = vadd.f32 %v1323, %v1392
        %v1425 = vadd.f32 %v1324, %v1393
        %v1426 = vadd.f32 %v1325, %v1394
        %v1427 = vadd.f32 %v1326, %v1395
        %v1428 = vadd.f32 %v1327, %v1396
        %v1429 = vadd.f32 %v1328, %v1397
        %v1430 = vadd.f32 %v1329, %v1398
        %v1431 = vadd.f32 %v1330, %v1399
        %v1432 = vld [vmem:[%s384 + $0x4] sm:$0xff]
        %v1433 = vld [vmem:[%s384 + $0xc] sm:$0xff]
        %v1434 = vld [vmem:[%s384 + $0x1c] sm:$0xff]
        %v1435 = vld [vmem:[%s384 + $0x24] sm:$0xff]
        %v1436 = vld [vmem:[%s384 + $0x34] sm:$0xff]
        %v1437 = vld [vmem:[%s384 + $0x3c] sm:$0xff]
        %v1438 = vld [vmem:[%s384 + $0x4c] sm:$0xff]
        %v1439 = vld [vmem:[%s384 + $0x54] sm:$0xff]
        %v1440 = vld [vmem:[%s384 + $0x64] sm:$0xff]
        %v1441 = vld [vmem:[%s384 + $0x6c] sm:$0xff]
        %v1442 = vld [vmem:[%s384 + $0x7c] sm:$0xff]
        %v1443 = vld [vmem:[%s384 + $0x84] sm:$0xff]
        %v1444 = vld [vmem:[%s384 + $0x94] sm:$0xff]
        %v1445 = vld [vmem:[%s384 + $0x9c] sm:$0xff]
        %v1446 = vld [vmem:[%s384 + $0xac] sm:$0xff]
        %v1447 = vld [vmem:[%s384 + $0xb4] sm:$0xff]
        %v1448 = vld [vmem:[%s384 + $0xc4] sm:$0xff]
        %v1449 = vld [vmem:[%s384 + $0xcc] sm:$0xff]
        %v1450 = vld [vmem:[%s384 + $0xdc] sm:$0xff]
        %v1451 = vld [vmem:[%s384 + $0xe4] sm:$0xff]
        %v1452 = vld [vmem:[%s384 + $0xf4] sm:$0xff]
        %v1453 = vld [vmem:[%s384 + $0xfc] sm:$0xff]
        %v1454 = vld [vmem:[%s384 + $0x10c] sm:$0xff]
        %v1455 = vld [vmem:[%s384 + $0x114] sm:$0xff]
        %v1456 = vld [vmem:[%s384 + $0x124] sm:$0xff]
        %v1457 = vld [vmem:[%s384 + $0x12c] sm:$0xff]
        %v1458 = vld [vmem:[%s384 + $0x13c] sm:$0xff]
        %v1459 = vld [vmem:[%s384 + $0x144] sm:$0xff]
        %v1460 = vld [vmem:[%s384 + $0x154] sm:$0xff]
        %v1461 = vld [vmem:[%s384 + $0x15c] sm:$0xff]
        %v1462 = vld [vmem:[%s384 + $0x16c] sm:$0xff]
        %v1463 = vld [vmem:[%s384 + $0x174] sm:$0xff]
        %v1464 = vld [vmem:[%s1 + $0x6] sm:$0x1]
        %v1465 = vlaneseq
        %v1466 = vshrl.u32 %v1465, 7
        %v1467 = vsub.s32 0, %v1466
        %v1468 = vrot.slane %v1464, %v1467
        %v1469 = vmul.f32 %v1432, %v1468
        %v1470 = vmul.f32 %v1433, %v1468
        %v1471 = vmul.f32 %v1434, %v1468
        %v1472 = vmul.f32 %v1435, %v1468
        %v1473 = vmul.f32 %v1436, %v1468
        %v1474 = vmul.f32 %v1437, %v1468
        %v1475 = vmul.f32 %v1438, %v1468
        %v1476 = vmul.f32 %v1439, %v1468
        %v1477 = vmul.f32 %v1440, %v1468
        %v1478 = vmul.f32 %v1441, %v1468
        %v1479 = vmul.f32 %v1442, %v1468
        %v1480 = vmul.f32 %v1443, %v1468
        %v1481 = vmul.f32 %v1444, %v1468
        %v1482 = vmul.f32 %v1445, %v1468
        %v1483 = vmul.f32 %v1446, %v1468
        %v1484 = vmul.f32 %v1447, %v1468
        %v1485 = vmul.f32 %v1448, %v1468
        %v1486 = vmul.f32 %v1449, %v1468
        %v1487 = vmul.f32 %v1450, %v1468
        %v1488 = vmul.f32 %v1451, %v1468
        %v1489 = vmul.f32 %v1452, %v1468
        %v1490 = vmul.f32 %v1453, %v1468
        %v1491 = vmul.f32 %v1454, %v1468
        %v1492 = vmul.f32 %v1455, %v1468
        %v1493 = vmul.f32 %v1456, %v1468
        %v1494 = vmul.f32 %v1457, %v1468
        %v1495 = vmul.f32 %v1458, %v1468
        %v1496 = vmul.f32 %v1459, %v1468
        %v1497 = vmul.f32 %v1460, %v1468
        %v1498 = vmul.f32 %v1461, %v1468
        %v1499 = vmul.f32 %v1462, %v1468
        %v1500 = vmul.f32 %v1463, %v1468
        %v1501 = vadd.f32 %v1400, %v1469
        %v1502 = vadd.f32 %v1401, %v1470
        %v1503 = vadd.f32 %v1402, %v1471
        %v1504 = vadd.f32 %v1403, %v1472
        %v1505 = vadd.f32 %v1404, %v1473
        %v1506 = vadd.f32 %v1405, %v1474
        %v1507 = vadd.f32 %v1406, %v1475
        %v1508 = vadd.f32 %v1407, %v1476
        %v1509 = vadd.f32 %v1408, %v1477
        %v1510 = vadd.f32 %v1409, %v1478
        %v1511 = vadd.f32 %v1410, %v1479
        %v1512 = vadd.f32 %v1411, %v1480
        %v1513 = vadd.f32 %v1412, %v1481
        %v1514 = vadd.f32 %v1413, %v1482
        %v1515 = vadd.f32 %v1414, %v1483
        %v1516 = vadd.f32 %v1415, %v1484
        %v1517 = vadd.f32 %v1416, %v1485
        %v1518 = vadd.f32 %v1417, %v1486
        %v1519 = vadd.f32 %v1418, %v1487
        %v1520 = vadd.f32 %v1419, %v1488
        %v1521 = vadd.f32 %v1420, %v1489
        %v1522 = vadd.f32 %v1421, %v1490
        %v1523 = vadd.f32 %v1422, %v1491
        %v1524 = vadd.f32 %v1423, %v1492
        %v1525 = vadd.f32 %v1424, %v1493
        %v1526 = vadd.f32 %v1425, %v1494
        %v1527 = vadd.f32 %v1426, %v1495
        %v1528 = vadd.f32 %v1427, %v1496
        %v1529 = vadd.f32 %v1428, %v1497
        %v1530 = vadd.f32 %v1429, %v1498
        %v1531 = vadd.f32 %v1430, %v1499
        %v1532 = vadd.f32 %v1431, %v1500
        %s1533 = scalar_lea.vmem [#allocation2], 96
        %v1534 = vld [vmem:[%s1533 + $0x2] sm:$0xff]
        %v1535 = vld [vmem:[%s1533 + $0xa] sm:$0xff]
        %v1536 = vld [vmem:[%s1533 + $0x1a] sm:$0xff]
        %v1537 = vld [vmem:[%s1533 + $0x22] sm:$0xff]
        %v1538 = vld [vmem:[%s1533 + $0x32] sm:$0xff]
        %v1539 = vld [vmem:[%s1533 + $0x3a] sm:$0xff]
        %v1540 = vld [vmem:[%s1533 + $0x4a] sm:$0xff]
        %v1541 = vld [vmem:[%s1533 + $0x52] sm:$0xff]
        %v1542 = vld [vmem:[%s1533 + $0x62] sm:$0xff]
        %v1543 = vld [vmem:[%s1533 + $0x6a] sm:$0xff]
        %v1544 = vld [vmem:[%s1533 + $0x7a] sm:$0xff]
        %v1545 = vld [vmem:[%s1533 + $0x82] sm:$0xff]
        %v1546 = vld [vmem:[%s1533 + $0x92] sm:$0xff]
        %v1547 = vld [vmem:[%s1533 + $0x9a] sm:$0xff]
        %v1548 = vld [vmem:[%s1533 + $0xaa] sm:$0xff]
        %v1549 = vld [vmem:[%s1533 + $0xb2] sm:$0xff]
        %v1550 = vld [vmem:[%s1533 + $0xc2] sm:$0xff]
        %v1551 = vld [vmem:[%s1533 + $0xca] sm:$0xff]
        %v1552 = vld [vmem:[%s1533 + $0xda] sm:$0xff]
        %v1553 = vld [vmem:[%s1533 + $0xe2] sm:$0xff]
        %v1554 = vld [vmem:[%s1533 + $0xf2] sm:$0xff]
        %v1555 = vld [vmem:[%s1533 + $0xfa] sm:$0xff]
        %v1556 = vld [vmem:[%s1533 + $0x10a] sm:$0xff]
        %v1557 = vld [vmem:[%s1533 + $0x112] sm:$0xff]
        %v1558 = vld [vmem:[%s1533 + $0x122] sm:$0xff]
        %v1559 = vld [vmem:[%s1533 + $0x12a] sm:$0xff]
        %v1560 = vld [vmem:[%s1533 + $0x13a] sm:$0xff]
        %v1561 = vld [vmem:[%s1533 + $0x142] sm:$0xff]
        %v1562 = vld [vmem:[%s1533 + $0x152] sm:$0xff]
        %v1563 = vld [vmem:[%s1533 + $0x15a] sm:$0xff]
        %v1564 = vld [vmem:[%s1533 + $0x16a] sm:$0xff]
        %v1565 = vld [vmem:[%s1533 + $0x172] sm:$0xff]
        %v1566 = vld [vmem:[%s1 + $0x7] sm:$0x1]
        %v1567 = vlaneseq
        %v1568 = vshrl.u32 %v1567, 7
        %v1569 = vsub.s32 0, %v1568
        %v1570 = vrot.slane %v1566, %v1569
        %v1571 = vmul.f32 %v1534, %v1570
        %v1572 = vmul.f32 %v1535, %v1570
        %v1573 = vmul.f32 %v1536, %v1570
        %v1574 = vmul.f32 %v1537, %v1570
        %v1575 = vmul.f32 %v1538, %v1570
        %v1576 = vmul.f32 %v1539, %v1570
        %v1577 = vmul.f32 %v1540, %v1570
        %v1578 = vmul.f32 %v1541, %v1570
        %v1579 = vmul.f32 %v1542, %v1570
        %v1580 = vmul.f32 %v1543, %v1570
        %v1581 = vmul.f32 %v1544, %v1570
        %v1582 = vmul.f32 %v1545, %v1570
        %v1583 = vmul.f32 %v1546, %v1570
        %v1584 = vmul.f32 %v1547, %v1570
        %v1585 = vmul.f32 %v1548, %v1570
        %v1586 = vmul.f32 %v1549, %v1570
        %v1587 = vmul.f32 %v1550, %v1570
        %v1588 = vmul.f32 %v1551, %v1570
        %v1589 = vmul.f32 %v1552, %v1570
        %v1590 = vmul.f32 %v1553, %v1570
        %v1591 = vmul.f32 %v1554, %v1570
        %v1592 = vmul.f32 %v1555, %v1570
        %v1593 = vmul.f32 %v1556, %v1570
        %v1594 = vmul.f32 %v1557, %v1570
        %v1595 = vmul.f32 %v1558, %v1570
        %v1596 = vmul.f32 %v1559, %v1570
        %v1597 = vmul.f32 %v1560, %v1570
        %v1598 = vmul.f32 %v1561, %v1570
        %v1599 = vmul.f32 %v1562, %v1570
        %v1600 = vmul.f32 %v1563, %v1570
        %v1601 = vmul.f32 %v1564, %v1570
        %v1602 = vmul.f32 %v1565, %v1570
        %v1603 = vadd.f32 %v1501, %v1571
        %v1604 = vadd.f32 %v1502, %v1572
        %v1605 = vadd.f32 %v1503, %v1573
        %v1606 = vadd.f32 %v1504, %v1574
        %v1607 = vadd.f32 %v1505, %v1575
        %v1608 = vadd.f32 %v1506, %v1576
        %v1609 = vadd.f32 %v1507, %v1577
        %v1610 = vadd.f32 %v1508, %v1578
        %v1611 = vadd.f32 %v1509, %v1579
        %v1612 = vadd.f32 %v1510, %v1580
        %v1613 = vadd.f32 %v1511, %v1581
        %v1614 = vadd.f32 %v1512, %v1582
        %v1615 = vadd.f32 %v1513, %v1583
        %v1616 = vadd.f32 %v1514, %v1584
        %v1617 = vadd.f32 %v1515, %v1585
        %v1618 = vadd.f32 %v1516, %v1586
        %v1619 = vadd.f32 %v1517, %v1587
        %v1620 = vadd.f32 %v1518, %v1588
        %v1621 = vadd.f32 %v1519, %v1589
        %v1622 = vadd.f32 %v1520, %v1590
        %v1623 = vadd.f32 %v1521, %v1591
        %v1624 = vadd.f32 %v1522, %v1592
        %v1625 = vadd.f32 %v1523, %v1593
        %v1626 = vadd.f32 %v1524, %v1594
        %v1627 = vadd.f32 %v1525, %v1595
        %v1628 = vadd.f32 %v1526, %v1596
        %v1629 = vadd.f32 %v1527, %v1597
        %v1630 = vadd.f32 %v1528, %v1598
        %v1631 = vadd.f32 %v1529, %v1599
        %v1632 = vadd.f32 %v1530, %v1600
        %v1633 = vadd.f32 %v1531, %v1601
        %v1634 = vadd.f32 %v1532, %v1602
        %v1635 = vld [vmem:[%s1533 + $0x3] sm:$0xff]
        %v1636 = vld [vmem:[%s1533 + $0xb] sm:$0xff]
        %v1637 = vld [vmem:[%s1533 + $0x1b] sm:$0xff]
        %v1638 = vld [vmem:[%s1533 + $0x23] sm:$0xff]
        %v1639 = vld [vmem:[%s1533 + $0x33] sm:$0xff]
        %v1640 = vld [vmem:[%s1533 + $0x3b] sm:$0xff]
        %v1641 = vld [vmem:[%s1533 + $0x4b] sm:$0xff]
        %v1642 = vld [vmem:[%s1533 + $0x53] sm:$0xff]
        %v1643 = vld [vmem:[%s1533 + $0x63] sm:$0xff]
        %v1644 = vld [vmem:[%s1533 + $0x6b] sm:$0xff]
        %v1645 = vld [vmem:[%s1533 + $0x7b] sm:$0xff]
        %v1646 = vld [vmem:[%s1533 + $0x83] sm:$0xff]
        %v1647 = vld [vmem:[%s1533 + $0x93] sm:$0xff]
        %v1648 = vld [vmem:[%s1533 + $0x9b] sm:$0xff]
        %v1649 = vld [vmem:[%s1533 + $0xab] sm:$0xff]
        %v1650 = vld [vmem:[%s1533 + $0xb3] sm:$0xff]
        %v1651 = vld [vmem:[%s1533 + $0xc3] sm:$0xff]
        %v1652 = vld [vmem:[%s1533 + $0xcb] sm:$0xff]
        %v1653 = vld [vmem:[%s1533 + $0xdb] sm:$0xff]
        %v1654 = vld [vmem:[%s1533 + $0xe3] sm:$0xff]
        %v1655 = vld [vmem:[%s1533 + $0xf3] sm:$0xff]
        %v1656 = vld [vmem:[%s1533 + $0xfb] sm:$0xff]
        %v1657 = vld [vmem:[%s1533 + $0x10b] sm:$0xff]
        %v1658 = vld [vmem:[%s1533 + $0x113] sm:$0xff]
        %v1659 = vld [vmem:[%s1533 + $0x123] sm:$0xff]
        %v1660 = vld [vmem:[%s1533 + $0x12b] sm:$0xff]
        %v1661 = vld [vmem:[%s1533 + $0x13b] sm:$0xff]
        %v1662 = vld [vmem:[%s1533 + $0x143] sm:$0xff]
        %v1663 = vld [vmem:[%s1533 + $0x153] sm:$0xff]
        %v1664 = vld [vmem:[%s1533 + $0x15b] sm:$0xff]
        %v1665 = vld [vmem:[%s1533 + $0x16b] sm:$0xff]
        %v1666 = vld [vmem:[%s1533 + $0x173] sm:$0xff]
        %v1667 = vld [vmem:[%s1 + $0x8] sm:$0x1]
        %v1668 = vlaneseq
        %v1669 = vshrl.u32 %v1668, 7
        %v1670 = vsub.s32 0, %v1669
        %v1671 = vrot.slane %v1667, %v1670
        %v1672 = vmul.f32 %v1635, %v1671
        %v1673 = vmul.f32 %v1636, %v1671
        %v1674 = vmul.f32 %v1637, %v1671
        %v1675 = vmul.f32 %v1638, %v1671
        %v1676 = vmul.f32 %v1639, %v1671
        %v1677 = vmul.f32 %v1640, %v1671
        %v1678 = vmul.f32 %v1641, %v1671
        %v1679 = vmul.f32 %v1642, %v1671
        %v1680 = vmul.f32 %v1643, %v1671
        %v1681 = vmul.f32 %v1644, %v1671
        %v1682 = vmul.f32 %v1645, %v1671
        %v1683 = vmul.f32 %v1646, %v1671
        %v1684 = vmul.f32 %v1647, %v1671
        %v1685 = vmul.f32 %v1648, %v1671
        %v1686 = vmul.f32 %v1649, %v1671
        %v1687 = vmul.f32 %v1650, %v1671
        %v1688 = vmul.f32 %v1651, %v1671
        %v1689 = vmul.f32 %v1652, %v1671
        %v1690 = vmul.f32 %v1653, %v1671
        %v1691 = vmul.f32 %v1654, %v1671
        %v1692 = vmul.f32 %v1655, %v1671
        %v1693 = vmul.f32 %v1656, %v1671
        %v1694 = vmul.f32 %v1657, %v1671
        %v1695 = vmul.f32 %v1658, %v1671
        %v1696 = vmul.f32 %v1659, %v1671
        %v1697 = vmul.f32 %v1660, %v1671
        %v1698 = vmul.f32 %v1661, %v1671
        %v1699 = vmul.f32 %v1662, %v1671
        %v1700 = vmul.f32 %v1663, %v1671
        %v1701 = vmul.f32 %v1664, %v1671
        %v1702 = vmul.f32 %v1665, %v1671
        %v1703 = vmul.f32 %v1666, %v1671
        %v1704 = vadd.f32 %v1603, %v1672
        %v1705 = vadd.f32 %v1604, %v1673
        %v1706 = vadd.f32 %v1605, %v1674
        %v1707 = vadd.f32 %v1606, %v1675
        %v1708 = vadd.f32 %v1607, %v1676
        %v1709 = vadd.f32 %v1608, %v1677
        %v1710 = vadd.f32 %v1609, %v1678
        %v1711 = vadd.f32 %v1610, %v1679
        %v1712 = vadd.f32 %v1611, %v1680
        %v1713 = vadd.f32 %v1612, %v1681
        %v1714 = vadd.f32 %v1613, %v1682
        %v1715 = vadd.f32 %v1614, %v1683
        %v1716 = vadd.f32 %v1615, %v1684
        %v1717 = vadd.f32 %v1616, %v1685
        %v1718 = vadd.f32 %v1617, %v1686
        %v1719 = vadd.f32 %v1618, %v1687
        %v1720 = vadd.f32 %v1619, %v1688
        %v1721 = vadd.f32 %v1620, %v1689
        %v1722 = vadd.f32 %v1621, %v1690
        %v1723 = vadd.f32 %v1622, %v1691
        %v1724 = vadd.f32 %v1623, %v1692
        %v1725 = vadd.f32 %v1624, %v1693
        %v1726 = vadd.f32 %v1625, %v1694
        %v1727 = vadd.f32 %v1626, %v1695
        %v1728 = vadd.f32 %v1627, %v1696
        %v1729 = vadd.f32 %v1628, %v1697
        %v1730 = vadd.f32 %v1629, %v1698
        %v1731 = vadd.f32 %v1630, %v1699
        %v1732 = vadd.f32 %v1631, %v1700
        %v1733 = vadd.f32 %v1632, %v1701
        %v1734 = vadd.f32 %v1633, %v1702
        %v1735 = vadd.f32 %v1634, %v1703
        %v1736 = vld [vmem:[%s1533 + $0x4] sm:$0xff]
        %v1737 = vld [vmem:[%s1533 + $0xc] sm:$0xff]
        %v1738 = vld [vmem:[%s1533 + $0x1c] sm:$0xff]
        %v1739 = vld [vmem:[%s1533 + $0x24] sm:$0xff]
        %v1740 = vld [vmem:[%s1533 + $0x34] sm:$0xff]
        %v1741 = vld [vmem:[%s1533 + $0x3c] sm:$0xff]
        %v1742 = vld [vmem:[%s1533 + $0x4c] sm:$0xff]
        %v1743 = vld [vmem:[%s1533 + $0x54] sm:$0xff]
        %v1744 = vld [vmem:[%s1533 + $0x64] sm:$0xff]
        %v1745 = vld [vmem:[%s1533 + $0x6c] sm:$0xff]
        %v1746 = vld [vmem:[%s1533 + $0x7c] sm:$0xff]
        %v1747 = vld [vmem:[%s1533 + $0x84] sm:$0xff]
        %v1748 = vld [vmem:[%s1533 + $0x94] sm:$0xff]
        %v1749 = vld [vmem:[%s1533 + $0x9c] sm:$0xff]
        %v1750 = vld [vmem:[%s1533 + $0xac] sm:$0xff]
        %v1751 = vld [vmem:[%s1533 + $0xb4] sm:$0xff]
        %v1752 = vld [vmem:[%s1533 + $0xc4] sm:$0xff]
        %v1753 = vld [vmem:[%s1533 + $0xcc] sm:$0xff]
        %v1754 = vld [vmem:[%s1533 + $0xdc] sm:$0xff]
        %v1755 = vld [vmem:[%s1533 + $0xe4] sm:$0xff]
        %v1756 = vld [vmem:[%s1533 + $0xf4] sm:$0xff]
        %v1757 = vld [vmem:[%s1533 + $0xfc] sm:$0xff]
        %v1758 = vld [vmem:[%s1533 + $0x10c] sm:$0xff]
        %v1759 = vld [vmem:[%s1533 + $0x114] sm:$0xff]
        %v1760 = vld [vmem:[%s1533 + $0x124] sm:$0xff]
        %v1761 = vld [vmem:[%s1533 + $0x12c] sm:$0xff]
        %v1762 = vld [vmem:[%s1533 + $0x13c] sm:$0xff]
        %v1763 = vld [vmem:[%s1533 + $0x144] sm:$0xff]
        %v1764 = vld [vmem:[%s1533 + $0x154] sm:$0xff]
        %v1765 = vld [vmem:[%s1533 + $0x15c] sm:$0xff]
        %v1766 = vld [vmem:[%s1533 + $0x16c] sm:$0xff]
        %v1767 = vld [vmem:[%s1533 + $0x174] sm:$0xff]
        %v1768 = vld [vmem:[%s1 + $0x9] sm:$0x1]
        %v1769 = vlaneseq
        %v1770 = vshrl.u32 %v1769, 7
        %v1771 = vsub.s32 0, %v1770
        %v1772 = vrot.slane %v1768, %v1771
        %v1773 = vmul.f32 %v1736, %v1772
        %v1774 = vmul.f32 %v1737, %v1772
        %v1775 = vmul.f32 %v1738, %v1772
        %v1776 = vmul.f32 %v1739, %v1772
        %v1777 = vmul.f32 %v1740, %v1772
        %v1778 = vmul.f32 %v1741, %v1772
        %v1779 = vmul.f32 %v1742, %v1772
        %v1780 = vmul.f32 %v1743, %v1772
        %v1781 = vmul.f32 %v1744, %v1772
        %v1782 = vmul.f32 %v1745, %v1772
        %v1783 = vmul.f32 %v1746, %v1772
        %v1784 = vmul.f32 %v1747, %v1772
        %v1785 = vmul.f32 %v1748, %v1772
        %v1786 = vmul.f32 %v1749, %v1772
        %v1787 = vmul.f32 %v1750, %v1772
        %v1788 = vmul.f32 %v1751, %v1772
        %v1789 = vmul.f32 %v1752, %v1772
        %v1790 = vmul.f32 %v1753, %v1772
        %v1791 = vmul.f32 %v1754, %v1772
        %v1792 = vmul.f32 %v1755, %v1772
        %v1793 = vmul.f32 %v1756, %v1772
        %v1794 = vmul.f32 %v1757, %v1772
        %v1795 = vmul.f32 %v1758, %v1772
        %v1796 = vmul.f32 %v1759, %v1772
        %v1797 = vmul.f32 %v1760, %v1772
        %v1798 = vmul.f32 %v1761, %v1772
        %v1799 = vmul.f32 %v1762, %v1772
        %v1800 = vmul.f32 %v1763, %v1772
        %v1801 = vmul.f32 %v1764, %v1772
        %v1802 = vmul.f32 %v1765, %v1772
        %v1803 = vmul.f32 %v1766, %v1772
        %v1804 = vmul.f32 %v1767, %v1772
        %v1805 = vadd.f32 %v1704, %v1773
        %v1806 = vadd.f32 %v1705, %v1774
        %v1807 = vadd.f32 %v1706, %v1775
        %v1808 = vadd.f32 %v1707, %v1776
        %v1809 = vadd.f32 %v1708, %v1777
        %v1810 = vadd.f32 %v1709, %v1778
        %v1811 = vadd.f32 %v1710, %v1779
        %v1812 = vadd.f32 %v1711, %v1780
        %v1813 = vadd.f32 %v1712, %v1781
        %v1814 = vadd.f32 %v1713, %v1782
        %v1815 = vadd.f32 %v1714, %v1783
        %v1816 = vadd.f32 %v1715, %v1784
        %v1817 = vadd.f32 %v1716, %v1785
        %v1818 = vadd.f32 %v1717, %v1786
        %v1819 = vadd.f32 %v1718, %v1787
        %v1820 = vadd.f32 %v1719, %v1788
        %v1821 = vadd.f32 %v1720, %v1789
        %v1822 = vadd.f32 %v1721, %v1790
        %v1823 = vadd.f32 %v1722, %v1791
        %v1824 = vadd.f32 %v1723, %v1792
        %v1825 = vadd.f32 %v1724, %v1793
        %v1826 = vadd.f32 %v1725, %v1794
        %v1827 = vadd.f32 %v1726, %v1795
        %v1828 = vadd.f32 %v1727, %v1796
        %v1829 = vadd.f32 %v1728, %v1797
        %v1830 = vadd.f32 %v1729, %v1798
        %v1831 = vadd.f32 %v1730, %v1799
        %v1832 = vadd.f32 %v1731, %v1800
        %v1833 = vadd.f32 %v1732, %v1801
        %v1834 = vadd.f32 %v1733, %v1802
        %v1835 = vadd.f32 %v1734, %v1803
        %v1836 = vadd.f32 %v1735, %v1804
        %v1837 = vld [vmem:[%s2 + $0x1] sm:$0x1]
        %v1838 = vlaneseq
        %v1839 = vshrl.u32 %v1838, 7
        %v1840 = vsub.s32 0, %v1839
        %v1841 = vrot.slane %v1837, %v1840
        %v1842 = vadd.f32 %v1805, %v1841
        %v1843 = vadd.f32 %v1806, %v1841
        %v1844 = vadd.f32 %v1807, %v1841
        %v1845 = vadd.f32 %v1808, %v1841
        %v1846 = vadd.f32 %v1809, %v1841
        %v1847 = vadd.f32 %v1810, %v1841
        %v1848 = vadd.f32 %v1811, %v1841
        %v1849 = vadd.f32 %v1812, %v1841
        %v1850 = vadd.f32 %v1813, %v1841
        %v1851 = vadd.f32 %v1814, %v1841
        %v1852 = vadd.f32 %v1815, %v1841
        %v1853 = vadd.f32 %v1816, %v1841
        %v1854 = vadd.f32 %v1817, %v1841
        %v1855 = vadd.f32 %v1818, %v1841
        %v1856 = vadd.f32 %v1819, %v1841
        %v1857 = vadd.f32 %v1820, %v1841
        %v1858 = vadd.f32 %v1821, %v1841
        %v1859 = vadd.f32 %v1822, %v1841
        %v1860 = vadd.f32 %v1823, %v1841
        %v1861 = vadd.f32 %v1824, %v1841
        %v1862 = vadd.f32 %v1825, %v1841
        %v1863 = vadd.f32 %v1826, %v1841
        %v1864 = vadd.f32 %v1827, %v1841
        %v1865 = vadd.f32 %v1828, %v1841
        %v1866 = vadd.f32 %v1829, %v1841
        %v1867 = vadd.f32 %v1830, %v1841
        %v1868 = vadd.f32 %v1831, %v1841
        %v1869 = vadd.f32 %v1832, %v1841
        %v1870 = vadd.f32 %v1833, %v1841
        %v1871 = vadd.f32 %v1834, %v1841
        %v1872 = vadd.f32 %v1835, %v1841
        %v1873 = vadd.f32 %v1836, %v1841
        %v1874 = vmax.f32 %v1842, 0.0
        %v1875 = vmax.f32 %v1843, 0.0
        %v1876 = vmax.f32 %v1844, 0.0
        %v1877 = vmax.f32 %v1845, 0.0
        %v1878 = vmax.f32 %v1846, 0.0
        %v1879 = vmax.f32 %v1847, 0.0
        %v1880 = vmax.f32 %v1848, 0.0
        %v1881 = vmax.f32 %v1849, 0.0
        %v1882 = vmax.f32 %v1850, 0.0
        %v1883 = vmax.f32 %v1851, 0.0
        %v1884 = vmax.f32 %v1852, 0.0
        %v1885 = vmax.f32 %v1853, 0.0
        %v1886 = vmax.f32 %v1854, 0.0
        %v1887 = vmax.f32 %v1855, 0.0
        %v1888 = vmax.f32 %v1856, 0.0
        %v1889 = vmax.f32 %v1857, 0.0
        %v1890 = vmax.f32 %v1858, 0.0
        %v1891 = vmax.f32 %v1859, 0.0
        %v1892 = vmax.f32 %v1860, 0.0
        %v1893 = vmax.f32 %v1861, 0.0
        %v1894 = vmax.f32 %v1862, 0.0
        %v1895 = vmax.f32 %v1863, 0.0
        %v1896 = vmax.f32 %v1864, 0.0
        %v1897 = vmax.f32 %v1865, 0.0
        %v1898 = vmax.f32 %v1866, 0.0
        %v1899 = vmax.f32 %v1867, 0.0
        %v1900 = vmax.f32 %v1868, 0.0
        %v1901 = vmax.f32 %v1869, 0.0
        %v1902 = vmax.f32 %v1870, 0.0
        %v1903 = vmax.f32 %v1871, 0.0
        %v1904 = vmax.f32 %v1872, 0.0
        %v1905 = vmax.f32 %v1873, 0.0
        %s1906 = scalar_lea.vmem %s3, 96
        %v1907 = vld [vmem:[%s1906] sm:$0xff]
        %v1908 = vld [vmem:[%s1906 + $0x8] sm:$0xff]
        %v1909 = vld [vmem:[%s1906 + $0x10] sm:$0xff]
        %v1910 = vld [vmem:[%s1906 + $0x18] sm:$0xff]
        %v1911 = vld [vmem:[%s1906 + $0x20] sm:$0xff]
        %v1912 = vld [vmem:[%s1906 + $0x28] sm:$0xff]
        %v1913 = vld [vmem:[%s1906 + $0x30] sm:$0xff]
        %v1914 = vld [vmem:[%s1906 + $0x38] sm:$0xff]
        %v1915 = vld [vmem:[%s1906 + $0x40] sm:$0xff]
        %v1916 = vld [vmem:[%s1906 + $0x48] sm:$0xff]
        %v1917 = vld [vmem:[%s1906 + $0x50] sm:$0xff]
        %v1918 = vld [vmem:[%s1906 + $0x58] sm:$0xff]
        %v1919 = vld [vmem:[%s4 + $0x1] sm:$0x1]
        %v1920 = vlaneseq
        %v1921 = vshrl.u32 %v1920, 7
        %v1922 = vsub.s32 0, %v1921
        %v1923 = vrot.slane %v1919, %v1922
        %v1925 = vsel %vm363, %v1874, 0
        %v1928 = vsel %vm363, %v1875, 0
        %v1931 = vsel %vm363, %v1876, 0
        %v1934 = vsel %vm363, %v1877, 0
        %v1937 = vsel %vm363, %v1878, 0
        %v1940 = vsel %vm363, %v1879, 0
        %v1943 = vsel %vm363, %v1880, 0
        %v1946 = vsel %vm363, %v1881, 0
        %v1949 = vsel %vm363, %v1882, 0
        %v1952 = vsel %vm363, %v1883, 0
        %v1955 = vsel %vm363, %v1884, 0
        %v1958 = vsel %vm363, %v1885, 0
        %v1961 = vsel %vm363, %v1886, 0
        %v1964 = vsel %vm363, %v1887, 0
        %v1967 = vsel %vm363, %v1888, 0
        %v1970 = vsel %vm363, %v1889, 0
        %v1973 = vsel %vm363, %v1890, 0
        %v1976 = vsel %vm363, %v1891, 0
        %v1979 = vsel %vm363, %v1892, 0
        %v1982 = vsel %vm363, %v1893, 0
        %v1985 = vsel %vm363, %v1894, 0
        %v1988 = vsel %vm363, %v1895, 0
        %v1991 = vsel %vm363, %v1896, 0
        %v1994 = vsel %vm363, %v1897, 0
        %v1997 = vsel %vm363, %v1898, 0
        %v2000 = vsel %vm363, %v1899, 0
        %v2003 = vsel %vm363, %v1900, 0
        %v2006 = vsel %vm363, %v1901, 0
        %v2009 = vsel %vm363, %v1902, 0
        %v2012 = vsel %vm363, %v1903, 0
        %v2015 = vsel %vm363, %v1904, 0
        %v2018 = vsel %vm363, %v1905, 0
        %2020 = vmatprep.subr.mxu0 0.0
        %2021 = vmatpush1.msra.mxu0 %v1907
        %2022 = vmatprep.subr.mxu0 0.0
        %2023 = vmatpush1.msra.mxu0 %v1908
        %2024 = vmatprep.subr.mxu0 0.0
        %2025 = vmatpush1.msra.mxu0 %v1909
        %2026 = vmatprep.subr.mxu0 0.0
        %2027 = vmatpush1.msra.mxu0 %v1910
        %2028 = vmatprep.subr.mxu0 0.0
        %2029 = vmatpush1.msra.mxu0 %v1911
        %2030 = vmatprep.subr.mxu0 0.0
        %2031 = vmatpush1.msra.mxu0 %v1912
        %2032 = vmatprep.subr.mxu0 0.0
        %2033 = vmatpush1.msra.mxu0 %v1913
        %2034 = vmatprep.subr.mxu0 0.0
        %2035 = vmatpush1.msra.mxu0 %v1914
        %2036 = vmatprep.subr.mxu0 0.0
        %2037 = vmatpush1.msra.mxu0 %v1915
        %2038 = vmatprep.subr.mxu0 0.0
        %2039 = vmatpush1.msra.mxu0 %v1916
        %2040 = vmatprep.subr.mxu0 0.0
        %2041 = vmatpush1.msra.mxu0 %v1917
        %2042 = vmatprep.subr.mxu0 0.0
        %2043 = vmatpush1.msra.mxu0 %v1918
        %2044 = vmatprep.subr.mxu0 0.0
        %2045 = vmatpush1.msra.mxu0 0.0
        %2046 = vmatprep.subr.mxu0 0.0
        %2047 = vmatpush1.msra.mxu0 0.0
        %2048 = vmatprep.subr.mxu0 0.0
        %2049 = vmatpush1.msra.mxu0 0.0
        %2050 = vmatprep.subr.mxu0 0.0
        %2051 = vmatpush1.msra.mxu0 0.0
        %2052 = vmatprep.subr.mxu0 0.0
        %2053 = vmatpush1.msra.mxu0 0.0
        %2054 = vmatprep.subr.mxu0 0.0
        %2055 = vmatpush1.msra.mxu0 0.0
        %2056 = vmatprep.subr.mxu0 0.0
        %2057 = vmatpush1.msra.mxu0 0.0
        %2058 = vmatprep.subr.mxu0 0.0
        %2059 = vmatpush1.msra.mxu0 0.0
        %2060 = vmatprep.subr.mxu0 0.0
        %2061 = vmatpush1.msra.mxu0 0.0
        %2062 = vmatprep.subr.mxu0 0.0
        %2063 = vmatpush1.msra.mxu0 0.0
        %2064 = vmatprep.subr.mxu0 0.0
        %2065 = vmatpush1.msra.mxu0 0.0
        %2066 = vmatprep.subr.mxu0 0.0
        %2067 = vmatpush1.msra.mxu0 0.0
        %2068 = vmatprep.subr.mxu0 0.0
        %2069 = vmatpush1.msra.mxu0 0.0
        %2070 = vmatprep.subr.mxu0 0.0
        %2071 = vmatpush1.msra.mxu0 0.0
        %2072 = vmatprep.subr.mxu0 0.0
        %2073 = vmatpush1.msra.mxu0 0.0
        %2074 = vmatprep.subr.mxu0 0.0
        %2075 = vmatpush1.msra.mxu0 0.0
        %2076 = vmatprep.subr.mxu0 0.0
        %2077 = vmatpush1.msra.mxu0 0.0
        %2078 = vmatprep.subr.mxu0 0.0
        %2079 = vmatpush1.msra.mxu0 0.0
        %2080 = vmatprep.subr.mxu0 0.0
        %2081 = vmatpush1.msra.mxu0 0.0
        %2082 = vmatprep.subr.mxu0 0.0
        %2083 = vmatpush1.msra.mxu0 0.0
        %2084 = vmatprep.mubr.f32.mxu0 0.0
        %2085 = vmatmul.mubr.f32.gmra.mrb[0].mxu0 %v1925
        %v2086 = vpop.f32.mrb[0].mxu0
        %v2087 = vadd.f32 %v1923, %v2086
        %v2088 = vpop.f32.mrb[0].mxu0
        %2089 = vmatprep.mubr.f32.mxu0 0.0
        %2090 = vmatmul.mubr.f32.gmra.mrb[0].mxu0 %v1928
        %v2091 = vpop.f32.mrb[0].mxu0
        %v2092 = vadd.f32 %v1923, %v2091
        %v2093 = vpop.f32.mrb[0].mxu0
        %2094 = vmatprep.mubr.f32.mxu0 0.0
        %2095 = vmatmul.mubr.f32.gmra.mrb[0].mxu0 %v1931
        %v2096 = vpop.f32.mrb[0].mxu0
        %v2097 = vadd.f32 %v1923, %v2096
        %v2098 = vpop.f32.mrb[0].mxu0
        %2099 = vmatprep.mubr.f32.mxu0 0.0
        %2100 = vmatmul.mubr.f32.gmra.mrb[0].mxu0 %v1934
        %v2101 = vpop.f32.mrb[0].mxu0
        %v2102 = vadd.f32 %v1923, %v2101
        %v2103 = vpop.f32.mrb[0].mxu0
        %2104 = vmatprep.mubr.f32.mxu0 0.0
        %2105 = vmatmul.mubr.f32.gmra.mrb[0].mxu0 %v1937
        %v2106 = vpop.f32.mrb[0].mxu0
        %v2107 = vadd.f32 %v1923, %v2106
        %v2108 = vpop.f32.mrb[0].mxu0
        %2109 = vmatprep.mubr.f32.mxu0 0.0
        %2110 = vmatmul.mubr.f32.gmra.mrb[0].mxu0 %v1940
        %v2111 = vpop.f32.mrb[0].mxu0
        %v2112 = vadd.f32 %v1923, %v2111
        %v2113 = vpop.f32.mrb[0].mxu0
        %2114 = vmatprep.mubr.f32.mxu0 0.0
        %2115 = vmatmul.mubr.f32.gmra.mrb[0].mxu0 %v1943
        %v2116 = vpop.f32.mrb[0].mxu0
        %v2117 = vadd.f32 %v1923, %v2116
        %v2118 = vpop.f32.mrb[0].mxu0
        %2119 = vmatprep.mubr.f32.mxu0 0.0
        %2120 = vmatmul.mubr.f32.gmra.mrb[0].mxu0 %v1946
        %v2121 = vpop.f32.mrb[0].mxu0
        %v2122 = vadd.f32 %v1923, %v2121
        %v2123 = vpop.f32.mrb[0].mxu0
        %2124 = vmatprep.mubr.f32.mxu0 0.0
        %2125 = vmatmul.mubr.f32.gmra.mrb[0].mxu0 %v1949
        %v2126 = vpop.f32.mrb[0].mxu0
        %v2127 = vadd.f32 %v1923, %v2126
        %v2128 = vpop.f32.mrb[0].mxu0
        %2129 = vmatprep.mubr.f32.mxu0 0.0
        %2130 = vmatmul.mubr.f32.gmra.mrb[0].mxu0 %v1952
        %v2131 = vpop.f32.mrb[0].mxu0
        %v2132 = vadd.f32 %v1923, %v2131
        %v2133 = vpop.f32.mrb[0].mxu0
        %2134 = vmatprep.mubr.f32.mxu0 0.0
        %2135 = vmatmul.mubr.f32.gmra.mrb[0].mxu0 %v1955
        %v2136 = vpop.f32.mrb[0].mxu0
        %v2137 = vadd.f32 %v1923, %v2136
        %v2138 = vpop.f32.mrb[0].mxu0
        %2139 = vmatprep.mubr.f32.mxu0 0.0
        %2140 = vmatmul.mubr.f32.gmra.mrb[0].mxu0 %v1958
        %v2141 = vpop.f32.mrb[0].mxu0
        %v2142 = vadd.f32 %v1923, %v2141
        %v2143 = vpop.f32.mrb[0].mxu0
        %2144 = vmatprep.mubr.f32.mxu0 0.0
        %2145 = vmatmul.mubr.f32.gmra.mrb[0].mxu0 %v1961
        %v2146 = vpop.f32.mrb[0].mxu0
        %v2147 = vadd.f32 %v1923, %v2146
        %v2148 = vpop.f32.mrb[0].mxu0
        %2149 = vmatprep.mubr.f32.mxu0 0.0
        %2150 = vmatmul.mubr.f32.gmra.mrb[0].mxu0 %v1964
        %v2151 = vpop.f32.mrb[0].mxu0
        %v2152 = vadd.f32 %v1923, %v2151
        %v2153 = vpop.f32.mrb[0].mxu0
        %2154 = vmatprep.mubr.f32.mxu0 0.0
        %2155 = vmatmul.mubr.f32.gmra.mrb[0].mxu0 %v1967
        %v2156 = vpop.f32.mrb[0].mxu0
        %v2157 = vadd.f32 %v1923, %v2156
        %v2158 = vpop.f32.mrb[0].mxu0
        %2159 = vmatprep.mubr.f32.mxu0 0.0
        %2160 = vmatmul.mubr.f32.gmra.mrb[0].mxu0 %v1970
        %v2161 = vpop.f32.mrb[0].mxu0
        %v2162 = vadd.f32 %v1923, %v2161
        %v2163 = vpop.f32.mrb[0].mxu0
        %2164 = vmatprep.mubr.f32.mxu0 0.0
        %2165 = vmatmul.mubr.f32.gmra.mrb[0].mxu0 %v1973
        %v2166 = vpop.f32.mrb[0].mxu0
        %v2167 = vadd.f32 %v1923, %v2166
        %v2168 = vpop.f32.mrb[0].mxu0
        %2169 = vmatprep.mubr.f32.mxu0 0.0
        %2170 = vmatmul.mubr.f32.gmra.mrb[0].mxu0 %v1976
        %v2171 = vpop.f32.mrb[0].mxu0
        %v2172 = vadd.f32 %v1923, %v2171
        %v2173 = vpop.f32.mrb[0].mxu0
        %2174 = vmatprep.mubr.f32.mxu0 0.0
        %2175 = vmatmul.mubr.f32.gmra.mrb[0].mxu0 %v1979
        %v2176 = vpop.f32.mrb[0].mxu0
        %v2177 = vadd.f32 %v1923, %v2176
        %v2178 = vpop.f32.mrb[0].mxu0
        %2179 = vmatprep.mubr.f32.mxu0 0.0
        %2180 = vmatmul.mubr.f32.gmra.mrb[0].mxu0 %v1982
        %v2181 = vpop.f32.mrb[0].mxu0
        %v2182 = vadd.f32 %v1923, %v2181
        %v2183 = vpop.f32.mrb[0].mxu0
        %2184 = vmatprep.mubr.f32.mxu0 0.0
        %2185 = vmatmul.mubr.f32.gmra.mrb[0].mxu0 %v1985
        %v2186 = vpop.f32.mrb[0].mxu0
        %v2187 = vadd.f32 %v1923, %v2186
        %v2188 = vpop.f32.mrb[0].mxu0
        %2189 = vmatprep.mubr.f32.mxu0 0.0
        %2190 = vmatmul.mubr.f32.gmra.mrb[0].mxu0 %v1988
        %v2191 = vpop.f32.mrb[0].mxu0
        %v2192 = vadd.f32 %v1923, %v2191
        %v2193 = vpop.f32.mrb[0].mxu0
        %2194 = vmatprep.mubr.f32.mxu0 0.0
        %2195 = vmatmul.mubr.f32.gmra.mrb[0].mxu0 %v1991
        %v2196 = vpop.f32.mrb[0].mxu0
        %v2197 = vadd.f32 %v1923, %v2196
        %v2198 = vpop.f32.mrb[0].mxu0
        %2199 = vmatprep.mubr.f32.mxu0 0.0
        %2200 = vmatmul.mubr.f32.gmra.mrb[0].mxu0 %v1994
        %v2201 = vpop.f32.mrb[0].mxu0
        %v2202 = vadd.f32 %v1923, %v2201
        %v2203 = vpop.f32.mrb[0].mxu0
        %2204 = vmatprep.mubr.f32.mxu0 0.0
        %2205 = vmatmul.mubr.f32.gmra.mrb[0].mxu0 %v1997
        %v2206 = vpop.f32.mrb[0].mxu0
        %v2207 = vadd.f32 %v1923, %v2206
        %v2208 = vpop.f32.mrb[0].mxu0
        %2209 = vmatprep.mubr.f32.mxu0 0.0
        %2210 = vmatmul.mubr.f32.gmra.mrb[0].mxu0 %v2000
        %v2211 = vpop.f32.mrb[0].mxu0
        %v2212 = vadd.f32 %v1923, %v2211
        %v2213 = vpop.f32.mrb[0].mxu0
        %2214 = vmatprep.mubr.f32.mxu0 0.0
        %2215 = vmatmul.mubr.f32.gmra.mrb[0].mxu0 %v2003
        %v2216 = vpop.f32.mrb[0].mxu0
        %v2217 = vadd.f32 %v1923, %v2216
        %v2218 = vpop.f32.mrb[0].mxu0
        %2219 = vmatprep.mubr.f32.mxu0 0.0
        %2220 = vmatmul.mubr.f32.gmra.mrb[0].mxu0 %v2006
        %v2221 = vpop.f32.mrb[0].mxu0
        %v2222 = vadd.f32 %v1923, %v2221
        %v2223 = vpop.f32.mrb[0].mxu0
        %2224 = vmatprep.mubr.f32.mxu0 0.0
        %2225 = vmatmul.mubr.f32.gmra.mrb[0].mxu0 %v2009
        %v2226 = vpop.f32.mrb[0].mxu0
        %v2227 = vadd.f32 %v1923, %v2226
        %v2228 = vpop.f32.mrb[0].mxu0
        %2229 = vmatprep.mubr.f32.mxu0 0.0
        %2230 = vmatmul.mubr.f32.gmra.mrb[0].mxu0 %v2012
        %v2231 = vpop.f32.mrb[0].mxu0
        %v2232 = vadd.f32 %v1923, %v2231
        %v2233 = vpop.f32.mrb[0].mxu0
        %2234 = vmatprep.mubr.f32.mxu0 0.0
        %2235 = vmatmul.mubr.f32.gmra.mrb[0].mxu0 %v2015
        %v2236 = vpop.f32.mrb[0].mxu0
        %v2237 = vadd.f32 %v1923, %v2236
        %v2238 = vpop.f32.mrb[0].mxu0
        %2239 = vmatprep.mubr.f32.mxu0 0.0
        %2240 = vmatmul.mubr.f32.gmra.mrb[0].mxu0 %v2018
        %v2241 = vpop.f32.mrb[0].mxu0
        %v2242 = vadd.f32 %v1923, %v2241
        %v2243 = vpop.f32.mrb[0].mxu0
        %2244 = vdwg.mxu0
        %v2245 = vmax.f32 %v2087, 0.0
        %v2246 = vmax.f32 %v2092, 0.0
        %v2247 = vmax.f32 %v2097, 0.0
        %v2248 = vmax.f32 %v2102, 0.0
        %v2249 = vmax.f32 %v2107, 0.0
        %v2250 = vmax.f32 %v2112, 0.0
        %v2251 = vmax.f32 %v2117, 0.0
        %v2252 = vmax.f32 %v2122, 0.0
        %v2253 = vmax.f32 %v2127, 0.0
        %v2254 = vmax.f32 %v2132, 0.0
        %v2255 = vmax.f32 %v2137, 0.0
        %v2256 = vmax.f32 %v2142, 0.0
        %v2257 = vmax.f32 %v2147, 0.0
        %v2258 = vmax.f32 %v2152, 0.0
        %v2259 = vmax.f32 %v2157, 0.0
        %v2260 = vmax.f32 %v2162, 0.0
        %v2261 = vmax.f32 %v2167, 0.0
        %v2262 = vmax.f32 %v2172, 0.0
        %v2263 = vmax.f32 %v2177, 0.0
        %v2264 = vmax.f32 %v2182, 0.0
        %v2265 = vmax.f32 %v2187, 0.0
        %v2266 = vmax.f32 %v2192, 0.0
        %v2267 = vmax.f32 %v2197, 0.0
        %v2268 = vmax.f32 %v2202, 0.0
        %v2269 = vmax.f32 %v2207, 0.0
        %v2270 = vmax.f32 %v2212, 0.0
        %v2271 = vmax.f32 %v2217, 0.0
        %v2272 = vmax.f32 %v2222, 0.0
        %v2273 = vmax.f32 %v2227, 0.0
        %v2274 = vmax.f32 %v2232, 0.0
        %v2275 = vmax.f32 %v2237, 0.0
        %v2276 = vmax.f32 %v2242, 0.0
        %v2277 = vadd.f32 %v894, %v2245
        %v2278 = vadd.f32 %v895, %v2246
        %v2279 = vadd.f32 %v896, %v2247
        %v2280 = vadd.f32 %v897, %v2248
        %v2281 = vadd.f32 %v898, %v2249
        %v2282 = vadd.f32 %v899, %v2250
        %v2283 = vadd.f32 %v900, %v2251
        %v2284 = vadd.f32 %v901, %v2252
        %v2285 = vadd.f32 %v902, %v2253
        %v2286 = vadd.f32 %v903, %v2254
        %v2287 = vadd.f32 %v904, %v2255
        %v2288 = vadd.f32 %v905, %v2256
        %v2289 = vadd.f32 %v906, %v2257
        %v2290 = vadd.f32 %v907, %v2258
        %v2291 = vadd.f32 %v908, %v2259
        %v2292 = vadd.f32 %v909, %v2260
        %v2293 = vadd.f32 %v910, %v2261
        %v2294 = vadd.f32 %v911, %v2262
        %v2295 = vadd.f32 %v912, %v2263
        %v2296 = vadd.f32 %v913, %v2264
        %v2297 = vadd.f32 %v914, %v2265
        %v2298 = vadd.f32 %v915, %v2266
        %v2299 = vadd.f32 %v916, %v2267
        %v2300 = vadd.f32 %v917, %v2268
        %v2301 = vadd.f32 %v918, %v2269
        %v2302 = vadd.f32 %v919, %v2270
        %v2303 = vadd.f32 %v920, %v2271
        %v2304 = vadd.f32 %v921, %v2272
        %v2305 = vadd.f32 %v922, %v2273
        %v2306 = vadd.f32 %v923, %v2274
        %v2307 = vadd.f32 %v924, %v2275
        %v2308 = vadd.f32 %v925, %v2276
        %s2309 = scalar_lea.vmem [#allocation2], 24
        %v2310 = vld [vmem:[%s2309 + $0x1] sm:$0xff]
        %v2311 = vld [vmem:[%s2309 + $0x9] sm:$0xff]
        %v2312 = vld [vmem:[%s2309 + $0x19] sm:$0xff]
        %v2313 = vld [vmem:[%s2309 + $0x21] sm:$0xff]
        %v2314 = vld [vmem:[%s2309 + $0x31] sm:$0xff]
        %v2315 = vld [vmem:[%s2309 + $0x39] sm:$0xff]
        %v2316 = vld [vmem:[%s2309 + $0x49] sm:$0xff]
        %v2317 = vld [vmem:[%s2309 + $0x51] sm:$0xff]
        %v2318 = vld [vmem:[%s2309 + $0x61] sm:$0xff]
        %v2319 = vld [vmem:[%s2309 + $0x69] sm:$0xff]
        %v2320 = vld [vmem:[%s2309 + $0x79] sm:$0xff]
        %v2321 = vld [vmem:[%s2309 + $0x81] sm:$0xff]
        %v2322 = vld [vmem:[%s2309 + $0x91] sm:$0xff]
        %v2323 = vld [vmem:[%s2309 + $0x99] sm:$0xff]
        %v2324 = vld [vmem:[%s2309 + $0xa9] sm:$0xff]
        %v2325 = vld [vmem:[%s2309 + $0xb1] sm:$0xff]
        %v2326 = vld [vmem:[%s2309 + $0xc1] sm:$0xff]
        %v2327 = vld [vmem:[%s2309 + $0xc9] sm:$0xff]
        %v2328 = vld [vmem:[%s2309 + $0xd9] sm:$0xff]
        %v2329 = vld [vmem:[%s2309 + $0xe1] sm:$0xff]
        %v2330 = vld [vmem:[%s2309 + $0xf1] sm:$0xff]
        %v2331 = vld [vmem:[%s2309 + $0xf9] sm:$0xff]
        %v2332 = vld [vmem:[%s2309 + $0x109] sm:$0xff]
        %v2333 = vld [vmem:[%s2309 + $0x111] sm:$0xff]
        %v2334 = vld [vmem:[%s2309 + $0x121] sm:$0xff]
        %v2335 = vld [vmem:[%s2309 + $0x129] sm:$0xff]
        %v2336 = vld [vmem:[%s2309 + $0x139] sm:$0xff]
        %v2337 = vld [vmem:[%s2309 + $0x141] sm:$0xff]
        %v2338 = vld [vmem:[%s2309 + $0x151] sm:$0xff]
        %v2339 = vld [vmem:[%s2309 + $0x159] sm:$0xff]
        %v2340 = vld [vmem:[%s2309 + $0x169] sm:$0xff]
        %v2341 = vld [vmem:[%s2309 + $0x171] sm:$0xff]
        %v2342 = vld [vmem:[%s1 + $0xa] sm:$0x1]
        %v2343 = vlaneseq
        %v2344 = vshrl.u32 %v2343, 7
        %v2345 = vsub.s32 0, %v2344
        %v2346 = vrot.slane %v2342, %v2345
        %v2347 = vmul.f32 %v2310, %v2346
        %v2348 = vmul.f32 %v2311, %v2346
        %v2349 = vmul.f32 %v2312, %v2346
        %v2350 = vmul.f32 %v2313, %v2346
        %v2351 = vmul.f32 %v2314, %v2346
        %v2352 = vmul.f32 %v2315, %v2346
        %v2353 = vmul.f32 %v2316, %v2346
        %v2354 = vmul.f32 %v2317, %v2346
        %v2355 = vmul.f32 %v2318, %v2346
        %v2356 = vmul.f32 %v2319, %v2346
        %v2357 = vmul.f32 %v2320, %v2346
        %v2358 = vmul.f32 %v2321, %v2346
        %v2359 = vmul.f32 %v2322, %v2346
        %v2360 = vmul.f32 %v2323, %v2346
        %v2361 = vmul.f32 %v2324, %v2346
        %v2362 = vmul.f32 %v2325, %v2346
        %v2363 = vmul.f32 %v2326, %v2346
        %v2364 = vmul.f32 %v2327, %v2346
        %v2365 = vmul.f32 %v2328, %v2346
        %v2366 = vmul.f32 %v2329, %v2346
        %v2367 = vmul.f32 %v2330, %v2346
        %v2368 = vmul.f32 %v2331, %v2346
        %v2369 = vmul.f32 %v2332, %v2346
        %v2370 = vmul.f32 %v2333, %v2346
        %v2371 = vmul.f32 %v2334, %v2346
        %v2372 = vmul.f32 %v2335, %v2346
        %v2373 = vmul.f32 %v2336, %v2346
        %v2374 = vmul.f32 %v2337, %v2346
        %v2375 = vmul.f32 %v2338, %v2346
        %v2376 = vmul.f32 %v2339, %v2346
        %v2377 = vmul.f32 %v2340, %v2346
        %v2378 = vmul.f32 %v2341, %v2346
        %v2379 = vadd.f32 %v2347, 0.0
        %v2380 = vadd.f32 %v2348, 0.0
        %v2381 = vadd.f32 %v2349, 0.0
        %v2382 = vadd.f32 %v2350, 0.0
        %v2383 = vadd.f32 %v2351, 0.0
        %v2384 = vadd.f32 %v2352, 0.0
        %v2385 = vadd.f32 %v2353, 0.0
        %v2386 = vadd.f32 %v2354, 0.0
        %v2387 = vadd.f32 %v2355, 0.0
        %v2388 = vadd.f32 %v2356, 0.0
        %v2389 = vadd.f32 %v2357, 0.0
        %v2390 = vadd.f32 %v2358, 0.0
        %v2391 = vadd.f32 %v2359, 0.0
        %v2392 = vadd.f32 %v2360, 0.0
        %v2393 = vadd.f32 %v2361, 0.0
        %v2394 = vadd.f32 %v2362, 0.0
        %v2395 = vadd.f32 %v2363, 0.0
        %v2396 = vadd.f32 %v2364, 0.0
        %v2397 = vadd.f32 %v2365, 0.0
        %v2398 = vadd.f32 %v2366, 0.0
        %v2399 = vadd.f32 %v2367, 0.0
        %v2400 = vadd.f32 %v2368, 0.0
        %v2401 = vadd.f32 %v2369, 0.0
        %v2402 = vadd.f32 %v2370, 0.0
        %v2403 = vadd.f32 %v2371, 0.0
        %v2404 = vadd.f32 %v2372, 0.0
        %v2405 = vadd.f32 %v2373, 0.0
        %v2406 = vadd.f32 %v2374, 0.0
        %v2407 = vadd.f32 %v2375, 0.0
        %v2408 = vadd.f32 %v2376, 0.0
        %v2409 = vadd.f32 %v2377, 0.0
        %v2410 = vadd.f32 %v2378, 0.0
        %v2411 = vld [vmem:[%s2309 + $0x3] sm:$0xff]
        %v2412 = vld [vmem:[%s2309 + $0xb] sm:$0xff]
        %v2413 = vld [vmem:[%s2309 + $0x1b] sm:$0xff]
        %v2414 = vld [vmem:[%s2309 + $0x23] sm:$0xff]
        %v2415 = vld [vmem:[%s2309 + $0x33] sm:$0xff]
        %v2416 = vld [vmem:[%s2309 + $0x3b] sm:$0xff]
        %v2417 = vld [vmem:[%s2309 + $0x4b] sm:$0xff]
        %v2418 = vld [vmem:[%s2309 + $0x53] sm:$0xff]
        %v2419 = vld [vmem:[%s2309 + $0x63] sm:$0xff]
        %v2420 = vld [vmem:[%s2309 + $0x6b] sm:$0xff]
        %v2421 = vld [vmem:[%s2309 + $0x7b] sm:$0xff]
        %v2422 = vld [vmem:[%s2309 + $0x83] sm:$0xff]
        %v2423 = vld [vmem:[%s2309 + $0x93] sm:$0xff]
        %v2424 = vld [vmem:[%s2309 + $0x9b] sm:$0xff]
        %v2425 = vld [vmem:[%s2309 + $0xab] sm:$0xff]
        %v2426 = vld [vmem:[%s2309 + $0xb3] sm:$0xff]
        %v2427 = vld [vmem:[%s2309 + $0xc3] sm:$0xff]
        %v2428 = vld [vmem:[%s2309 + $0xcb] sm:$0xff]
        %v2429 = vld [vmem:[%s2309 + $0xdb] sm:$0xff]
        %v2430 = vld [vmem:[%s2309 + $0xe3] sm:$0xff]
        %v2431 = vld [vmem:[%s2309 + $0xf3] sm:$0xff]
        %v2432 = vld [vmem:[%s2309 + $0xfb] sm:$0xff]
        %v2433 = vld [vmem:[%s2309 + $0x10b] sm:$0xff]
        %v2434 = vld [vmem:[%s2309 + $0x113] sm:$0xff]
        %v2435 = vld [vmem:[%s2309 + $0x123] sm:$0xff]
        %v2436 = vld [vmem:[%s2309 + $0x12b] sm:$0xff]
        %v2437 = vld [vmem:[%s2309 + $0x13b] sm:$0xff]
        %v2438 = vld [vmem:[%s2309 + $0x143] sm:$0xff]
        %v2439 = vld [vmem:[%s2309 + $0x153] sm:$0xff]
        %v2440 = vld [vmem:[%s2309 + $0x15b] sm:$0xff]
        %v2441 = vld [vmem:[%s2309 + $0x16b] sm:$0xff]
        %v2442 = vld [vmem:[%s2309 + $0x173] sm:$0xff]
        %v2443 = vld [vmem:[%s1 + $0xb] sm:$0x1]
        %v2444 = vlaneseq
        %v2445 = vshrl.u32 %v2444, 7
        %v2446 = vsub.s32 0, %v2445
        %v2447 = vrot.slane %v2443, %v2446
        %v2448 = vmul.f32 %v2411, %v2447
        %v2449 = vmul.f32 %v2412, %v2447
        %v2450 = vmul.f32 %v2413, %v2447
        %v2451 = vmul.f32 %v2414, %v2447
        %v2452 = vmul.f32 %v2415, %v2447
        %v2453 = vmul.f32 %v2416, %v2447
        %v2454 = vmul.f32 %v2417, %v2447
        %v2455 = vmul.f32 %v2418, %v2447
        %v2456 = vmul.f32 %v2419, %v2447
        %v2457 = vmul.f32 %v2420, %v2447
        %v2458 = vmul.f32 %v2421, %v2447
        %v2459 = vmul.f32 %v2422, %v2447
        %v2460 = vmul.f32 %v2423, %v2447
        %v2461 = vmul.f32 %v2424, %v2447
        %v2462 = vmul.f32 %v2425, %v2447
        %v2463 = vmul.f32 %v2426, %v2447
        %v2464 = vmul.f32 %v2427, %v2447
        %v2465 = vmul.f32 %v2428, %v2447
        %v2466 = vmul.f32 %v2429, %v2447
        %v2467 = vmul.f32 %v2430, %v2447
        %v2468 = vmul.f32 %v2431, %v2447
        %v2469 = vmul.f32 %v2432, %v2447
        %v2470 = vmul.f32 %v2433, %v2447
        %v2471 = vmul.f32 %v2434, %v2447
        %v2472 = vmul.f32 %v2435, %v2447
        %v2473 = vmul.f32 %v2436, %v2447
        %v2474 = vmul.f32 %v2437, %v2447
        %v2475 = vmul.f32 %v2438, %v2447
        %v2476 = vmul.f32 %v2439, %v2447
        %v2477 = vmul.f32 %v2440, %v2447
        %v2478 = vmul.f32 %v2441, %v2447
        %v2479 = vmul.f32 %v2442, %v2447
        %v2480 = vadd.f32 %v2379, %v2448
        %v2481 = vadd.f32 %v2380, %v2449
        %v2482 = vadd.f32 %v2381, %v2450
        %v2483 = vadd.f32 %v2382, %v2451
        %v2484 = vadd.f32 %v2383, %v2452
        %v2485 = vadd.f32 %v2384, %v2453
        %v2486 = vadd.f32 %v2385, %v2454
        %v2487 = vadd.f32 %v2386, %v2455
        %v2488 = vadd.f32 %v2387, %v2456
        %v2489 = vadd.f32 %v2388, %v2457
        %v2490 = vadd.f32 %v2389, %v2458
        %v2491 = vadd.f32 %v2390, %v2459
        %v2492 = vadd.f32 %v2391, %v2460
        %v2493 = vadd.f32 %v2392, %v2461
        %v2494 = vadd.f32 %v2393, %v2462
        %v2495 = vadd.f32 %v2394, %v2463
        %v2496 = vadd.f32 %v2395, %v2464
        %v2497 = vadd.f32 %v2396, %v2465
        %v2498 = vadd.f32 %v2397, %v2466
        %v2499 = vadd.f32 %v2398, %v2467
        %v2500 = vadd.f32 %v2399, %v2468
        %v2501 = vadd.f32 %v2400, %v2469
        %v2502 = vadd.f32 %v2401, %v2470
        %v2503 = vadd.f32 %v2402, %v2471
        %v2504 = vadd.f32 %v2403, %v2472
        %v2505 = vadd.f32 %v2404, %v2473
        %v2506 = vadd.f32 %v2405, %v2474
        %v2507 = vadd.f32 %v2406, %v2475
        %v2508 = vadd.f32 %v2407, %v2476
        %v2509 = vadd.f32 %v2408, %v2477
        %v2510 = vadd.f32 %v2409, %v2478
        %v2511 = vadd.f32 %v2410, %v2479
        %v2512 = vld [vmem:[%s2309 + $0x5] sm:$0xff]
        %v2513 = vld [vmem:[%s2309 + $0xd] sm:$0xff]
        %v2514 = vld [vmem:[%s2309 + $0x1d] sm:$0xff]
        %v2515 = vld [vmem:[%s2309 + $0x25] sm:$0xff]
        %v2516 = vld [vmem:[%s2309 + $0x35] sm:$0xff]
        %v2517 = vld [vmem:[%s2309 + $0x3d] sm:$0xff]
        %v2518 = vld [vmem:[%s2309 + $0x4d] sm:$0xff]
        %v2519 = vld [vmem:[%s2309 + $0x55] sm:$0xff]
        %v2520 = vld [vmem:[%s2309 + $0x65] sm:$0xff]
        %v2521 = vld [vmem:[%s2309 + $0x6d] sm:$0xff]
        %v2522 = vld [vmem:[%s2309 + $0x7d] sm:$0xff]
        %v2523 = vld [vmem:[%s2309 + $0x85] sm:$0xff]
        %v2524 = vld [vmem:[%s2309 + $0x95] sm:$0xff]
        %v2525 = vld [vmem:[%s2309 + $0x9d] sm:$0xff]
        %v2526 = vld [vmem:[%s2309 + $0xad] sm:$0xff]
        %v2527 = vld [vmem:[%s2309 + $0xb5] sm:$0xff]
        %v2528 = vld [vmem:[%s2309 + $0xc5] sm:$0xff]
        %v2529 = vld [vmem:[%s2309 + $0xcd] sm:$0xff]
        %v2530 = vld [vmem:[%s2309 + $0xdd] sm:$0xff]
        %v2531 = vld [vmem:[%s2309 + $0xe5] sm:$0xff]
        %v2532 = vld [vmem:[%s2309 + $0xf5] sm:$0xff]
        %v2533 = vld [vmem:[%s2309 + $0xfd] sm:$0xff]
        %v2534 = vld [vmem:[%s2309 + $0x10d] sm:$0xff]
        %v2535 = vld [vmem:[%s2309 + $0x115] sm:$0xff]
        %v2536 = vld [vmem:[%s2309 + $0x125] sm:$0xff]
        %v2537 = vld [vmem:[%s2309 + $0x12d] sm:$0xff]
        %v2538 = vld [vmem:[%s2309 + $0x13d] sm:$0xff]
        %v2539 = vld [vmem:[%s2309 + $0x145] sm:$0xff]
        %v2540 = vld [vmem:[%s2309 + $0x155] sm:$0xff]
        %v2541 = vld [vmem:[%s2309 + $0x15d] sm:$0xff]
        %v2542 = vld [vmem:[%s2309 + $0x16d] sm:$0xff]
        %v2543 = vld [vmem:[%s2309 + $0x175] sm:$0xff]
        %v2544 = vld [vmem:[%s1 + $0xc] sm:$0x1]
        %v2545 = vlaneseq
        %v2546 = vshrl.u32 %v2545, 7
        %v2547 = vsub.s32 0, %v2546
        %v2548 = vrot.slane %v2544, %v2547
        %v2549 = vmul.f32 %v2512, %v2548
        %v2550 = vmul.f32 %v2513, %v2548
        %v2551 = vmul.f32 %v2514, %v2548
        %v2552 = vmul.f32 %v2515, %v2548
        %v2553 = vmul.f32 %v2516, %v2548
        %v2554 = vmul.f32 %v2517, %v2548
        %v2555 = vmul.f32 %v2518, %v2548
        %v2556 = vmul.f32 %v2519, %v2548
        %v2557 = vmul.f32 %v2520, %v2548
        %v2558 = vmul.f32 %v2521, %v2548
        %v2559 = vmul.f32 %v2522, %v2548
        %v2560 = vmul.f32 %v2523, %v2548
        %v2561 = vmul.f32 %v2524, %v2548
        %v2562 = vmul.f32 %v2525, %v2548
        %v2563 = vmul.f32 %v2526, %v2548
        %v2564 = vmul.f32 %v2527, %v2548
        %v2565 = vmul.f32 %v2528, %v2548
        %v2566 = vmul.f32 %v2529, %v2548
        %v2567 = vmul.f32 %v2530, %v2548
        %v2568 = vmul.f32 %v2531, %v2548
        %v2569 = vmul.f32 %v2532, %v2548
        %v2570 = vmul.f32 %v2533, %v2548
        %v2571 = vmul.f32 %v2534, %v2548
        %v2572 = vmul.f32 %v2535, %v2548
        %v2573 = vmul.f32 %v2536, %v2548
        %v2574 = vmul.f32 %v2537, %v2548
        %v2575 = vmul.f32 %v2538, %v2548
        %v2576 = vmul.f32 %v2539, %v2548
        %v2577 = vmul.f32 %v2540, %v2548
        %v2578 = vmul.f32 %v2541, %v2548
        %v2579 = vmul.f32 %v2542, %v2548
        %v2580 = vmul.f32 %v2543, %v2548
        %v2581 = vadd.f32 %v2480, %v2549
        %v2582 = vadd.f32 %v2481, %v2550
        %v2583 = vadd.f32 %v2482, %v2551
        %v2584 = vadd.f32 %v2483, %v2552
        %v2585 = vadd.f32 %v2484, %v2553
        %v2586 = vadd.f32 %v2485, %v2554
        %v2587 = vadd.f32 %v2486, %v2555
        %v2588 = vadd.f32 %v2487, %v2556
        %v2589 = vadd.f32 %v2488, %v2557
        %v2590 = vadd.f32 %v2489, %v2558
        %v2591 = vadd.f32 %v2490, %v2559
        %v2592 = vadd.f32 %v2491, %v2560
        %v2593 = vadd.f32 %v2492, %v2561
        %v2594 = vadd.f32 %v2493, %v2562
        %v2595 = vadd.f32 %v2494, %v2563
        %v2596 = vadd.f32 %v2495, %v2564
        %v2597 = vadd.f32 %v2496, %v2565
        %v2598 = vadd.f32 %v2497, %v2566
        %v2599 = vadd.f32 %v2498, %v2567
        %v2600 = vadd.f32 %v2499, %v2568
        %v2601 = vadd.f32 %v2500, %v2569
        %v2602 = vadd.f32 %v2501, %v2570
        %v2603 = vadd.f32 %v2502, %v2571
        %v2604 = vadd.f32 %v2503, %v2572
        %v2605 = vadd.f32 %v2504, %v2573
        %v2606 = vadd.f32 %v2505, %v2574
        %v2607 = vadd.f32 %v2506, %v2575
        %v2608 = vadd.f32 %v2507, %v2576
        %v2609 = vadd.f32 %v2508, %v2577
        %v2610 = vadd.f32 %v2509, %v2578
        %v2611 = vadd.f32 %v2510, %v2579
        %v2612 = vadd.f32 %v2511, %v2580
        %v2613 = vld [vmem:[%s384 + $0x1] sm:$0xff]
        %v2614 = vld [vmem:[%s384 + $0x9] sm:$0xff]
        %v2615 = vld [vmem:[%s384 + $0x19] sm:$0xff]
        %v2616 = vld [vmem:[%s384 + $0x21] sm:$0xff]
        %v2617 = vld [vmem:[%s384 + $0x31] sm:$0xff]
        %v2618 = vld [vmem:[%s384 + $0x39] sm:$0xff]
        %v2619 = vld [vmem:[%s384 + $0x49] sm:$0xff]
        %v2620 = vld [vmem:[%s384 + $0x51] sm:$0xff]
        %v2621 = vld [vmem:[%s384 + $0x61] sm:$0xff]
        %v2622 = vld [vmem:[%s384 + $0x69] sm:$0xff]
        %v2623 = vld [vmem:[%s384 + $0x79] sm:$0xff]
        %v2624 = vld [vmem:[%s384 + $0x81] sm:$0xff]
        %v2625 = vld [vmem:[%s384 + $0x91] sm:$0xff]
        %v2626 = vld [vmem:[%s384 + $0x99] sm:$0xff]
        %v2627 = vld [vmem:[%s384 + $0xa9] sm:$0xff]
        %v2628 = vld [vmem:[%s384 + $0xb1] sm:$0xff]
        %v2629 = vld [vmem:[%s384 + $0xc1] sm:$0xff]
        %v2630 = vld [vmem:[%s384 + $0xc9] sm:$0xff]
        %v2631 = vld [vmem:[%s384 + $0xd9] sm:$0xff]
        %v2632 = vld [vmem:[%s384 + $0xe1] sm:$0xff]
        %v2633 = vld [vmem:[%s384 + $0xf1] sm:$0xff]
        %v2634 = vld [vmem:[%s384 + $0xf9] sm:$0xff]
        %v2635 = vld [vmem:[%s384 + $0x109] sm:$0xff]
        %v2636 = vld [vmem:[%s384 + $0x111] sm:$0xff]
        %v2637 = vld [vmem:[%s384 + $0x121] sm:$0xff]
        %v2638 = vld [vmem:[%s384 + $0x129] sm:$0xff]
        %v2639 = vld [vmem:[%s384 + $0x139] sm:$0xff]
        %v2640 = vld [vmem:[%s384 + $0x141] sm:$0xff]
        %v2641 = vld [vmem:[%s384 + $0x151] sm:$0xff]
        %v2642 = vld [vmem:[%s384 + $0x159] sm:$0xff]
        %v2643 = vld [vmem:[%s384 + $0x169] sm:$0xff]
        %v2644 = vld [vmem:[%s384 + $0x171] sm:$0xff]
        %v2645 = vld [vmem:[%s1 + $0xd] sm:$0x1]
        %v2646 = vlaneseq
        %v2647 = vshrl.u32 %v2646, 7
        %v2648 = vsub.s32 0, %v2647
        %v2649 = vrot.slane %v2645, %v2648
        %v2650 = vmul.f32 %v2613, %v2649
        %v2651 = vmul.f32 %v2614, %v2649
        %v2652 = vmul.f32 %v2615, %v2649
        %v2653 = vmul.f32 %v2616, %v2649
        %v2654 = vmul.f32 %v2617, %v2649
        %v2655 = vmul.f32 %v2618, %v2649
        %v2656 = vmul.f32 %v2619, %v2649
        %v2657 = vmul.f32 %v2620, %v2649
        %v2658 = vmul.f32 %v2621, %v2649
        %v2659 = vmul.f32 %v2622, %v2649
        %v2660 = vmul.f32 %v2623, %v2649
        %v2661 = vmul.f32 %v2624, %v2649
        %v2662 = vmul.f32 %v2625, %v2649
        %v2663 = vmul.f32 %v2626, %v2649
        %v2664 = vmul.f32 %v2627, %v2649
        %v2665 = vmul.f32 %v2628, %v2649
        %v2666 = vmul.f32 %v2629, %v2649
        %v2667 = vmul.f32 %v2630, %v2649
        %v2668 = vmul.f32 %v2631, %v2649
        %v2669 = vmul.f32 %v2632, %v2649
        %v2670 = vmul.f32 %v2633, %v2649
        %v2671 = vmul.f32 %v2634, %v2649
        %v2672 = vmul.f32 %v2635, %v2649
        %v2673 = vmul.f32 %v2636, %v2649
        %v2674 = vmul.f32 %v2637, %v2649
        %v2675 = vmul.f32 %v2638, %v2649
        %v2676 = vmul.f32 %v2639, %v2649
        %v2677 = vmul.f32 %v2640, %v2649
        %v2678 = vmul.f32 %v2641, %v2649
        %v2679 = vmul.f32 %v2642, %v2649
        %v2680 = vmul.f32 %v2643, %v2649
        %v2681 = vmul.f32 %v2644, %v2649
        %v2682 = vadd.f32 %v2581, %v2650
        %v2683 = vadd.f32 %v2582, %v2651
        %v2684 = vadd.f32 %v2583, %v2652
        %v2685 = vadd.f32 %v2584, %v2653
        %v2686 = vadd.f32 %v2585, %v2654
        %v2687 = vadd.f32 %v2586, %v2655
        %v2688 = vadd.f32 %v2587, %v2656
        %v2689 = vadd.f32 %v2588, %v2657
        %v2690 = vadd.f32 %v2589, %v2658
        %v2691 = vadd.f32 %v2590, %v2659
        %v2692 = vadd.f32 %v2591, %v2660
        %v2693 = vadd.f32 %v2592, %v2661
        %v2694 = vadd.f32 %v2593, %v2662
        %v2695 = vadd.f32 %v2594, %v2663
        %v2696 = vadd.f32 %v2595, %v2664
        %v2697 = vadd.f32 %v2596, %v2665
        %v2698 = vadd.f32 %v2597, %v2666
        %v2699 = vadd.f32 %v2598, %v2667
        %v2700 = vadd.f32 %v2599, %v2668
        %v2701 = vadd.f32 %v2600, %v2669
        %v2702 = vadd.f32 %v2601, %v2670
        %v2703 = vadd.f32 %v2602, %v2671
        %v2704 = vadd.f32 %v2603, %v2672
        %v2705 = vadd.f32 %v2604, %v2673
        %v2706 = vadd.f32 %v2605, %v2674
        %v2707 = vadd.f32 %v2606, %v2675
        %v2708 = vadd.f32 %v2607, %v2676
        %v2709 = vadd.f32 %v2608, %v2677
        %v2710 = vadd.f32 %v2609, %v2678
        %v2711 = vadd.f32 %v2610, %v2679
        %v2712 = vadd.f32 %v2611, %v2680
        %v2713 = vadd.f32 %v2612, %v2681
        %v2714 = vld [vmem:[%s1 + $0xe] sm:$0x1]
        %v2715 = vlaneseq
        %v2716 = vshrl.u32 %v2715, 7
        %v2717 = vsub.s32 0, %v2716
        %v2718 = vrot.slane %v2714, %v2717
        %v2719 = vmul.f32 %v1331, %v2718
        %v2720 = vmul.f32 %v1332, %v2718
        %v2721 = vmul.f32 %v1333, %v2718
        %v2722 = vmul.f32 %v1334, %v2718
        %v2723 = vmul.f32 %v1335, %v2718
        %v2724 = vmul.f32 %v1336, %v2718
        %v2725 = vmul.f32 %v1337, %v2718
        %v2726 = vmul.f32 %v1338, %v2718
        %v2727 = vmul.f32 %v1339, %v2718
        %v2728 = vmul.f32 %v1340, %v2718
        %v2729 = vmul.f32 %v1341, %v2718
        %v2730 = vmul.f32 %v1342, %v2718
        %v2731 = vmul.f32 %v1343, %v2718
        %v2732 = vmul.f32 %v1344, %v2718
        %v2733 = vmul.f32 %v1345, %v2718
        %v2734 = vmul.f32 %v1346, %v2718
        %v2735 = vmul.f32 %v1347, %v2718
        %v2736 = vmul.f32 %v1348, %v2718
        %v2737 = vmul.f32 %v1349, %v2718
        %v2738 = vmul.f32 %v1350, %v2718
        %v2739 = vmul.f32 %v1351, %v2718
        %v2740 = vmul.f32 %v1352, %v2718
        %v2741 = vmul.f32 %v1353, %v2718
        %v2742 = vmul.f32 %v1354, %v2718
        %v2743 = vmul.f32 %v1355, %v2718
        %v2744 = vmul.f32 %v1356, %v2718
        %v2745 = vmul.f32 %v1357, %v2718
        %v2746 = vmul.f32 %v1358, %v2718
        %v2747 = vmul.f32 %v1359, %v2718
        %v2748 = vmul.f32 %v1360, %v2718
        %v2749 = vmul.f32 %v1361, %v2718
        %v2750 = vmul.f32 %v1362, %v2718
        %v2751 = vadd.f32 %v2682, %v2719
        %v2752 = vadd.f32 %v2683, %v2720
        %v2753 = vadd.f32 %v2684, %v2721
        %v2754 = vadd.f32 %v2685, %v2722
        %v2755 = vadd.f32 %v2686, %v2723
        %v2756 = vadd.f32 %v2687, %v2724
        %v2757 = vadd.f32 %v2688, %v2725
        %v2758 = vadd.f32 %v2689, %v2726
        %v2759 = vadd.f32 %v2690, %v2727
        %v2760 = vadd.f32 %v2691, %v2728
        %v2761 = vadd.f32 %v2692, %v2729
        %v2762 = vadd.f32 %v2693, %v2730
        %v2763 = vadd.f32 %v2694, %v2731
        %v2764 = vadd.f32 %v2695, %v2732
        %v2765 = vadd.f32 %v2696, %v2733
        %v2766 = vadd.f32 %v2697, %v2734
        %v2767 = vadd.f32 %v2698, %v2735
        %v2768 = vadd.f32 %v2699, %v2736
        %v2769 = vadd.f32 %v2700, %v2737
        %v2770 = vadd.f32 %v2701, %v2738
        %v2771 = vadd.f32 %v2702, %v2739
        %v2772 = vadd.f32 %v2703, %v2740
        %v2773 = vadd.f32 %v2704, %v2741
        %v2774 = vadd.f32 %v2705, %v2742
        %v2775 = vadd.f32 %v2706, %v2743
        %v2776 = vadd.f32 %v2707, %v2744
        %v2777 = vadd.f32 %v2708, %v2745
        %v2778 = vadd.f32 %v2709, %v2746
        %v2779 = vadd.f32 %v2710, %v2747
        %v2780 = vadd.f32 %v2711, %v2748
        %v2781 = vadd.f32 %v2712, %v2749
        %v2782 = vadd.f32 %v2713, %v2750
        %v2783 = vld [vmem:[%s384 + $0x5] sm:$0xff]
        %v2784 = vld [vmem:[%s384 + $0xd] sm:$0xff]
        %v2785 = vld [vmem:[%s384 + $0x1d] sm:$0xff]
        %v2786 = vld [vmem:[%s384 + $0x25] sm:$0xff]
        %v2787 = vld [vmem:[%s384 + $0x35] sm:$0xff]
        %v2788 = vld [vmem:[%s384 + $0x3d] sm:$0xff]
        %v2789 = vld [vmem:[%s384 + $0x4d] sm:$0xff]
        %v2790 = vld [vmem:[%s384 + $0x55] sm:$0xff]
        %v2791 = vld [vmem:[%s384 + $0x65] sm:$0xff]
        %v2792 = vld [vmem:[%s384 + $0x6d] sm:$0xff]
        %v2793 = vld [vmem:[%s384 + $0x7d] sm:$0xff]
        %v2794 = vld [vmem:[%s384 + $0x85] sm:$0xff]
        %v2795 = vld [vmem:[%s384 + $0x95] sm:$0xff]
        %v2796 = vld [vmem:[%s384 + $0x9d] sm:$0xff]
        %v2797 = vld [vmem:[%s384 + $0xad] sm:$0xff]
        %v2798 = vld [vmem:[%s384 + $0xb5] sm:$0xff]
        %v2799 = vld [vmem:[%s384 + $0xc5] sm:$0xff]
        %v2800 = vld [vmem:[%s384 + $0xcd] sm:$0xff]
        %v2801 = vld [vmem:[%s384 + $0xdd] sm:$0xff]
        %v2802 = vld [vmem:[%s384 + $0xe5] sm:$0xff]
        %v2803 = vld [vmem:[%s384 + $0xf5] sm:$0xff]
        %v2804 = vld [vmem:[%s384 + $0xfd] sm:$0xff]
        %v2805 = vld [vmem:[%s384 + $0x10d] sm:$0xff]
        %v2806 = vld [vmem:[%s384 + $0x115] sm:$0xff]
        %v2807 = vld [vmem:[%s384 + $0x125] sm:$0xff]
        %v2808 = vld [vmem:[%s384 + $0x12d] sm:$0xff]
        %v2809 = vld [vmem:[%s384 + $0x13d] sm:$0xff]
        %v2810 = vld [vmem:[%s384 + $0x145] sm:$0xff]
        %v2811 = vld [vmem:[%s384 + $0x155] sm:$0xff]
        %v2812 = vld [vmem:[%s384 + $0x15d] sm:$0xff]
        %v2813 = vld [vmem:[%s384 + $0x16d] sm:$0xff]
        %v2814 = vld [vmem:[%s384 + $0x175] sm:$0xff]
        %v2815 = vld [vmem:[%s1 + $0xf] sm:$0x1]
        %v2816 = vlaneseq
        %v2817 = vshrl.u32 %v2816, 7
        %v2818 = vsub.s32 0, %v2817
        %v2819 = vrot.slane %v2815, %v2818
        %v2820 = vmul.f32 %v2783, %v2819
        %v2821 = vmul.f32 %v2784, %v2819
        %v2822 = vmul.f32 %v2785, %v2819
        %v2823 = vmul.f32 %v2786, %v2819
        %v2824 = vmul.f32 %v2787, %v2819
        %v2825 = vmul.f32 %v2788, %v2819
        %v2826 = vmul.f32 %v2789, %v2819
        %v2827 = vmul.f32 %v2790, %v2819
        %v2828 = vmul.f32 %v2791, %v2819
        %v2829 = vmul.f32 %v2792, %v2819
        %v2830 = vmul.f32 %v2793, %v2819
        %v2831 = vmul.f32 %v2794, %v2819
        %v2832 = vmul.f32 %v2795, %v2819
        %v2833 = vmul.f32 %v2796, %v2819
        %v2834 = vmul.f32 %v2797, %v2819
        %v2835 = vmul.f32 %v2798, %v2819
        %v2836 = vmul.f32 %v2799, %v2819
        %v2837 = vmul.f32 %v2800, %v2819
        %v2838 = vmul.f32 %v2801, %v2819
        %v2839 = vmul.f32 %v2802, %v2819
        %v2840 = vmul.f32 %v2803, %v2819
        %v2841 = vmul.f32 %v2804, %v2819
        %v2842 = vmul.f32 %v2805, %v2819
        %v2843 = vmul.f32 %v2806, %v2819
        %v2844 = vmul.f32 %v2807, %v2819
        %v2845 = vmul.f32 %v2808, %v2819
        %v2846 = vmul.f32 %v2809, %v2819
        %v2847 = vmul.f32 %v2810, %v2819
        %v2848 = vmul.f32 %v2811, %v2819
        %v2849 = vmul.f32 %v2812, %v2819
        %v2850 = vmul.f32 %v2813, %v2819
        %v2851 = vmul.f32 %v2814, %v2819
        %v2852 = vadd.f32 %v2751, %v2820
        %v2853 = vadd.f32 %v2752, %v2821
        %v2854 = vadd.f32 %v2753, %v2822
        %v2855 = vadd.f32 %v2754, %v2823
        %v2856 = vadd.f32 %v2755, %v2824
        %v2857 = vadd.f32 %v2756, %v2825
        %v2858 = vadd.f32 %v2757, %v2826
        %v2859 = vadd.f32 %v2758, %v2827
        %v2860 = vadd.f32 %v2759, %v2828
        %v2861 = vadd.f32 %v2760, %v2829
        %v2862 = vadd.f32 %v2761, %v2830
        %v2863 = vadd.f32 %v2762, %v2831
        %v2864 = vadd.f32 %v2763, %v2832
        %v2865 = vadd.f32 %v2764, %v2833
        %v2866 = vadd.f32 %v2765, %v2834
        %v2867 = vadd.f32 %v2766, %v2835
        %v2868 = vadd.f32 %v2767, %v2836
        %v2869 = vadd.f32 %v2768, %v2837
        %v2870 = vadd.f32 %v2769, %v2838
        %v2871 = vadd.f32 %v2770, %v2839
        %v2872 = vadd.f32 %v2771, %v2840
        %v2873 = vadd.f32 %v2772, %v2841
        %v2874 = vadd.f32 %v2773, %v2842
        %v2875 = vadd.f32 %v2774, %v2843
        %v2876 = vadd.f32 %v2775, %v2844
        %v2877 = vadd.f32 %v2776, %v2845
        %v2878 = vadd.f32 %v2777, %v2846
        %v2879 = vadd.f32 %v2778, %v2847
        %v2880 = vadd.f32 %v2779, %v2848
        %v2881 = vadd.f32 %v2780, %v2849
        %v2882 = vadd.f32 %v2781, %v2850
        %v2883 = vadd.f32 %v2782, %v2851
        %s2884 = scalar_lea.vmem [#allocation2], 120
        %v2885 = vld [vmem:[%s2884 + $0x1] sm:$0xff]
        %v2886 = vld [vmem:[%s2884 + $0x9] sm:$0xff]
        %v2887 = vld [vmem:[%s2884 + $0x19] sm:$0xff]
        %v2888 = vld [vmem:[%s2884 + $0x21] sm:$0xff]
        %v2889 = vld [vmem:[%s2884 + $0x31] sm:$0xff]
        %v2890 = vld [vmem:[%s2884 + $0x39] sm:$0xff]
        %v2891 = vld [vmem:[%s2884 + $0x49] sm:$0xff]
        %v2892 = vld [vmem:[%s2884 + $0x51] sm:$0xff]
        %v2893 = vld [vmem:[%s2884 + $0x61] sm:$0xff]
        %v2894 = vld [vmem:[%s2884 + $0x69] sm:$0xff]
        %v2895 = vld [vmem:[%s2884 + $0x79] sm:$0xff]
        %v2896 = vld [vmem:[%s2884 + $0x81] sm:$0xff]
        %v2897 = vld [vmem:[%s2884 + $0x91] sm:$0xff]
        %v2898 = vld [vmem:[%s2884 + $0x99] sm:$0xff]
        %v2899 = vld [vmem:[%s2884 + $0xa9] sm:$0xff]
        %v2900 = vld [vmem:[%s2884 + $0xb1] sm:$0xff]
        %v2901 = vld [vmem:[%s2884 + $0xc1] sm:$0xff]
        %v2902 = vld [vmem:[%s2884 + $0xc9] sm:$0xff]
        %v2903 = vld [vmem:[%s2884 + $0xd9] sm:$0xff]
        %v2904 = vld [vmem:[%s2884 + $0xe1] sm:$0xff]
        %v2905 = vld [vmem:[%s2884 + $0xf1] sm:$0xff]
        %v2906 = vld [vmem:[%s2884 + $0xf9] sm:$0xff]
        %v2907 = vld [vmem:[%s2884 + $0x109] sm:$0xff]
        %v2908 = vld [vmem:[%s2884 + $0x111] sm:$0xff]
        %v2909 = vld [vmem:[%s2884 + $0x121] sm:$0xff]
        %v2910 = vld [vmem:[%s2884 + $0x129] sm:$0xff]
        %v2911 = vld [vmem:[%s2884 + $0x139] sm:$0xff]
        %v2912 = vld [vmem:[%s2884 + $0x141] sm:$0xff]
        %v2913 = vld [vmem:[%s2884 + $0x151] sm:$0xff]
        %v2914 = vld [vmem:[%s2884 + $0x159] sm:$0xff]
        %v2915 = vld [vmem:[%s2884 + $0x169] sm:$0xff]
        %v2916 = vld [vmem:[%s2884 + $0x171] sm:$0xff]
        %v2917 = vld [vmem:[%s1 + $0x10] sm:$0x1]
        %v2918 = vlaneseq
        %v2919 = vshrl.u32 %v2918, 7
        %v2920 = vsub.s32 0, %v2919
        %v2921 = vrot.slane %v2917, %v2920
        %v2922 = vmul.f32 %v2885, %v2921
        %v2923 = vmul.f32 %v2886, %v2921
        %v2924 = vmul.f32 %v2887, %v2921
        %v2925 = vmul.f32 %v2888, %v2921
        %v2926 = vmul.f32 %v2889, %v2921
        %v2927 = vmul.f32 %v2890, %v2921
        %v2928 = vmul.f32 %v2891, %v2921
        %v2929 = vmul.f32 %v2892, %v2921
        %v2930 = vmul.f32 %v2893, %v2921
        %v2931 = vmul.f32 %v2894, %v2921
        %v2932 = vmul.f32 %v2895, %v2921
        %v2933 = vmul.f32 %v2896, %v2921
        %v2934 = vmul.f32 %v2897, %v2921
        %v2935 = vmul.f32 %v2898, %v2921
        %v2936 = vmul.f32 %v2899, %v2921
        %v2937 = vmul.f32 %v2900, %v2921
        %v2938 = vmul.f32 %v2901, %v2921
        %v2939 = vmul.f32 %v2902, %v2921
        %v2940 = vmul.f32 %v2903, %v2921
        %v2941 = vmul.f32 %v2904, %v2921
        %v2942 = vmul.f32 %v2905, %v2921
        %v2943 = vmul.f32 %v2906, %v2921
        %v2944 = vmul.f32 %v2907, %v2921
        %v2945 = vmul.f32 %v2908, %v2921
        %v2946 = vmul.f32 %v2909, %v2921
        %v2947 = vmul.f32 %v2910, %v2921
        %v2948 = vmul.f32 %v2911, %v2921
        %v2949 = vmul.f32 %v2912, %v2921
        %v2950 = vmul.f32 %v2913, %v2921
        %v2951 = vmul.f32 %v2914, %v2921
        %v2952 = vmul.f32 %v2915, %v2921
        %v2953 = vmul.f32 %v2916, %v2921
        %v2954 = vadd.f32 %v2852, %v2922
        %v2955 = vadd.f32 %v2853, %v2923
        %v2956 = vadd.f32 %v2854, %v2924
        %v2957 = vadd.f32 %v2855, %v2925
        %v2958 = vadd.f32 %v2856, %v2926
        %v2959 = vadd.f32 %v2857, %v2927
        %v2960 = vadd.f32 %v2858, %v2928
        %v2961 = vadd.f32 %v2859, %v2929
        %v2962 = vadd.f32 %v2860, %v2930
        %v2963 = vadd.f32 %v2861, %v2931
        %v2964 = vadd.f32 %v2862, %v2932
        %v2965 = vadd.f32 %v2863, %v2933
        %v2966 = vadd.f32 %v2864, %v2934
        %v2967 = vadd.f32 %v2865, %v2935
        %v2968 = vadd.f32 %v2866, %v2936
        %v2969 = vadd.f32 %v2867, %v2937
        %v2970 = vadd.f32 %v2868, %v2938
        %v2971 = vadd.f32 %v2869, %v2939
        %v2972 = vadd.f32 %v2870, %v2940
        %v2973 = vadd.f32 %v2871, %v2941
        %v2974 = vadd.f32 %v2872, %v2942
        %v2975 = vadd.f32 %v2873, %v2943
        %v2976 = vadd.f32 %v2874, %v2944
        %v2977 = vadd.f32 %v2875, %v2945
        %v2978 = vadd.f32 %v2876, %v2946
        %v2979 = vadd.f32 %v2877, %v2947
        %v2980 = vadd.f32 %v2878, %v2948
        %v2981 = vadd.f32 %v2879, %v2949
        %v2982 = vadd.f32 %v2880, %v2950
        %v2983 = vadd.f32 %v2881, %v2951
        %v2984 = vadd.f32 %v2882, %v2952
        %v2985 = vadd.f32 %v2883, %v2953
        %v2986 = vld [vmem:[%s2884 + $0x3] sm:$0xff]
        %v2987 = vld [vmem:[%s2884 + $0xb] sm:$0xff]
        %v2988 = vld [vmem:[%s2884 + $0x1b] sm:$0xff]
        %v2989 = vld [vmem:[%s2884 + $0x23] sm:$0xff]
        %v2990 = vld [vmem:[%s2884 + $0x33] sm:$0xff]
        %v2991 = vld [vmem:[%s2884 + $0x3b] sm:$0xff]
        %v2992 = vld [vmem:[%s2884 + $0x4b] sm:$0xff]
        %v2993 = vld [vmem:[%s2884 + $0x53] sm:$0xff]
        %v2994 = vld [vmem:[%s2884 + $0x63] sm:$0xff]
        %v2995 = vld [vmem:[%s2884 + $0x6b] sm:$0xff]
        %v2996 = vld [vmem:[%s2884 + $0x7b] sm:$0xff]
        %v2997 = vld [vmem:[%s2884 + $0x83] sm:$0xff]
        %v2998 = vld [vmem:[%s2884 + $0x93] sm:$0xff]
        %v2999 = vld [vmem:[%s2884 + $0x9b] sm:$0xff]
        %v3000 = vld [vmem:[%s2884 + $0xab] sm:$0xff]
        %v3001 = vld [vmem:[%s2884 + $0xb3] sm:$0xff]
        %v3002 = vld [vmem:[%s2884 + $0xc3] sm:$0xff]
        %v3003 = vld [vmem:[%s2884 + $0xcb] sm:$0xff]
        %v3004 = vld [vmem:[%s2884 + $0xdb] sm:$0xff]
        %v3005 = vld [vmem:[%s2884 + $0xe3] sm:$0xff]
        %v3006 = vld [vmem:[%s2884 + $0xf3] sm:$0xff]
        %v3007 = vld [vmem:[%s2884 + $0xfb] sm:$0xff]
        %v3008 = vld [vmem:[%s2884 + $0x10b] sm:$0xff]
        %v3009 = vld [vmem:[%s2884 + $0x113] sm:$0xff]
        %v3010 = vld [vmem:[%s2884 + $0x123] sm:$0xff]
        %v3011 = vld [vmem:[%s2884 + $0x12b] sm:$0xff]
        %v3012 = vld [vmem:[%s2884 + $0x13b] sm:$0xff]
        %v3013 = vld [vmem:[%s2884 + $0x143] sm:$0xff]
        %v3014 = vld [vmem:[%s2884 + $0x153] sm:$0xff]
        %v3015 = vld [vmem:[%s2884 + $0x15b] sm:$0xff]
        %v3016 = vld [vmem:[%s2884 + $0x16b] sm:$0xff]
        %v3017 = vld [vmem:[%s2884 + $0x173] sm:$0xff]
        %v3018 = vld [vmem:[%s1 + $0x11] sm:$0x1]
        %v3019 = vlaneseq
        %v3020 = vshrl.u32 %v3019, 7
        %v3021 = vsub.s32 0, %v3020
        %v3022 = vrot.slane %v3018, %v3021
        %v3023 = vmul.f32 %v2986, %v3022
        %v3024 = vmul.f32 %v2987, %v3022
        %v3025 = vmul.f32 %v2988, %v3022
        %v3026 = vmul.f32 %v2989, %v3022
        %v3027 = vmul.f32 %v2990, %v3022
        %v3028 = vmul.f32 %v2991, %v3022
        %v3029 = vmul.f32 %v2992, %v3022
        %v3030 = vmul.f32 %v2993, %v3022
        %v3031 = vmul.f32 %v2994, %v3022
        %v3032 = vmul.f32 %v2995, %v3022
        %v3033 = vmul.f32 %v2996, %v3022
        %v3034 = vmul.f32 %v2997, %v3022
        %v3035 = vmul.f32 %v2998, %v3022
        %v3036 = vmul.f32 %v2999, %v3022
        %v3037 = vmul.f32 %v3000, %v3022
        %v3038 = vmul.f32 %v3001, %v3022
        %v3039 = vmul.f32 %v3002, %v3022
        %v3040 = vmul.f32 %v3003, %v3022
        %v3041 = vmul.f32 %v3004, %v3022
        %v3042 = vmul.f32 %v3005, %v3022
        %v3043 = vmul.f32 %v3006, %v3022
        %v3044 = vmul.f32 %v3007, %v3022
        %v3045 = vmul.f32 %v3008, %v3022
        %v3046 = vmul.f32 %v3009, %v3022
        %v3047 = vmul.f32 %v3010, %v3022
        %v3048 = vmul.f32 %v3011, %v3022
        %v3049 = vmul.f32 %v3012, %v3022
        %v3050 = vmul.f32 %v3013, %v3022
        %v3051 = vmul.f32 %v3014, %v3022
        %v3052 = vmul.f32 %v3015, %v3022
        %v3053 = vmul.f32 %v3016, %v3022
        %v3054 = vmul.f32 %v3017, %v3022
        %v3055 = vadd.f32 %v2954, %v3023
        %v3056 = vadd.f32 %v2955, %v3024
        %v3057 = vadd.f32 %v2956, %v3025
        %v3058 = vadd.f32 %v2957, %v3026
        %v3059 = vadd.f32 %v2958, %v3027
        %v3060 = vadd.f32 %v2959, %v3028
        %v3061 = vadd.f32 %v2960, %v3029
        %v3062 = vadd.f32 %v2961, %v3030
        %v3063 = vadd.f32 %v2962, %v3031
        %v3064 = vadd.f32 %v2963, %v3032
        %v3065 = vadd.f32 %v2964, %v3033
        %v3066 = vadd.f32 %v2965, %v3034
        %v3067 = vadd.f32 %v2966, %v3035
        %v3068 = vadd.f32 %v2967, %v3036
        %v3069 = vadd.f32 %v2968, %v3037
        %v3070 = vadd.f32 %v2969, %v3038
        %v3071 = vadd.f32 %v2970, %v3039
        %v3072 = vadd.f32 %v2971, %v3040
        %v3073 = vadd.f32 %v2972, %v3041
        %v3074 = vadd.f32 %v2973, %v3042
        %v3075 = vadd.f32 %v2974, %v3043
        %v3076 = vadd.f32 %v2975, %v3044
        %v3077 = vadd.f32 %v2976, %v3045
        %v3078 = vadd.f32 %v2977, %v3046
        %v3079 = vadd.f32 %v2978, %v3047
        %v3080 = vadd.f32 %v2979, %v3048
        %v3081 = vadd.f32 %v2980, %v3049
        %v3082 = vadd.f32 %v2981, %v3050
        %v3083 = vadd.f32 %v2982, %v3051
        %v3084 = vadd.f32 %v2983, %v3052
        %v3085 = vadd.f32 %v2984, %v3053
        %v3086 = vadd.f32 %v2985, %v3054
        %v3087 = vld [vmem:[%s2884 + $0x5] sm:$0xff]
        %v3088 = vld [vmem:[%s2884 + $0xd] sm:$0xff]
        %v3089 = vld [vmem:[%s2884 + $0x1d] sm:$0xff]
        %v3090 = vld [vmem:[%s2884 + $0x25] sm:$0xff]
        %v3091 = vld [vmem:[%s2884 + $0x35] sm:$0xff]
        %v3092 = vld [vmem:[%s2884 + $0x3d] sm:$0xff]
        %v3093 = vld [vmem:[%s2884 + $0x4d] sm:$0xff]
        %v3094 = vld [vmem:[%s2884 + $0x55] sm:$0xff]
        %v3095 = vld [vmem:[%s2884 + $0x65] sm:$0xff]
        %v3096 = vld [vmem:[%s2884 + $0x6d] sm:$0xff]
        %v3097 = vld [vmem:[%s2884 + $0x7d] sm:$0xff]
        %v3098 = vld [vmem:[%s2884 + $0x85] sm:$0xff]
        %v3099 = vld [vmem:[%s2884 + $0x95] sm:$0xff]
        %v3100 = vld [vmem:[%s2884 + $0x9d] sm:$0xff]
        %v3101 = vld [vmem:[%s2884 + $0xad] sm:$0xff]
        %v3102 = vld [vmem:[%s2884 + $0xb5] sm:$0xff]
        %v3103 = vld [vmem:[%s2884 + $0xc5] sm:$0xff]
        %v3104 = vld [vmem:[%s2884 + $0xcd] sm:$0xff]
        %v3105 = vld [vmem:[%s2884 + $0xdd] sm:$0xff]
        %v3106 = vld [vmem:[%s2884 + $0xe5] sm:$0xff]
        %v3107 = vld [vmem:[%s2884 + $0xf5] sm:$0xff]
        %v3108 = vld [vmem:[%s2884 + $0xfd] sm:$0xff]
        %v3109 = vld [vmem:[%s2884 + $0x10d] sm:$0xff]
        %v3110 = vld [vmem:[%s2884 + $0x115] sm:$0xff]
        %v3111 = vld [vmem:[%s2884 + $0x125] sm:$0xff]
        %v3112 = vld [vmem:[%s2884 + $0x12d] sm:$0xff]
        %v3113 = vld [vmem:[%s2884 + $0x13d] sm:$0xff]
        %v3114 = vld [vmem:[%s2884 + $0x145] sm:$0xff]
        %v3115 = vld [vmem:[%s2884 + $0x155] sm:$0xff]
        %v3116 = vld [vmem:[%s2884 + $0x15d] sm:$0xff]
        %v3117 = vld [vmem:[%s2884 + $0x16d] sm:$0xff]
        %v3118 = vld [vmem:[%s2884 + $0x175] sm:$0xff]
        %v3119 = vld [vmem:[%s1 + $0x12] sm:$0x1]
        %v3120 = vlaneseq
        %v3121 = vshrl.u32 %v3120, 7
        %v3122 = vsub.s32 0, %v3121
        %v3123 = vrot.slane %v3119, %v3122
        %v3124 = vmul.f32 %v3087, %v3123
        %v3125 = vmul.f32 %v3088, %v3123
        %v3126 = vmul.f32 %v3089, %v3123
        %v3127 = vmul.f32 %v3090, %v3123
        %v3128 = vmul.f32 %v3091, %v3123
        %v3129 = vmul.f32 %v3092, %v3123
        %v3130 = vmul.f32 %v3093, %v3123
        %v3131 = vmul.f32 %v3094, %v3123
        %v3132 = vmul.f32 %v3095, %v3123
        %v3133 = vmul.f32 %v3096, %v3123
        %v3134 = vmul.f32 %v3097, %v3123
        %v3135 = vmul.f32 %v3098, %v3123
        %v3136 = vmul.f32 %v3099, %v3123
        %v3137 = vmul.f32 %v3100, %v3123
        %v3138 = vmul.f32 %v3101, %v3123
        %v3139 = vmul.f32 %v3102, %v3123
        %v3140 = vmul.f32 %v3103, %v3123
        %v3141 = vmul.f32 %v3104, %v3123
        %v3142 = vmul.f32 %v3105, %v3123
        %v3143 = vmul.f32 %v3106, %v3123
        %v3144 = vmul.f32 %v3107, %v3123
        %v3145 = vmul.f32 %v3108, %v3123
        %v3146 = vmul.f32 %v3109, %v3123
        %v3147 = vmul.f32 %v3110, %v3123
        %v3148 = vmul.f32 %v3111, %v3123
        %v3149 = vmul.f32 %v3112, %v3123
        %v3150 = vmul.f32 %v3113, %v3123
        %v3151 = vmul.f32 %v3114, %v3123
        %v3152 = vmul.f32 %v3115, %v3123
        %v3153 = vmul.f32 %v3116, %v3123
        %v3154 = vmul.f32 %v3117, %v3123
        %v3155 = vmul.f32 %v3118, %v3123
        %v3156 = vadd.f32 %v3055, %v3124
        %v3157 = vadd.f32 %v3056, %v3125
        %v3158 = vadd.f32 %v3057, %v3126
        %v3159 = vadd.f32 %v3058, %v3127
        %v3160 = vadd.f32 %v3059, %v3128
        %v3161 = vadd.f32 %v3060, %v3129
        %v3162 = vadd.f32 %v3061, %v3130
        %v3163 = vadd.f32 %v3062, %v3131
        %v3164 = vadd.f32 %v3063, %v3132
        %v3165 = vadd.f32 %v3064, %v3133
        %v3166 = vadd.f32 %v3065, %v3134
        %v3167 = vadd.f32 %v3066, %v3135
        %v3168 = vadd.f32 %v3067, %v3136
        %v3169 = vadd.f32 %v3068, %v3137
        %v3170 = vadd.f32 %v3069, %v3138
        %v3171 = vadd.f32 %v3070, %v3139
        %v3172 = vadd.f32 %v3071, %v3140
        %v3173 = vadd.f32 %v3072, %v3141
        %v3174 = vadd.f32 %v3073, %v3142
        %v3175 = vadd.f32 %v3074, %v3143
        %v3176 = vadd.f32 %v3075, %v3144
        %v3177 = vadd.f32 %v3076, %v3145
        %v3178 = vadd.f32 %v3077, %v3146
        %v3179 = vadd.f32 %v3078, %v3147
        %v3180 = vadd.f32 %v3079, %v3148
        %v3181 = vadd.f32 %v3080, %v3149
        %v3182 = vadd.f32 %v3081, %v3150
        %v3183 = vadd.f32 %v3082, %v3151
        %v3184 = vadd.f32 %v3083, %v3152
        %v3185 = vadd.f32 %v3084, %v3153
        %v3186 = vadd.f32 %v3085, %v3154
        %v3187 = vadd.f32 %v3086, %v3155
        %v3188 = vld [vmem:[%s2 + $0x2] sm:$0x1]
        %v3189 = vlaneseq
        %v3190 = vshrl.u32 %v3189, 7
        %v3191 = vsub.s32 0, %v3190
        %v3192 = vrot.slane %v3188, %v3191
        %v3193 = vadd.f32 %v3156, %v3192
        %v3194 = vadd.f32 %v3157, %v3192
        %v3195 = vadd.f32 %v3158, %v3192
        %v3196 = vadd.f32 %v3159, %v3192
        %v3197 = vadd.f32 %v3160, %v3192
        %v3198 = vadd.f32 %v3161, %v3192
        %v3199 = vadd.f32 %v3162, %v3192
        %v3200 = vadd.f32 %v3163, %v3192
        %v3201 = vadd.f32 %v3164, %v3192
        %v3202 = vadd.f32 %v3165, %v3192
        %v3203 = vadd.f32 %v3166, %v3192
        %v3204 = vadd.f32 %v3167, %v3192
        %v3205 = vadd.f32 %v3168, %v3192
        %v3206 = vadd.f32 %v3169, %v3192
        %v3207 = vadd.f32 %v3170, %v3192
        %v3208 = vadd.f32 %v3171, %v3192
        %v3209 = vadd.f32 %v3172, %v3192
        %v3210 = vadd.f32 %v3173, %v3192
        %v3211 = vadd.f32 %v3174, %v3192
        %v3212 = vadd.f32 %v3175, %v3192
        %v3213 = vadd.f32 %v3176, %v3192
        %v3214 = vadd.f32 %v3177, %v3192
        %v3215 = vadd.f32 %v3178, %v3192
        %v3216 = vadd.f32 %v3179, %v3192
        %v3217 = vadd.f32 %v3180, %v3192
        %v3218 = vadd.f32 %v3181, %v3192
        %v3219 = vadd.f32 %v3182, %v3192
        %v3220 = vadd.f32 %v3183, %v3192
        %v3221 = vadd.f32 %v3184, %v3192
        %v3222 = vadd.f32 %v3185, %v3192
        %v3223 = vadd.f32 %v3186, %v3192
        %v3224 = vadd.f32 %v3187, %v3192
        %v3225 = vmax.f32 %v3193, 0.0
        %v3226 = vmax.f32 %v3194, 0.0
        %v3227 = vmax.f32 %v3195, 0.0
        %v3228 = vmax.f32 %v3196, 0.0
        %v3229 = vmax.f32 %v3197, 0.0
        %v3230 = vmax.f32 %v3198, 0.0
        %v3231 = vmax.f32 %v3199, 0.0
        %v3232 = vmax.f32 %v3200, 0.0
        %v3233 = vmax.f32 %v3201, 0.0
        %v3234 = vmax.f32 %v3202, 0.0
        %v3235 = vmax.f32 %v3203, 0.0
        %v3236 = vmax.f32 %v3204, 0.0
        %v3237 = vmax.f32 %v3205, 0.0
        %v3238 = vmax.f32 %v3206, 0.0
        %v3239 = vmax.f32 %v3207, 0.0
        %v3240 = vmax.f32 %v3208, 0.0
        %v3241 = vmax.f32 %v3209, 0.0
        %v3242 = vmax.f32 %v3210, 0.0
        %v3243 = vmax.f32 %v3211, 0.0
        %v3244 = vmax.f32 %v3212, 0.0
        %v3245 = vmax.f32 %v3213, 0.0
        %v3246 = vmax.f32 %v3214, 0.0
        %v3247 = vmax.f32 %v3215, 0.0
        %v3248 = vmax.f32 %v3216, 0.0
        %v3249 = vmax.f32 %v3217, 0.0
        %v3250 = vmax.f32 %v3218, 0.0
        %v3251 = vmax.f32 %v3219, 0.0
        %v3252 = vmax.f32 %v3220, 0.0
        %v3253 = vmax.f32 %v3221, 0.0
        %v3254 = vmax.f32 %v3222, 0.0
        %v3255 = vmax.f32 %v3223, 0.0
        %v3256 = vmax.f32 %v3224, 0.0
        %s3257 = scalar_lea.vmem %s3, 192
        %v3258 = vld [vmem:[%s3257] sm:$0xff]
        %v3259 = vld [vmem:[%s3257 + $0x8] sm:$0xff]
        %v3260 = vld [vmem:[%s3257 + $0x10] sm:$0xff]
        %v3261 = vld [vmem:[%s3257 + $0x18] sm:$0xff]
        %v3262 = vld [vmem:[%s3257 + $0x20] sm:$0xff]
        %v3263 = vld [vmem:[%s3257 + $0x28] sm:$0xff]
        %v3264 = vld [vmem:[%s3257 + $0x30] sm:$0xff]
        %v3265 = vld [vmem:[%s3257 + $0x38] sm:$0xff]
        %v3266 = vld [vmem:[%s3257 + $0x40] sm:$0xff]
        %v3267 = vld [vmem:[%s3257 + $0x48] sm:$0xff]
        %v3268 = vld [vmem:[%s3257 + $0x50] sm:$0xff]
        %v3269 = vld [vmem:[%s3257 + $0x58] sm:$0xff]
        %v3270 = vld [vmem:[%s4 + $0x2] sm:$0x1]
        %v3271 = vlaneseq
        %v3272 = vshrl.u32 %v3271, 7
        %v3273 = vsub.s32 0, %v3272
        %v3274 = vrot.slane %v3270, %v3273
        %v3276 = vsel %vm363, %v3225, 0
        %v3279 = vsel %vm363, %v3226, 0
        %v3282 = vsel %vm363, %v3227, 0
        %v3285 = vsel %vm363, %v3228, 0
        %v3288 = vsel %vm363, %v3229, 0
        %v3291 = vsel %vm363, %v3230, 0
        %v3294 = vsel %vm363, %v3231, 0
        %v3297 = vsel %vm363, %v3232, 0
        %v3300 = vsel %vm363, %v3233, 0
        %v3303 = vsel %vm363, %v3234, 0
        %v3306 = vsel %vm363, %v3235, 0
        %v3309 = vsel %vm363, %v3236, 0
        %v3312 = vsel %vm363, %v3237, 0
        %v3315 = vsel %vm363, %v3238, 0
        %v3318 = vsel %vm363, %v3239, 0
        %v3321 = vsel %vm363, %v3240, 0
        %v3324 = vsel %vm363, %v3241, 0
        %v3327 = vsel %vm363, %v3242, 0
        %v3330 = vsel %vm363, %v3243, 0
        %v3333 = vsel %vm363, %v3244, 0
        %v3336 = vsel %vm363, %v3245, 0
        %v3339 = vsel %vm363, %v3246, 0
        %v3342 = vsel %vm363, %v3247, 0
        %v3345 = vsel %vm363, %v3248, 0
        %v3348 = vsel %vm363, %v3249, 0
        %v3351 = vsel %vm363, %v3250, 0
        %v3354 = vsel %vm363, %v3251, 0
        %v3357 = vsel %vm363, %v3252, 0
        %v3360 = vsel %vm363, %v3253, 0
        %v3363 = vsel %vm363, %v3254, 0
        %v3366 = vsel %vm363, %v3255, 0
        %v3369 = vsel %vm363, %v3256, 0
        %3371 = vmatprep.subr.mxu0 0.0
        %3372 = vmatpush1.msra.mxu0 %v3258
        %3373 = vmatprep.subr.mxu0 0.0
        %3374 = vmatpush1.msra.mxu0 %v3259
        %3375 = vmatprep.subr.mxu0 0.0
        %3376 = vmatpush1.msra.mxu0 %v3260
        %3377 = vmatprep.subr.mxu0 0.0
        %3378 = vmatpush1.msra.mxu0 %v3261
        %3379 = vmatprep.subr.mxu0 0.0
        %3380 = vmatpush1.msra.mxu0 %v3262
        %3381 = vmatprep.subr.mxu0 0.0
        %3382 = vmatpush1.msra.mxu0 %v3263
        %3383 = vmatprep.subr.mxu0 0.0
        %3384 = vmatpush1.msra.mxu0 %v3264
        %3385 = vmatprep.subr.mxu0 0.0
        %3386 = vmatpush1.msra.mxu0 %v3265
        %3387 = vmatprep.subr.mxu0 0.0
        %3388 = vmatpush1.msra.mxu0 %v3266
        %3389 = vmatprep.subr.mxu0 0.0
        %3390 = vmatpush1.msra.mxu0 %v3267
        %3391 = vmatprep.subr.mxu0 0.0
        %3392 = vmatpush1.msra.mxu0 %v3268
        %3393 = vmatprep.subr.mxu0 0.0
        %3394 = vmatpush1.msra.mxu0 %v3269
        %3395 = vmatprep.subr.mxu0 0.0
        %3396 = vmatpush1.msra.mxu0 0.0
        %3397 = vmatprep.subr.mxu0 0.0
        %3398 = vmatpush1.msra.mxu0 0.0
        %3399 = vmatprep.subr.mxu0 0.0
        %3400 = vmatpush1.msra.mxu0 0.0
        %3401 = vmatprep.subr.mxu0 0.0
        %3402 = vmatpush1.msra.mxu0 0.0
        %3403 = vmatprep.subr.mxu0 0.0
        %3404 = vmatpush1.msra.mxu0 0.0
        %3405 = vmatprep.subr.mxu0 0.0
        %3406 = vmatpush1.msra.mxu0 0.0
        %3407 = vmatprep.subr.mxu0 0.0
        %3408 = vmatpush1.msra.mxu0 0.0
        %3409 = vmatprep.subr.mxu0 0.0
        %3410 = vmatpush1.msra.mxu0 0.0
        %3411 = vmatprep.subr.mxu0 0.0
        %3412 = vmatpush1.msra.mxu0 0.0
        %3413 = vmatprep.subr.mxu0 0.0
        %3414 = vmatpush1.msra.mxu0 0.0
        %3415 = vmatprep.subr.mxu0 0.0
        %3416 = vmatpush1.msra.mxu0 0.0
        %3417 = vmatprep.subr.mxu0 0.0
        %3418 = vmatpush1.msra.mxu0 0.0
        %3419 = vmatprep.subr.mxu0 0.0
        %3420 = vmatpush1.msra.mxu0 0.0
        %3421 = vmatprep.subr.mxu0 0.0
        %3422 = vmatpush1.msra.mxu0 0.0
        %3423 = vmatprep.subr.mxu0 0.0
        %3424 = vmatpush1.msra.mxu0 0.0
        %3425 = vmatprep.subr.mxu0 0.0
        %3426 = vmatpush1.msra.mxu0 0.0
        %3427 = vmatprep.subr.mxu0 0.0
        %3428 = vmatpush1.msra.mxu0 0.0
        %3429 = vmatprep.subr.mxu0 0.0
        %3430 = vmatpush1.msra.mxu0 0.0
        %3431 = vmatprep.subr.mxu0 0.0
        %3432 = vmatpush1.msra.mxu0 0.0
        %3433 = vmatprep.subr.mxu0 0.0
        %3434 = vmatpush1.msra.mxu0 0.0
        %3435 = vmatprep.mubr.f32.mxu0 0.0
        %3436 = vmatmul.mubr.f32.gmra.mrb[0].mxu0 %v3276
        %v3437 = vpop.f32.mrb[0].mxu0
        %v3438 = vadd.f32 %v3274, %v3437
        %v3439 = vpop.f32.mrb[0].mxu0
        %3440 = vmatprep.mubr.f32.mxu0 0.0
        %3441 = vmatmul.mubr.f32.gmra.mrb[0].mxu0 %v3279
        %v3442 = vpop.f32.mrb[0].mxu0
        %v3443 = vadd.f32 %v3274, %v3442
        %v3444 = vpop.f32.mrb[0].mxu0
        %3445 = vmatprep.mubr.f32.mxu0 0.0
        %3446 = vmatmul.mubr.f32.gmra.mrb[0].mxu0 %v3282
        %v3447 = vpop.f32.mrb[0].mxu0
        %v3448 = vadd.f32 %v3274, %v3447
        %v3449 = vpop.f32.mrb[0].mxu0
        %3450 = vmatprep.mubr.f32.mxu0 0.0
        %3451 = vmatmul.mubr.f32.gmra.mrb[0].mxu0 %v3285
        %v3452 = vpop.f32.mrb[0].mxu0
        %v3453 = vadd.f32 %v3274, %v3452
        %v3454 = vpop.f32.mrb[0].mxu0
        %3455 = vmatprep.mubr.f32.mxu0 0.0
        %3456 = vmatmul.mubr.f32.gmra.mrb[0].mxu0 %v3288
        %v3457 = vpop.f32.mrb[0].mxu0
        %v3458 = vadd.f32 %v3274, %v3457
        %v3459 = vpop.f32.mrb[0].mxu0
        %3460 = vmatprep.mubr.f32.mxu0 0.0
        %3461 = vmatmul.mubr.f32.gmra.mrb[0].mxu0 %v3291
        %v3462 = vpop.f32.mrb[0].mxu0
        %v3463 = vadd.f32 %v3274, %v3462
        %v3464 = vpop.f32.mrb[0].mxu0
        %3465 = vmatprep.mubr.f32.mxu0 0.0
        %3466 = vmatmul.mubr.f32.gmra.mrb[0].mxu0 %v3294
        %v3467 = vpop.f32.mrb[0].mxu0
        %v3468 = vadd.f32 %v3274, %v3467
        %v3469 = vpop.f32.mrb[0].mxu0
        %3470 = vmatprep.mubr.f32.mxu0 0.0
        %3471 = vmatmul.mubr.f32.gmra.mrb[0].mxu0 %v3297
        %v3472 = vpop.f32.mrb[0].mxu0
        %v3473 = vadd.f32 %v3274, %v3472
        %v3474 = vpop.f32.mrb[0].mxu0
        %3475 = vmatprep.mubr.f32.mxu0 0.0
        %3476 = vmatmul.mubr.f32.gmra.mrb[0].mxu0 %v3300
        %v3477 = vpop.f32.mrb[0].mxu0
        %v3478 = vadd.f32 %v3274, %v3477
        %v3479 = vpop.f32.mrb[0].mxu0
        %3480 = vmatprep.mubr.f32.mxu0 0.0
        %3481 = vmatmul.mubr.f32.gmra.mrb[0].mxu0 %v3303
        %v3482 = vpop.f32.mrb[0].mxu0
        %v3483 = vadd.f32 %v3274, %v3482
        %v3484 = vpop.f32.mrb[0].mxu0
        %3485 = vmatprep.mubr.f32.mxu0 0.0
        %3486 = vmatmul.mubr.f32.gmra.mrb[0].mxu0 %v3306
        %v3487 = vpop.f32.mrb[0].mxu0
        %v3488 = vadd.f32 %v3274, %v3487
        %v3489 = vpop.f32.mrb[0].mxu0
        %3490 = vmatprep.mubr.f32.mxu0 0.0
        %3491 = vmatmul.mubr.f32.gmra.mrb[0].mxu0 %v3309
        %v3492 = vpop.f32.mrb[0].mxu0
        %v3493 = vadd.f32 %v3274, %v3492
        %v3494 = vpop.f32.mrb[0].mxu0
        %3495 = vmatprep.mubr.f32.mxu0 0.0
        %3496 = vmatmul.mubr.f32.gmra.mrb[0].mxu0 %v3312
        %v3497 = vpop.f32.mrb[0].mxu0
        %v3498 = vadd.f32 %v3274, %v3497
        %v3499 = vpop.f32.mrb[0].mxu0
        %3500 = vmatprep.mubr.f32.mxu0 0.0
        %3501 = vmatmul.mubr.f32.gmra.mrb[0].mxu0 %v3315
        %v3502 = vpop.f32.mrb[0].mxu0
        %v3503 = vadd.f32 %v3274, %v3502
        %v3504 = vpop.f32.mrb[0].mxu0
        %3505 = vmatprep.mubr.f32.mxu0 0.0
        %3506 = vmatmul.mubr.f32.gmra.mrb[0].mxu0 %v3318
        %v3507 = vpop.f32.mrb[0].mxu0
        %v3508 = vadd.f32 %v3274, %v3507
        %v3509 = vpop.f32.mrb[0].mxu0
        %3510 = vmatprep.mubr.f32.mxu0 0.0
        %3511 = vmatmul.mubr.f32.gmra.mrb[0].mxu0 %v3321
        %v3512 = vpop.f32.mrb[0].mxu0
        %v3513 = vadd.f32 %v3274, %v3512
        %v3514 = vpop.f32.mrb[0].mxu0
        %3515 = vmatprep.mubr.f32.mxu0 0.0
        %3516 = vmatmul.mubr.f32.gmra.mrb[0].mxu0 %v3324
        %v3517 = vpop.f32.mrb[0].mxu0
        %v3518 = vadd.f32 %v3274, %v3517
        %v3519 = vpop.f32.mrb[0].mxu0
        %3520 = vmatprep.mubr.f32.mxu0 0.0
        %3521 = vmatmul.mubr.f32.gmra.mrb[0].mxu0 %v3327
        %v3522 = vpop.f32.mrb[0].mxu0
        %v3523 = vadd.f32 %v3274, %v3522
        %v3524 = vpop.f32.mrb[0].mxu0
        %3525 = vmatprep.mubr.f32.mxu0 0.0
        %3526 = vmatmul.mubr.f32.gmra.mrb[0].mxu0 %v3330
        %v3527 = vpop.f32.mrb[0].mxu0
        %v3528 = vadd.f32 %v3274, %v3527
        %v3529 = vpop.f32.mrb[0].mxu0
        %3530 = vmatprep.mubr.f32.mxu0 0.0
        %3531 = vmatmul.mubr.f32.gmra.mrb[0].mxu0 %v3333
        %v3532 = vpop.f32.mrb[0].mxu0
        %v3533 = vadd.f32 %v3274, %v3532
        %v3534 = vpop.f32.mrb[0].mxu0
        %3535 = vmatprep.mubr.f32.mxu0 0.0
        %3536 = vmatmul.mubr.f32.gmra.mrb[0].mxu0 %v3336
        %v3537 = vpop.f32.mrb[0].mxu0
        %v3538 = vadd.f32 %v3274, %v3537
        %v3539 = vpop.f32.mrb[0].mxu0
        %3540 = vmatprep.mubr.f32.mxu0 0.0
        %3541 = vmatmul.mubr.f32.gmra.mrb[0].mxu0 %v3339
        %v3542 = vpop.f32.mrb[0].mxu0
        %v3543 = vadd.f32 %v3274, %v3542
        %v3544 = vpop.f32.mrb[0].mxu0
        %3545 = vmatprep.mubr.f32.mxu0 0.0
        %3546 = vmatmul.mubr.f32.gmra.mrb[0].mxu0 %v3342
        %v3547 = vpop.f32.mrb[0].mxu0
        %v3548 = vadd.f32 %v3274, %v3547
        %v3549 = vpop.f32.mrb[0].mxu0
        %3550 = vmatprep.mubr.f32.mxu0 0.0
        %3551 = vmatmul.mubr.f32.gmra.mrb[0].mxu0 %v3345
        %v3552 = vpop.f32.mrb[0].mxu0
        %v3553 = vadd.f32 %v3274, %v3552
        %v3554 = vpop.f32.mrb[0].mxu0
        %3555 = vmatprep.mubr.f32.mxu0 0.0
        %3556 = vmatmul.mubr.f32.gmra.mrb[0].mxu0 %v3348
        %v3557 = vpop.f32.mrb[0].mxu0
        %v3558 = vadd.f32 %v3274, %v3557
        %v3559 = vpop.f32.mrb[0].mxu0
        %3560 = vmatprep.mubr.f32.mxu0 0.0
        %3561 = vmatmul.mubr.f32.gmra.mrb[0].mxu0 %v3351
        %v3562 = vpop.f32.mrb[0].mxu0
        %v3563 = vadd.f32 %v3274, %v3562
        %v3564 = vpop.f32.mrb[0].mxu0
        %3565 = vmatprep.mubr.f32.mxu0 0.0
        %3566 = vmatmul.mubr.f32.gmra.mrb[0].mxu0 %v3354
        %v3567 = vpop.f32.mrb[0].mxu0
        %v3568 = vadd.f32 %v3274, %v3567
        %v3569 = vpop.f32.mrb[0].mxu0
        %3570 = vmatprep.mubr.f32.mxu0 0.0
        %3571 = vmatmul.mubr.f32.gmra.mrb[0].mxu0 %v3357
        %v3572 = vpop.f32.mrb[0].mxu0
        %v3573 = vadd.f32 %v3274, %v3572
        %v3574 = vpop.f32.mrb[0].mxu0
        %3575 = vmatprep.mubr.f32.mxu0 0.0
        %3576 = vmatmul.mubr.f32.gmra.mrb[0].mxu0 %v3360
        %v3577 = vpop.f32.mrb[0].mxu0
        %v3578 = vadd.f32 %v3274, %v3577
        %v3579 = vpop.f32.mrb[0].mxu0
        %3580 = vmatprep.mubr.f32.mxu0 0.0
        %3581 = vmatmul.mubr.f32.gmra.mrb[0].mxu0 %v3363
        %v3582 = vpop.f32.mrb[0].mxu0
        %v3583 = vadd.f32 %v3274, %v3582
        %v3584 = vpop.f32.mrb[0].mxu0
        %3585 = vmatprep.mubr.f32.mxu0 0.0
        %3586 = vmatmul.mubr.f32.gmra.mrb[0].mxu0 %v3366
        %v3587 = vpop.f32.mrb[0].mxu0
        %v3588 = vadd.f32 %v3274, %v3587
        %v3589 = vpop.f32.mrb[0].mxu0
        %3590 = vmatprep.mubr.f32.mxu0 0.0
        %3591 = vmatmul.mubr.f32.gmra.mrb[0].mxu0 %v3369
        %v3592 = vpop.f32.mrb[0].mxu0
        %v3593 = vadd.f32 %v3274, %v3592
        %v3594 = vpop.f32.mrb[0].mxu0
        %3595 = vdwg.mxu0
        %v3596 = vmax.f32 %v3438, 0.0
        %v3597 = vmax.f32 %v3443, 0.0
        %v3598 = vmax.f32 %v3448, 0.0
        %v3599 = vmax.f32 %v3453, 0.0
        %v3600 = vmax.f32 %v3458, 0.0
        %v3601 = vmax.f32 %v3463, 0.0
        %v3602 = vmax.f32 %v3468, 0.0
        %v3603 = vmax.f32 %v3473, 0.0
        %v3604 = vmax.f32 %v3478, 0.0
        %v3605 = vmax.f32 %v3483, 0.0
        %v3606 = vmax.f32 %v3488, 0.0
        %v3607 = vmax.f32 %v3493, 0.0
        %v3608 = vmax.f32 %v3498, 0.0
        %v3609 = vmax.f32 %v3503, 0.0
        %v3610 = vmax.f32 %v3508, 0.0
        %v3611 = vmax.f32 %v3513, 0.0
        %v3612 = vmax.f32 %v3518, 0.0
        %v3613 = vmax.f32 %v3523, 0.0
        %v3614 = vmax.f32 %v3528, 0.0
        %v3615 = vmax.f32 %v3533, 0.0
        %v3616 = vmax.f32 %v3538, 0.0
        %v3617 = vmax.f32 %v3543, 0.0
        %v3618 = vmax.f32 %v3548, 0.0
        %v3619 = vmax.f32 %v3553, 0.0
        %v3620 = vmax.f32 %v3558, 0.0
        %v3621 = vmax.f32 %v3563, 0.0
        %v3622 = vmax.f32 %v3568, 0.0
        %v3623 = vmax.f32 %v3573, 0.0
        %v3624 = vmax.f32 %v3578, 0.0
        %v3625 = vmax.f32 %v3583, 0.0
        %v3626 = vmax.f32 %v3588, 0.0
        %v3627 = vmax.f32 %v3593, 0.0
        %v3628 = vadd.f32 %v2277, %v3596
        %v3629 = vadd.f32 %v2278, %v3597
        %v3630 = vadd.f32 %v2279, %v3598
        %v3631 = vadd.f32 %v2280, %v3599
        %v3632 = vadd.f32 %v2281, %v3600
        %v3633 = vadd.f32 %v2282, %v3601
        %v3634 = vadd.f32 %v2283, %v3602
        %v3635 = vadd.f32 %v2284, %v3603
        %v3636 = vadd.f32 %v2285, %v3604
        %v3637 = vadd.f32 %v2286, %v3605
        %v3638 = vadd.f32 %v2287, %v3606
        %v3639 = vadd.f32 %v2288, %v3607
        %v3640 = vadd.f32 %v2289, %v3608
        %v3641 = vadd.f32 %v2290, %v3609
        %v3642 = vadd.f32 %v2291, %v3610
        %v3643 = vadd.f32 %v2292, %v3611
        %v3644 = vadd.f32 %v2293, %v3612
        %v3645 = vadd.f32 %v2294, %v3613
        %v3646 = vadd.f32 %v2295, %v3614
        %v3647 = vadd.f32 %v2296, %v3615
        %v3648 = vadd.f32 %v2297, %v3616
        %v3649 = vadd.f32 %v2298, %v3617
        %v3650 = vadd.f32 %v2299, %v3618
        %v3651 = vadd.f32 %v2300, %v3619
        %v3652 = vadd.f32 %v2301, %v3620
        %v3653 = vadd.f32 %v2302, %v3621
        %v3654 = vadd.f32 %v2303, %v3622
        %v3655 = vadd.f32 %v2304, %v3623
        %v3656 = vadd.f32 %v2305, %v3624
        %v3657 = vadd.f32 %v2306, %v3625
        %v3658 = vadd.f32 %v2307, %v3626
        %v3659 = vadd.f32 %v2308, %v3627
        %v3660 = vld [vmem:[#allocation2] sm:$0xff]
        %v3661 = vld [vmem:[#allocation2 + $0x8] sm:$0xff]
        %v3662 = vld [vmem:[#allocation2 + $0x18] sm:$0xff]
        %v3663 = vld [vmem:[#allocation2 + $0x20] sm:$0xff]
        %v3664 = vld [vmem:[#allocation2 + $0x30] sm:$0xff]
        %v3665 = vld [vmem:[#allocation2 + $0x38] sm:$0xff]
        %v3666 = vld [vmem:[#allocation2 + $0x48] sm:$0xff]
        %v3667 = vld [vmem:[#allocation2 + $0x50] sm:$0xff]
        %v3668 = vld [vmem:[#allocation2 + $0x60] sm:$0xff]
        %v3669 = vld [vmem:[#allocation2 + $0x68] sm:$0xff]
        %v3670 = vld [vmem:[#allocation2 + $0x78] sm:$0xff]
        %v3671 = vld [vmem:[#allocation2 + $0x80] sm:$0xff]
        %v3672 = vld [vmem:[#allocation2 + $0x90] sm:$0xff]
        %v3673 = vld [vmem:[#allocation2 + $0x98] sm:$0xff]
        %v3674 = vld [vmem:[#allocation2 + $0xa8] sm:$0xff]
        %v3675 = vld [vmem:[#allocation2 + $0xb0] sm:$0xff]
        %v3676 = vld [vmem:[#allocation2 + $0xc0] sm:$0xff]
        %v3677 = vld [vmem:[#allocation2 + $0xc8] sm:$0xff]
        %v3678 = vld [vmem:[#allocation2 + $0xd8] sm:$0xff]
        %v3679 = vld [vmem:[#allocation2 + $0xe0] sm:$0xff]
        %v3680 = vld [vmem:[#allocation2 + $0xf0] sm:$0xff]
        %v3681 = vld [vmem:[#allocation2 + $0xf8] sm:$0xff]
        %v3682 = vld [vmem:[#allocation2 + $0x108] sm:$0xff]
        %v3683 = vld [vmem:[#allocation2 + $0x110] sm:$0xff]
        %v3684 = vld [vmem:[#allocation2 + $0x120] sm:$0xff]
        %v3685 = vld [vmem:[#allocation2 + $0x128] sm:$0xff]
        %v3686 = vld [vmem:[#allocation2 + $0x138] sm:$0xff]
        %v3687 = vld [vmem:[#allocation2 + $0x140] sm:$0xff]
        %v3688 = vld [vmem:[#allocation2 + $0x150] sm:$0xff]
        %v3689 = vld [vmem:[#allocation2 + $0x158] sm:$0xff]
        %v3690 = vld [vmem:[#allocation2 + $0x168] sm:$0xff]
        %v3691 = vld [vmem:[#allocation2 + $0x170] sm:$0xff]
        %v3692 = vld [vmem:[%s1 + $0x13] sm:$0x1]
        %v3693 = vlaneseq
        %v3694 = vshrl.u32 %v3693, 7
        %v3695 = vsub.s32 0, %v3694
        %v3696 = vrot.slane %v3692, %v3695
        %v3697 = vmul.f32 %v3660, %v3696
        %v3698 = vmul.f32 %v3661, %v3696
        %v3699 = vmul.f32 %v3662, %v3696
        %v3700 = vmul.f32 %v3663, %v3696
        %v3701 = vmul.f32 %v3664, %v3696
        %v3702 = vmul.f32 %v3665, %v3696
        %v3703 = vmul.f32 %v3666, %v3696
        %v3704 = vmul.f32 %v3667, %v3696
        %v3705 = vmul.f32 %v3668, %v3696
        %v3706 = vmul.f32 %v3669, %v3696
        %v3707 = vmul.f32 %v3670, %v3696
        %v3708 = vmul.f32 %v3671, %v3696
        %v3709 = vmul.f32 %v3672, %v3696
        %v3710 = vmul.f32 %v3673, %v3696
        %v3711 = vmul.f32 %v3674, %v3696
        %v3712 = vmul.f32 %v3675, %v3696
        %v3713 = vmul.f32 %v3676, %v3696
        %v3714 = vmul.f32 %v3677, %v3696
        %v3715 = vmul.f32 %v3678, %v3696
        %v3716 = vmul.f32 %v3679, %v3696
        %v3717 = vmul.f32 %v3680, %v3696
        %v3718 = vmul.f32 %v3681, %v3696
        %v3719 = vmul.f32 %v3682, %v3696
        %v3720 = vmul.f32 %v3683, %v3696
        %v3721 = vmul.f32 %v3684, %v3696
        %v3722 = vmul.f32 %v3685, %v3696
        %v3723 = vmul.f32 %v3686, %v3696
        %v3724 = vmul.f32 %v3687, %v3696
        %v3725 = vmul.f32 %v3688, %v3696
        %v3726 = vmul.f32 %v3689, %v3696
        %v3727 = vmul.f32 %v3690, %v3696
        %v3728 = vmul.f32 %v3691, %v3696
        %v3729 = vadd.f32 %v3697, 0.0
        %v3730 = vadd.f32 %v3698, 0.0
        %v3731 = vadd.f32 %v3699, 0.0
        %v3732 = vadd.f32 %v3700, 0.0
        %v3733 = vadd.f32 %v3701, 0.0
        %v3734 = vadd.f32 %v3702, 0.0
        %v3735 = vadd.f32 %v3703, 0.0
        %v3736 = vadd.f32 %v3704, 0.0
        %v3737 = vadd.f32 %v3705, 0.0
        %v3738 = vadd.f32 %v3706, 0.0
        %v3739 = vadd.f32 %v3707, 0.0
        %v3740 = vadd.f32 %v3708, 0.0
        %v3741 = vadd.f32 %v3709, 0.0
        %v3742 = vadd.f32 %v3710, 0.0
        %v3743 = vadd.f32 %v3711, 0.0
        %v3744 = vadd.f32 %v3712, 0.0
        %v3745 = vadd.f32 %v3713, 0.0
        %v3746 = vadd.f32 %v3714, 0.0
        %v3747 = vadd.f32 %v3715, 0.0
        %v3748 = vadd.f32 %v3716, 0.0
        %v3749 = vadd.f32 %v3717, 0.0
        %v3750 = vadd.f32 %v3718, 0.0
        %v3751 = vadd.f32 %v3719, 0.0
        %v3752 = vadd.f32 %v3720, 0.0
        %v3753 = vadd.f32 %v3721, 0.0
        %v3754 = vadd.f32 %v3722, 0.0
        %v3755 = vadd.f32 %v3723, 0.0
        %v3756 = vadd.f32 %v3724, 0.0
        %v3757 = vadd.f32 %v3725, 0.0
        %v3758 = vadd.f32 %v3726, 0.0
        %v3759 = vadd.f32 %v3727, 0.0
        %v3760 = vadd.f32 %v3728, 0.0
        %v3761 = vld [vmem:[#allocation2 + $0x3] sm:$0xff]
        %v3762 = vld [vmem:[#allocation2 + $0xb] sm:$0xff]
        %v3763 = vld [vmem:[#allocation2 + $0x1b] sm:$0xff]
        %v3764 = vld [vmem:[#allocation2 + $0x23] sm:$0xff]
        %v3765 = vld [vmem:[#allocation2 + $0x33] sm:$0xff]
        %v3766 = vld [vmem:[#allocation2 + $0x3b] sm:$0xff]
        %v3767 = vld [vmem:[#allocation2 + $0x4b] sm:$0xff]
        %v3768 = vld [vmem:[#allocation2 + $0x53] sm:$0xff]
        %v3769 = vld [vmem:[#allocation2 + $0x63] sm:$0xff]
        %v3770 = vld [vmem:[#allocation2 + $0x6b] sm:$0xff]
        %v3771 = vld [vmem:[#allocation2 + $0x7b] sm:$0xff]
        %v3772 = vld [vmem:[#allocation2 + $0x83] sm:$0xff]
        %v3773 = vld [vmem:[#allocation2 + $0x93] sm:$0xff]
        %v3774 = vld [vmem:[#allocation2 + $0x9b] sm:$0xff]
        %v3775 = vld [vmem:[#allocation2 + $0xab] sm:$0xff]
        %v3776 = vld [vmem:[#allocation2 + $0xb3] sm:$0xff]
        %v3777 = vld [vmem:[#allocation2 + $0xc3] sm:$0xff]
        %v3778 = vld [vmem:[#allocation2 + $0xcb] sm:$0xff]
        %v3779 = vld [vmem:[#allocation2 + $0xdb] sm:$0xff]
        %v3780 = vld [vmem:[#allocation2 + $0xe3] sm:$0xff]
        %v3781 = vld [vmem:[#allocation2 + $0xf3] sm:$0xff]
        %v3782 = vld [vmem:[#allocation2 + $0xfb] sm:$0xff]
        %v3783 = vld [vmem:[#allocation2 + $0x10b] sm:$0xff]
        %v3784 = vld [vmem:[#allocation2 + $0x113] sm:$0xff]
        %v3785 = vld [vmem:[#allocation2 + $0x123] sm:$0xff]
        %v3786 = vld [vmem:[#allocation2 + $0x12b] sm:$0xff]
        %v3787 = vld [vmem:[#allocation2 + $0x13b] sm:$0xff]
        %v3788 = vld [vmem:[#allocation2 + $0x143] sm:$0xff]
        %v3789 = vld [vmem:[#allocation2 + $0x153] sm:$0xff]
        %v3790 = vld [vmem:[#allocation2 + $0x15b] sm:$0xff]
        %v3791 = vld [vmem:[#allocation2 + $0x16b] sm:$0xff]
        %v3792 = vld [vmem:[#allocation2 + $0x173] sm:$0xff]
        %v3793 = vld [vmem:[%s1 + $0x14] sm:$0x1]
        %v3794 = vlaneseq
        %v3795 = vshrl.u32 %v3794, 7
        %v3796 = vsub.s32 0, %v3795
        %v3797 = vrot.slane %v3793, %v3796
        %v3798 = vmul.f32 %v3761, %v3797
        %v3799 = vmul.f32 %v3762, %v3797
        %v3800 = vmul.f32 %v3763, %v3797
        %v3801 = vmul.f32 %v3764, %v3797
        %v3802 = vmul.f32 %v3765, %v3797
        %v3803 = vmul.f32 %v3766, %v3797
        %v3804 = vmul.f32 %v3767, %v3797
        %v3805 = vmul.f32 %v3768, %v3797
        %v3806 = vmul.f32 %v3769, %v3797
        %v3807 = vmul.f32 %v3770, %v3797
        %v3808 = vmul.f32 %v3771, %v3797
        %v3809 = vmul.f32 %v3772, %v3797
        %v3810 = vmul.f32 %v3773, %v3797
        %v3811 = vmul.f32 %v3774, %v3797
        %v3812 = vmul.f32 %v3775, %v3797
        %v3813 = vmul.f32 %v3776, %v3797
        %v3814 = vmul.f32 %v3777, %v3797
        %v3815 = vmul.f32 %v3778, %v3797
        %v3816 = vmul.f32 %v3779, %v3797
        %v3817 = vmul.f32 %v3780, %v3797
        %v3818 = vmul.f32 %v3781, %v3797
        %v3819 = vmul.f32 %v3782, %v3797
        %v3820 = vmul.f32 %v3783, %v3797
        %v3821 = vmul.f32 %v3784, %v3797
        %v3822 = vmul.f32 %v3785, %v3797
        %v3823 = vmul.f32 %v3786, %v3797
        %v3824 = vmul.f32 %v3787, %v3797
        %v3825 = vmul.f32 %v3788, %v3797
        %v3826 = vmul.f32 %v3789, %v3797
        %v3827 = vmul.f32 %v3790, %v3797
        %v3828 = vmul.f32 %v3791, %v3797
        %v3829 = vmul.f32 %v3792, %v3797
        %v3830 = vadd.f32 %v3729, %v3798
        %v3831 = vadd.f32 %v3730, %v3799
        %v3832 = vadd.f32 %v3731, %v3800
        %v3833 = vadd.f32 %v3732, %v3801
        %v3834 = vadd.f32 %v3733, %v3802
        %v3835 = vadd.f32 %v3734, %v3803
        %v3836 = vadd.f32 %v3735, %v3804
        %v3837 = vadd.f32 %v3736, %v3805
        %v3838 = vadd.f32 %v3737, %v3806
        %v3839 = vadd.f32 %v3738, %v3807
        %v3840 = vadd.f32 %v3739, %v3808
        %v3841 = vadd.f32 %v3740, %v3809
        %v3842 = vadd.f32 %v3741, %v3810
        %v3843 = vadd.f32 %v3742, %v3811
        %v3844 = vadd.f32 %v3743, %v3812
        %v3845 = vadd.f32 %v3744, %v3813
        %v3846 = vadd.f32 %v3745, %v3814
        %v3847 = vadd.f32 %v3746, %v3815
        %v3848 = vadd.f32 %v3747, %v3816
        %v3849 = vadd.f32 %v3748, %v3817
        %v3850 = vadd.f32 %v3749, %v3818
        %v3851 = vadd.f32 %v3750, %v3819
        %v3852 = vadd.f32 %v3751, %v3820
        %v3853 = vadd.f32 %v3752, %v3821
        %v3854 = vadd.f32 %v3753, %v3822
        %v3855 = vadd.f32 %v3754, %v3823
        %v3856 = vadd.f32 %v3755, %v3824
        %v3857 = vadd.f32 %v3756, %v3825
        %v3858 = vadd.f32 %v3757, %v3826
        %v3859 = vadd.f32 %v3758, %v3827
        %v3860 = vadd.f32 %v3759, %v3828
        %v3861 = vadd.f32 %v3760, %v3829
        %v3862 = vld [vmem:[#allocation2 + $0x6] sm:$0xff]
        %v3863 = vld [vmem:[#allocation2 + $0xe] sm:$0xff]
        %v3864 = vld [vmem:[#allocation2 + $0x1e] sm:$0xff]
        %v3865 = vld [vmem:[#allocation2 + $0x26] sm:$0xff]
        %v3866 = vld [vmem:[#allocation2 + $0x36] sm:$0xff]
        %v3867 = vld [vmem:[#allocation2 + $0x3e] sm:$0xff]
        %v3868 = vld [vmem:[#allocation2 + $0x4e] sm:$0xff]
        %v3869 = vld [vmem:[#allocation2 + $0x56] sm:$0xff]
        %v3870 = vld [vmem:[#allocation2 + $0x66] sm:$0xff]
        %v3871 = vld [vmem:[#allocation2 + $0x6e] sm:$0xff]
        %v3872 = vld [vmem:[#allocation2 + $0x7e] sm:$0xff]
        %v3873 = vld [vmem:[#allocation2 + $0x86] sm:$0xff]
        %v3874 = vld [vmem:[#allocation2 + $0x96] sm:$0xff]
        %v3875 = vld [vmem:[#allocation2 + $0x9e] sm:$0xff]
        %v3876 = vld [vmem:[#allocation2 + $0xae] sm:$0xff]
        %v3877 = vld [vmem:[#allocation2 + $0xb6] sm:$0xff]
        %v3878 = vld [vmem:[#allocation2 + $0xc6] sm:$0xff]
        %v3879 = vld [vmem:[#allocation2 + $0xce] sm:$0xff]
        %v3880 = vld [vmem:[#allocation2 + $0xde] sm:$0xff]
        %v3881 = vld [vmem:[#allocation2 + $0xe6] sm:$0xff]
        %v3882 = vld [vmem:[#allocation2 + $0xf6] sm:$0xff]
        %v3883 = vld [vmem:[#allocation2 + $0xfe] sm:$0xff]
        %v3884 = vld [vmem:[#allocation2 + $0x10e] sm:$0xff]
        %v3885 = vld [vmem:[#allocation2 + $0x116] sm:$0xff]
        %v3886 = vld [vmem:[#allocation2 + $0x126] sm:$0xff]
        %v3887 = vld [vmem:[#allocation2 + $0x12e] sm:$0xff]
        %v3888 = vld [vmem:[#allocation2 + $0x13e] sm:$0xff]
        %v3889 = vld [vmem:[#allocation2 + $0x146] sm:$0xff]
        %v3890 = vld [vmem:[#allocation2 + $0x156] sm:$0xff]
        %v3891 = vld [vmem:[#allocation2 + $0x15e] sm:$0xff]
        %v3892 = vld [vmem:[#allocation2 + $0x16e] sm:$0xff]
        %v3893 = vld [vmem:[#allocation2 + $0x176] sm:$0xff]
        %v3894 = vld [vmem:[%s1 + $0x15] sm:$0x1]
        %v3895 = vlaneseq
        %v3896 = vshrl.u32 %v3895, 7
        %v3897 = vsub.s32 0, %v3896
        %v3898 = vrot.slane %v3894, %v3897
        %v3899 = vmul.f32 %v3862, %v3898
        %v3900 = vmul.f32 %v3863, %v3898
        %v3901 = vmul.f32 %v3864, %v3898
        %v3902 = vmul.f32 %v3865, %v3898
        %v3903 = vmul.f32 %v3866, %v3898
        %v3904 = vmul.f32 %v3867, %v3898
        %v3905 = vmul.f32 %v3868, %v3898
        %v3906 = vmul.f32 %v3869, %v3898
        %v3907 = vmul.f32 %v3870, %v3898
        %v3908 = vmul.f32 %v3871, %v3898
        %v3909 = vmul.f32 %v3872, %v3898
        %v3910 = vmul.f32 %v3873, %v3898
        %v3911 = vmul.f32 %v3874, %v3898
        %v3912 = vmul.f32 %v3875, %v3898
        %v3913 = vmul.f32 %v3876, %v3898
        %v3914 = vmul.f32 %v3877, %v3898
        %v3915 = vmul.f32 %v3878, %v3898
        %v3916 = vmul.f32 %v3879, %v3898
        %v3917 = vmul.f32 %v3880, %v3898
        %v3918 = vmul.f32 %v3881, %v3898
        %v3919 = vmul.f32 %v3882, %v3898
        %v3920 = vmul.f32 %v3883, %v3898
        %v3921 = vmul.f32 %v3884, %v3898
        %v3922 = vmul.f32 %v3885, %v3898
        %v3923 = vmul.f32 %v3886, %v3898
        %v3924 = vmul.f32 %v3887, %v3898
        %v3925 = vmul.f32 %v3888, %v3898
        %v3926 = vmul.f32 %v3889, %v3898
        %v3927 = vmul.f32 %v3890, %v3898
        %v3928 = vmul.f32 %v3891, %v3898
        %v3929 = vmul.f32 %v3892, %v3898
        %v3930 = vmul.f32 %v3893, %v3898
        %v3931 = vadd.f32 %v3830, %v3899
        %v3932 = vadd.f32 %v3831, %v3900
        %v3933 = vadd.f32 %v3832, %v3901
        %v3934 = vadd.f32 %v3833, %v3902
        %v3935 = vadd.f32 %v3834, %v3903
        %v3936 = vadd.f32 %v3835, %v3904
        %v3937 = vadd.f32 %v3836, %v3905
        %v3938 = vadd.f32 %v3837, %v3906
        %v3939 = vadd.f32 %v3838, %v3907
        %v3940 = vadd.f32 %v3839, %v3908
        %v3941 = vadd.f32 %v3840, %v3909
        %v3942 = vadd.f32 %v3841, %v3910
        %v3943 = vadd.f32 %v3842, %v3911
        %v3944 = vadd.f32 %v3843, %v3912
        %v3945 = vadd.f32 %v3844, %v3913
        %v3946 = vadd.f32 %v3845, %v3914
        %v3947 = vadd.f32 %v3846, %v3915
        %v3948 = vadd.f32 %v3847, %v3916
        %v3949 = vadd.f32 %v3848, %v3917
        %v3950 = vadd.f32 %v3849, %v3918
        %v3951 = vadd.f32 %v3850, %v3919
        %v3952 = vadd.f32 %v3851, %v3920
        %v3953 = vadd.f32 %v3852, %v3921
        %v3954 = vadd.f32 %v3853, %v3922
        %v3955 = vadd.f32 %v3854, %v3923
        %v3956 = vadd.f32 %v3855, %v3924
        %v3957 = vadd.f32 %v3856, %v3925
        %v3958 = vadd.f32 %v3857, %v3926
        %v3959 = vadd.f32 %v3858, %v3927
        %v3960 = vadd.f32 %v3859, %v3928
        %v3961 = vadd.f32 %v3860, %v3929
        %v3962 = vadd.f32 %v3861, %v3930
        %v3963 = vld [vmem:[%s384] sm:$0xff]
        %v3964 = vld [vmem:[%s384 + $0x8] sm:$0xff]
        %v3965 = vld [vmem:[%s384 + $0x18] sm:$0xff]
        %v3966 = vld [vmem:[%s384 + $0x20] sm:$0xff]
        %v3967 = vld [vmem:[%s384 + $0x30] sm:$0xff]
        %v3968 = vld [vmem:[%s384 + $0x38] sm:$0xff]
        %v3969 = vld [vmem:[%s384 + $0x48] sm:$0xff]
        %v3970 = vld [vmem:[%s384 + $0x50] sm:$0xff]
        %v3971 = vld [vmem:[%s384 + $0x60] sm:$0xff]
        %v3972 = vld [vmem:[%s384 + $0x68] sm:$0xff]
        %v3973 = vld [vmem:[%s384 + $0x78] sm:$0xff]
        %v3974 = vld [vmem:[%s384 + $0x80] sm:$0xff]
        %v3975 = vld [vmem:[%s384 + $0x90] sm:$0xff]
        %v3976 = vld [vmem:[%s384 + $0x98] sm:$0xff]
        %v3977 = vld [vmem:[%s384 + $0xa8] sm:$0xff]
        %v3978 = vld [vmem:[%s384 + $0xb0] sm:$0xff]
        %v3979 = vld [vmem:[%s384 + $0xc0] sm:$0xff]
        %v3980 = vld [vmem:[%s384 + $0xc8] sm:$0xff]
        %v3981 = vld [vmem:[%s384 + $0xd8] sm:$0xff]
        %v3982 = vld [vmem:[%s384 + $0xe0] sm:$0xff]
        %v3983 = vld [vmem:[%s384 + $0xf0] sm:$0xff]
        %v3984 = vld [vmem:[%s384 + $0xf8] sm:$0xff]
        %v3985 = vld [vmem:[%s384 + $0x108] sm:$0xff]
        %v3986 = vld [vmem:[%s384 + $0x110] sm:$0xff]
        %v3987 = vld [vmem:[%s384 + $0x120] sm:$0xff]
        %v3988 = vld [vmem:[%s384 + $0x128] sm:$0xff]
        %v3989 = vld [vmem:[%s384 + $0x138] sm:$0xff]
        %v3990 = vld [vmem:[%s384 + $0x140] sm:$0xff]
        %v3991 = vld [vmem:[%s384 + $0x150] sm:$0xff]
        %v3992 = vld [vmem:[%s384 + $0x158] sm:$0xff]
        %v3993 = vld [vmem:[%s384 + $0x168] sm:$0xff]
        %v3994 = vld [vmem:[%s384 + $0x170] sm:$0xff]
        %v3995 = vld [vmem:[%s1 + $0x16] sm:$0x1]
        %v3996 = vlaneseq
        %v3997 = vshrl.u32 %v3996, 7
        %v3998 = vsub.s32 0, %v3997
        %v3999 = vrot.slane %v3995, %v3998
        %v4000 = vmul.f32 %v3963, %v3999
        %v4001 = vmul.f32 %v3964, %v3999
        %v4002 = vmul.f32 %v3965, %v3999
        %v4003 = vmul.f32 %v3966, %v3999
        %v4004 = vmul.f32 %v3967, %v3999
        %v4005 = vmul.f32 %v3968, %v3999
        %v4006 = vmul.f32 %v3969, %v3999
        %v4007 = vmul.f32 %v3970, %v3999
        %v4008 = vmul.f32 %v3971, %v3999
        %v4009 = vmul.f32 %v3972, %v3999
        %v4010 = vmul.f32 %v3973, %v3999
        %v4011 = vmul.f32 %v3974, %v3999
        %v4012 = vmul.f32 %v3975, %v3999
        %v4013 = vmul.f32 %v3976, %v3999
        %v4014 = vmul.f32 %v3977, %v3999
        %v4015 = vmul.f32 %v3978, %v3999
        %v4016 = vmul.f32 %v3979, %v3999
        %v4017 = vmul.f32 %v3980, %v3999
        %v4018 = vmul.f32 %v3981, %v3999
        %v4019 = vmul.f32 %v3982, %v3999
        %v4020 = vmul.f32 %v3983, %v3999
        %v4021 = vmul.f32 %v3984, %v3999
        %v4022 = vmul.f32 %v3985, %v3999
        %v4023 = vmul.f32 %v3986, %v3999
        %v4024 = vmul.f32 %v3987, %v3999
        %v4025 = vmul.f32 %v3988, %v3999
        %v4026 = vmul.f32 %v3989, %v3999
        %v4027 = vmul.f32 %v3990, %v3999
        %v4028 = vmul.f32 %v3991, %v3999
        %v4029 = vmul.f32 %v3992, %v3999
        %v4030 = vmul.f32 %v3993, %v3999
        %v4031 = vmul.f32 %v3994, %v3999
        %v4032 = vadd.f32 %v3931, %v4000
        %v4033 = vadd.f32 %v3932, %v4001
        %v4034 = vadd.f32 %v3933, %v4002
        %v4035 = vadd.f32 %v3934, %v4003
        %v4036 = vadd.f32 %v3935, %v4004
        %v4037 = vadd.f32 %v3936, %v4005
        %v4038 = vadd.f32 %v3937, %v4006
        %v4039 = vadd.f32 %v3938, %v4007
        %v4040 = vadd.f32 %v3939, %v4008
        %v4041 = vadd.f32 %v3940, %v4009
        %v4042 = vadd.f32 %v3941, %v4010
        %v4043 = vadd.f32 %v3942, %v4011
        %v4044 = vadd.f32 %v3943, %v4012
        %v4045 = vadd.f32 %v3944, %v4013
        %v4046 = vadd.f32 %v3945, %v4014
        %v4047 = vadd.f32 %v3946, %v4015
        %v4048 = vadd.f32 %v3947, %v4016
        %v4049 = vadd.f32 %v3948, %v4017
        %v4050 = vadd.f32 %v3949, %v4018
        %v4051 = vadd.f32 %v3950, %v4019
        %v4052 = vadd.f32 %v3951, %v4020
        %v4053 = vadd.f32 %v3952, %v4021
        %v4054 = vadd.f32 %v3953, %v4022
        %v4055 = vadd.f32 %v3954, %v4023
        %v4056 = vadd.f32 %v3955, %v4024
        %v4057 = vadd.f32 %v3956, %v4025
        %v4058 = vadd.f32 %v3957, %v4026
        %v4059 = vadd.f32 %v3958, %v4027
        %v4060 = vadd.f32 %v3959, %v4028
        %v4061 = vadd.f32 %v3960, %v4029
        %v4062 = vadd.f32 %v3961, %v4030
        %v4063 = vadd.f32 %v3962, %v4031
        %v4064 = vld [vmem:[%s1 + $0x17] sm:$0x1]
        %v4065 = vlaneseq
        %v4066 = vshrl.u32 %v4065, 7
        %v4067 = vsub.s32 0, %v4066
        %v4068 = vrot.slane %v4064, %v4067
        %v4069 = vmul.f32 %v1331, %v4068
        %v4070 = vmul.f32 %v1332, %v4068
        %v4071 = vmul.f32 %v1333, %v4068
        %v4072 = vmul.f32 %v1334, %v4068
        %v4073 = vmul.f32 %v1335, %v4068
        %v4074 = vmul.f32 %v1336, %v4068
        %v4075 = vmul.f32 %v1337, %v4068
        %v4076 = vmul.f32 %v1338, %v4068
        %v4077 = vmul.f32 %v1339, %v4068
        %v4078 = vmul.f32 %v1340, %v4068
        %v4079 = vmul.f32 %v1341, %v4068
        %v4080 = vmul.f32 %v1342, %v4068
        %v4081 = vmul.f32 %v1343, %v4068
        %v4082 = vmul.f32 %v1344, %v4068
        %v4083 = vmul.f32 %v1345, %v4068
        %v4084 = vmul.f32 %v1346, %v4068
        %v4085 = vmul.f32 %v1347, %v4068
        %v4086 = vmul.f32 %v1348, %v4068
        %v4087 = vmul.f32 %v1349, %v4068
        %v4088 = vmul.f32 %v1350, %v4068
        %v4089 = vmul.f32 %v1351, %v4068
        %v4090 = vmul.f32 %v1352, %v4068
        %v4091 = vmul.f32 %v1353, %v4068
        %v4092 = vmul.f32 %v1354, %v4068
        %v4093 = vmul.f32 %v1355, %v4068
        %v4094 = vmul.f32 %v1356, %v4068
        %v4095 = vmul.f32 %v1357, %v4068
        %v4096 = vmul.f32 %v1358, %v4068
        %v4097 = vmul.f32 %v1359, %v4068
        %v4098 = vmul.f32 %v1360, %v4068
        %v4099 = vmul.f32 %v1361, %v4068
        %v4100 = vmul.f32 %v1362, %v4068
        %v4101 = vadd.f32 %v4032, %v4069
        %v4102 = vadd.f32 %v4033, %v4070
        %v4103 = vadd.f32 %v4034, %v4071
        %v4104 = vadd.f32 %v4035, %v4072
        %v4105 = vadd.f32 %v4036, %v4073
        %v4106 = vadd.f32 %v4037, %v4074
        %v4107 = vadd.f32 %v4038, %v4075
        %v4108 = vadd.f32 %v4039, %v4076
        %v4109 = vadd.f32 %v4040, %v4077
        %v4110 = vadd.f32 %v4041, %v4078
        %v4111 = vadd.f32 %v4042, %v4079
        %v4112 = vadd.f32 %v4043, %v4080
        %v4113 = vadd.f32 %v4044, %v4081
        %v4114 = vadd.f32 %v4045, %v4082
        %v4115 = vadd.f32 %v4046, %v4083
        %v4116 = vadd.f32 %v4047, %v4084
        %v4117 = vadd.f32 %v4048, %v4085
        %v4118 = vadd.f32 %v4049, %v4086
        %v4119 = vadd.f32 %v4050, %v4087
        %v4120 = vadd.f32 %v4051, %v4088
        %v4121 = vadd.f32 %v4052, %v4089
        %v4122 = vadd.f32 %v4053, %v4090
        %v4123 = vadd.f32 %v4054, %v4091
        %v4124 = vadd.f32 %v4055, %v4092
        %v4125 = vadd.f32 %v4056, %v4093
        %v4126 = vadd.f32 %v4057, %v4094
        %v4127 = vadd.f32 %v4058, %v4095
        %v4128 = vadd.f32 %v4059, %v4096
        %v4129 = vadd.f32 %v4060, %v4097
        %v4130 = vadd.f32 %v4061, %v4098
        %v4131 = vadd.f32 %v4062, %v4099
        %v4132 = vadd.f32 %v4063, %v4100
        %v4133 = vld [vmem:[%s384 + $0x6] sm:$0xff]
        %v4134 = vld [vmem:[%s384 + $0xe] sm:$0xff]
        %v4135 = vld [vmem:[%s384 + $0x1e] sm:$0xff]
        %v4136 = vld [vmem:[%s384 + $0x26] sm:$0xff]
        %v4137 = vld [vmem:[%s384 + $0x36] sm:$0xff]
        %v4138 = vld [vmem:[%s384 + $0x3e] sm:$0xff]
        %v4139 = vld [vmem:[%s384 + $0x4e] sm:$0xff]
        %v4140 = vld [vmem:[%s384 + $0x56] sm:$0xff]
        %v4141 = vld [vmem:[%s384 + $0x66] sm:$0xff]
        %v4142 = vld [vmem:[%s384 + $0x6e] sm:$0xff]
        %v4143 = vld [vmem:[%s384 + $0x7e] sm:$0xff]
        %v4144 = vld [vmem:[%s384 + $0x86] sm:$0xff]
        %v4145 = vld [vmem:[%s384 + $0x96] sm:$0xff]
        %v4146 = vld [vmem:[%s384 + $0x9e] sm:$0xff]
        %v4147 = vld [vmem:[%s384 + $0xae] sm:$0xff]
        %v4148 = vld [vmem:[%s384 + $0xb6] sm:$0xff]
        %v4149 = vld [vmem:[%s384 + $0xc6] sm:$0xff]
        %v4150 = vld [vmem:[%s384 + $0xce] sm:$0xff]
        %v4151 = vld [vmem:[%s384 + $0xde] sm:$0xff]
        %v4152 = vld [vmem:[%s384 + $0xe6] sm:$0xff]
        %v4153 = vld [vmem:[%s384 + $0xf6] sm:$0xff]
        %v4154 = vld [vmem:[%s384 + $0xfe] sm:$0xff]
        %v4155 = vld [vmem:[%s384 + $0x10e] sm:$0xff]
        %v4156 = vld [vmem:[%s384 + $0x116] sm:$0xff]
        %v4157 = vld [vmem:[%s384 + $0x126] sm:$0xff]
        %v4158 = vld [vmem:[%s384 + $0x12e] sm:$0xff]
        %v4159 = vld [vmem:[%s384 + $0x13e] sm:$0xff]
        %v4160 = vld [vmem:[%s384 + $0x146] sm:$0xff]
        %v4161 = vld [vmem:[%s384 + $0x156] sm:$0xff]
        %v4162 = vld [vmem:[%s384 + $0x15e] sm:$0xff]
        %v4163 = vld [vmem:[%s384 + $0x16e] sm:$0xff]
        %v4164 = vld [vmem:[%s384 + $0x176] sm:$0xff]
        %v4165 = vld [vmem:[%s1 + $0x18] sm:$0x1]
        %v4166 = vlaneseq
        %v4167 = vshrl.u32 %v4166, 7
        %v4168 = vsub.s32 0, %v4167
        %v4169 = vrot.slane %v4165, %v4168
        %v4170 = vmul.f32 %v4133, %v4169
        %v4171 = vmul.f32 %v4134, %v4169
        %v4172 = vmul.f32 %v4135, %v4169
        %v4173 = vmul.f32 %v4136, %v4169
        %v4174 = vmul.f32 %v4137, %v4169
        %v4175 = vmul.f32 %v4138, %v4169
        %v4176 = vmul.f32 %v4139, %v4169
        %v4177 = vmul.f32 %v4140, %v4169
        %v4178 = vmul.f32 %v4141, %v4169
        %v4179 = vmul.f32 %v4142, %v4169
        %v4180 = vmul.f32 %v4143, %v4169
        %v4181 = vmul.f32 %v4144, %v4169
        %v4182 = vmul.f32 %v4145, %v4169
        %v4183 = vmul.f32 %v4146, %v4169
        %v4184 = vmul.f32 %v4147, %v4169
        %v4185 = vmul.f32 %v4148, %v4169
        %v4186 = vmul.f32 %v4149, %v4169
        %v4187 = vmul.f32 %v4150, %v4169
        %v4188 = vmul.f32 %v4151, %v4169
        %v4189 = vmul.f32 %v4152, %v4169
        %v4190 = vmul.f32 %v4153, %v4169
        %v4191 = vmul.f32 %v4154, %v4169
        %v4192 = vmul.f32 %v4155, %v4169
        %v4193 = vmul.f32 %v4156, %v4169
        %v4194 = vmul.f32 %v4157, %v4169
        %v4195 = vmul.f32 %v4158, %v4169
        %v4196 = vmul.f32 %v4159, %v4169
        %v4197 = vmul.f32 %v4160, %v4169
        %v4198 = vmul.f32 %v4161, %v4169
        %v4199 = vmul.f32 %v4162, %v4169
        %v4200 = vmul.f32 %v4163, %v4169
        %v4201 = vmul.f32 %v4164, %v4169
        %v4202 = vadd.f32 %v4101, %v4170
        %v4203 = vadd.f32 %v4102, %v4171
        %v4204 = vadd.f32 %v4103, %v4172
        %v4205 = vadd.f32 %v4104, %v4173
        %v4206 = vadd.f32 %v4105, %v4174
        %v4207 = vadd.f32 %v4106, %v4175
        %v4208 = vadd.f32 %v4107, %v4176
        %v4209 = vadd.f32 %v4108, %v4177
        %v4210 = vadd.f32 %v4109, %v4178
        %v4211 = vadd.f32 %v4110, %v4179
        %v4212 = vadd.f32 %v4111, %v4180
        %v4213 = vadd.f32 %v4112, %v4181
        %v4214 = vadd.f32 %v4113, %v4182
        %v4215 = vadd.f32 %v4114, %v4183
        %v4216 = vadd.f32 %v4115, %v4184
        %v4217 = vadd.f32 %v4116, %v4185
        %v4218 = vadd.f32 %v4117, %v4186
        %v4219 = vadd.f32 %v4118, %v4187
        %v4220 = vadd.f32 %v4119, %v4188
        %v4221 = vadd.f32 %v4120, %v4189
        %v4222 = vadd.f32 %v4121, %v4190
        %v4223 = vadd.f32 %v4122, %v4191
        %v4224 = vadd.f32 %v4123, %v4192
        %v4225 = vadd.f32 %v4124, %v4193
        %v4226 = vadd.f32 %v4125, %v4194
        %v4227 = vadd.f32 %v4126, %v4195
        %v4228 = vadd.f32 %v4127, %v4196
        %v4229 = vadd.f32 %v4128, %v4197
        %v4230 = vadd.f32 %v4129, %v4198
        %v4231 = vadd.f32 %v4130, %v4199
        %v4232 = vadd.f32 %v4131, %v4200
        %v4233 = vadd.f32 %v4132, %v4201
        %s4234 = scalar_lea.vmem [#allocation2], 144
        %v4235 = vld [vmem:[%s4234] sm:$0xff]
        %v4236 = vld [vmem:[%s4234 + $0x8] sm:$0xff]
        %v4237 = vld [vmem:[%s4234 + $0x18] sm:$0xff]
        %v4238 = vld [vmem:[%s4234 + $0x20] sm:$0xff]
        %v4239 = vld [vmem:[%s4234 + $0x30] sm:$0xff]
        %v4240 = vld [vmem:[%s4234 + $0x38] sm:$0xff]
        %v4241 = vld [vmem:[%s4234 + $0x48] sm:$0xff]
        %v4242 = vld [vmem:[%s4234 + $0x50] sm:$0xff]
        %v4243 = vld [vmem:[%s4234 + $0x60] sm:$0xff]
        %v4244 = vld [vmem:[%s4234 + $0x68] sm:$0xff]
        %v4245 = vld [vmem:[%s4234 + $0x78] sm:$0xff]
        %v4246 = vld [vmem:[%s4234 + $0x80] sm:$0xff]
        %v4247 = vld [vmem:[%s4234 + $0x90] sm:$0xff]
        %v4248 = vld [vmem:[%s4234 + $0x98] sm:$0xff]
        %v4249 = vld [vmem:[%s4234 + $0xa8] sm:$0xff]
        %v4250 = vld [vmem:[%s4234 + $0xb0] sm:$0xff]
        %v4251 = vld [vmem:[%s4234 + $0xc0] sm:$0xff]
        %v4252 = vld [vmem:[%s4234 + $0xc8] sm:$0xff]
        %v4253 = vld [vmem:[%s4234 + $0xd8] sm:$0xff]
        %v4254 = vld [vmem:[%s4234 + $0xe0] sm:$0xff]
        %v4255 = vld [vmem:[%s4234 + $0xf0] sm:$0xff]
        %v4256 = vld [vmem:[%s4234 + $0xf8] sm:$0xff]
        %v4257 = vld [vmem:[%s4234 + $0x108] sm:$0xff]
        %v4258 = vld [vmem:[%s4234 + $0x110] sm:$0xff]
        %v4259 = vld [vmem:[%s4234 + $0x120] sm:$0xff]
        %v4260 = vld [vmem:[%s4234 + $0x128] sm:$0xff]
        %v4261 = vld [vmem:[%s4234 + $0x138] sm:$0xff]
        %v4262 = vld [vmem:[%s4234 + $0x140] sm:$0xff]
        %v4263 = vld [vmem:[%s4234 + $0x150] sm:$0xff]
        %v4264 = vld [vmem:[%s4234 + $0x158] sm:$0xff]
        %v4265 = vld [vmem:[%s4234 + $0x168] sm:$0xff]
        %v4266 = vld [vmem:[%s4234 + $0x170] sm:$0xff]
        %v4267 = vld [vmem:[%s1 + $0x19] sm:$0x1]
        %v4268 = vlaneseq
        %v4269 = vshrl.u32 %v4268, 7
        %v4270 = vsub.s32 0, %v4269
        %v4271 = vrot.slane %v4267, %v4270
        %v4272 = vmul.f32 %v4235, %v4271
        %v4273 = vmul.f32 %v4236, %v4271
        %v4274 = vmul.f32 %v4237, %v4271
        %v4275 = vmul.f32 %v4238, %v4271
        %v4276 = vmul.f32 %v4239, %v4271
        %v4277 = vmul.f32 %v4240, %v4271
        %v4278 = vmul.f32 %v4241, %v4271
        %v4279 = vmul.f32 %v4242, %v4271
        %v4280 = vmul.f32 %v4243, %v4271
        %v4281 = vmul.f32 %v4244, %v4271
        %v4282 = vmul.f32 %v4245, %v4271
        %v4283 = vmul.f32 %v4246, %v4271
        %v4284 = vmul.f32 %v4247, %v4271
        %v4285 = vmul.f32 %v4248, %v4271
        %v4286 = vmul.f32 %v4249, %v4271
        %v4287 = vmul.f32 %v4250, %v4271
        %v4288 = vmul.f32 %v4251, %v4271
        %v4289 = vmul.f32 %v4252, %v4271
        %v4290 = vmul.f32 %v4253, %v4271
        %v4291 = vmul.f32 %v4254, %v4271
        %v4292 = vmul.f32 %v4255, %v4271
        %v4293 = vmul.f32 %v4256, %v4271
        %v4294 = vmul.f32 %v4257, %v4271
        %v4295 = vmul.f32 %v4258, %v4271
        %v4296 = vmul.f32 %v4259, %v4271
        %v4297 = vmul.f32 %v4260, %v4271
        %v4298 = vmul.f32 %v4261, %v4271
        %v4299 = vmul.f32 %v4262, %v4271
        %v4300 = vmul.f32 %v4263, %v4271
        %v4301 = vmul.f32 %v4264, %v4271
        %v4302 = vmul.f32 %v4265, %v4271
        %v4303 = vmul.f32 %v4266, %v4271
        %v4304 = vadd.f32 %v4202, %v4272
        %v4305 = vadd.f32 %v4203, %v4273
        %v4306 = vadd.f32 %v4204, %v4274
        %v4307 = vadd.f32 %v4205, %v4275
        %v4308 = vadd.f32 %v4206, %v4276
        %v4309 = vadd.f32 %v4207, %v4277
        %v4310 = vadd.f32 %v4208, %v4278
        %v4311 = vadd.f32 %v4209, %v4279
        %v4312 = vadd.f32 %v4210, %v4280
        %v4313 = vadd.f32 %v4211, %v4281
        %v4314 = vadd.f32 %v4212, %v4282
        %v4315 = vadd.f32 %v4213, %v4283
        %v4316 = vadd.f32 %v4214, %v4284
        %v4317 = vadd.f32 %v4215, %v4285
        %v4318 = vadd.f32 %v4216, %v4286
        %v4319 = vadd.f32 %v4217, %v4287
        %v4320 = vadd.f32 %v4218, %v4288
        %v4321 = vadd.f32 %v4219, %v4289
        %v4322 = vadd.f32 %v4220, %v4290
        %v4323 = vadd.f32 %v4221, %v4291
        %v4324 = vadd.f32 %v4222, %v4292
        %v4325 = vadd.f32 %v4223, %v4293
        %v4326 = vadd.f32 %v4224, %v4294
        %v4327 = vadd.f32 %v4225, %v4295
        %v4328 = vadd.f32 %v4226, %v4296
        %v4329 = vadd.f32 %v4227, %v4297
        %v4330 = vadd.f32 %v4228, %v4298
        %v4331 = vadd.f32 %v4229, %v4299
        %v4332 = vadd.f32 %v4230, %v4300
        %v4333 = vadd.f32 %v4231, %v4301
        %v4334 = vadd.f32 %v4232, %v4302
        %v4335 = vadd.f32 %v4233, %v4303
        %v4336 = vld [vmem:[%s4234 + $0x3] sm:$0xff]
        %v4337 = vld [vmem:[%s4234 + $0xb] sm:$0xff]
        %v4338 = vld [vmem:[%s4234 + $0x1b] sm:$0xff]
        %v4339 = vld [vmem:[%s4234 + $0x23] sm:$0xff]
        %v4340 = vld [vmem:[%s4234 + $0x33] sm:$0xff]
        %v4341 = vld [vmem:[%s4234 + $0x3b] sm:$0xff]
        %v4342 = vld [vmem:[%s4234 + $0x4b] sm:$0xff]
        %v4343 = vld [vmem:[%s4234 + $0x53] sm:$0xff]
        %v4344 = vld [vmem:[%s4234 + $0x63] sm:$0xff]
        %v4345 = vld [vmem:[%s4234 + $0x6b] sm:$0xff]
        %v4346 = vld [vmem:[%s4234 + $0x7b] sm:$0xff]
        %v4347 = vld [vmem:[%s4234 + $0x83] sm:$0xff]
        %v4348 = vld [vmem:[%s4234 + $0x93] sm:$0xff]
        %v4349 = vld [vmem:[%s4234 + $0x9b] sm:$0xff]
        %v4350 = vld [vmem:[%s4234 + $0xab] sm:$0xff]
        %v4351 = vld [vmem:[%s4234 + $0xb3] sm:$0xff]
        %v4352 = vld [vmem:[%s4234 + $0xc3] sm:$0xff]
        %v4353 = vld [vmem:[%s4234 + $0xcb] sm:$0xff]
        %v4354 = vld [vmem:[%s4234 + $0xdb] sm:$0xff]
        %v4355 = vld [vmem:[%s4234 + $0xe3] sm:$0xff]
        %v4356 = vld [vmem:[%s4234 + $0xf3] sm:$0xff]
        %v4357 = vld [vmem:[%s4234 + $0xfb] sm:$0xff]
        %v4358 = vld [vmem:[%s4234 + $0x10b] sm:$0xff]
        %v4359 = vld [vmem:[%s4234 + $0x113] sm:$0xff]
        %v4360 = vld [vmem:[%s4234 + $0x123] sm:$0xff]
        %v4361 = vld [vmem:[%s4234 + $0x12b] sm:$0xff]
        %v4362 = vld [vmem:[%s4234 + $0x13b] sm:$0xff]
        %v4363 = vld [vmem:[%s4234 + $0x143] sm:$0xff]
        %v4364 = vld [vmem:[%s4234 + $0x153] sm:$0xff]
        %v4365 = vld [vmem:[%s4234 + $0x15b] sm:$0xff]
        %v4366 = vld [vmem:[%s4234 + $0x16b] sm:$0xff]
        %v4367 = vld [vmem:[%s4234 + $0x173] sm:$0xff]
        %v4368 = vld [vmem:[%s1 + $0x1a] sm:$0x1]
        %v4369 = vlaneseq
        %v4370 = vshrl.u32 %v4369, 7
        %v4371 = vsub.s32 0, %v4370
        %v4372 = vrot.slane %v4368, %v4371
        %v4373 = vmul.f32 %v4336, %v4372
        %v4374 = vmul.f32 %v4337, %v4372
        %v4375 = vmul.f32 %v4338, %v4372
        %v4376 = vmul.f32 %v4339, %v4372
        %v4377 = vmul.f32 %v4340, %v4372
        %v4378 = vmul.f32 %v4341, %v4372
        %v4379 = vmul.f32 %v4342, %v4372
        %v4380 = vmul.f32 %v4343, %v4372
        %v4381 = vmul.f32 %v4344, %v4372
        %v4382 = vmul.f32 %v4345, %v4372
        %v4383 = vmul.f32 %v4346, %v4372
        %v4384 = vmul.f32 %v4347, %v4372
        %v4385 = vmul.f32 %v4348, %v4372
        %v4386 = vmul.f32 %v4349, %v4372
        %v4387 = vmul.f32 %v4350, %v4372
        %v4388 = vmul.f32 %v4351, %v4372
        %v4389 = vmul.f32 %v4352, %v4372
        %v4390 = vmul.f32 %v4353, %v4372
        %v4391 = vmul.f32 %v4354, %v4372
        %v4392 = vmul.f32 %v4355, %v4372
        %v4393 = vmul.f32 %v4356, %v4372
        %v4394 = vmul.f32 %v4357, %v4372
        %v4395 = vmul.f32 %v4358, %v4372
        %v4396 = vmul.f32 %v4359, %v4372
        %v4397 = vmul.f32 %v4360, %v4372
        %v4398 = vmul.f32 %v4361, %v4372
        %v4399 = vmul.f32 %v4362, %v4372
        %v4400 = vmul.f32 %v4363, %v4372
        %v4401 = vmul.f32 %v4364, %v4372
        %v4402 = vmul.f32 %v4365, %v4372
        %v4403 = vmul.f32 %v4366, %v4372
        %v4404 = vmul.f32 %v4367, %v4372
        %v4405 = vadd.f32 %v4304, %v4373
        %v4406 = vadd.f32 %v4305, %v4374
        %v4407 = vadd.f32 %v4306, %v4375
        %v4408 = vadd.f32 %v4307, %v4376
        %v4409 = vadd.f32 %v4308, %v4377
        %v4410 = vadd.f32 %v4309, %v4378
        %v4411 = vadd.f32 %v4310, %v4379
        %v4412 = vadd.f32 %v4311, %v4380
        %v4413 = vadd.f32 %v4312, %v4381
        %v4414 = vadd.f32 %v4313, %v4382
        %v4415 = vadd.f32 %v4314, %v4383
        %v4416 = vadd.f32 %v4315, %v4384
        %v4417 = vadd.f32 %v4316, %v4385
        %v4418 = vadd.f32 %v4317, %v4386
        %v4419 = vadd.f32 %v4318, %v4387
        %v4420 = vadd.f32 %v4319, %v4388
        %v4421 = vadd.f32 %v4320, %v4389
        %v4422 = vadd.f32 %v4321, %v4390
        %v4423 = vadd.f32 %v4322, %v4391
        %v4424 = vadd.f32 %v4323, %v4392
        %v4425 = vadd.f32 %v4324, %v4393
        %v4426 = vadd.f32 %v4325, %v4394
        %v4427 = vadd.f32 %v4326, %v4395
        %v4428 = vadd.f32 %v4327, %v4396
        %v4429 = vadd.f32 %v4328, %v4397
        %v4430 = vadd.f32 %v4329, %v4398
        %v4431 = vadd.f32 %v4330, %v4399
        %v4432 = vadd.f32 %v4331, %v4400
        %v4433 = vadd.f32 %v4332, %v4401
        %v4434 = vadd.f32 %v4333, %v4402
        %v4435 = vadd.f32 %v4334, %v4403
        %v4436 = vadd.f32 %v4335, %v4404
        %v4437 = vld [vmem:[%s4234 + $0x6] sm:$0xff]
        %v4438 = vld [vmem:[%s4234 + $0xe] sm:$0xff]
        %v4439 = vld [vmem:[%s4234 + $0x1e] sm:$0xff]
        %v4440 = vld [vmem:[%s4234 + $0x26] sm:$0xff]
        %v4441 = vld [vmem:[%s4234 + $0x36] sm:$0xff]
        %v4442 = vld [vmem:[%s4234 + $0x3e] sm:$0xff]
        %v4443 = vld [vmem:[%s4234 + $0x4e] sm:$0xff]
        %v4444 = vld [vmem:[%s4234 + $0x56] sm:$0xff]
        %v4445 = vld [vmem:[%s4234 + $0x66] sm:$0xff]
        %v4446 = vld [vmem:[%s4234 + $0x6e] sm:$0xff]
        %v4447 = vld [vmem:[%s4234 + $0x7e] sm:$0xff]
        %v4448 = vld [vmem:[%s4234 + $0x86] sm:$0xff]
        %v4449 = vld [vmem:[%s4234 + $0x96] sm:$0xff]
        %v4450 = vld [vmem:[%s4234 + $0x9e] sm:$0xff]
        %v4451 = vld [vmem:[%s4234 + $0xae] sm:$0xff]
        %v4452 = vld [vmem:[%s4234 + $0xb6] sm:$0xff]
        %v4453 = vld [vmem:[%s4234 + $0xc6] sm:$0xff]
        %v4454 = vld [vmem:[%s4234 + $0xce] sm:$0xff]
        %v4455 = vld [vmem:[%s4234 + $0xde] sm:$0xff]
        %v4456 = vld [vmem:[%s4234 + $0xe6] sm:$0xff]
        %v4457 = vld [vmem:[%s4234 + $0xf6] sm:$0xff]
        %v4458 = vld [vmem:[%s4234 + $0xfe] sm:$0xff]
        %v4459 = vld [vmem:[%s4234 + $0x10e] sm:$0xff]
        %v4460 = vld [vmem:[%s4234 + $0x116] sm:$0xff]
        %v4461 = vld [vmem:[%s4234 + $0x126] sm:$0xff]
        %v4462 = vld [vmem:[%s4234 + $0x12e] sm:$0xff]
        %v4463 = vld [vmem:[%s4234 + $0x13e] sm:$0xff]
        %v4464 = vld [vmem:[%s4234 + $0x146] sm:$0xff]
        %v4465 = vld [vmem:[%s4234 + $0x156] sm:$0xff]
        %v4466 = vld [vmem:[%s4234 + $0x15e] sm:$0xff]
        %v4467 = vld [vmem:[%s4234 + $0x16e] sm:$0xff]
        %v4468 = vld [vmem:[%s4234 + $0x176] sm:$0xff]
        %v4469 = vld [vmem:[%s1 + $0x1b] sm:$0x1]
        %v4470 = vlaneseq
        %v4471 = vshrl.u32 %v4470, 7
        %v4472 = vsub.s32 0, %v4471
        %v4473 = vrot.slane %v4469, %v4472
        %v4474 = vmul.f32 %v4437, %v4473
        %v4475 = vmul.f32 %v4438, %v4473
        %v4476 = vmul.f32 %v4439, %v4473
        %v4477 = vmul.f32 %v4440, %v4473
        %v4478 = vmul.f32 %v4441, %v4473
        %v4479 = vmul.f32 %v4442, %v4473
        %v4480 = vmul.f32 %v4443, %v4473
        %v4481 = vmul.f32 %v4444, %v4473
        %v4482 = vmul.f32 %v4445, %v4473
        %v4483 = vmul.f32 %v4446, %v4473
        %v4484 = vmul.f32 %v4447, %v4473
        %v4485 = vmul.f32 %v4448, %v4473
        %v4486 = vmul.f32 %v4449, %v4473
        %v4487 = vmul.f32 %v4450, %v4473
        %v4488 = vmul.f32 %v4451, %v4473
        %v4489 = vmul.f32 %v4452, %v4473
        %v4490 = vmul.f32 %v4453, %v4473
        %v4491 = vmul.f32 %v4454, %v4473
        %v4492 = vmul.f32 %v4455, %v4473
        %v4493 = vmul.f32 %v4456, %v4473
        %v4494 = vmul.f32 %v4457, %v4473
        %v4495 = vmul.f32 %v4458, %v4473
        %v4496 = vmul.f32 %v4459, %v4473
        %v4497 = vmul.f32 %v4460, %v4473
        %v4498 = vmul.f32 %v4461, %v4473
        %v4499 = vmul.f32 %v4462, %v4473
        %v4500 = vmul.f32 %v4463, %v4473
        %v4501 = vmul.f32 %v4464, %v4473
        %v4502 = vmul.f32 %v4465, %v4473
        %v4503 = vmul.f32 %v4466, %v4473
        %v4504 = vmul.f32 %v4467, %v4473
        %v4505 = vmul.f32 %v4468, %v4473
        %v4506 = vadd.f32 %v4405, %v4474
        %v4507 = vadd.f32 %v4406, %v4475
        %v4508 = vadd.f32 %v4407, %v4476
        %v4509 = vadd.f32 %v4408, %v4477
        %v4510 = vadd.f32 %v4409, %v4478
        %v4511 = vadd.f32 %v4410, %v4479
        %v4512 = vadd.f32 %v4411, %v4480
        %v4513 = vadd.f32 %v4412, %v4481
        %v4514 = vadd.f32 %v4413, %v4482
        %v4515 = vadd.f32 %v4414, %v4483
        %v4516 = vadd.f32 %v4415, %v4484
        %v4517 = vadd.f32 %v4416, %v4485
        %v4518 = vadd.f32 %v4417, %v4486
        %v4519 = vadd.f32 %v4418, %v4487
        %v4520 = vadd.f32 %v4419, %v4488
        %v4521 = vadd.f32 %v4420, %v4489
        %v4522 = vadd.f32 %v4421, %v4490
        %v4523 = vadd.f32 %v4422, %v4491
        %v4524 = vadd.f32 %v4423, %v4492
        %v4525 = vadd.f32 %v4424, %v4493
        %v4526 = vadd.f32 %v4425, %v4494
        %v4527 = vadd.f32 %v4426, %v4495
        %v4528 = vadd.f32 %v4427, %v4496
        %v4529 = vadd.f32 %v4428, %v4497
        %v4530 = vadd.f32 %v4429, %v4498
        %v4531 = vadd.f32 %v4430, %v4499
        %v4532 = vadd.f32 %v4431, %v4500
        %v4533 = vadd.f32 %v4432, %v4501
        %v4534 = vadd.f32 %v4433, %v4502
        %v4535 = vadd.f32 %v4434, %v4503
        %v4536 = vadd.f32 %v4435, %v4504
        %v4537 = vadd.f32 %v4436, %v4505
        %v4538 = vld [vmem:[%s2 + $0x3] sm:$0x1]
        %v4539 = vlaneseq
        %v4540 = vshrl.u32 %v4539, 7
        %v4541 = vsub.s32 0, %v4540
        %v4542 = vrot.slane %v4538, %v4541
        %v4543 = vadd.f32 %v4506, %v4542
        %v4544 = vadd.f32 %v4507, %v4542
        %v4545 = vadd.f32 %v4508, %v4542
        %v4546 = vadd.f32 %v4509, %v4542
        %v4547 = vadd.f32 %v4510, %v4542
        %v4548 = vadd.f32 %v4511, %v4542
        %v4549 = vadd.f32 %v4512, %v4542
        %v4550 = vadd.f32 %v4513, %v4542
        %v4551 = vadd.f32 %v4514, %v4542
        %v4552 = vadd.f32 %v4515, %v4542
        %v4553 = vadd.f32 %v4516, %v4542
        %v4554 = vadd.f32 %v4517, %v4542
        %v4555 = vadd.f32 %v4518, %v4542
        %v4556 = vadd.f32 %v4519, %v4542
        %v4557 = vadd.f32 %v4520, %v4542
        %v4558 = vadd.f32 %v4521, %v4542
        %v4559 = vadd.f32 %v4522, %v4542
        %v4560 = vadd.f32 %v4523, %v4542
        %v4561 = vadd.f32 %v4524, %v4542
        %v4562 = vadd.f32 %v4525, %v4542
        %v4563 = vadd.f32 %v4526, %v4542
        %v4564 = vadd.f32 %v4527, %v4542
        %v4565 = vadd.f32 %v4528, %v4542
        %v4566 = vadd.f32 %v4529, %v4542
        %v4567 = vadd.f32 %v4530, %v4542
        %v4568 = vadd.f32 %v4531, %v4542
        %v4569 = vadd.f32 %v4532, %v4542
        %v4570 = vadd.f32 %v4533, %v4542
        %v4571 = vadd.f32 %v4534, %v4542
        %v4572 = vadd.f32 %v4535, %v4542
        %v4573 = vadd.f32 %v4536, %v4542
        %v4574 = vadd.f32 %v4537, %v4542
        %v4575 = vmax.f32 %v4543, 0.0
        %v4576 = vmax.f32 %v4544, 0.0
        %v4577 = vmax.f32 %v4545, 0.0
        %v4578 = vmax.f32 %v4546, 0.0
        %v4579 = vmax.f32 %v4547, 0.0
        %v4580 = vmax.f32 %v4548, 0.0
        %v4581 = vmax.f32 %v4549, 0.0
        %v4582 = vmax.f32 %v4550, 0.0
        %v4583 = vmax.f32 %v4551, 0.0
        %v4584 = vmax.f32 %v4552, 0.0
        %v4585 = vmax.f32 %v4553, 0.0
        %v4586 = vmax.f32 %v4554, 0.0
        %v4587 = vmax.f32 %v4555, 0.0
        %v4588 = vmax.f32 %v4556, 0.0
        %v4589 = vmax.f32 %v4557, 0.0
        %v4590 = vmax.f32 %v4558, 0.0
        %v4591 = vmax.f32 %v4559, 0.0
        %v4592 = vmax.f32 %v4560, 0.0
        %v4593 = vmax.f32 %v4561, 0.0
        %v4594 = vmax.f32 %v4562, 0.0
        %v4595 = vmax.f32 %v4563, 0.0
        %v4596 = vmax.f32 %v4564, 0.0
        %v4597 = vmax.f32 %v4565, 0.0
        %v4598 = vmax.f32 %v4566, 0.0
        %v4599 = vmax.f32 %v4567, 0.0
        %v4600 = vmax.f32 %v4568, 0.0
        %v4601 = vmax.f32 %v4569, 0.0
        %v4602 = vmax.f32 %v4570, 0.0
        %v4603 = vmax.f32 %v4571, 0.0
        %v4604 = vmax.f32 %v4572, 0.0
        %v4605 = vmax.f32 %v4573, 0.0
        %v4606 = vmax.f32 %v4574, 0.0
        %s4607 = scalar_lea.vmem %s3, 288
        %v4608 = vld [vmem:[%s4607] sm:$0xff]
        %v4609 = vld [vmem:[%s4607 + $0x8] sm:$0xff]
        %v4610 = vld [vmem:[%s4607 + $0x10] sm:$0xff]
        %v4611 = vld [vmem:[%s4607 + $0x18] sm:$0xff]
        %v4612 = vld [vmem:[%s4607 + $0x20] sm:$0xff]
        %v4613 = vld [vmem:[%s4607 + $0x28] sm:$0xff]
        %v4614 = vld [vmem:[%s4607 + $0x30] sm:$0xff]
        %v4615 = vld [vmem:[%s4607 + $0x38] sm:$0xff]
        %v4616 = vld [vmem:[%s4607 + $0x40] sm:$0xff]
        %v4617 = vld [vmem:[%s4607 + $0x48] sm:$0xff]
        %v4618 = vld [vmem:[%s4607 + $0x50] sm:$0xff]
        %v4619 = vld [vmem:[%s4607 + $0x58] sm:$0xff]
        %v4620 = vld [vmem:[%s4 + $0x3] sm:$0x1]
        %v4621 = vlaneseq
        %v4622 = vshrl.u32 %v4621, 7
        %v4623 = vsub.s32 0, %v4622
        %v4624 = vrot.slane %v4620, %v4623
        %v4626 = vsel %vm363, %v4575, 0
        %v4629 = vsel %vm363, %v4576, 0
        %v4632 = vsel %vm363, %v4577, 0
        %v4635 = vsel %vm363, %v4578, 0
        %v4638 = vsel %vm363, %v4579, 0
        %v4641 = vsel %vm363, %v4580, 0
        %v4644 = vsel %vm363, %v4581, 0
        %v4647 = vsel %vm363, %v4582, 0
        %v4650 = vsel %vm363, %v4583, 0
        %v4653 = vsel %vm363, %v4584, 0
        %v4656 = vsel %vm363, %v4585, 0
        %v4659 = vsel %vm363, %v4586, 0
        %v4662 = vsel %vm363, %v4587, 0
        %v4665 = vsel %vm363, %v4588, 0
        %v4668 = vsel %vm363, %v4589, 0
        %v4671 = vsel %vm363, %v4590, 0
        %v4674 = vsel %vm363, %v4591, 0
        %v4677 = vsel %vm363, %v4592, 0
        %v4680 = vsel %vm363, %v4593, 0
        %v4683 = vsel %vm363, %v4594, 0
        %v4686 = vsel %vm363, %v4595, 0
        %v4689 = vsel %vm363, %v4596, 0
        %v4692 = vsel %vm363, %v4597, 0
        %v4695 = vsel %vm363, %v4598, 0
        %v4698 = vsel %vm363, %v4599, 0
        %v4701 = vsel %vm363, %v4600, 0
        %v4704 = vsel %vm363, %v4601, 0
        %v4707 = vsel %vm363, %v4602, 0
        %v4710 = vsel %vm363, %v4603, 0
        %v4713 = vsel %vm363, %v4604, 0
        %v4716 = vsel %vm363, %v4605, 0
        %v4719 = vsel %vm363, %v4606, 0
        %4721 = vmatprep.subr.mxu0 0.0
        %4722 = vmatpush1.msra.mxu0 %v4608
        %4723 = vmatprep.subr.mxu0 0.0
        %4724 = vmatpush1.msra.mxu0 %v4609
        %4725 = vmatprep.subr.mxu0 0.0
        %4726 = vmatpush1.msra.mxu0 %v4610
        %4727 = vmatprep.subr.mxu0 0.0
        %4728 = vmatpush1.msra.mxu0 %v4611
        %4729 = vmatprep.subr.mxu0 0.0
        %4730 = vmatpush1.msra.mxu0 %v4612
        %4731 = vmatprep.subr.mxu0 0.0
        %4732 = vmatpush1.msra.mxu0 %v4613
        %4733 = vmatprep.subr.mxu0 0.0
        %4734 = vmatpush1.msra.mxu0 %v4614
        %4735 = vmatprep.subr.mxu0 0.0
        %4736 = vmatpush1.msra.mxu0 %v4615
        %4737 = vmatprep.subr.mxu0 0.0
        %4738 = vmatpush1.msra.mxu0 %v4616
        %4739 = vmatprep.subr.mxu0 0.0
        %4740 = vmatpush1.msra.mxu0 %v4617
        %4741 = vmatprep.subr.mxu0 0.0
        %4742 = vmatpush1.msra.mxu0 %v4618
        %4743 = vmatprep.subr.mxu0 0.0
        %4744 = vmatpush1.msra.mxu0 %v4619
        %4745 = vmatprep.subr.mxu0 0.0
        %4746 = vmatpush1.msra.mxu0 0.0
        %4747 = vmatprep.subr.mxu0 0.0
        %4748 = vmatpush1.msra.mxu0 0.0
        %4749 = vmatprep.subr.mxu0 0.0
        %4750 = vmatpush1.msra.mxu0 0.0
        %4751 = vmatprep.subr.mxu0 0.0
        %4752 = vmatpush1.msra.mxu0 0.0
        %4753 = vmatprep.subr.mxu0 0.0
        %4754 = vmatpush1.msra.mxu0 0.0
        %4755 = vmatprep.subr.mxu0 0.0
        %4756 = vmatpush1.msra.mxu0 0.0
        %4757 = vmatprep.subr.mxu0 0.0
        %4758 = vmatpush1.msra.mxu0 0.0
        %4759 = vmatprep.subr.mxu0 0.0
        %4760 = vmatpush1.msra.mxu0 0.0
        %4761 = vmatprep.subr.mxu0 0.0
        %4762 = vmatpush1.msra.mxu0 0.0
        %4763 = vmatprep.subr.mxu0 0.0
        %4764 = vmatpush1.msra.mxu0 0.0
        %4765 = vmatprep.subr.mxu0 0.0
        %4766 = vmatpush1.msra.mxu0 0.0
        %4767 = vmatprep.subr.mxu0 0.0
        %4768 = vmatpush1.msra.mxu0 0.0
        %4769 = vmatprep.subr.mxu0 0.0
        %4770 = vmatpush1.msra.mxu0 0.0
        %4771 = vmatprep.subr.mxu0 0.0
        %4772 = vmatpush1.msra.mxu0 0.0
        %4773 = vmatprep.subr.mxu0 0.0
        %4774 = vmatpush1.msra.mxu0 0.0
        %4775 = vmatprep.subr.mxu0 0.0
        %4776 = vmatpush1.msra.mxu0 0.0
        %4777 = vmatprep.subr.mxu0 0.0
        %4778 = vmatpush1.msra.mxu0 0.0
        %4779 = vmatprep.subr.mxu0 0.0
        %4780 = vmatpush1.msra.mxu0 0.0
        %4781 = vmatprep.subr.mxu0 0.0
        %4782 = vmatpush1.msra.mxu0 0.0
        %4783 = vmatprep.subr.mxu0 0.0
        %4784 = vmatpush1.msra.mxu0 0.0
        %4785 = vmatprep.mubr.f32.mxu0 0.0
        %4786 = vmatmul.mubr.f32.gmra.mrb[0].mxu0 %v4626
        %v4787 = vpop.f32.mrb[0].mxu0
        %v4788 = vadd.f32 %v4624, %v4787
        %v4789 = vpop.f32.mrb[0].mxu0
        %4790 = vmatprep.mubr.f32.mxu0 0.0
        %4791 = vmatmul.mubr.f32.gmra.mrb[0].mxu0 %v4629
        %v4792 = vpop.f32.mrb[0].mxu0
        %v4793 = vadd.f32 %v4624, %v4792
        %v4794 = vpop.f32.mrb[0].mxu0
        %4795 = vmatprep.mubr.f32.mxu0 0.0
        %4796 = vmatmul.mubr.f32.gmra.mrb[0].mxu0 %v4632
        %v4797 = vpop.f32.mrb[0].mxu0
        %v4798 = vadd.f32 %v4624, %v4797
        %v4799 = vpop.f32.mrb[0].mxu0
        %4800 = vmatprep.mubr.f32.mxu0 0.0
        %4801 = vmatmul.mubr.f32.gmra.mrb[0].mxu0 %v4635
        %v4802 = vpop.f32.mrb[0].mxu0
        %v4803 = vadd.f32 %v4624, %v4802
        %v4804 = vpop.f32.mrb[0].mxu0
        %4805 = vmatprep.mubr.f32.mxu0 0.0
        %4806 = vmatmul.mubr.f32.gmra.mrb[0].mxu0 %v4638
        %v4807 = vpop.f32.mrb[0].mxu0
        %v4808 = vadd.f32 %v4624, %v4807
        %v4809 = vpop.f32.mrb[0].mxu0
        %4810 = vmatprep.mubr.f32.mxu0 0.0
        %4811 = vmatmul.mubr.f32.gmra.mrb[0].mxu0 %v4641
        %v4812 = vpop.f32.mrb[0].mxu0
        %v4813 = vadd.f32 %v4624, %v4812
        %v4814 = vpop.f32.mrb[0].mxu0
        %4815 = vmatprep.mubr.f32.mxu0 0.0
        %4816 = vmatmul.mubr.f32.gmra.mrb[0].mxu0 %v4644
        %v4817 = vpop.f32.mrb[0].mxu0
        %v4818 = vadd.f32 %v4624, %v4817
        %v4819 = vpop.f32.mrb[0].mxu0
        %4820 = vmatprep.mubr.f32.mxu0 0.0
        %4821 = vmatmul.mubr.f32.gmra.mrb[0].mxu0 %v4647
        %v4822 = vpop.f32.mrb[0].mxu0
        %v4823 = vadd.f32 %v4624, %v4822
        %v4824 = vpop.f32.mrb[0].mxu0
        %4825 = vmatprep.mubr.f32.mxu0 0.0
        %4826 = vmatmul.mubr.f32.gmra.mrb[0].mxu0 %v4650
        %v4827 = vpop.f32.mrb[0].mxu0
        %v4828 = vadd.f32 %v4624, %v4827
        %v4829 = vpop.f32.mrb[0].mxu0
        %4830 = vmatprep.mubr.f32.mxu0 0.0
        %4831 = vmatmul.mubr.f32.gmra.mrb[0].mxu0 %v4653
        %v4832 = vpop.f32.mrb[0].mxu0
        %v4833 = vadd.f32 %v4624, %v4832
        %v4834 = vpop.f32.mrb[0].mxu0
        %4835 = vmatprep.mubr.f32.mxu0 0.0
        %4836 = vmatmul.mubr.f32.gmra.mrb[0].mxu0 %v4656
        %v4837 = vpop.f32.mrb[0].mxu0
        %v4838 = vadd.f32 %v4624, %v4837
        %v4839 = vpop.f32.mrb[0].mxu0
        %4840 = vmatprep.mubr.f32.mxu0 0.0
        %4841 = vmatmul.mubr.f32.gmra.mrb[0].mxu0 %v4659
        %v4842 = vpop.f32.mrb[0].mxu0
        %v4843 = vadd.f32 %v4624, %v4842
        %v4844 = vpop.f32.mrb[0].mxu0
        %4845 = vmatprep.mubr.f32.mxu0 0.0
        %4846 = vmatmul.mubr.f32.gmra.mrb[0].mxu0 %v4662
        %v4847 = vpop.f32.mrb[0].mxu0
        %v4848 = vadd.f32 %v4624, %v4847
        %v4849 = vpop.f32.mrb[0].mxu0
        %4850 = vmatprep.mubr.f32.mxu0 0.0
        %4851 = vmatmul.mubr.f32.gmra.mrb[0].mxu0 %v4665
        %v4852 = vpop.f32.mrb[0].mxu0
        %v4853 = vadd.f32 %v4624, %v4852
        %v4854 = vpop.f32.mrb[0].mxu0
        %4855 = vmatprep.mubr.f32.mxu0 0.0
        %4856 = vmatmul.mubr.f32.gmra.mrb[0].mxu0 %v4668
        %v4857 = vpop.f32.mrb[0].mxu0
        %v4858 = vadd.f32 %v4624, %v4857
        %v4859 = vpop.f32.mrb[0].mxu0
        %4860 = vmatprep.mubr.f32.mxu0 0.0
        %4861 = vmatmul.mubr.f32.gmra.mrb[0].mxu0 %v4671
        %v4862 = vpop.f32.mrb[0].mxu0
        %v4863 = vadd.f32 %v4624, %v4862
        %v4864 = vpop.f32.mrb[0].mxu0
        %4865 = vmatprep.mubr.f32.mxu0 0.0
        %4866 = vmatmul.mubr.f32.gmra.mrb[0].mxu0 %v4674
        %v4867 = vpop.f32.mrb[0].mxu0
        %v4868 = vadd.f32 %v4624, %v4867
        %v4869 = vpop.f32.mrb[0].mxu0
        %4870 = vmatprep.mubr.f32.mxu0 0.0
        %4871 = vmatmul.mubr.f32.gmra.mrb[0].mxu0 %v4677
        %v4872 = vpop.f32.mrb[0].mxu0
        %v4873 = vadd.f32 %v4624, %v4872
        %v4874 = vpop.f32.mrb[0].mxu0
        %4875 = vmatprep.mubr.f32.mxu0 0.0
        %4876 = vmatmul.mubr.f32.gmra.mrb[0].mxu0 %v4680
        %v4877 = vpop.f32.mrb[0].mxu0
        %v4878 = vadd.f32 %v4624, %v4877
        %v4879 = vpop.f32.mrb[0].mxu0
        %4880 = vmatprep.mubr.f32.mxu0 0.0
        %4881 = vmatmul.mubr.f32.gmra.mrb[0].mxu0 %v4683
        %v4882 = vpop.f32.mrb[0].mxu0
        %v4883 = vadd.f32 %v4624, %v4882
        %v4884 = vpop.f32.mrb[0].mxu0
        %4885 = vmatprep.mubr.f32.mxu0 0.0
        %4886 = vmatmul.mubr.f32.gmra.mrb[0].mxu0 %v4686
        %v4887 = vpop.f32.mrb[0].mxu0
        %v4888 = vadd.f32 %v4624, %v4887
        %v4889 = vpop.f32.mrb[0].mxu0
        %4890 = vmatprep.mubr.f32.mxu0 0.0
        %4891 = vmatmul.mubr.f32.gmra.mrb[0].mxu0 %v4689
        %v4892 = vpop.f32.mrb[0].mxu0
        %v4893 = vadd.f32 %v4624, %v4892
        %v4894 = vpop.f32.mrb[0].mxu0
        %4895 = vmatprep.mubr.f32.mxu0 0.0
        %4896 = vmatmul.mubr.f32.gmra.mrb[0].mxu0 %v4692
        %v4897 = vpop.f32.mrb[0].mxu0
        %v4898 = vadd.f32 %v4624, %v4897
        %v4899 = vpop.f32.mrb[0].mxu0
        %4900 = vmatprep.mubr.f32.mxu0 0.0
        %4901 = vmatmul.mubr.f32.gmra.mrb[0].mxu0 %v4695
        %v4902 = vpop.f32.mrb[0].mxu0
        %v4903 = vadd.f32 %v4624, %v4902
        %v4904 = vpop.f32.mrb[0].mxu0
        %4905 = vmatprep.mubr.f32.mxu0 0.0
        %4906 = vmatmul.mubr.f32.gmra.mrb[0].mxu0 %v4698
        %v4907 = vpop.f32.mrb[0].mxu0
        %v4908 = vadd.f32 %v4624, %v4907
        %v4909 = vpop.f32.mrb[0].mxu0
        %4910 = vmatprep.mubr.f32.mxu0 0.0
        %4911 = vmatmul.mubr.f32.gmra.mrb[0].mxu0 %v4701
        %v4912 = vpop.f32.mrb[0].mxu0
        %v4913 = vadd.f32 %v4624, %v4912
        %v4914 = vpop.f32.mrb[0].mxu0
        %4915 = vmatprep.mubr.f32.mxu0 0.0
        %4916 = vmatmul.mubr.f32.gmra.mrb[0].mxu0 %v4704
        %v4917 = vpop.f32.mrb[0].mxu0
        %v4918 = vadd.f32 %v4624, %v4917
        %v4919 = vpop.f32.mrb[0].mxu0
        %4920 = vmatprep.mubr.f32.mxu0 0.0
        %4921 = vmatmul.mubr.f32.gmra.mrb[0].mxu0 %v4707
        %v4922 = vpop.f32.mrb[0].mxu0
        %v4923 = vadd.f32 %v4624, %v4922
        %v4924 = vpop.f32.mrb[0].mxu0
        %4925 = vmatprep.mubr.f32.mxu0 0.0
        %4926 = vmatmul.mubr.f32.gmra.mrb[0].mxu0 %v4710
        %v4927 = vpop.f32.mrb[0].mxu0
        %v4928 = vadd.f32 %v4624, %v4927
        %v4929 = vpop.f32.mrb[0].mxu0
        %4930 = vmatprep.mubr.f32.mxu0 0.0
        %4931 = vmatmul.mubr.f32.gmra.mrb[0].mxu0 %v4713
        %v4932 = vpop.f32.mrb[0].mxu0
        %v4933 = vadd.f32 %v4624, %v4932
        %v4934 = vpop.f32.mrb[0].mxu0
        %4935 = vmatprep.mubr.f32.mxu0 0.0
        %4936 = vmatmul.mubr.f32.gmra.mrb[0].mxu0 %v4716
        %v4937 = vpop.f32.mrb[0].mxu0
        %v4938 = vadd.f32 %v4624, %v4937
        %v4939 = vpop.f32.mrb[0].mxu0
        %4940 = vmatprep.mubr.f32.mxu0 0.0
        %4941 = vmatmul.mubr.f32.gmra.mrb[0].mxu0 %v4719
        %v4942 = vpop.f32.mrb[0].mxu0
        %v4943 = vadd.f32 %v4624, %v4942
        %v4944 = vpop.f32.mrb[0].mxu0
        %4945 = vdwg.mxu0
        %v4946 = vmax.f32 %v4788, 0.0
        %v4947 = vmax.f32 %v4793, 0.0
        %v4948 = vmax.f32 %v4798, 0.0
        %v4949 = vmax.f32 %v4803, 0.0
        %v4950 = vmax.f32 %v4808, 0.0
        %v4951 = vmax.f32 %v4813, 0.0
        %v4952 = vmax.f32 %v4818, 0.0
        %v4953 = vmax.f32 %v4823, 0.0
        %v4954 = vmax.f32 %v4828, 0.0
        %v4955 = vmax.f32 %v4833, 0.0
        %v4956 = vmax.f32 %v4838, 0.0
        %v4957 = vmax.f32 %v4843, 0.0
        %v4958 = vmax.f32 %v4848, 0.0
        %v4959 = vmax.f32 %v4853, 0.0
        %v4960 = vmax.f32 %v4858, 0.0
        %v4961 = vmax.f32 %v4863, 0.0
        %v4962 = vmax.f32 %v4868, 0.0
        %v4963 = vmax.f32 %v4873, 0.0
        %v4964 = vmax.f32 %v4878, 0.0
        %v4965 = vmax.f32 %v4883, 0.0
        %v4966 = vmax.f32 %v4888, 0.0
        %v4967 = vmax.f32 %v4893, 0.0
        %v4968 = vmax.f32 %v4898, 0.0
        %v4969 = vmax.f32 %v4903, 0.0
        %v4970 = vmax.f32 %v4908, 0.0
        %v4971 = vmax.f32 %v4913, 0.0
        %v4972 = vmax.f32 %v4918, 0.0
        %v4973 = vmax.f32 %v4923, 0.0
        %v4974 = vmax.f32 %v4928, 0.0
        %v4975 = vmax.f32 %v4933, 0.0
        %v4976 = vmax.f32 %v4938, 0.0
        %v4977 = vmax.f32 %v4943, 0.0
        %v4978 = vadd.f32 %v3628, %v4946
        %v4979 = vadd.f32 %v3629, %v4947
        %v4980 = vadd.f32 %v3630, %v4948
        %v4981 = vadd.f32 %v3631, %v4949
        %v4982 = vadd.f32 %v3632, %v4950
        %v4983 = vadd.f32 %v3633, %v4951
        %v4984 = vadd.f32 %v3634, %v4952
        %v4985 = vadd.f32 %v3635, %v4953
        %v4986 = vadd.f32 %v3636, %v4954
        %v4987 = vadd.f32 %v3637, %v4955
        %v4988 = vadd.f32 %v3638, %v4956
        %v4989 = vadd.f32 %v3639, %v4957
        %v4990 = vadd.f32 %v3640, %v4958
        %v4991 = vadd.f32 %v3641, %v4959
        %v4992 = vadd.f32 %v3642, %v4960
        %v4993 = vadd.f32 %v3643, %v4961
        %v4994 = vadd.f32 %v3644, %v4962
        %v4995 = vadd.f32 %v3645, %v4963
        %v4996 = vadd.f32 %v3646, %v4964
        %v4997 = vadd.f32 %v3647, %v4965
        %v4998 = vadd.f32 %v3648, %v4966
        %v4999 = vadd.f32 %v3649, %v4967
        %v5000 = vadd.f32 %v3650, %v4968
        %v5001 = vadd.f32 %v3651, %v4969
        %v5002 = vadd.f32 %v3652, %v4970
        %v5003 = vadd.f32 %v3653, %v4971
        %v5004 = vadd.f32 %v3654, %v4972
        %v5005 = vadd.f32 %v3655, %v4973
        %v5006 = vadd.f32 %v3656, %v4974
        %v5007 = vadd.f32 %v3657, %v4975
        %v5008 = vadd.f32 %v3658, %v4976
        %v5009 = vadd.f32 %v3659, %v4977
        %v5010 = vadd.f32 %v4978, %v4979
        %v5011 = vadd.f32 %v5010, %v4980
        %v5012 = vadd.f32 %v5011, %v4981
        %v5013 = vadd.f32 %v5012, %v4982
        %v5014 = vadd.f32 %v5013, %v4983
        %v5015 = vadd.f32 %v5014, %v4984
        %v5016 = vadd.f32 %v5015, %v4985
        %v5017 = vadd.f32 %v5016, %v4986
        %v5018 = vadd.f32 %v5017, %v4987
        %v5019 = vadd.f32 %v5018, %v4988
        %v5020 = vadd.f32 %v5019, %v4989
        %v5021 = vadd.f32 %v5020, %v4990
        %v5022 = vadd.f32 %v5021, %v4991
        %v5023 = vadd.f32 %v5022, %v4992
        %v5024 = vadd.f32 %v5023, %v4993
        %v5025 = vadd.f32 %v5024, %v4994
        %v5026 = vadd.f32 %v5025, %v4995
        %v5027 = vadd.f32 %v5026, %v4996
        %v5028 = vadd.f32 %v5027, %v4997
        %v5029 = vadd.f32 %v5028, %v4998
        %v5030 = vadd.f32 %v5029, %v4999
        %v5031 = vadd.f32 %v5030, %v5000
        %v5032 = vadd.f32 %v5031, %v5001
        %v5033 = vadd.f32 %v5032, %v5002
        %v5034 = vadd.f32 %v5033, %v5003
        %v5035 = vadd.f32 %v5034, %v5004
        %v5036 = vadd.f32 %v5035, %v5005
        %v5037 = vadd.f32 %v5036, %v5006
        %v5038 = vadd.f32 %v5037, %v5007
        %v5039 = vadd.f32 %v5038, %v5008
        %v5040 = vadd.f32 %v5039, %v5009
        %v5041 = vrot.slane %v5040, 4
        %v5042 = vadd.f32 %v5040, %v5041
        %v5043 = vrot.slane %v5042, 2
        %v5044 = vadd.f32 %v5042, %v5043
        %v5045 = vrot.slane %v5044, 1
        %v5046 = vadd.f32 %v5044, %v5045
        %v5047 = vrcp.pop 256.0
        %v5048 = vmul.f32 %v5046, %v5047
        %v5049 = vld [vmem:[%s5] sm:$0xff]
        %v5050 = vld [vmem:[%s5 + $0x8] sm:$0xff]
        %v5051 = vld [vmem:[%s5 + $0x10] sm:$0xff]
        %v5052 = vld [vmem:[%s5 + $0x18] sm:$0xff]
        %v5053 = vld [vmem:[%s5 + $0x20] sm:$0xff]
        %v5054 = vld [vmem:[%s5 + $0x28] sm:$0xff]
        %v5055 = vld [vmem:[%s5 + $0x30] sm:$0xff]
        %v5056 = vld [vmem:[%s5 + $0x38] sm:$0xff]
        %v5057 = vld [vmem:[%s5 + $0x40] sm:$0xff]
        %v5058 = vld [vmem:[%s5 + $0x48] sm:$0xff]
        %v5059 = vld [vmem:[%s5 + $0x50] sm:$0xff]
        %v5060 = vld [vmem:[%s5 + $0x58] sm:$0xff]
        %v5061 = vld [vmem:[%s5 + $0x60] sm:$0xff]
        %v5062 = vld [vmem:[%s5 + $0x68] sm:$0xff]
        %v5063 = vld [vmem:[%s5 + $0x70] sm:$0xff]
        %v5064 = vld [vmem:[%s5 + $0x78] sm:$0xff]
        %5065 = vmatprep.subr.mxu0 0.0
        %5066 = vmatpush1.msra.mxu0 %v5049
        %5067 = vmatprep.subr.mxu0 0.0
        %5068 = vmatpush1.msra.mxu0 %v5050
        %5069 = vmatprep.subr.mxu0 0.0
        %5070 = vmatpush1.msra.mxu0 %v5051
        %5071 = vmatprep.subr.mxu0 0.0
        %5072 = vmatpush1.msra.mxu0 %v5052
        %5073 = vmatprep.subr.mxu0 0.0
        %5074 = vmatpush1.msra.mxu0 %v5053
        %5075 = vmatprep.subr.mxu0 0.0
        %5076 = vmatpush1.msra.mxu0 %v5054
        %5077 = vmatprep.subr.mxu0 0.0
        %5078 = vmatpush1.msra.mxu0 %v5055
        %5079 = vmatprep.subr.mxu0 0.0
        %5080 = vmatpush1.msra.mxu0 %v5056
        %5081 = vmatprep.subr.mxu0 0.0
        %5082 = vmatpush1.msra.mxu0 %v5057
        %5083 = vmatprep.subr.mxu0 0.0
        %5084 = vmatpush1.msra.mxu0 %v5058
        %5085 = vmatprep.subr.mxu0 0.0
        %5086 = vmatpush1.msra.mxu0 %v5059
        %5087 = vmatprep.subr.mxu0 0.0
        %5088 = vmatpush1.msra.mxu0 %v5060
        %5089 = vmatprep.subr.mxu0 0.0
        %5090 = vmatpush1.msra.mxu0 %v5061
        %5091 = vmatprep.subr.mxu0 0.0
        %5092 = vmatpush1.msra.mxu0 %v5062
        %5093 = vmatprep.subr.mxu0 0.0
        %5094 = vmatpush1.msra.mxu0 %v5063
        %5095 = vmatprep.subr.mxu0 0.0
        %5096 = vmatpush1.msra.mxu0 %v5064
        %5097 = vmatprep.subr.mxu0 0.0
        %5098 = vmatpush1.msra.mxu0 0.0
        %5099 = vmatprep.subr.mxu0 0.0
        %5100 = vmatpush1.msra.mxu0 0.0
        %5101 = vmatprep.subr.mxu0 0.0
        %5102 = vmatpush1.msra.mxu0 0.0
        %5103 = vmatprep.subr.mxu0 0.0
        %5104 = vmatpush1.msra.mxu0 0.0
        %5105 = vmatprep.subr.mxu0 0.0
        %5106 = vmatpush1.msra.mxu0 0.0
        %5107 = vmatprep.subr.mxu0 0.0
        %5108 = vmatpush1.msra.mxu0 0.0
        %5109 = vmatprep.subr.mxu0 0.0
        %5110 = vmatpush1.msra.mxu0 0.0
        %5111 = vmatprep.subr.mxu0 0.0
        %5112 = vmatpush1.msra.mxu0 0.0
        %5113 = vmatprep.subr.mxu0 0.0
        %5114 = vmatpush1.msra.mxu0 0.0
        %5115 = vmatprep.subr.mxu0 0.0
        %5116 = vmatpush1.msra.mxu0 0.0
        %5117 = vmatprep.subr.mxu0 0.0
        %5118 = vmatpush1.msra.mxu0 0.0
        %5119 = vmatprep.subr.mxu0 0.0
        %5120 = vmatpush1.msra.mxu0 0.0
        %5121 = vmatprep.subr.mxu0 0.0
        %5122 = vmatpush1.msra.mxu0 0.0
        %5123 = vmatprep.subr.mxu0 0.0
        %5124 = vmatpush1.msra.mxu0 0.0
        %5125 = vmatprep.subr.mxu0 0.0
        %5126 = vmatpush1.msra.mxu0 0.0
        %5127 = vmatprep.subr.mxu0 0.0
        %5128 = vmatpush1.msra.mxu0 0.0
        %5129 = vmatprep.mubr.f32.mxu0 0.0
        %5130 = vmatmul.mubr.f32.gmra.mrb[0].mxu0 %v5048
        %v5131 = vpop.f32.mrb[0].mxu0
        %v5132 = vadd.f32 0.0, %v5131
        %v5133 = vpop.f32.mrb[0].mxu0
        %5134 = vdwg.mxu0
        %v5135 = vmax.f32 %v5132, 0.0
        %v5136 = vld [vmem:[%s6] sm:$0xff]
        %vm5137 = vcmask 64512
        %v5139 = vsel %vm5137, %v5135, 0
        %5141 = vmatprep.subr.mxu0 0.0
        %5142 = vmatpush1.msra.mxu0 %v5136
        %5143 = vmatprep.subr.mxu0 0.0
        %5144 = vmatpush1.msra.mxu0 0.0
        %5145 = vmatprep.subr.mxu0 0.0
        %5146 = vmatpush1.msra.mxu0 0.0
        %5147 = vmatprep.subr.mxu0 0.0
        %5148 = vmatpush1.msra.mxu0 0.0
        %5149 = vmatprep.subr.mxu0 0.0
        %5150 = vmatpush1.msra.mxu0 0.0
        %5151 = vmatprep.subr.mxu0 0.0
        %5152 = vmatpush1.msra.mxu0 0.0
        %5153 = vmatprep.subr.mxu0 0.0
        %5154 = vmatpush1.msra.mxu0 0.0
        %5155 = vmatprep.subr.mxu0 0.0
        %5156 = vmatpush1.msra.mxu0 0.0
        %5157 = vmatprep.subr.mxu0 0.0
        %5158 = vmatpush1.msra.mxu0 0.0
        %5159 = vmatprep.subr.mxu0 0.0
        %5160 = vmatpush1.msra.mxu0 0.0
        %5161 = vmatprep.subr.mxu0 0.0
        %5162 = vmatpush1.msra.mxu0 0.0
        %5163 = vmatprep.subr.mxu0 0.0
        %5164 = vmatpush1.msra.mxu0 0.0
        %5165 = vmatprep.subr.mxu0 0.0
        %5166 = vmatpush1.msra.mxu0 0.0
        %5167 = vmatprep.subr.mxu0 0.0
        %5168 = vmatpush1.msra.mxu0 0.0
        %5169 = vmatprep.subr.mxu0 0.0
        %5170 = vmatpush1.msra.mxu0 0.0
        %5171 = vmatprep.subr.mxu0 0.0
        %5172 = vmatpush1.msra.mxu0 0.0
        %5173 = vmatprep.subr.mxu0 0.0
        %5174 = vmatpush1.msra.mxu0 0.0
        %5175 = vmatprep.subr.mxu0 0.0
        %5176 = vmatpush1.msra.mxu0 0.0
        %5177 = vmatprep.subr.mxu0 0.0
        %5178 = vmatpush1.msra.mxu0 0.0
        %5179 = vmatprep.subr.mxu0 0.0
        %5180 = vmatpush1.msra.mxu0 0.0
        %5181 = vmatprep.subr.mxu0 0.0
        %5182 = vmatpush1.msra.mxu0 0.0
        %5183 = vmatprep.subr.mxu0 0.0
        %5184 = vmatpush1.msra.mxu0 0.0
        %5185 = vmatprep.subr.mxu0 0.0
        %5186 = vmatpush1.msra.mxu0 0.0
        %5187 = vmatprep.subr.mxu0 0.0
        %5188 = vmatpush1.msra.mxu0 0.0
        %5189 = vmatprep.subr.mxu0 0.0
        %5190 = vmatpush1.msra.mxu0 0.0
        %5191 = vmatprep.subr.mxu0 0.0
        %5192 = vmatpush1.msra.mxu0 0.0
        %5193 = vmatprep.subr.mxu0 0.0
        %5194 = vmatpush1.msra.mxu0 0.0
        %5195 = vmatprep.subr.mxu0 0.0
        %5196 = vmatpush1.msra.mxu0 0.0
        %5197 = vmatprep.subr.mxu0 0.0
        %5198 = vmatpush1.msra.mxu0 0.0
        %5199 = vmatprep.subr.mxu0 0.0
        %5200 = vmatpush1.msra.mxu0 0.0
        %5201 = vmatprep.subr.mxu0 0.0
        %5202 = vmatpush1.msra.mxu0 0.0
        %5203 = vmatprep.subr.mxu0 0.0
        %5204 = vmatpush1.msra.mxu0 0.0
        %5205 = vmatprep.mubr.f32.mxu0 0.0
        %5206 = vmatmul.mubr.f32.gmra.mrb[0].mxu0 %v5139
        %v5207 = vpop.f32.mrb[0].mxu0
        %v5208 = vadd.f32 0.0, %v5207
        %v5209 = vpop.f32.mrb[0].mxu0
        %5210 = vdwg.mxu0
        %v5211 = vmax.f32 %v5208, 0.0
        %v5212 = vsub.f32 0.0, %v5211
        %v5213 = vmul.f32 %v5212, 1.442695
        %v5214 = vpow.pop %v5213
        %v5215 = vadd.f32 %v5214, 1.0
        %v5216 = vrcp.pop %v5215
        %v5217 = vmul.f32 1.0, %v5216
        %v5218 = vlaneseq
        %v5219 = vshrl.u32 %v5218, 7
        %v5220 = vsub.s32 0, %v5219
        %v5221 = vrot.slane %v5217, %v5220
        %v5222 = vmul.f32 %v4978, %v5221
        %v5223 = vmul.f32 %v4979, %v5221
        %v5224 = vmul.f32 %v4980, %v5221
        %v5225 = vmul.f32 %v4981, %v5221
        %v5226 = vmul.f32 %v4982, %v5221
        %v5227 = vmul.f32 %v4983, %v5221
        %v5228 = vmul.f32 %v4984, %v5221
        %v5229 = vmul.f32 %v4985, %v5221
        %v5230 = vmul.f32 %v4986, %v5221
        %v5231 = vmul.f32 %v4987, %v5221
        %v5232 = vmul.f32 %v4988, %v5221
        %v5233 = vmul.f32 %v4989, %v5221
        %v5234 = vmul.f32 %v4990, %v5221
        %v5235 = vmul.f32 %v4991, %v5221
        %v5236 = vmul.f32 %v4992, %v5221
        %v5237 = vmul.f32 %v4993, %v5221
        %v5238 = vmul.f32 %v4994, %v5221
        %v5239 = vmul.f32 %v4995, %v5221
        %v5240 = vmul.f32 %v4996, %v5221
        %v5241 = vmul.f32 %v4997, %v5221
        %v5242 = vmul.f32 %v4998, %v5221
        %v5243 = vmul.f32 %v4999, %v5221
        %v5244 = vmul.f32 %v5000, %v5221
        %v5245 = vmul.f32 %v5001, %v5221
        %v5246 = vmul.f32 %v5002, %v5221
        %v5247 = vmul.f32 %v5003, %v5221
        %v5248 = vmul.f32 %v5004, %v5221
        %v5249 = vmul.f32 %v5005, %v5221
        %v5250 = vmul.f32 %v5006, %v5221
        %v5251 = vmul.f32 %v5007, %v5221
        %v5252 = vmul.f32 %v5008, %v5221
        %v5253 = vmul.f32 %v5009, %v5221
        %v5254 = vld [vmem:[%s7] sm:$0xff]
        %v5255 = vld [vmem:[%s7 + $0x8] sm:$0xff]
        %v5256 = vld [vmem:[%s7 + $0x10] sm:$0xff]
        %v5257 = vld [vmem:[%s7 + $0x18] sm:$0xff]
        %v5258 = vld [vmem:[%s7 + $0x20] sm:$0xff]
        %v5259 = vld [vmem:[%s7 + $0x28] sm:$0xff]
        %v5260 = vld [vmem:[%s7 + $0x30] sm:$0xff]
        %v5261 = vld [vmem:[%s7 + $0x38] sm:$0xff]
        %v5262 = vld [vmem:[%s7 + $0x40] sm:$0xff]
        %v5263 = vld [vmem:[%s7 + $0x48] sm:$0xff]
        %v5264 = vld [vmem:[%s7 + $0x50] sm:$0xff]
        %v5265 = vld [vmem:[%s7 + $0x58] sm:$0xff]
        %v5266 = vld [vmem:[%s7 + $0x60] sm:$0xff]
        %v5267 = vld [vmem:[%s7 + $0x68] sm:$0xff]
        %v5268 = vld [vmem:[%s7 + $0x70] sm:$0xff]
        %v5269 = vld [vmem:[%s7 + $0x78] sm:$0xff]
        %v5270 = vld [vmem:[%s8] sm:$0x1]
        %v5272 = vlaneseq
        %v5273 = vshrl.u32 %v5272, 7
        %v5274 = vsub.s32 0, %v5273
        %v5275 = vrot.slane %v5270, %v5274
        %5277 = vmatprep.subr.mxu0 0.0
        %5278 = vmatpush1.msra.mxu0 %v5254
        %5279 = vmatprep.subr.mxu0 0.0
        %5280 = vmatpush1.msra.mxu0 %v5255
        %5281 = vmatprep.subr.mxu0 0.0
        %5282 = vmatpush1.msra.mxu0 %v5256
        %5283 = vmatprep.subr.mxu0 0.0
        %5284 = vmatpush1.msra.mxu0 %v5257
        %5285 = vmatprep.subr.mxu0 0.0
        %5286 = vmatpush1.msra.mxu0 %v5258
        %5287 = vmatprep.subr.mxu0 0.0
        %5288 = vmatpush1.msra.mxu0 %v5259
        %5289 = vmatprep.subr.mxu0 0.0
        %5290 = vmatpush1.msra.mxu0 %v5260
        %5291 = vmatprep.subr.mxu0 0.0
        %5292 = vmatpush1.msra.mxu0 %v5261
        %5293 = vmatprep.subr.mxu0 0.0
        %5294 = vmatpush1.msra.mxu0 %v5262
        %5295 = vmatprep.subr.mxu0 0.0
        %5296 = vmatpush1.msra.mxu0 %v5263
        %5297 = vmatprep.subr.mxu0 0.0
        %5298 = vmatpush1.msra.mxu0 %v5264
        %5299 = vmatprep.subr.mxu0 0.0
        %5300 = vmatpush1.msra.mxu0 %v5265
        %5301 = vmatprep.subr.mxu0 0.0
        %5302 = vmatpush1.msra.mxu0 %v5266
        %5303 = vmatprep.subr.mxu0 0.0
        %5304 = vmatpush1.msra.mxu0 %v5267
        %5305 = vmatprep.subr.mxu0 0.0
        %5306 = vmatpush1.msra.mxu0 %v5268
        %5307 = vmatprep.subr.mxu0 0.0
        %5308 = vmatpush1.msra.mxu0 %v5269
        %5309 = vmatprep.subr.mxu0 0.0
        %5310 = vmatpush1.msra.mxu0 0.0
        %5311 = vmatprep.subr.mxu0 0.0
        %5312 = vmatpush1.msra.mxu0 0.0
        %5313 = vmatprep.subr.mxu0 0.0
        %5314 = vmatpush1.msra.mxu0 0.0
        %5315 = vmatprep.subr.mxu0 0.0
        %5316 = vmatpush1.msra.mxu0 0.0
        %5317 = vmatprep.subr.mxu0 0.0
        %5318 = vmatpush1.msra.mxu0 0.0
        %5319 = vmatprep.subr.mxu0 0.0
        %5320 = vmatpush1.msra.mxu0 0.0
        %5321 = vmatprep.subr.mxu0 0.0
        %5322 = vmatpush1.msra.mxu0 0.0
        %5323 = vmatprep.subr.mxu0 0.0
        %5324 = vmatpush1.msra.mxu0 0.0
        %5325 = vmatprep.subr.mxu0 0.0
        %5326 = vmatpush1.msra.mxu0 0.0
        %5327 = vmatprep.subr.mxu0 0.0
        %5328 = vmatpush1.msra.mxu0 0.0
        %5329 = vmatprep.subr.mxu0 0.0
        %5330 = vmatpush1.msra.mxu0 0.0
        %5331 = vmatprep.subr.mxu0 0.0
        %5332 = vmatpush1.msra.mxu0 0.0
        %5333 = vmatprep.subr.mxu0 0.0
        %5334 = vmatpush1.msra.mxu0 0.0
        %5335 = vmatprep.subr.mxu0 0.0
        %5336 = vmatpush1.msra.mxu0 0.0
        %5337 = vmatprep.subr.mxu0 0.0
        %5338 = vmatpush1.msra.mxu0 0.0
        %5339 = vmatprep.subr.mxu0 0.0
        %5340 = vmatpush1.msra.mxu0 0.0
        %5341 = vmatprep.mubr.f32.mxu0 0.0
        %5342 = vmatmul.mubr.f32.gmra.mrb[0].mxu0 %v5222
        %v5343 = vpop.f32.mrb[0].mxu0
        %v5344 = vadd.f32 %v5275, %v5343
        %v5345 = vpop.f32.mrb[0].mxu0
        %5346 = vmatprep.mubr.f32.mxu0 0.0
        %5347 = vmatmul.mubr.f32.gmra.mrb[0].mxu0 %v5223
        %v5348 = vpop.f32.mrb[0].mxu0
        %v5349 = vadd.f32 %v5275, %v5348
        %v5350 = vpop.f32.mrb[0].mxu0
        %5351 = vmatprep.mubr.f32.mxu0 0.0
        %5352 = vmatmul.mubr.f32.gmra.mrb[0].mxu0 %v5224
        %v5353 = vpop.f32.mrb[0].mxu0
        %v5354 = vadd.f32 %v5275, %v5353
        %v5355 = vpop.f32.mrb[0].mxu0
        %5356 = vmatprep.mubr.f32.mxu0 0.0
        %5357 = vmatmul.mubr.f32.gmra.mrb[0].mxu0 %v5225
        %v5358 = vpop.f32.mrb[0].mxu0
        %v5359 = vadd.f32 %v5275, %v5358
        %v5360 = vpop.f32.mrb[0].mxu0
        %5361 = vmatprep.mubr.f32.mxu0 0.0
        %5362 = vmatmul.mubr.f32.gmra.mrb[0].mxu0 %v5226
        %v5363 = vpop.f32.mrb[0].mxu0
        %v5364 = vadd.f32 %v5275, %v5363
        %v5365 = vpop.f32.mrb[0].mxu0
        %5366 = vmatprep.mubr.f32.mxu0 0.0
        %5367 = vmatmul.mubr.f32.gmra.mrb[0].mxu0 %v5227
        %v5368 = vpop.f32.mrb[0].mxu0
        %v5369 = vadd.f32 %v5275, %v5368
        %v5370 = vpop.f32.mrb[0].mxu0
        %5371 = vmatprep.mubr.f32.mxu0 0.0
        %5372 = vmatmul.mubr.f32.gmra.mrb[0].mxu0 %v5228
        %v5373 = vpop.f32.mrb[0].mxu0
        %v5374 = vadd.f32 %v5275, %v5373
        %v5375 = vpop.f32.mrb[0].mxu0
        %5376 = vmatprep.mubr.f32.mxu0 0.0
        %5377 = vmatmul.mubr.f32.gmra.mrb[0].mxu0 %v5229
        %v5378 = vpop.f32.mrb[0].mxu0
        %v5379 = vadd.f32 %v5275, %v5378
        %v5380 = vpop.f32.mrb[0].mxu0
        %5381 = vmatprep.mubr.f32.mxu0 0.0
        %5382 = vmatmul.mubr.f32.gmra.mrb[0].mxu0 %v5230
        %v5383 = vpop.f32.mrb[0].mxu0
        %v5384 = vadd.f32 %v5275, %v5383
        %v5385 = vpop.f32.mrb[0].mxu0
        %5386 = vmatprep.mubr.f32.mxu0 0.0
        %5387 = vmatmul.mubr.f32.gmra.mrb[0].mxu0 %v5231
        %v5388 = vpop.f32.mrb[0].mxu0
        %v5389 = vadd.f32 %v5275, %v5388
        %v5390 = vpop.f32.mrb[0].mxu0
        %5391 = vmatprep.mubr.f32.mxu0 0.0
        %5392 = vmatmul.mubr.f32.gmra.mrb[0].mxu0 %v5232
        %v5393 = vpop.f32.mrb[0].mxu0
        %v5394 = vadd.f32 %v5275, %v5393
        %v5395 = vpop.f32.mrb[0].mxu0
        %5396 = vmatprep.mubr.f32.mxu0 0.0
        %5397 = vmatmul.mubr.f32.gmra.mrb[0].mxu0 %v5233
        %v5398 = vpop.f32.mrb[0].mxu0
        %v5399 = vadd.f32 %v5275, %v5398
        %v5400 = vpop.f32.mrb[0].mxu0
        %5401 = vmatprep.mubr.f32.mxu0 0.0
        %5402 = vmatmul.mubr.f32.gmra.mrb[0].mxu0 %v5234
        %v5403 = vpop.f32.mrb[0].mxu0
        %v5404 = vadd.f32 %v5275, %v5403
        %v5405 = vpop.f32.mrb[0].mxu0
        %5406 = vmatprep.mubr.f32.mxu0 0.0
        %5407 = vmatmul.mubr.f32.gmra.mrb[0].mxu0 %v5235
        %v5408 = vpop.f32.mrb[0].mxu0
        %v5409 = vadd.f32 %v5275, %v5408
        %v5410 = vpop.f32.mrb[0].mxu0
        %5411 = vmatprep.mubr.f32.mxu0 0.0
        %5412 = vmatmul.mubr.f32.gmra.mrb[0].mxu0 %v5236
        %v5413 = vpop.f32.mrb[0].mxu0
        %v5414 = vadd.f32 %v5275, %v5413
        %v5415 = vpop.f32.mrb[0].mxu0
        %5416 = vmatprep.mubr.f32.mxu0 0.0
        %5417 = vmatmul.mubr.f32.gmra.mrb[0].mxu0 %v5237
        %v5418 = vpop.f32.mrb[0].mxu0
        %v5419 = vadd.f32 %v5275, %v5418
        %v5420 = vpop.f32.mrb[0].mxu0
        %5421 = vmatprep.mubr.f32.mxu0 0.0
        %5422 = vmatmul.mubr.f32.gmra.mrb[0].mxu0 %v5238
        %v5423 = vpop.f32.mrb[0].mxu0
        %v5424 = vadd.f32 %v5275, %v5423
        %v5425 = vpop.f32.mrb[0].mxu0
        %5426 = vmatprep.mubr.f32.mxu0 0.0
        %5427 = vmatmul.mubr.f32.gmra.mrb[0].mxu0 %v5239
        %v5428 = vpop.f32.mrb[0].mxu0
        %v5429 = vadd.f32 %v5275, %v5428
        %v5430 = vpop.f32.mrb[0].mxu0
        %5431 = vmatprep.mubr.f32.mxu0 0.0
        %5432 = vmatmul.mubr.f32.gmra.mrb[0].mxu0 %v5240
        %v5433 = vpop.f32.mrb[0].mxu0
        %v5434 = vadd.f32 %v5275, %v5433
        %v5435 = vpop.f32.mrb[0].mxu0
        %5436 = vmatprep.mubr.f32.mxu0 0.0
        %5437 = vmatmul.mubr.f32.gmra.mrb[0].mxu0 %v5241
        %v5438 = vpop.f32.mrb[0].mxu0
        %v5439 = vadd.f32 %v5275, %v5438
        %v5440 = vpop.f32.mrb[0].mxu0
        %5441 = vmatprep.mubr.f32.mxu0 0.0
        %5442 = vmatmul.mubr.f32.gmra.mrb[0].mxu0 %v5242
        %v5443 = vpop.f32.mrb[0].mxu0
        %v5444 = vadd.f32 %v5275, %v5443
        %v5445 = vpop.f32.mrb[0].mxu0
        %5446 = vmatprep.mubr.f32.mxu0 0.0
        %5447 = vmatmul.mubr.f32.gmra.mrb[0].mxu0 %v5243
        %v5448 = vpop.f32.mrb[0].mxu0
        %v5449 = vadd.f32 %v5275, %v5448
        %v5450 = vpop.f32.mrb[0].mxu0
        %5451 = vmatprep.mubr.f32.mxu0 0.0
        %5452 = vmatmul.mubr.f32.gmra.mrb[0].mxu0 %v5244
        %v5453 = vpop.f32.mrb[0].mxu0
        %v5454 = vadd.f32 %v5275, %v5453
        %v5455 = vpop.f32.mrb[0].mxu0
        %5456 = vmatprep.mubr.f32.mxu0 0.0
        %5457 = vmatmul.mubr.f32.gmra.mrb[0].mxu0 %v5245
        %v5458 = vpop.f32.mrb[0].mxu0
        %v5459 = vadd.f32 %v5275, %v5458
        %v5460 = vpop.f32.mrb[0].mxu0
        %5461 = vmatprep.mubr.f32.mxu0 0.0
        %5462 = vmatmul.mubr.f32.gmra.mrb[0].mxu0 %v5246
        %v5463 = vpop.f32.mrb[0].mxu0
        %v5464 = vadd.f32 %v5275, %v5463
        %v5465 = vpop.f32.mrb[0].mxu0
        %5466 = vmatprep.mubr.f32.mxu0 0.0
        %5467 = vmatmul.mubr.f32.gmra.mrb[0].mxu0 %v5247
        %v5468 = vpop.f32.mrb[0].mxu0
        %v5469 = vadd.f32 %v5275, %v5468
        %v5470 = vpop.f32.mrb[0].mxu0
        %5471 = vmatprep.mubr.f32.mxu0 0.0
        %5472 = vmatmul.mubr.f32.gmra.mrb[0].mxu0 %v5248
        %v5473 = vpop.f32.mrb[0].mxu0
        %v5474 = vadd.f32 %v5275, %v5473
        %v5475 = vpop.f32.mrb[0].mxu0
        %5476 = vmatprep.mubr.f32.mxu0 0.0
        %5477 = vmatmul.mubr.f32.gmra.mrb[0].mxu0 %v5249
        %v5478 = vpop.f32.mrb[0].mxu0
        %v5479 = vadd.f32 %v5275, %v5478
        %v5480 = vpop.f32.mrb[0].mxu0
        %5481 = vmatprep.mubr.f32.mxu0 0.0
        %5482 = vmatmul.mubr.f32.gmra.mrb[0].mxu0 %v5250
        %v5483 = vpop.f32.mrb[0].mxu0
        %v5484 = vadd.f32 %v5275, %v5483
        %v5485 = vpop.f32.mrb[0].mxu0
        %5486 = vmatprep.mubr.f32.mxu0 0.0
        %5487 = vmatmul.mubr.f32.gmra.mrb[0].mxu0 %v5251
        %v5488 = vpop.f32.mrb[0].mxu0
        %v5489 = vadd.f32 %v5275, %v5488
        %v5490 = vpop.f32.mrb[0].mxu0
        %5491 = vmatprep.mubr.f32.mxu0 0.0
        %5492 = vmatmul.mubr.f32.gmra.mrb[0].mxu0 %v5252
        %v5493 = vpop.f32.mrb[0].mxu0
        %v5494 = vadd.f32 %v5275, %v5493
        %v5495 = vpop.f32.mrb[0].mxu0
        %5496 = vmatprep.mubr.f32.mxu0 0.0
        %5497 = vmatmul.mubr.f32.gmra.mrb[0].mxu0 %v5253
        %v5498 = vpop.f32.mrb[0].mxu0
        %v5499 = vadd.f32 %v5275, %v5498
        %v5500 = vpop.f32.mrb[0].mxu0
        %5501 = vdwg.mxu0
        %v5502 = vmax.f32 %v5344, 0.0
        %v5503 = vmax.f32 %v5349, 0.0
        %v5504 = vmax.f32 %v5354, 0.0
        %v5505 = vmax.f32 %v5359, 0.0
        %v5506 = vmax.f32 %v5364, 0.0
        %v5507 = vmax.f32 %v5369, 0.0
        %v5508 = vmax.f32 %v5374, 0.0
        %v5509 = vmax.f32 %v5379, 0.0
        %v5510 = vmax.f32 %v5384, 0.0
        %v5511 = vmax.f32 %v5389, 0.0
        %v5512 = vmax.f32 %v5394, 0.0
        %v5513 = vmax.f32 %v5399, 0.0
        %v5514 = vmax.f32 %v5404, 0.0
        %v5515 = vmax.f32 %v5409, 0.0
        %v5516 = vmax.f32 %v5414, 0.0
        %v5517 = vmax.f32 %v5419, 0.0
        %v5518 = vmax.f32 %v5424, 0.0
        %v5519 = vmax.f32 %v5429, 0.0
        %v5520 = vmax.f32 %v5434, 0.0
        %v5521 = vmax.f32 %v5439, 0.0
        %v5522 = vmax.f32 %v5444, 0.0
        %v5523 = vmax.f32 %v5449, 0.0
        %v5524 = vmax.f32 %v5454, 0.0
        %v5525 = vmax.f32 %v5459, 0.0
        %v5526 = vmax.f32 %v5464, 0.0
        %v5527 = vmax.f32 %v5469, 0.0
        %v5528 = vmax.f32 %v5474, 0.0
        %v5529 = vmax.f32 %v5479, 0.0
        %v5530 = vmax.f32 %v5484, 0.0
        %v5531 = vmax.f32 %v5489, 0.0
        %v5532 = vmax.f32 %v5494, 0.0
        %v5533 = vmax.f32 %v5499, 0.0
        %vm5534 = vcmask 261120
        %5535 = vst.msk [vmem:[%s325] sm:$0xff] %vm5534, %v5502
        %5536 = vst.msk [vmem:[%s325 + $0x8] sm:$0xff] %vm5534, %v5503
        %5537 = vst.msk [vmem:[%s325 + $0x10] sm:$0xff] %vm5534, %v5504
        %5538 = vst.msk [vmem:[%s325 + $0x18] sm:$0xff] %vm5534, %v5505
        %5539 = vst.msk [vmem:[%s325 + $0x20] sm:$0xff] %vm5534, %v5506
        %5540 = vst.msk [vmem:[%s325 + $0x28] sm:$0xff] %vm5534, %v5507
        %5541 = vst.msk [vmem:[%s325 + $0x30] sm:$0xff] %vm5534, %v5508
        %5542 = vst.msk [vmem:[%s325 + $0x38] sm:$0xff] %vm5534, %v5509
        %5543 = vst.msk [vmem:[%s325 + $0x40] sm:$0xff] %vm5534, %v5510
        %5544 = vst.msk [vmem:[%s325 + $0x48] sm:$0xff] %vm5534, %v5511
        %5545 = vst.msk [vmem:[%s325 + $0x50] sm:$0xff] %vm5534, %v5512
        %5546 = vst.msk [vmem:[%s325 + $0x58] sm:$0xff] %vm5534, %v5513
        %5547 = vst.msk [vmem:[%s325 + $0x60] sm:$0xff] %vm5534, %v5514
        %5548 = vst.msk [vmem:[%s325 + $0x68] sm:$0xff] %vm5534, %v5515
        %5549 = vst.msk [vmem:[%s325 + $0x70] sm:$0xff] %vm5534, %v5516
        %5550 = vst.msk [vmem:[%s325 + $0x78] sm:$0xff] %vm5534, %v5517
        %5551 = vst.msk [vmem:[%s325 + $0x80] sm:$0xff] %vm5534, %v5518
        %5552 = vst.msk [vmem:[%s325 + $0x88] sm:$0xff] %vm5534, %v5519
        %5553 = vst.msk [vmem:[%s325 + $0x90] sm:$0xff] %vm5534, %v5520
        %5554 = vst.msk [vmem:[%s325 + $0x98] sm:$0xff] %vm5534, %v5521
        %5555 = vst.msk [vmem:[%s325 + $0xa0] sm:$0xff] %vm5534, %v5522
        %5556 = vst.msk [vmem:[%s325 + $0xa8] sm:$0xff] %vm5534, %v5523
        %5557 = vst.msk [vmem:[%s325 + $0xb0] sm:$0xff] %vm5534, %v5524
        %5558 = vst.msk [vmem:[%s325 + $0xb8] sm:$0xff] %vm5534, %v5525
        %5559 = vst.msk [vmem:[%s325 + $0xc0] sm:$0xff] %vm5534, %v5526
        %5560 = vst.msk [vmem:[%s325 + $0xc8] sm:$0xff] %vm5534, %v5527
        %5561 = vst.msk [vmem:[%s325 + $0xd0] sm:$0xff] %vm5534, %v5528
        %5562 = vst.msk [vmem:[%s325 + $0xd8] sm:$0xff] %vm5534, %v5529
        %5563 = vst.msk [vmem:[%s325 + $0xe0] sm:$0xff] %vm5534, %v5530
        %5564 = vst.msk [vmem:[%s325 + $0xe8] sm:$0xff] %vm5534, %v5531
        %5565 = vst.msk [vmem:[%s325 + $0xf0] sm:$0xff] %vm5534, %v5532
        %5566 = vst.msk [vmem:[%s325 + $0xf8] sm:$0xff] %vm5534, %v5533
        %s5567 = sand.u32 %s225, 1
        %s5568 = scalar_lea.sflag [#allocation4], %s5567
        %s5569 = sand.u32 %s225, 1
        %s5570 = smul.addr %s5569, 256
        %s5571 = scalar_lea.vmem [#allocation3], %s5570
        // Predicated region
        $region57: #{cajpu_forward.3} parent=55 // pred_check
          %p5572 = pneg %p235
        $region58: #{cajpu_forward.3} parent=55 // pred_check_branch
          %5574 = sbr.rel (%p5572) target = $region60
        $region59: #{cajpu_forward.3} parent=55 // pred_region
          %s5576 = ssub.s32 4096, 4096
          %5577 = vsyncadd %s5568, %s5576
          %s5578 = smul.addr %s23, 32
          %s5579 = smul.addr %s5578, 128
          %s5580 = scalar_lea.hbm %s9, %s5579
          %s5581 = sshll.u32 %s5571, 4
          %s5582 = int_to_ptr.vmem [resolvable:$true] %s5581
          %5587 = dma.vmem_to_hbm [thread:$0]  %s5582, 4096, %s5580, %s5568, 128, 128, 8
        $region60: #{cajpu_forward.3} parent=55 // pred_fallthru
          _
      $region56: #{cajpu_forward.3} parent=5 // pred_fallthru
        _
      %p5588 = scmp.le.s32.totalorder 2, %s18
      // Predicated region
      $region61: #{cajpu_forward.3} parent=5 // pred_check
        %p5589 = pneg %p5588
      $region62: #{cajpu_forward.3} parent=5 // pred_check_branch
        %5591 = sbr.rel (%p5589) target = $region64
      $region63: #{cajpu_forward.3} parent=5 // pred_region
        %s5592 = ssub.s32 %s18, 2
        // Predicated region
        $region65: #{cajpu_forward.3} parent=63 // pred_check
          %p5593 = pneg %p241
        $region66: #{cajpu_forward.3} parent=63 // pred_check_branch
          %5595 = sbr.rel (%p5593) target = $region68
        $region67: #{cajpu_forward.3} parent=63 // pred_region
          %s5596 = sand.u32 %s226, 1
          %s5597 = scalar_lea.sflag [#allocation4], %s5596
          %s5598 = sand.u32 %s226, 1
          %s5599 = smul.addr %s5598, 256
          %s5600 = scalar_lea.vmem [#allocation3], %s5599
          %5601 = dma.done %s5597, 4096
        $region68: #{cajpu_forward.3} parent=63 // pred_fallthru
          _
      $region64: #{cajpu_forward.3} parent=5 // pred_fallthru
        _
    $region6: #{cajpu_forward.3} parent=1 // loop_footer
      %s22 = sadd.s32 1, %s18
    $region7: #{cajpu_forward.3} parent=1 // loop_footer_branch
      %17 = sbr.rel target = $region3
    $region8: #{cajpu_forward.3} parent=1 // loop_exit
      _
    %5602 = vsyncpa [#allocation4], 1
    %s5603 = scalar_lea.sflag [#allocation4], 1
    %5604 = vsyncpa %s5603, 1

</llo_original>
